<compile_context>
chip_gen: v7x
topology: tpu7x:2x2x1
jax: 0.10.0
libtpu: 0.0.40
codegen_flags: <defaults>
</compile_context>

<pallas_src>
import math

import jax
import jax.numpy as jnp
from jax.experimental import pallas as pl
from jax.experimental.pallas import tpu as pltpu


MATMUL_DTYPE = jnp.float32  # set to jnp.bfloat16 on v5e if ~1e-3 error is OK


# ----------------------------------------------------------------------------
# Fused kernel: 3-layer LSTM + FC head, single invocation (no grid).
# ----------------------------------------------------------------------------
def _fused_lstm_fc_kernel(
    x_ref,                              # (T*Bp, D_in) VMEM; row t*Bp+b = x[b, t]
    w0_ih_ref, w0_hh_ref, b0_ref,       # layer 0: (D_in,4H), (H,4H), (1,4H) VMEM
    w1_ih_hbm, w1_hh_hbm, b1_ref,       # layer 1: (H,4H) HBM, (H,4H) HBM, (1,4H) VMEM
    w2_ih_hbm, w2_hh_hbm, b2_ref,       # layer 2: same layout as layer 1
    fc_w_ref, fc_b_ref,                 # (1,H), (1,1) VMEM
    out_ref,                            # (Bp, 1) VMEM
    xp_ref,                             # scratch (T*Bp, 4H) f32 — hoisted projection
    acts_ref,                           # scratch (T*Bp, H)  f32 — inter-layer acts
    wih_buf, whh_buf,                   # scratch (2, H, 4H) f32 — layer-1/2 weights
    sems,                               # DMA semaphores (2, 2)
):
    Bp = out_ref.shape[0]
    T = x_ref.shape[0] // Bp
    H = w0_hh_ref.shape[0]

    # --- Kick off layer-1/2 weight DMAs now; they overlap with layer-0
    # compute and are waited on only right before each layer uses them. ---
    copies = []
    for slot, (wi_hbm, wh_hbm) in enumerate(
            ((w1_ih_hbm, w1_hh_hbm), (w2_ih_hbm, w2_hh_hbm))):
        ci = pltpu.make_async_copy(wi_hbm, wih_buf.at[slot], sems.at[slot, 0])
        ch = pltpu.make_async_copy(wh_hbm, whh_buf.at[slot], sems.at[slot, 1])
        ci.start()
        ch.start()
        copies.append((ci, ch))

    def run_layer(in_ref, wih_view, whh_view, b_view):
        # Hoisted input projection for ALL timesteps at once (off the serial
        # recurrence); parked in VMEM scratch, not SSA values.
        xp_ref[...] = (
            jnp.dot(in_ref[...].astype(MATMUL_DTYPE),
                    wih_view[...].astype(MATMUL_DTYPE),
                    preferred_element_type=jnp.float32)
            + b_view[...]
        )
        whh = whh_view[...].astype(MATMUL_DTYPE)     # hoisted out of the loop

        h = jnp.zeros((Bp, H), jnp.float32)
        c = jnp.zeros((Bp, H), jnp.float32)
        for t in range(T):                           # unrolled, T=8
            lo, hi = t * Bp, (t + 1) * Bp
            # Single recurrent matmul per step on the dependency chain.
            gates = xp_ref[lo:hi, :] + jnp.dot(
                h.astype(MATMUL_DTYPE), whh, preferred_element_type=jnp.float32)
            # Gate layout is [i, f, o, g] (permuted at param-prep time):
            # one sigmoid over 3H lanes + one tanh over H lanes per step.
            sig = jax.nn.sigmoid(gates[:, : 3 * H])
            g_g = jnp.tanh(gates[:, 3 * H:])
            i_g = sig[:, 0 * H:1 * H]
            f_g = sig[:, 1 * H:2 * H]
            o_g = sig[:, 2 * H:3 * H]
            c = f_g * c + i_g * g_g
            h = o_g * jnp.tanh(c)
            acts_ref[lo:hi, :] = h                   # next layer's input, in VMEM
        return h

    # Layer 0: small weights already resident (auto-DMA'd whole-array operands).
    run_layer(x_ref, w0_ih_ref, w0_hh_ref, b0_ref)

    # Layer 1: wait for its weight DMAs only now (they ran under layer 0).
    for cp in copies[0]:
        cp.wait()
    run_layer(acts_ref, wih_buf.at[0], whh_buf.at[0], b1_ref)

    # Layer 2 (top).
    for cp in copies[1]:
        cp.wait()
    h_last = run_layer(acts_ref, wih_buf.at[1], whh_buf.at[1], b2_ref)

    # TODO(synk): inter-layer dropout (p=0.1) is training-only; no-op here.

    # FC head: VPU multiply + lane reduction (avoids a 1-column MXU matmul).
    out_ref[...] = (
        jnp.sum(h_last * fc_w_ref[...], axis=-1, keepdims=True) + fc_b_ref[...]
    )


# ----------------------------------------------------------------------------
# Parameter construction (PyTorch layout) and kernel-layout preparation
# ----------------------------------------------------------------------------
def init_raw_params(key, input_dim, hidden_dim, num_layers):
    """Deterministic stand-ins mirroring nn.LSTM / nn.Linear init (PyTorch layout)."""
    k = 1.0 / math.sqrt(hidden_dim)
    raw = {"lstm": []}
    for layer in range(num_layers):
        d_in = input_dim if layer == 0 else hidden_dim
        key, k1, k2, k3, k4 = jax.random.split(key, 5)
        raw["lstm"].append({
            "w_ih": jax.random.uniform(k1, (4 * hidden_dim, d_in), jnp.float32, -k, k),
            "w_hh": jax.random.uniform(k2, (4 * hidden_dim, hidden_dim), jnp.float32, -k, k),
            "b_ih": jax.random.uniform(k3, (4 * hidden_dim,), jnp.float32, -k, k),
            "b_hh": jax.random.uniform(k4, (4 * hidden_dim,), jnp.float32, -k, k),
        })
    key, k5, k6 = jax.random.split(key, 3)
    raw["fc_w"] = jax.random.uniform(k5, (1, hidden_dim), jnp.float32, -k, k)
    raw["fc_b"] = jax.random.uniform(k6, (1,), jnp.float32, -k, k)
    return raw


def prepare_params(raw, hidden_dim):
    """Kernel layout: transpose, fuse biases, permute gates [i,f,g,o] -> [i,f,o,g]."""
    H = hidden_dim

    def perm(w):  # w: (..., 4H), one-time host-side column permutation
        return jnp.concatenate(
            [w[..., : 2 * H], w[..., 3 * H:], w[..., 2 * H: 3 * H]], axis=-1)

    params = {"lstm": []}
    for lyr in raw["lstm"]:
        params["lstm"].append({
            "wih_t": perm(jnp.transpose(lyr["w_ih"])),                     # (d_in, 4H)
            "whh_t": perm(jnp.transpose(lyr["w_hh"])),                     # (H, 4H)
            "bias": perm((lyr["b_ih"] + lyr["b_hh"]).reshape(1, 4 * H)),   # (1, 4H)
        })
    params["fc_w"] = raw["fc_w"]                      # (1, H)
    params["fc_b"] = raw["fc_b"].reshape(1, 1)        # (1, 1)
    return params


# ----------------------------------------------------------------------------
# Wrapper
# ----------------------------------------------------------------------------
@jax.jit
def lstm_model_forward(x, params):
    """Equivalent of LSTMModel.forward: x (B, T, input_dim) batch-first -> (B, 1)."""
    B, T, D = x.shape
    Bp = ((B + 7) // 8) * 8                           # pad batch to the 8-sublane granule

    x_tm = jnp.transpose(x, (1, 0, 2)).astype(jnp.float32)      # (T, B, D)
    if Bp != B:
        x_tm = jnp.pad(x_tm, ((0, 0), (0, Bp - B), (0, 0)))     # padded rows stay isolated
    x2d = x_tm.reshape(T * Bp, D)                               # row t*Bp + b = x[b, t]

    l0, l1, l2 = params["lstm"]
    H = l0["whh_t"].shape[0]

    vmem = pl.BlockSpec(memory_space=pltpu.MemorySpace.VMEM)
    hbm = pl.BlockSpec(memory_space=pl.ANY)           # manual DMA inside the kernel

    y_pad = pl.pallas_call(
        _fused_lstm_fc_kernel,
        out_shape=jax.ShapeDtypeStruct((Bp, 1), jnp.float32),
        in_specs=[
            vmem,                    # x
            vmem, vmem, vmem,        # layer 0 (small, resident up front)
            hbm, hbm, vmem,          # layer 1 (bulk weights DMA'd in-kernel)
            hbm, hbm, vmem,          # layer 2
            vmem, vmem,              # fc
        ],
        out_specs=vmem,
        scratch_shapes=[
            pltpu.VMEM((T * Bp, 4 * H), jnp.float32),   # xp (hoisted projection)
            pltpu.VMEM((T * Bp, H), jnp.float32),       # inter-layer activations
            pltpu.VMEM((2, H, 4 * H), jnp.float32),     # layer-1/2 W_ih^T buffers
            pltpu.VMEM((2, H, 4 * H), jnp.float32),     # layer-1/2 W_hh^T buffers
            pltpu.SemaphoreType.DMA((2, 2)),
        ],
    )(
        x2d,
        l0["wih_t"], l0["whh_t"], l0["bias"],
        l1["wih_t"], l1["whh_t"], l1["bias"],
        l2["wih_t"], l2["whh_t"], l2["bias"],
        params["fc_w"], params["fc_b"],
    )
    return y_pad[:B]


# ----------------------------------------------------------------------------
# Pure-JAX reference (PyTorch gate order, for checking the kernel)
# ----------------------------------------------------------------------------
def _reference_forward(x, raw):
    H = raw["lstm"][0]["w_hh"].shape[1]
    out = jnp.transpose(x, (1, 0, 2)).astype(jnp.float32)       # (T, B, D)
    B = out.shape[1]
    for lyr in raw["lstm"]:
        wih_t = jnp.transpose(lyr["w_ih"])
        whh_t = jnp.transpose(lyr["w_hh"])
        b = (lyr["b_ih"] + lyr["b_hh"])[None, :]
        h = jnp.zeros((B, H), jnp.float32)
        c = jnp.zeros((B, H), jnp.float32)
        hs = []
        for t in range(out.shape[0]):
            gates = out[t] @ wih_t + h @ whh_t + b
            i = jax.nn.sigmoid(gates[:, 0 * H:1 * H])
            f = jax.nn.sigmoid(gates[:, 1 * H:2 * H])
            g = jnp.tanh(gates[:, 2 * H:3 * H])
            o = jax.nn.sigmoid(gates[:, 3 * H:4 * H])
            c = f * c + i * g
            h = o * jnp.tanh(c)
            hs.append(h)
        out = jnp.stack(hs, axis=0)
    return out[-1] @ raw["fc_w"].T + raw["fc_b"]


# ----------------------------------------------------------------------------
if __name__ == "__main__":
    B, T = 2, 8
    INPUT_DIM = 8        # len(important_feats)
    HIDDEN_DIM = 128
    NUM_LAYERS = 3

    key = jax.random.PRNGKey(0)
    key, pkey, xkey = jax.random.split(key, 3)

    raw = init_raw_params(pkey, INPUT_DIM, HIDDEN_DIM, NUM_LAYERS)
    params = prepare_params(raw, HIDDEN_DIM)
    x = jax.random.normal(xkey, (B, T, INPUT_DIM), jnp.float32)

    y = jax.block_until_ready(lstm_model_forward(x, params))
    assert y.shape == (B, 1)

    y_ref = _reference_forward(x, raw)
    # f32 MXU path typically matches the XLA reference to ~1e-5; 1e-3 leaves
    # headroom for flipping MATMUL_DTYPE to bfloat16 on v5e.
    assert jnp.allclose(y, y_ref, atol=1e-3, rtol=1e-3), "kernel mismatch vs reference"

    print("KERNEL_OK")
</pallas_src>

<mosaic_0001>
module attributes {stable_mosaic.version = 11 : i64} {
  func.func @_fused_lstm_fc_kernel(%arg0: memref<64x8xf32, #tpu.memory_space<vmem>>, %arg1: memref<8x512xf32, #tpu.memory_space<vmem>>, %arg2: memref<128x512xf32, #tpu.memory_space<vmem>>, %arg3: memref<1x512xf32, #tpu.memory_space<vmem>>, %arg4: memref<128x512xf32, #tpu.memory_space<any>>, %arg5: memref<128x512xf32, #tpu.memory_space<any>>, %arg6: memref<1x512xf32, #tpu.memory_space<vmem>>, %arg7: memref<128x512xf32, #tpu.memory_space<any>>, %arg8: memref<128x512xf32, #tpu.memory_space<any>>, %arg9: memref<1x512xf32, #tpu.memory_space<vmem>>, %arg10: memref<1x128xf32, #tpu.memory_space<vmem>>, %arg11: memref<1x1xf32, #tpu.memory_space<vmem>>, %arg12: memref<8x1xf32, #tpu.memory_space<vmem>>, %arg13: memref<64x512xf32, #tpu.memory_space<vmem>>, %arg14: memref<64x128xf32, #tpu.memory_space<vmem>>, %arg15: memref<2x128x512xf32, #tpu.memory_space<vmem>>, %arg16: memref<2x128x512xf32, #tpu.memory_space<vmem>>, %arg17: memref<2x2x!tpu.dma_semaphore, #tpu.memory_space<semaphore_mem>>) attributes {dimension_semantics = [], scalar_prefetch = 0 : i64, scratch_operands = 5 : i64, tpu.core_type = #tpu.core_type<tc>} {
    %c0_i32 = arith.constant 0 : i32
    %c0_i32_0 = arith.constant 0 : i32
    %c0_i32_1 = arith.constant 0 : i32
    %c0_i32_2 = arith.constant 0 : i32
    %c0_i32_3 = arith.constant 0 : i32
    %0 = tpu.memref_slice %arg15[%c0_i32, %c0_i32_2, %c0_i32_3] : memref<2x128x512xf32, #tpu.memory_space<vmem>> -> memref<1x128x512xf32, #tpu.memory_space<vmem>>
    %1 = tpu.memref_squeeze %0 : memref<1x128x512xf32, #tpu.memory_space<vmem>> -> memref<128x512xf32, #tpu.memory_space<vmem>>
    %2 = tpu.memref_slice %arg17[%c0_i32_0, %c0_i32_1] : memref<2x2x!tpu.dma_semaphore, #tpu.memory_space<semaphore_mem>> -> memref<1x1x!tpu.dma_semaphore, #tpu.memory_space<semaphore_mem>>
    %3 = tpu.memref_squeeze %2 : memref<1x1x!tpu.dma_semaphore, #tpu.memory_space<semaphore_mem>> -> memref<!tpu.dma_semaphore, #tpu.memory_space<semaphore_mem>>
    tpu.enqueue_dma source(%arg4 : memref<128x512xf32, #tpu.memory_space<any>>) target(%1 : memref<128x512xf32, #tpu.memory_space<vmem>>) target_semaphore(%3 : memref<!tpu.dma_semaphore, #tpu.memory_space<semaphore_mem>>)
    %c0_i32_4 = arith.constant 0 : i32
    %c0_i32_5 = arith.constant 0 : i32
    %c1_i32 = arith.constant 1 : i32
    %c0_i32_6 = arith.constant 0 : i32
    %c0_i32_7 = arith.constant 0 : i32
    %4 = tpu.memref_slice %arg16[%c0_i32_4, %c0_i32_6, %c0_i32_7] : memref<2x128x512xf32, #tpu.memory_space<vmem>> -> memref<1x128x512xf32, #tpu.memory_space<vmem>>
    %5 = tpu.memref_squeeze %4 : memref<1x128x512xf32, #tpu.memory_space<vmem>> -> memref<128x512xf32, #tpu.memory_space<vmem>>
    %6 = tpu.memref_slice %arg17[%c0_i32_5, %c1_i32] : memref<2x2x!tpu.dma_semaphore, #tpu.memory_space<semaphore_mem>> -> memref<1x1x!tpu.dma_semaphore, #tpu.memory_space<semaphore_mem>>
    %7 = tpu.memref_squeeze %6 : memref<1x1x!tpu.dma_semaphore, #tpu.memory_space<semaphore_mem>> -> memref<!tpu.dma_semaphore, #tpu.memory_space<semaphore_mem>>
    tpu.enqueue_dma source(%arg5 : memref<128x512xf32, #tpu.memory_space<any>>) target(%5 : memref<128x512xf32, #tpu.memory_space<vmem>>) target_semaphore(%7 : memref<!tpu.dma_semaphore, #tpu.memory_space<semaphore_mem>>)
    %c1_i32_8 = arith.constant 1 : i32
    %c1_i32_9 = arith.constant 1 : i32
    %c0_i32_10 = arith.constant 0 : i32
    %c0_i32_11 = arith.constant 0 : i32
    %c0_i32_12 = arith.constant 0 : i32
    %8 = tpu.memref_slice %arg15[%c1_i32_8, %c0_i32_11, %c0_i32_12] : memref<2x128x512xf32, #tpu.memory_space<vmem>> -> memref<1x128x512xf32, #tpu.memory_space<vmem>>
    %9 = tpu.memref_squeeze %8 : memref<1x128x512xf32, #tpu.memory_space<vmem>> -> memref<128x512xf32, #tpu.memory_space<vmem>>
    %10 = tpu.memref_slice %arg17[%c1_i32_9, %c0_i32_10] : memref<2x2x!tpu.dma_semaphore, #tpu.memory_space<semaphore_mem>> -> memref<1x1x!tpu.dma_semaphore, #tpu.memory_space<semaphore_mem>>
    %11 = tpu.memref_squeeze %10 : memref<1x1x!tpu.dma_semaphore, #tpu.memory_space<semaphore_mem>> -> memref<!tpu.dma_semaphore, #tpu.memory_space<semaphore_mem>>
    tpu.enqueue_dma source(%arg7 : memref<128x512xf32, #tpu.memory_space<any>>) target(%9 : memref<128x512xf32, #tpu.memory_space<vmem>>) target_semaphore(%11 : memref<!tpu.dma_semaphore, #tpu.memory_space<semaphore_mem>>)
    %c1_i32_13 = arith.constant 1 : i32
    %c1_i32_14 = arith.constant 1 : i32
    %c1_i32_15 = arith.constant 1 : i32
    %c0_i32_16 = arith.constant 0 : i32
    %c0_i32_17 = arith.constant 0 : i32
    %12 = tpu.memref_slice %arg16[%c1_i32_13, %c0_i32_16, %c0_i32_17] : memref<2x128x512xf32, #tpu.memory_space<vmem>> -> memref<1x128x512xf32, #tpu.memory_space<vmem>>
    %13 = tpu.memref_squeeze %12 : memref<1x128x512xf32, #tpu.memory_space<vmem>> -> memref<128x512xf32, #tpu.memory_space<vmem>>
    %14 = tpu.memref_slice %arg17[%c1_i32_14, %c1_i32_15] : memref<2x2x!tpu.dma_semaphore, #tpu.memory_space<semaphore_mem>> -> memref<1x1x!tpu.dma_semaphore, #tpu.memory_space<semaphore_mem>>
    %15 = tpu.memref_squeeze %14 : memref<1x1x!tpu.dma_semaphore, #tpu.memory_space<semaphore_mem>> -> memref<!tpu.dma_semaphore, #tpu.memory_space<semaphore_mem>>
    tpu.enqueue_dma source(%arg8 : memref<128x512xf32, #tpu.memory_space<any>>) target(%13 : memref<128x512xf32, #tpu.memory_space<vmem>>) target_semaphore(%15 : memref<!tpu.dma_semaphore, #tpu.memory_space<semaphore_mem>>)
    %c0 = arith.constant 0 : index
    %c0_18 = arith.constant 0 : index
    %16 = vector.load %arg0[%c0, %c0_18] : memref<64x8xf32, #tpu.memory_space<vmem>>, vector<64x8xf32>
    %c0_19 = arith.constant 0 : index
    %c0_20 = arith.constant 0 : index
    %17 = vector.load %arg1[%c0_19, %c0_20] : memref<8x512xf32, #tpu.memory_space<vmem>>, vector<8x512xf32>
    %cst = arith.constant dense<0.000000e+00> : vector<64x512xf32>
    %18 = tpu.matmul %16, %17, %cst {dimension_numbers = #tpu.dot_dimension_numbers<[1], [0], [0], [1], [0, 0, 1, 1], [], []>} : vector<64x8xf32>, vector<8x512xf32>, vector<64x512xf32> -> vector<64x512xf32>
    %c0_21 = arith.constant 0 : index
    %c0_22 = arith.constant 0 : index
    %19 = vector.load %arg3[%c0_21, %c0_22] : memref<1x512xf32, #tpu.memory_space<vmem>>, vector<1x512xf32>
    %20 = vector.broadcast %19 : vector<1x512xf32> to vector<64x512xf32>
    %21 = arith.addf %18, %20 : vector<64x512xf32>
    %c0_23 = arith.constant 0 : index
    %c0_24 = arith.constant 0 : index
    %22 = vector.load %arg13[%c0_23, %c0_24] : memref<64x512xf32, #tpu.memory_space<vmem>>, vector<64x512xf32>
    tpu.vector_store %arg13[%c0_23, %c0_24], %21 {strides = array<i32>} : memref<64x512xf32, #tpu.memory_space<vmem>>, vector<64x512xf32>,
    %c0_25 = arith.constant 0 : index
    %c0_26 = arith.constant 0 : index
    %23 = vector.load %arg2[%c0_25, %c0_26] : memref<128x512xf32, #tpu.memory_space<vmem>>, vector<128x512xf32>
    %cst_27 = arith.constant 0.000000e+00 : f32
    %24 = vector.broadcast %cst_27 : f32 to vector<8x128xf32>
    %cst_28 = arith.constant 0.000000e+00 : f32
    %25 = vector.broadcast %cst_28 : f32 to vector<8x128xf32>
    %c0_29 = arith.constant 0 : index
    %c0_30 = arith.constant 0 : index
    %26 = vector.load %arg13[%c0_29, %c0_30] : memref<64x512xf32, #tpu.memory_space<vmem>>, vector<8x512xf32>
    %cst_31 = arith.constant dense<0.000000e+00> : vector<8x512xf32>
    %27 = tpu.matmul %24, %23, %cst_31 {dimension_numbers = #tpu.dot_dimension_numbers<[1], [0], [0], [1], [0, 0, 1, 1], [], []>} : vector<8x128xf32>, vector<128x512xf32>, vector<8x512xf32> -> vector<8x512xf32>
    %28 = arith.addf %26, %27 : vector<8x512xf32>
    %29 = vector.extract_strided_slice %28 {offsets = [0, 0], sizes = [8, 384], strides = [1, 1]} : vector<8x512xf32> to vector<8x384xf32>
    %30 = arith.negf %29 : vector<8x384xf32>
    %31 = math.exp %30 : vector<8x384xf32>
    %cst_32 = arith.constant 1.000000e+00 : f32
    %32 = vector.broadcast %cst_32 : f32 to vector<8x384xf32>
    %33 = arith.addf %32, %31 : vector<8x384xf32>
    %34 = arith.divf %32, %33 : vector<8x384xf32>
    %35 = vector.extract_strided_slice %28 {offsets = [0, 384], sizes = [8, 128], strides = [1, 1]} : vector<8x512xf32> to vector<8x128xf32>
    %36 = math.tanh %35 : vector<8x128xf32>
    %37 = vector.extract_strided_slice %34 {offsets = [0, 0], sizes = [8, 128], strides = [1, 1]} : vector<8x384xf32> to vector<8x128xf32>
    %38 = vector.extract_strided_slice %34 {offsets = [0, 128], sizes = [8, 128], strides = [1, 1]} : vector<8x384xf32> to vector<8x128xf32>
    %39 = vector.extract_strided_slice %34 {offsets = [0, 256], sizes = [8, 128], strides = [1, 1]} : vector<8x384xf32> to vector<8x128xf32>
    %40 = arith.mulf %38, %25 : vector<8x128xf32>
    %41 = arith.mulf %37, %36 : vector<8x128xf32>
    %42 = arith.addf %40, %41 : vector<8x128xf32>
    %43 = math.tanh %42 : vector<8x128xf32>
    %44 = arith.mulf %39, %43 : vector<8x128xf32>
    %c0_33 = arith.constant 0 : index
    %c0_34 = arith.constant 0 : index
    %45 = vector.load %arg14[%c0_33, %c0_34] : memref<64x128xf32, #tpu.memory_space<vmem>>, vector<8x128xf32>
    tpu.vector_store %arg14[%c0_33, %c0_34], %44 {strides = array<i32>} : memref<64x128xf32, #tpu.memory_space<vmem>>, vector<8x128xf32>,
    %c8 = arith.constant 8 : index
    %c0_35 = arith.constant 0 : index
    %46 = vector.load %arg13[%c8, %c0_35] : memref<64x512xf32, #tpu.memory_space<vmem>>, vector<8x512xf32>
    %cst_36 = arith.constant dense<0.000000e+00> : vector<8x512xf32>
    %47 = tpu.matmul %44, %23, %cst_36 {dimension_numbers = #tpu.dot_dimension_numbers<[1], [0], [0], [1], [0, 0, 1, 1], [], []>} : vector<8x128xf32>, vector<128x512xf32>, vector<8x512xf32> -> vector<8x512xf32>
    %48 = arith.addf %46, %47 : vector<8x512xf32>
    %49 = vector.extract_strided_slice %48 {offsets = [0, 0], sizes = [8, 384], strides = [1, 1]} : vector<8x512xf32> to vector<8x384xf32>
    %50 = arith.negf %49 : vector<8x384xf32>
    %51 = math.exp %50 : vector<8x384xf32>
    %cst_37 = arith.constant 1.000000e+00 : f32
    %52 = vector.broadcast %cst_37 : f32 to vector<8x384xf32>
    %53 = arith.addf %52, %51 : vector<8x384xf32>
    %54 = arith.divf %52, %53 : vector<8x384xf32>
    %55 = vector.extract_strided_slice %48 {offsets = [0, 384], sizes = [8, 128], strides = [1, 1]} : vector<8x512xf32> to vector<8x128xf32>
    %56 = math.tanh %55 : vector<8x128xf32>
    %57 = vector.extract_strided_slice %54 {offsets = [0, 0], sizes = [8, 128], strides = [1, 1]} : vector<8x384xf32> to vector<8x128xf32>
    %58 = vector.extract_strided_slice %54 {offsets = [0, 128], sizes = [8, 128], strides = [1, 1]} : vector<8x384xf32> to vector<8x128xf32>
    %59 = vector.extract_strided_slice %54 {offsets = [0, 256], sizes = [8, 128], strides = [1, 1]} : vector<8x384xf32> to vector<8x128xf32>
    %60 = arith.mulf %58, %42 : vector<8x128xf32>
    %61 = arith.mulf %57, %56 : vector<8x128xf32>
    %62 = arith.addf %60, %61 : vector<8x128xf32>
    %63 = math.tanh %62 : vector<8x128xf32>
    %64 = arith.mulf %59, %63 : vector<8x128xf32>
    %c8_38 = arith.constant 8 : index
    %c0_39 = arith.constant 0 : index
    %65 = vector.load %arg14[%c8_38, %c0_39] : memref<64x128xf32, #tpu.memory_space<vmem>>, vector<8x128xf32>
    tpu.vector_store %arg14[%c8_38, %c0_39], %64 {strides = array<i32>} : memref<64x128xf32, #tpu.memory_space<vmem>>, vector<8x128xf32>,
    %c16 = arith.constant 16 : index
    %c0_40 = arith.constant 0 : index
    %66 = vector.load %arg13[%c16, %c0_40] : memref<64x512xf32, #tpu.memory_space<vmem>>, vector<8x512xf32>
    %cst_41 = arith.constant dense<0.000000e+00> : vector<8x512xf32>
    %67 = tpu.matmul %64, %23, %cst_41 {dimension_numbers = #tpu.dot_dimension_numbers<[1], [0], [0], [1], [0, 0, 1, 1], [], []>} : vector<8x128xf32>, vector<128x512xf32>, vector<8x512xf32> -> vector<8x512xf32>
    %68 = arith.addf %66, %67 : vector<8x512xf32>
    %69 = vector.extract_strided_slice %68 {offsets = [0, 0], sizes = [8, 384], strides = [1, 1]} : vector<8x512xf32> to vector<8x384xf32>
    %70 = arith.negf %69 : vector<8x384xf32>
    %71 = math.exp %70 : vector<8x384xf32>
    %cst_42 = arith.constant 1.000000e+00 : f32
    %72 = vector.broadcast %cst_42 : f32 to vector<8x384xf32>
    %73 = arith.addf %72, %71 : vector<8x384xf32>
    %74 = arith.divf %72, %73 : vector<8x384xf32>
    %75 = vector.extract_strided_slice %68 {offsets = [0, 384], sizes = [8, 128], strides = [1, 1]} : vector<8x512xf32> to vector<8x128xf32>
    %76 = math.tanh %75 : vector<8x128xf32>
    %77 = vector.extract_strided_slice %74 {offsets = [0, 0], sizes = [8, 128], strides = [1, 1]} : vector<8x384xf32> to vector<8x128xf32>
    %78 = vector.extract_strided_slice %74 {offsets = [0, 128], sizes = [8, 128], strides = [1, 1]} : vector<8x384xf32> to vector<8x128xf32>
    %79 = vector.extract_strided_slice %74 {offsets = [0, 256], sizes = [8, 128], strides = [1, 1]} : vector<8x384xf32> to vector<8x128xf32>
    %80 = arith.mulf %78, %62 : vector<8x128xf32>
    %81 = arith.mulf %77, %76 : vector<8x128xf32>
    %82 = arith.addf %80, %81 : vector<8x128xf32>
    %83 = math.tanh %82 : vector<8x128xf32>
    %84 = arith.mulf %79, %83 : vector<8x128xf32>
    %c16_43 = arith.constant 16 : index
    %c0_44 = arith.constant 0 : index
    %85 = vector.load %arg14[%c16_43, %c0_44] : memref<64x128xf32, #tpu.memory_space<vmem>>, vector<8x128xf32>
    tpu.vector_store %arg14[%c16_43, %c0_44], %84 {strides = array<i32>} : memref<64x128xf32, #tpu.memory_space<vmem>>, vector<8x128xf32>,
    %c24 = arith.constant 24 : index
    %c0_45 = arith.constant 0 : index
    %86 = vector.load %arg13[%c24, %c0_45] : memref<64x512xf32, #tpu.memory_space<vmem>>, vector<8x512xf32>
    %cst_46 = arith.constant dense<0.000000e+00> : vector<8x512xf32>
    %87 = tpu.matmul %84, %23, %cst_46 {dimension_numbers = #tpu.dot_dimension_numbers<[1], [0], [0], [1], [0, 0, 1, 1], [], []>} : vector<8x128xf32>, vector<128x512xf32>, vector<8x512xf32> -> vector<8x512xf32>
    %88 = arith.addf %86, %87 : vector<8x512xf32>
    %89 = vector.extract_strided_slice %88 {offsets = [0, 0], sizes = [8, 384], strides = [1, 1]} : vector<8x512xf32> to vector<8x384xf32>
    %90 = arith.negf %89 : vector<8x384xf32>
    %91 = math.exp %90 : vector<8x384xf32>
    %cst_47 = arith.constant 1.000000e+00 : f32
    %92 = vector.broadcast %cst_47 : f32 to vector<8x384xf32>
    %93 = arith.addf %92, %91 : vector<8x384xf32>
    %94 = arith.divf %92, %93 : vector<8x384xf32>
    %95 = vector.extract_strided_slice %88 {offsets = [0, 384], sizes = [8, 128], strides = [1, 1]} : vector<8x512xf32> to vector<8x128xf32>
    %96 = math.tanh %95 : vector<8x128xf32>
    %97 = vector.extract_strided_slice %94 {offsets = [0, 0], sizes = [8, 128], strides = [1, 1]} : vector<8x384xf32> to vector<8x128xf32>
    %98 = vector.extract_strided_slice %94 {offsets = [0, 128], sizes = [8, 128], strides = [1, 1]} : vector<8x384xf32> to vector<8x128xf32>
    %99 = vector.extract_strided_slice %94 {offsets = [0, 256], sizes = [8, 128], strides = [1, 1]} : vector<8x384xf32> to vector<8x128xf32>
    %100 = arith.mulf %98, %82 : vector<8x128xf32>
    %101 = arith.mulf %97, %96 : vector<8x128xf32>
    %102 = arith.addf %100, %101 : vector<8x128xf32>
    %103 = math.tanh %102 : vector<8x128xf32>
    %104 = arith.mulf %99, %103 : vector<8x128xf32>
    %c24_48 = arith.constant 24 : index
    %c0_49 = arith.constant 0 : index
    %105 = vector.load %arg14[%c24_48, %c0_49] : memref<64x128xf32, #tpu.memory_space<vmem>>, vector<8x128xf32>
    tpu.vector_store %arg14[%c24_48, %c0_49], %104 {strides = array<i32>} : memref<64x128xf32, #tpu.memory_space<vmem>>, vector<8x128xf32>,
    %c32 = arith.constant 32 : index
    %c0_50 = arith.constant 0 : index
    %106 = vector.load %arg13[%c32, %c0_50] : memref<64x512xf32, #tpu.memory_space<vmem>>, vector<8x512xf32>
    %cst_51 = arith.constant dense<0.000000e+00> : vector<8x512xf32>
    %107 = tpu.matmul %104, %23, %cst_51 {dimension_numbers = #tpu.dot_dimension_numbers<[1], [0], [0], [1], [0, 0, 1, 1], [], []>} : vector<8x128xf32>, vector<128x512xf32>, vector<8x512xf32> -> vector<8x512xf32>
    %108 = arith.addf %106, %107 : vector<8x512xf32>
    %109 = vector.extract_strided_slice %108 {offsets = [0, 0], sizes = [8, 384], strides = [1, 1]} : vector<8x512xf32> to vector<8x384xf32>
    %110 = arith.negf %109 : vector<8x384xf32>
    %111 = math.exp %110 : vector<8x384xf32>
    %cst_52 = arith.constant 1.000000e+00 : f32
    %112 = vector.broadcast %cst_52 : f32 to vector<8x384xf32>
    %113 = arith.addf %112, %111 : vector<8x384xf32>
    %114 = arith.divf %112, %113 : vector<8x384xf32>
    %115 = vector.extract_strided_slice %108 {offsets = [0, 384], sizes = [8, 128], strides = [1, 1]} : vector<8x512xf32> to vector<8x128xf32>
    %116 = math.tanh %115 : vector<8x128xf32>
    %117 = vector.extract_strided_slice %114 {offsets = [0, 0], sizes = [8, 128], strides = [1, 1]} : vector<8x384xf32> to vector<8x128xf32>
    %118 = vector.extract_strided_slice %114 {offsets = [0, 128], sizes = [8, 128], strides = [1, 1]} : vector<8x384xf32> to vector<8x128xf32>
    %119 = vector.extract_strided_slice %114 {offsets = [0, 256], sizes = [8, 128], strides = [1, 1]} : vector<8x384xf32> to vector<8x128xf32>
    %120 = arith.mulf %118, %102 : vector<8x128xf32>
    %121 = arith.mulf %117, %116 : vector<8x128xf32>
    %122 = arith.addf %120, %121 : vector<8x128xf32>
    %123 = math.tanh %122 : vector<8x128xf32>
    %124 = arith.mulf %119, %123 : vector<8x128xf32>
    %c32_53 = arith.constant 32 : index
    %c0_54 = arith.constant 0 : index
    %125 = vector.load %arg14[%c32_53, %c0_54] : memref<64x128xf32, #tpu.memory_space<vmem>>, vector<8x128xf32>
    tpu.vector_store %arg14[%c32_53, %c0_54], %124 {strides = array<i32>} : memref<64x128xf32, #tpu.memory_space<vmem>>, vector<8x128xf32>,
    %c40 = arith.constant 40 : index
    %c0_55 = arith.constant 0 : index
    %126 = vector.load %arg13[%c40, %c0_55] : memref<64x512xf32, #tpu.memory_space<vmem>>, vector<8x512xf32>
    %cst_56 = arith.constant dense<0.000000e+00> : vector<8x512xf32>
    %127 = tpu.matmul %124, %23, %cst_56 {dimension_numbers = #tpu.dot_dimension_numbers<[1], [0], [0], [1], [0, 0, 1, 1], [], []>} : vector<8x128xf32>, vector<128x512xf32>, vector<8x512xf32> -> vector<8x512xf32>
    %128 = arith.addf %126, %127 : vector<8x512xf32>
    %129 = vector.extract_strided_slice %128 {offsets = [0, 0], sizes = [8, 384], strides = [1, 1]} : vector<8x512xf32> to vector<8x384xf32>
    %130 = arith.negf %129 : vector<8x384xf32>
    %131 = math.exp %130 : vector<8x384xf32>
    %cst_57 = arith.constant 1.000000e+00 : f32
    %132 = vector.broadcast %cst_57 : f32 to vector<8x384xf32>
    %133 = arith.addf %132, %131 : vector<8x384xf32>
    %134 = arith.divf %132, %133 : vector<8x384xf32>
    %135 = vector.extract_strided_slice %128 {offsets = [0, 384], sizes = [8, 128], strides = [1, 1]} : vector<8x512xf32> to vector<8x128xf32>
    %136 = math.tanh %135 : vector<8x128xf32>
    %137 = vector.extract_strided_slice %134 {offsets = [0, 0], sizes = [8, 128], strides = [1, 1]} : vector<8x384xf32> to vector<8x128xf32>
    %138 = vector.extract_strided_slice %134 {offsets = [0, 128], sizes = [8, 128], strides = [1, 1]} : vector<8x384xf32> to vector<8x128xf32>
    %139 = vector.extract_strided_slice %134 {offsets = [0, 256], sizes = [8, 128], strides = [1, 1]} : vector<8x384xf32> to vector<8x128xf32>
    %140 = arith.mulf %138, %122 : vector<8x128xf32>
    %141 = arith.mulf %137, %136 : vector<8x128xf32>
    %142 = arith.addf %140, %141 : vector<8x128xf32>
    %143 = math.tanh %142 : vector<8x128xf32>
    %144 = arith.mulf %139, %143 : vector<8x128xf32>
    %c40_58 = arith.constant 40 : index
    %c0_59 = arith.constant 0 : index
    %145 = vector.load %arg14[%c40_58, %c0_59] : memref<64x128xf32, #tpu.memory_space<vmem>>, vector<8x128xf32>
    tpu.vector_store %arg14[%c40_58, %c0_59], %144 {strides = array<i32>} : memref<64x128xf32, #tpu.memory_space<vmem>>, vector<8x128xf32>,
    %c48 = arith.constant 48 : index
    %c0_60 = arith.constant 0 : index
    %146 = vector.load %arg13[%c48, %c0_60] : memref<64x512xf32, #tpu.memory_space<vmem>>, vector<8x512xf32>
    %cst_61 = arith.constant dense<0.000000e+00> : vector<8x512xf32>
    %147 = tpu.matmul %144, %23, %cst_61 {dimension_numbers = #tpu.dot_dimension_numbers<[1], [0], [0], [1], [0, 0, 1, 1], [], []>} : vector<8x128xf32>, vector<128x512xf32>, vector<8x512xf32> -> vector<8x512xf32>
    %148 = arith.addf %146, %147 : vector<8x512xf32>
    %149 = vector.extract_strided_slice %148 {offsets = [0, 0], sizes = [8, 384], strides = [1, 1]} : vector<8x512xf32> to vector<8x384xf32>
    %150 = arith.negf %149 : vector<8x384xf32>
    %151 = math.exp %150 : vector<8x384xf32>
    %cst_62 = arith.constant 1.000000e+00 : f32
    %152 = vector.broadcast %cst_62 : f32 to vector<8x384xf32>
    %153 = arith.addf %152, %151 : vector<8x384xf32>
    %154 = arith.divf %152, %153 : vector<8x384xf32>
    %155 = vector.extract_strided_slice %148 {offsets = [0, 384], sizes = [8, 128], strides = [1, 1]} : vector<8x512xf32> to vector<8x128xf32>
    %156 = math.tanh %155 : vector<8x128xf32>
    %157 = vector.extract_strided_slice %154 {offsets = [0, 0], sizes = [8, 128], strides = [1, 1]} : vector<8x384xf32> to vector<8x128xf32>
    %158 = vector.extract_strided_slice %154 {offsets = [0, 128], sizes = [8, 128], strides = [1, 1]} : vector<8x384xf32> to vector<8x128xf32>
    %159 = vector.extract_strided_slice %154 {offsets = [0, 256], sizes = [8, 128], strides = [1, 1]} : vector<8x384xf32> to vector<8x128xf32>
    %160 = arith.mulf %158, %142 : vector<8x128xf32>
    %161 = arith.mulf %157, %156 : vector<8x128xf32>
    %162 = arith.addf %160, %161 : vector<8x128xf32>
    %163 = math.tanh %162 : vector<8x128xf32>
    %164 = arith.mulf %159, %163 : vector<8x128xf32>
    %c48_63 = arith.constant 48 : index
    %c0_64 = arith.constant 0 : index
    %165 = vector.load %arg14[%c48_63, %c0_64] : memref<64x128xf32, #tpu.memory_space<vmem>>, vector<8x128xf32>
    tpu.vector_store %arg14[%c48_63, %c0_64], %164 {strides = array<i32>} : memref<64x128xf32, #tpu.memory_space<vmem>>, vector<8x128xf32>,
    %c56 = arith.constant 56 : index
    %c0_65 = arith.constant 0 : index
    %166 = vector.load %arg13[%c56, %c0_65] : memref<64x512xf32, #tpu.memory_space<vmem>>, vector<8x512xf32>
    %cst_66 = arith.constant dense<0.000000e+00> : vector<8x512xf32>
    %167 = tpu.matmul %164, %23, %cst_66 {dimension_numbers = #tpu.dot_dimension_numbers<[1], [0], [0], [1], [0, 0, 1, 1], [], []>} : vector<8x128xf32>, vector<128x512xf32>, vector<8x512xf32> -> vector<8x512xf32>
    %168 = arith.addf %166, %167 : vector<8x512xf32>
    %169 = vector.extract_strided_slice %168 {offsets = [0, 0], sizes = [8, 384], strides = [1, 1]} : vector<8x512xf32> to vector<8x384xf32>
    %170 = arith.negf %169 : vector<8x384xf32>
    %171 = math.exp %170 : vector<8x384xf32>
    %cst_67 = arith.constant 1.000000e+00 : f32
    %172 = vector.broadcast %cst_67 : f32 to vector<8x384xf32>
    %173 = arith.addf %172, %171 : vector<8x384xf32>
    %174 = arith.divf %172, %173 : vector<8x384xf32>
    %175 = vector.extract_strided_slice %168 {offsets = [0, 384], sizes = [8, 128], strides = [1, 1]} : vector<8x512xf32> to vector<8x128xf32>
    %176 = math.tanh %175 : vector<8x128xf32>
    %177 = vector.extract_strided_slice %174 {offsets = [0, 0], sizes = [8, 128], strides = [1, 1]} : vector<8x384xf32> to vector<8x128xf32>
    %178 = vector.extract_strided_slice %174 {offsets = [0, 128], sizes = [8, 128], strides = [1, 1]} : vector<8x384xf32> to vector<8x128xf32>
    %179 = vector.extract_strided_slice %174 {offsets = [0, 256], sizes = [8, 128], strides = [1, 1]} : vector<8x384xf32> to vector<8x128xf32>
    %180 = arith.mulf %178, %162 : vector<8x128xf32>
    %181 = arith.mulf %177, %176 : vector<8x128xf32>
    %182 = arith.addf %180, %181 : vector<8x128xf32>
    %183 = math.tanh %182 : vector<8x128xf32>
    %184 = arith.mulf %179, %183 : vector<8x128xf32>
    %c56_68 = arith.constant 56 : index
    %c0_69 = arith.constant 0 : index
    %185 = vector.load %arg14[%c56_68, %c0_69] : memref<64x128xf32, #tpu.memory_space<vmem>>, vector<8x128xf32>
    tpu.vector_store %arg14[%c56_68, %c0_69], %184 {strides = array<i32>} : memref<64x128xf32, #tpu.memory_space<vmem>>, vector<8x128xf32>,
    %c0_i32_70 = arith.constant 0 : i32
    %c0_i32_71 = arith.constant 0 : i32
    %c0_i32_72 = arith.constant 0 : i32
    %c0_i32_73 = arith.constant 0 : i32
    %c0_i32_74 = arith.constant 0 : i32
    %186 = tpu.memref_slice %arg15[%c0_i32_70, %c0_i32_73, %c0_i32_74] : memref<2x128x512xf32, #tpu.memory_space<vmem>> -> memref<1x128x512xf32, #tpu.memory_space<vmem>>
    %187 = tpu.memref_squeeze %186 : memref<1x128x512xf32, #tpu.memory_space<vmem>> -> memref<128x512xf32, #tpu.memory_space<vmem>>
    %188 = tpu.memref_slice %arg17[%c0_i32_71, %c0_i32_72] : memref<2x2x!tpu.dma_semaphore, #tpu.memory_space<semaphore_mem>> -> memref<1x1x!tpu.dma_semaphore, #tpu.memory_space<semaphore_mem>>
    %189 = tpu.memref_squeeze %188 : memref<1x1x!tpu.dma_semaphore, #tpu.memory_space<semaphore_mem>> -> memref<!tpu.dma_semaphore, #tpu.memory_space<semaphore_mem>>
    tpu.wait_dma2 semaphore(%189 : memref<!tpu.dma_semaphore, #tpu.memory_space<semaphore_mem>>) src(%arg4 : memref<128x512xf32, #tpu.memory_space<any>>) dst(%187 : memref<128x512xf32, #tpu.memory_space<vmem>>)
    %c0_i32_75 = arith.constant 0 : i32
    %c0_i32_76 = arith.constant 0 : i32
    %c1_i32_77 = arith.constant 1 : i32
    %c0_i32_78 = arith.constant 0 : i32
    %c0_i32_79 = arith.constant 0 : i32
    %190 = tpu.memref_slice %arg16[%c0_i32_75, %c0_i32_78, %c0_i32_79] : memref<2x128x512xf32, #tpu.memory_space<vmem>> -> memref<1x128x512xf32, #tpu.memory_space<vmem>>
    %191 = tpu.memref_squeeze %190 : memref<1x128x512xf32, #tpu.memory_space<vmem>> -> memref<128x512xf32, #tpu.memory_space<vmem>>
    %192 = tpu.memref_slice %arg17[%c0_i32_76, %c1_i32_77] : memref<2x2x!tpu.dma_semaphore, #tpu.memory_space<semaphore_mem>> -> memref<1x1x!tpu.dma_semaphore, #tpu.memory_space<semaphore_mem>>
    %193 = tpu.memref_squeeze %192 : memref<1x1x!tpu.dma_semaphore, #tpu.memory_space<semaphore_mem>> -> memref<!tpu.dma_semaphore, #tpu.memory_space<semaphore_mem>>
    tpu.wait_dma2 semaphore(%193 : memref<!tpu.dma_semaphore, #tpu.memory_space<semaphore_mem>>) src(%arg5 : memref<128x512xf32, #tpu.memory_space<any>>) dst(%191 : memref<128x512xf32, #tpu.memory_space<vmem>>)
    %c0_80 = arith.constant 0 : index
    %c0_81 = arith.constant 0 : index
    %194 = vector.load %arg14[%c0_80, %c0_81] : memref<64x128xf32, #tpu.memory_space<vmem>>, vector<64x128xf32>
    %c0_82 = arith.constant 0 : index
    %c0_83 = arith.constant 0 : index
    %c0_84 = arith.constant 0 : index
    %195 = vector.load %arg15[%c0_82, %c0_83, %c0_84] : memref<2x128x512xf32, #tpu.memory_space<vmem>>, vector<1x128x512xf32>
    %196 = vector.shape_cast %195 : vector<1x128x512xf32> to vector<128x512xf32>
    %cst_85 = arith.constant dense<0.000000e+00> : vector<64x512xf32>
    %197 = tpu.matmul %194, %196, %cst_85 {dimension_numbers = #tpu.dot_dimension_numbers<[1], [0], [0], [1], [0, 0, 1, 1], [], []>} : vector<64x128xf32>, vector<128x512xf32>, vector<64x512xf32> -> vector<64x512xf32>
    %c0_86 = arith.constant 0 : index
    %c0_87 = arith.constant 0 : index
    %198 = vector.load %arg6[%c0_86, %c0_87] : memref<1x512xf32, #tpu.memory_space<vmem>>, vector<1x512xf32>
    %199 = vector.broadcast %198 : vector<1x512xf32> to vector<64x512xf32>
    %200 = arith.addf %197, %199 : vector<64x512xf32>
    %c0_88 = arith.constant 0 : index
    %c0_89 = arith.constant 0 : index
    %201 = vector.load %arg13[%c0_88, %c0_89] : memref<64x512xf32, #tpu.memory_space<vmem>>, vector<64x512xf32>
    tpu.vector_store %arg13[%c0_88, %c0_89], %200 {strides = array<i32>} : memref<64x512xf32, #tpu.memory_space<vmem>>, vector<64x512xf32>,
    %c0_90 = arith.constant 0 : index
    %c0_91 = arith.constant 0 : index
    %c0_92 = arith.constant 0 : index
    %202 = vector.load %arg16[%c0_90, %c0_91, %c0_92] : memref<2x128x512xf32, #tpu.memory_space<vmem>>, vector<1x128x512xf32>
    %203 = vector.shape_cast %202 : vector<1x128x512xf32> to vector<128x512xf32>
    %cst_93 = arith.constant 0.000000e+00 : f32
    %204 = vector.broadcast %cst_93 : f32 to vector<8x128xf32>
    %cst_94 = arith.constant 0.000000e+00 : f32
    %205 = vector.broadcast %cst_94 : f32 to vector<8x128xf32>
    %c0_95 = arith.constant 0 : index
    %c0_96 = arith.constant 0 : index
    %206 = vector.load %arg13[%c0_95, %c0_96] : memref<64x512xf32, #tpu.memory_space<vmem>>, vector<8x512xf32>
    %cst_97 = arith.constant dense<0.000000e+00> : vector<8x512xf32>
    %207 = tpu.matmul %204, %203, %cst_97 {dimension_numbers = #tpu.dot_dimension_numbers<[1], [0], [0], [1], [0, 0, 1, 1], [], []>} : vector<8x128xf32>, vector<128x512xf32>, vector<8x512xf32> -> vector<8x512xf32>
    %208 = arith.addf %206, %207 : vector<8x512xf32>
    %209 = vector.extract_strided_slice %208 {offsets = [0, 0], sizes = [8, 384], strides = [1, 1]} : vector<8x512xf32> to vector<8x384xf32>
    %210 = arith.negf %209 : vector<8x384xf32>
    %211 = math.exp %210 : vector<8x384xf32>
    %cst_98 = arith.constant 1.000000e+00 : f32
    %212 = vector.broadcast %cst_98 : f32 to vector<8x384xf32>
    %213 = arith.addf %212, %211 : vector<8x384xf32>
    %214 = arith.divf %212, %213 : vector<8x384xf32>
    %215 = vector.extract_strided_slice %208 {offsets = [0, 384], sizes = [8, 128], strides = [1, 1]} : vector<8x512xf32> to vector<8x128xf32>
    %216 = math.tanh %215 : vector<8x128xf32>
    %217 = vector.extract_strided_slice %214 {offsets = [0, 0], sizes = [8, 128], strides = [1, 1]} : vector<8x384xf32> to vector<8x128xf32>
    %218 = vector.extract_strided_slice %214 {offsets = [0, 128], sizes = [8, 128], strides = [1, 1]} : vector<8x384xf32> to vector<8x128xf32>
    %219 = vector.extract_strided_slice %214 {offsets = [0, 256], sizes = [8, 128], strides = [1, 1]} : vector<8x384xf32> to vector<8x128xf32>
    %220 = arith.mulf %218, %205 : vector<8x128xf32>
    %221 = arith.mulf %217, %216 : vector<8x128xf32>
    %222 = arith.addf %220, %221 : vector<8x128xf32>
    %223 = math.tanh %222 : vector<8x128xf32>
    %224 = arith.mulf %219, %223 : vector<8x128xf32>
    %c0_99 = arith.constant 0 : index
    %c0_100 = arith.constant 0 : index
    %225 = vector.load %arg14[%c0_99, %c0_100] : memref<64x128xf32, #tpu.memory_space<vmem>>, vector<8x128xf32>
    tpu.vector_store %arg14[%c0_99, %c0_100], %224 {strides = array<i32>} : memref<64x128xf32, #tpu.memory_space<vmem>>, vector<8x128xf32>,
    %c8_101 = arith.constant 8 : index
    %c0_102 = arith.constant 0 : index
    %226 = vector.load %arg13[%c8_101, %c0_102] : memref<64x512xf32, #tpu.memory_space<vmem>>, vector<8x512xf32>
    %cst_103 = arith.constant dense<0.000000e+00> : vector<8x512xf32>
    %227 = tpu.matmul %224, %203, %cst_103 {dimension_numbers = #tpu.dot_dimension_numbers<[1], [0], [0], [1], [0, 0, 1, 1], [], []>} : vector<8x128xf32>, vector<128x512xf32>, vector<8x512xf32> -> vector<8x512xf32>
    %228 = arith.addf %226, %227 : vector<8x512xf32>
    %229 = vector.extract_strided_slice %228 {offsets = [0, 0], sizes = [8, 384], strides = [1, 1]} : vector<8x512xf32> to vector<8x384xf32>
    %230 = arith.negf %229 : vector<8x384xf32>
    %231 = math.exp %230 : vector<8x384xf32>
    %cst_104 = arith.constant 1.000000e+00 : f32
    %232 = vector.broadcast %cst_104 : f32 to vector<8x384xf32>
    %233 = arith.addf %232, %231 : vector<8x384xf32>
    %234 = arith.divf %232, %233 : vector<8x384xf32>
    %235 = vector.extract_strided_slice %228 {offsets = [0, 384], sizes = [8, 128], strides = [1, 1]} : vector<8x512xf32> to vector<8x128xf32>
    %236 = math.tanh %235 : vector<8x128xf32>
    %237 = vector.extract_strided_slice %234 {offsets = [0, 0], sizes = [8, 128], strides = [1, 1]} : vector<8x384xf32> to vector<8x128xf32>
    %238 = vector.extract_strided_slice %234 {offsets = [0, 128], sizes = [8, 128], strides = [1, 1]} : vector<8x384xf32> to vector<8x128xf32>
    %239 = vector.extract_strided_slice %234 {offsets = [0, 256], sizes = [8, 128], strides = [1, 1]} : vector<8x384xf32> to vector<8x128xf32>
    %240 = arith.mulf %238, %222 : vector<8x128xf32>
    %241 = arith.mulf %237, %236 : vector<8x128xf32>
    %242 = arith.addf %240, %241 : vector<8x128xf32>
    %243 = math.tanh %242 : vector<8x128xf32>
    %244 = arith.mulf %239, %243 : vector<8x128xf32>
    %c8_105 = arith.constant 8 : index
    %c0_106 = arith.constant 0 : index
    %245 = vector.load %arg14[%c8_105, %c0_106] : memref<64x128xf32, #tpu.memory_space<vmem>>, vector<8x128xf32>
    tpu.vector_store %arg14[%c8_105, %c0_106], %244 {strides = array<i32>} : memref<64x128xf32, #tpu.memory_space<vmem>>, vector<8x128xf32>,
    %c16_107 = arith.constant 16 : index
    %c0_108 = arith.constant 0 : index
    %246 = vector.load %arg13[%c16_107, %c0_108] : memref<64x512xf32, #tpu.memory_space<vmem>>, vector<8x512xf32>
    %cst_109 = arith.constant dense<0.000000e+00> : vector<8x512xf32>
    %247 = tpu.matmul %244, %203, %cst_109 {dimension_numbers = #tpu.dot_dimension_numbers<[1], [0], [0], [1], [0, 0, 1, 1], [], []>} : vector<8x128xf32>, vector<128x512xf32>, vector<8x512xf32> -> vector<8x512xf32>
    %248 = arith.addf %246, %247 : vector<8x512xf32>
    %249 = vector.extract_strided_slice %248 {offsets = [0, 0], sizes = [8, 384], strides = [1, 1]} : vector<8x512xf32> to vector<8x384xf32>
    %250 = arith.negf %249 : vector<8x384xf32>
    %251 = math.exp %250 : vector<8x384xf32>
    %cst_110 = arith.constant 1.000000e+00 : f32
    %252 = vector.broadcast %cst_110 : f32 to vector<8x384xf32>
    %253 = arith.addf %252, %251 : vector<8x384xf32>
    %254 = arith.divf %252, %253 : vector<8x384xf32>
    %255 = vector.extract_strided_slice %248 {offsets = [0, 384], sizes = [8, 128], strides = [1, 1]} : vector<8x512xf32> to vector<8x128xf32>
    %256 = math.tanh %255 : vector<8x128xf32>
    %257 = vector.extract_strided_slice %254 {offsets = [0, 0], sizes = [8, 128], strides = [1, 1]} : vector<8x384xf32> to vector<8x128xf32>
    %258 = vector.extract_strided_slice %254 {offsets = [0, 128], sizes = [8, 128], strides = [1, 1]} : vector<8x384xf32> to vector<8x128xf32>
    %259 = vector.extract_strided_slice %254 {offsets = [0, 256], sizes = [8, 128], strides = [1, 1]} : vector<8x384xf32> to vector<8x128xf32>
    %260 = arith.mulf %258, %242 : vector<8x128xf32>
    %261 = arith.mulf %257, %256 : vector<8x128xf32>
    %262 = arith.addf %260, %261 : vector<8x128xf32>
    %263 = math.tanh %262 : vector<8x128xf32>
    %264 = arith.mulf %259, %263 : vector<8x128xf32>
    %c16_111 = arith.constant 16 : index
    %c0_112 = arith.constant 0 : index
    %265 = vector.load %arg14[%c16_111, %c0_112] : memref<64x128xf32, #tpu.memory_space<vmem>>, vector<8x128xf32>
    tpu.vector_store %arg14[%c16_111, %c0_112], %264 {strides = array<i32>} : memref<64x128xf32, #tpu.memory_space<vmem>>, vector<8x128xf32>,
    %c24_113 = arith.constant 24 : index
    %c0_114 = arith.constant 0 : index
    %266 = vector.load %arg13[%c24_113, %c0_114] : memref<64x512xf32, #tpu.memory_space<vmem>>, vector<8x512xf32>
    %cst_115 = arith.constant dense<0.000000e+00> : vector<8x512xf32>
    %267 = tpu.matmul %264, %203, %cst_115 {dimension_numbers = #tpu.dot_dimension_numbers<[1], [0], [0], [1], [0, 0, 1, 1], [], []>} : vector<8x128xf32>, vector<128x512xf32>, vector<8x512xf32> -> vector<8x512xf32>
    %268 = arith.addf %266, %267 : vector<8x512xf32>
    %269 = vector.extract_strided_slice %268 {offsets = [0, 0], sizes = [8, 384], strides = [1, 1]} : vector<8x512xf32> to vector<8x384xf32>
    %270 = arith.negf %269 : vector<8x384xf32>
    %271 = math.exp %270 : vector<8x384xf32>
    %cst_116 = arith.constant 1.000000e+00 : f32
    %272 = vector.broadcast %cst_116 : f32 to vector<8x384xf32>
    %273 = arith.addf %272, %271 : vector<8x384xf32>
    %274 = arith.divf %272, %273 : vector<8x384xf32>
    %275 = vector.extract_strided_slice %268 {offsets = [0, 384], sizes = [8, 128], strides = [1, 1]} : vector<8x512xf32> to vector<8x128xf32>
    %276 = math.tanh %275 : vector<8x128xf32>
    %277 = vector.extract_strided_slice %274 {offsets = [0, 0], sizes = [8, 128], strides = [1, 1]} : vector<8x384xf32> to vector<8x128xf32>
    %278 = vector.extract_strided_slice %274 {offsets = [0, 128], sizes = [8, 128], strides = [1, 1]} : vector<8x384xf32> to vector<8x128xf32>
    %279 = vector.extract_strided_slice %274 {offsets = [0, 256], sizes = [8, 128], strides = [1, 1]} : vector<8x384xf32> to vector<8x128xf32>
    %280 = arith.mulf %278, %262 : vector<8x128xf32>
    %281 = arith.mulf %277, %276 : vector<8x128xf32>
    %282 = arith.addf %280, %281 : vector<8x128xf32>
    %283 = math.tanh %282 : vector<8x128xf32>
    %284 = arith.mulf %279, %283 : vector<8x128xf32>
    %c24_117 = arith.constant 24 : index
    %c0_118 = arith.constant 0 : index
    %285 = vector.load %arg14[%c24_117, %c0_118] : memref<64x128xf32, #tpu.memory_space<vmem>>, vector<8x128xf32>
    tpu.vector_store %arg14[%c24_117, %c0_118], %284 {strides = array<i32>} : memref<64x128xf32, #tpu.memory_space<vmem>>, vector<8x128xf32>,
    %c32_119 = arith.constant 32 : index
    %c0_120 = arith.constant 0 : index
    %286 = vector.load %arg13[%c32_119, %c0_120] : memref<64x512xf32, #tpu.memory_space<vmem>>, vector<8x512xf32>
    %cst_121 = arith.constant dense<0.000000e+00> : vector<8x512xf32>
    %287 = tpu.matmul %284, %203, %cst_121 {dimension_numbers = #tpu.dot_dimension_numbers<[1], [0], [0], [1], [0, 0, 1, 1], [], []>} : vector<8x128xf32>, vector<128x512xf32>, vector<8x512xf32> -> vector<8x512xf32>
    %288 = arith.addf %286, %287 : vector<8x512xf32>
    %289 = vector.extract_strided_slice %288 {offsets = [0, 0], sizes = [8, 384], strides = [1, 1]} : vector<8x512xf32> to vector<8x384xf32>
    %290 = arith.negf %289 : vector<8x384xf32>
    %291 = math.exp %290 : vector<8x384xf32>
    %cst_122 = arith.constant 1.000000e+00 : f32
    %292 = vector.broadcast %cst_122 : f32 to vector<8x384xf32>
    %293 = arith.addf %292, %291 : vector<8x384xf32>
    %294 = arith.divf %292, %293 : vector<8x384xf32>
    %295 = vector.extract_strided_slice %288 {offsets = [0, 384], sizes = [8, 128], strides = [1, 1]} : vector<8x512xf32> to vector<8x128xf32>
    %296 = math.tanh %295 : vector<8x128xf32>
    %297 = vector.extract_strided_slice %294 {offsets = [0, 0], sizes = [8, 128], strides = [1, 1]} : vector<8x384xf32> to vector<8x128xf32>
    %298 = vector.extract_strided_slice %294 {offsets = [0, 128], sizes = [8, 128], strides = [1, 1]} : vector<8x384xf32> to vector<8x128xf32>
    %299 = vector.extract_strided_slice %294 {offsets = [0, 256], sizes = [8, 128], strides = [1, 1]} : vector<8x384xf32> to vector<8x128xf32>
    %300 = arith.mulf %298, %282 : vector<8x128xf32>
    %301 = arith.mulf %297, %296 : vector<8x128xf32>
    %302 = arith.addf %300, %301 : vector<8x128xf32>
    %303 = math.tanh %302 : vector<8x128xf32>
    %304 = arith.mulf %299, %303 : vector<8x128xf32>
    %c32_123 = arith.constant 32 : index
    %c0_124 = arith.constant 0 : index
    %305 = vector.load %arg14[%c32_123, %c0_124] : memref<64x128xf32, #tpu.memory_space<vmem>>, vector<8x128xf32>
    tpu.vector_store %arg14[%c32_123, %c0_124], %304 {strides = array<i32>} : memref<64x128xf32, #tpu.memory_space<vmem>>, vector<8x128xf32>,
    %c40_125 = arith.constant 40 : index
    %c0_126 = arith.constant 0 : index
    %306 = vector.load %arg13[%c40_125, %c0_126] : memref<64x512xf32, #tpu.memory_space<vmem>>, vector<8x512xf32>
    %cst_127 = arith.constant dense<0.000000e+00> : vector<8x512xf32>
    %307 = tpu.matmul %304, %203, %cst_127 {dimension_numbers = #tpu.dot_dimension_numbers<[1], [0], [0], [1], [0, 0, 1, 1], [], []>} : vector<8x128xf32>, vector<128x512xf32>, vector<8x512xf32> -> vector<8x512xf32>
    %308 = arith.addf %306, %307 : vector<8x512xf32>
    %309 = vector.extract_strided_slice %308 {offsets = [0, 0], sizes = [8, 384], strides = [1, 1]} : vector<8x512xf32> to vector<8x384xf32>
    %310 = arith.negf %309 : vector<8x384xf32>
    %311 = math.exp %310 : vector<8x384xf32>
    %cst_128 = arith.constant 1.000000e+00 : f32
    %312 = vector.broadcast %cst_128 : f32 to vector<8x384xf32>
    %313 = arith.addf %312, %311 : vector<8x384xf32>
    %314 = arith.divf %312, %313 : vector<8x384xf32>
    %315 = vector.extract_strided_slice %308 {offsets = [0, 384], sizes = [8, 128], strides = [1, 1]} : vector<8x512xf32> to vector<8x128xf32>
    %316 = math.tanh %315 : vector<8x128xf32>
    %317 = vector.extract_strided_slice %314 {offsets = [0, 0], sizes = [8, 128], strides = [1, 1]} : vector<8x384xf32> to vector<8x128xf32>
    %318 = vector.extract_strided_slice %314 {offsets = [0, 128], sizes = [8, 128], strides = [1, 1]} : vector<8x384xf32> to vector<8x128xf32>
    %319 = vector.extract_strided_slice %314 {offsets = [0, 256], sizes = [8, 128], strides = [1, 1]} : vector<8x384xf32> to vector<8x128xf32>
    %320 = arith.mulf %318, %302 : vector<8x128xf32>
    %321 = arith.mulf %317, %316 : vector<8x128xf32>
    %322 = arith.addf %320, %321 : vector<8x128xf32>
    %323 = math.tanh %322 : vector<8x128xf32>
    %324 = arith.mulf %319, %323 : vector<8x128xf32>
    %c40_129 = arith.constant 40 : index
    %c0_130 = arith.constant 0 : index
    %325 = vector.load %arg14[%c40_129, %c0_130] : memref<64x128xf32, #tpu.memory_space<vmem>>, vector<8x128xf32>
    tpu.vector_store %arg14[%c40_129, %c0_130], %324 {strides = array<i32>} : memref<64x128xf32, #tpu.memory_space<vmem>>, vector<8x128xf32>,
    %c48_131 = arith.constant 48 : index
    %c0_132 = arith.constant 0 : index
    %326 = vector.load %arg13[%c48_131, %c0_132] : memref<64x512xf32, #tpu.memory_space<vmem>>, vector<8x512xf32>
    %cst_133 = arith.constant dense<0.000000e+00> : vector<8x512xf32>
    %327 = tpu.matmul %324, %203, %cst_133 {dimension_numbers = #tpu.dot_dimension_numbers<[1], [0], [0], [1], [0, 0, 1, 1], [], []>} : vector<8x128xf32>, vector<128x512xf32>, vector<8x512xf32> -> vector<8x512xf32>
    %328 = arith.addf %326, %327 : vector<8x512xf32>
    %329 = vector.extract_strided_slice %328 {offsets = [0, 0], sizes = [8, 384], strides = [1, 1]} : vector<8x512xf32> to vector<8x384xf32>
    %330 = arith.negf %329 : vector<8x384xf32>
    %331 = math.exp %330 : vector<8x384xf32>
    %cst_134 = arith.constant 1.000000e+00 : f32
    %332 = vector.broadcast %cst_134 : f32 to vector<8x384xf32>
    %333 = arith.addf %332, %331 : vector<8x384xf32>
    %334 = arith.divf %332, %333 : vector<8x384xf32>
    %335 = vector.extract_strided_slice %328 {offsets = [0, 384], sizes = [8, 128], strides = [1, 1]} : vector<8x512xf32> to vector<8x128xf32>
    %336 = math.tanh %335 : vector<8x128xf32>
    %337 = vector.extract_strided_slice %334 {offsets = [0, 0], sizes = [8, 128], strides = [1, 1]} : vector<8x384xf32> to vector<8x128xf32>
    %338 = vector.extract_strided_slice %334 {offsets = [0, 128], sizes = [8, 128], strides = [1, 1]} : vector<8x384xf32> to vector<8x128xf32>
    %339 = vector.extract_strided_slice %334 {offsets = [0, 256], sizes = [8, 128], strides = [1, 1]} : vector<8x384xf32> to vector<8x128xf32>
    %340 = arith.mulf %338, %322 : vector<8x128xf32>
    %341 = arith.mulf %337, %336 : vector<8x128xf32>
    %342 = arith.addf %340, %341 : vector<8x128xf32>
    %343 = math.tanh %342 : vector<8x128xf32>
    %344 = arith.mulf %339, %343 : vector<8x128xf32>
    %c48_135 = arith.constant 48 : index
    %c0_136 = arith.constant 0 : index
    %345 = vector.load %arg14[%c48_135, %c0_136] : memref<64x128xf32, #tpu.memory_space<vmem>>, vector<8x128xf32>
    tpu.vector_store %arg14[%c48_135, %c0_136], %344 {strides = array<i32>} : memref<64x128xf32, #tpu.memory_space<vmem>>, vector<8x128xf32>,
    %c56_137 = arith.constant 56 : index
    %c0_138 = arith.constant 0 : index
    %346 = vector.load %arg13[%c56_137, %c0_138] : memref<64x512xf32, #tpu.memory_space<vmem>>, vector<8x512xf32>
    %cst_139 = arith.constant dense<0.000000e+00> : vector<8x512xf32>
    %347 = tpu.matmul %344, %203, %cst_139 {dimension_numbers = #tpu.dot_dimension_numbers<[1], [0], [0], [1], [0, 0, 1, 1], [], []>} : vector<8x128xf32>, vector<128x512xf32>, vector<8x512xf32> -> vector<8x512xf32>
    %348 = arith.addf %346, %347 : vector<8x512xf32>
    %349 = vector.extract_strided_slice %348 {offsets = [0, 0], sizes = [8, 384], strides = [1, 1]} : vector<8x512xf32> to vector<8x384xf32>
    %350 = arith.negf %349 : vector<8x384xf32>
    %351 = math.exp %350 : vector<8x384xf32>
    %cst_140 = arith.constant 1.000000e+00 : f32
    %352 = vector.broadcast %cst_140 : f32 to vector<8x384xf32>
    %353 = arith.addf %352, %351 : vector<8x384xf32>
    %354 = arith.divf %352, %353 : vector<8x384xf32>
    %355 = vector.extract_strided_slice %348 {offsets = [0, 384], sizes = [8, 128], strides = [1, 1]} : vector<8x512xf32> to vector<8x128xf32>
    %356 = math.tanh %355 : vector<8x128xf32>
    %357 = vector.extract_strided_slice %354 {offsets = [0, 0], sizes = [8, 128], strides = [1, 1]} : vector<8x384xf32> to vector<8x128xf32>
    %358 = vector.extract_strided_slice %354 {offsets = [0, 128], sizes = [8, 128], strides = [1, 1]} : vector<8x384xf32> to vector<8x128xf32>
    %359 = vector.extract_strided_slice %354 {offsets = [0, 256], sizes = [8, 128], strides = [1, 1]} : vector<8x384xf32> to vector<8x128xf32>
    %360 = arith.mulf %358, %342 : vector<8x128xf32>
    %361 = arith.mulf %357, %356 : vector<8x128xf32>
    %362 = arith.addf %360, %361 : vector<8x128xf32>
    %363 = math.tanh %362 : vector<8x128xf32>
    %364 = arith.mulf %359, %363 : vector<8x128xf32>
    %c56_141 = arith.constant 56 : index
    %c0_142 = arith.constant 0 : index
    %365 = vector.load %arg14[%c56_141, %c0_142] : memref<64x128xf32, #tpu.memory_space<vmem>>, vector<8x128xf32>
    tpu.vector_store %arg14[%c56_141, %c0_142], %364 {strides = array<i32>} : memref<64x128xf32, #tpu.memory_space<vmem>>, vector<8x128xf32>,
    %c1_i32_143 = arith.constant 1 : i32
    %c1_i32_144 = arith.constant 1 : i32
    %c0_i32_145 = arith.constant 0 : i32
    %c0_i32_146 = arith.constant 0 : i32
    %c0_i32_147 = arith.constant 0 : i32
    %366 = tpu.memref_slice %arg15[%c1_i32_143, %c0_i32_146, %c0_i32_147] : memref<2x128x512xf32, #tpu.memory_space<vmem>> -> memref<1x128x512xf32, #tpu.memory_space<vmem>>
    %367 = tpu.memref_squeeze %366 : memref<1x128x512xf32, #tpu.memory_space<vmem>> -> memref<128x512xf32, #tpu.memory_space<vmem>>
    %368 = tpu.memref_slice %arg17[%c1_i32_144, %c0_i32_145] : memref<2x2x!tpu.dma_semaphore, #tpu.memory_space<semaphore_mem>> -> memref<1x1x!tpu.dma_semaphore, #tpu.memory_space<semaphore_mem>>
    %369 = tpu.memref_squeeze %368 : memref<1x1x!tpu.dma_semaphore, #tpu.memory_space<semaphore_mem>> -> memref<!tpu.dma_semaphore, #tpu.memory_space<semaphore_mem>>
    tpu.wait_dma2 semaphore(%369 : memref<!tpu.dma_semaphore, #tpu.memory_space<semaphore_mem>>) src(%arg7 : memref<128x512xf32, #tpu.memory_space<any>>) dst(%367 : memref<128x512xf32, #tpu.memory_space<vmem>>)
    %c1_i32_148 = arith.constant 1 : i32
    %c1_i32_149 = arith.constant 1 : i32
    %c1_i32_150 = arith.constant 1 : i32
    %c0_i32_151 = arith.constant 0 : i32
    %c0_i32_152 = arith.constant 0 : i32
    %370 = tpu.memref_slice %arg16[%c1_i32_148, %c0_i32_151, %c0_i32_152] : memref<2x128x512xf32, #tpu.memory_space<vmem>> -> memref<1x128x512xf32, #tpu.memory_space<vmem>>
    %371 = tpu.memref_squeeze %370 : memref<1x128x512xf32, #tpu.memory_space<vmem>> -> memref<128x512xf32, #tpu.memory_space<vmem>>
    %372 = tpu.memref_slice %arg17[%c1_i32_149, %c1_i32_150] : memref<2x2x!tpu.dma_semaphore, #tpu.memory_space<semaphore_mem>> -> memref<1x1x!tpu.dma_semaphore, #tpu.memory_space<semaphore_mem>>
    %373 = tpu.memref_squeeze %372 : memref<1x1x!tpu.dma_semaphore, #tpu.memory_space<semaphore_mem>> -> memref<!tpu.dma_semaphore, #tpu.memory_space<semaphore_mem>>
    tpu.wait_dma2 semaphore(%373 : memref<!tpu.dma_semaphore, #tpu.memory_space<semaphore_mem>>) src(%arg8 : memref<128x512xf32, #tpu.memory_space<any>>) dst(%371 : memref<128x512xf32, #tpu.memory_space<vmem>>)
    %c0_153 = arith.constant 0 : index
    %c0_154 = arith.constant 0 : index
    %374 = vector.load %arg14[%c0_153, %c0_154] : memref<64x128xf32, #tpu.memory_space<vmem>>, vector<64x128xf32>
    %c1 = arith.constant 1 : index
    %c0_155 = arith.constant 0 : index
    %c0_156 = arith.constant 0 : index
    %375 = vector.load %arg15[%c1, %c0_155, %c0_156] : memref<2x128x512xf32, #tpu.memory_space<vmem>>, vector<1x128x512xf32>
    %376 = vector.shape_cast %375 : vector<1x128x512xf32> to vector<128x512xf32>
    %cst_157 = arith.constant dense<0.000000e+00> : vector<64x512xf32>
    %377 = tpu.matmul %374, %376, %cst_157 {dimension_numbers = #tpu.dot_dimension_numbers<[1], [0], [0], [1], [0, 0, 1, 1], [], []>} : vector<64x128xf32>, vector<128x512xf32>, vector<64x512xf32> -> vector<64x512xf32>
    %c0_158 = arith.constant 0 : index
    %c0_159 = arith.constant 0 : index
    %378 = vector.load %arg9[%c0_158, %c0_159] : memref<1x512xf32, #tpu.memory_space<vmem>>, vector<1x512xf32>
    %379 = vector.broadcast %378 : vector<1x512xf32> to vector<64x512xf32>
    %380 = arith.addf %377, %379 : vector<64x512xf32>
    %c0_160 = arith.constant 0 : index
    %c0_161 = arith.constant 0 : index
    %381 = vector.load %arg13[%c0_160, %c0_161] : memref<64x512xf32, #tpu.memory_space<vmem>>, vector<64x512xf32>
    tpu.vector_store %arg13[%c0_160, %c0_161], %380 {strides = array<i32>} : memref<64x512xf32, #tpu.memory_space<vmem>>, vector<64x512xf32>,
    %c1_162 = arith.constant 1 : index
    %c0_163 = arith.constant 0 : index
    %c0_164 = arith.constant 0 : index
    %382 = vector.load %arg16[%c1_162, %c0_163, %c0_164] : memref<2x128x512xf32, #tpu.memory_space<vmem>>, vector<1x128x512xf32>
    %383 = vector.shape_cast %382 : vector<1x128x512xf32> to vector<128x512xf32>
    %cst_165 = arith.constant 0.000000e+00 : f32
    %384 = vector.broadcast %cst_165 : f32 to vector<8x128xf32>
    %cst_166 = arith.constant 0.000000e+00 : f32
    %385 = vector.broadcast %cst_166 : f32 to vector<8x128xf32>
    %c0_167 = arith.constant 0 : index
    %c0_168 = arith.constant 0 : index
    %386 = vector.load %arg13[%c0_167, %c0_168] : memref<64x512xf32, #tpu.memory_space<vmem>>, vector<8x512xf32>
    %cst_169 = arith.constant dense<0.000000e+00> : vector<8x512xf32>
    %387 = tpu.matmul %384, %383, %cst_169 {dimension_numbers = #tpu.dot_dimension_numbers<[1], [0], [0], [1], [0, 0, 1, 1], [], []>} : vector<8x128xf32>, vector<128x512xf32>, vector<8x512xf32> -> vector<8x512xf32>
    %388 = arith.addf %386, %387 : vector<8x512xf32>
    %389 = vector.extract_strided_slice %388 {offsets = [0, 0], sizes = [8, 384], strides = [1, 1]} : vector<8x512xf32> to vector<8x384xf32>
    %390 = arith.negf %389 : vector<8x384xf32>
    %391 = math.exp %390 : vector<8x384xf32>
    %cst_170 = arith.constant 1.000000e+00 : f32
    %392 = vector.broadcast %cst_170 : f32 to vector<8x384xf32>
    %393 = arith.addf %392, %391 : vector<8x384xf32>
    %394 = arith.divf %392, %393 : vector<8x384xf32>
    %395 = vector.extract_strided_slice %388 {offsets = [0, 384], sizes = [8, 128], strides = [1, 1]} : vector<8x512xf32> to vector<8x128xf32>
    %396 = math.tanh %395 : vector<8x128xf32>
    %397 = vector.extract_strided_slice %394 {offsets = [0, 0], sizes = [8, 128], strides = [1, 1]} : vector<8x384xf32> to vector<8x128xf32>
    %398 = vector.extract_strided_slice %394 {offsets = [0, 128], sizes = [8, 128], strides = [1, 1]} : vector<8x384xf32> to vector<8x128xf32>
    %399 = vector.extract_strided_slice %394 {offsets = [0, 256], sizes = [8, 128], strides = [1, 1]} : vector<8x384xf32> to vector<8x128xf32>
    %400 = arith.mulf %398, %385 : vector<8x128xf32>
    %401 = arith.mulf %397, %396 : vector<8x128xf32>
    %402 = arith.addf %400, %401 : vector<8x128xf32>
    %403 = math.tanh %402 : vector<8x128xf32>
    %404 = arith.mulf %399, %403 : vector<8x128xf32>
    %c0_171 = arith.constant 0 : index
    %c0_172 = arith.constant 0 : index
    %405 = vector.load %arg14[%c0_171, %c0_172] : memref<64x128xf32, #tpu.memory_space<vmem>>, vector<8x128xf32>
    tpu.vector_store %arg14[%c0_171, %c0_172], %404 {strides = array<i32>} : memref<64x128xf32, #tpu.memory_space<vmem>>, vector<8x128xf32>,
    %c8_173 = arith.constant 8 : index
    %c0_174 = arith.constant 0 : index
    %406 = vector.load %arg13[%c8_173, %c0_174] : memref<64x512xf32, #tpu.memory_space<vmem>>, vector<8x512xf32>
    %cst_175 = arith.constant dense<0.000000e+00> : vector<8x512xf32>
    %407 = tpu.matmul %404, %383, %cst_175 {dimension_numbers = #tpu.dot_dimension_numbers<[1], [0], [0], [1], [0, 0, 1, 1], [], []>} : vector<8x128xf32>, vector<128x512xf32>, vector<8x512xf32> -> vector<8x512xf32>
    %408 = arith.addf %406, %407 : vector<8x512xf32>
    %409 = vector.extract_strided_slice %408 {offsets = [0, 0], sizes = [8, 384], strides = [1, 1]} : vector<8x512xf32> to vector<8x384xf32>
    %410 = arith.negf %409 : vector<8x384xf32>
    %411 = math.exp %410 : vector<8x384xf32>
    %cst_176 = arith.constant 1.000000e+00 : f32
    %412 = vector.broadcast %cst_176 : f32 to vector<8x384xf32>
    %413 = arith.addf %412, %411 : vector<8x384xf32>
    %414 = arith.divf %412, %413 : vector<8x384xf32>
    %415 = vector.extract_strided_slice %408 {offsets = [0, 384], sizes = [8, 128], strides = [1, 1]} : vector<8x512xf32> to vector<8x128xf32>
    %416 = math.tanh %415 : vector<8x128xf32>
    %417 = vector.extract_strided_slice %414 {offsets = [0, 0], sizes = [8, 128], strides = [1, 1]} : vector<8x384xf32> to vector<8x128xf32>
    %418 = vector.extract_strided_slice %414 {offsets = [0, 128], sizes = [8, 128], strides = [1, 1]} : vector<8x384xf32> to vector<8x128xf32>
    %419 = vector.extract_strided_slice %414 {offsets = [0, 256], sizes = [8, 128], strides = [1, 1]} : vector<8x384xf32> to vector<8x128xf32>
    %420 = arith.mulf %418, %402 : vector<8x128xf32>
    %421 = arith.mulf %417, %416 : vector<8x128xf32>
    %422 = arith.addf %420, %421 : vector<8x128xf32>
    %423 = math.tanh %422 : vector<8x128xf32>
    %424 = arith.mulf %419, %423 : vector<8x128xf32>
    %c8_177 = arith.constant 8 : index
    %c0_178 = arith.constant 0 : index
    %425 = vector.load %arg14[%c8_177, %c0_178] : memref<64x128xf32, #tpu.memory_space<vmem>>, vector<8x128xf32>
    tpu.vector_store %arg14[%c8_177, %c0_178], %424 {strides = array<i32>} : memref<64x128xf32, #tpu.memory_space<vmem>>, vector<8x128xf32>,
    %c16_179 = arith.constant 16 : index
    %c0_180 = arith.constant 0 : index
    %426 = vector.load %arg13[%c16_179, %c0_180] : memref<64x512xf32, #tpu.memory_space<vmem>>, vector<8x512xf32>
    %cst_181 = arith.constant dense<0.000000e+00> : vector<8x512xf32>
    %427 = tpu.matmul %424, %383, %cst_181 {dimension_numbers = #tpu.dot_dimension_numbers<[1], [0], [0], [1], [0, 0, 1, 1], [], []>} : vector<8x128xf32>, vector<128x512xf32>, vector<8x512xf32> -> vector<8x512xf32>
    %428 = arith.addf %426, %427 : vector<8x512xf32>
    %429 = vector.extract_strided_slice %428 {offsets = [0, 0], sizes = [8, 384], strides = [1, 1]} : vector<8x512xf32> to vector<8x384xf32>
    %430 = arith.negf %429 : vector<8x384xf32>
    %431 = math.exp %430 : vector<8x384xf32>
    %cst_182 = arith.constant 1.000000e+00 : f32
    %432 = vector.broadcast %cst_182 : f32 to vector<8x384xf32>
    %433 = arith.addf %432, %431 : vector<8x384xf32>
    %434 = arith.divf %432, %433 : vector<8x384xf32>
    %435 = vector.extract_strided_slice %428 {offsets = [0, 384], sizes = [8, 128], strides = [1, 1]} : vector<8x512xf32> to vector<8x128xf32>
    %436 = math.tanh %435 : vector<8x128xf32>
    %437 = vector.extract_strided_slice %434 {offsets = [0, 0], sizes = [8, 128], strides = [1, 1]} : vector<8x384xf32> to vector<8x128xf32>
    %438 = vector.extract_strided_slice %434 {offsets = [0, 128], sizes = [8, 128], strides = [1, 1]} : vector<8x384xf32> to vector<8x128xf32>
    %439 = vector.extract_strided_slice %434 {offsets = [0, 256], sizes = [8, 128], strides = [1, 1]} : vector<8x384xf32> to vector<8x128xf32>
    %440 = arith.mulf %438, %422 : vector<8x128xf32>
    %441 = arith.mulf %437, %436 : vector<8x128xf32>
    %442 = arith.addf %440, %441 : vector<8x128xf32>
    %443 = math.tanh %442 : vector<8x128xf32>
    %444 = arith.mulf %439, %443 : vector<8x128xf32>
    %c16_183 = arith.constant 16 : index
    %c0_184 = arith.constant 0 : index
    %445 = vector.load %arg14[%c16_183, %c0_184] : memref<64x128xf32, #tpu.memory_space<vmem>>, vector<8x128xf32>
    tpu.vector_store %arg14[%c16_183, %c0_184], %444 {strides = array<i32>} : memref<64x128xf32, #tpu.memory_space<vmem>>, vector<8x128xf32>,
    %c24_185 = arith.constant 24 : index
    %c0_186 = arith.constant 0 : index
    %446 = vector.load %arg13[%c24_185, %c0_186] : memref<64x512xf32, #tpu.memory_space<vmem>>, vector<8x512xf32>
    %cst_187 = arith.constant dense<0.000000e+00> : vector<8x512xf32>
    %447 = tpu.matmul %444, %383, %cst_187 {dimension_numbers = #tpu.dot_dimension_numbers<[1], [0], [0], [1], [0, 0, 1, 1], [], []>} : vector<8x128xf32>, vector<128x512xf32>, vector<8x512xf32> -> vector<8x512xf32>
    %448 = arith.addf %446, %447 : vector<8x512xf32>
    %449 = vector.extract_strided_slice %448 {offsets = [0, 0], sizes = [8, 384], strides = [1, 1]} : vector<8x512xf32> to vector<8x384xf32>
    %450 = arith.negf %449 : vector<8x384xf32>
    %451 = math.exp %450 : vector<8x384xf32>
    %cst_188 = arith.constant 1.000000e+00 : f32
    %452 = vector.broadcast %cst_188 : f32 to vector<8x384xf32>
    %453 = arith.addf %452, %451 : vector<8x384xf32>
    %454 = arith.divf %452, %453 : vector<8x384xf32>
    %455 = vector.extract_strided_slice %448 {offsets = [0, 384], sizes = [8, 128], strides = [1, 1]} : vector<8x512xf32> to vector<8x128xf32>
    %456 = math.tanh %455 : vector<8x128xf32>
    %457 = vector.extract_strided_slice %454 {offsets = [0, 0], sizes = [8, 128], strides = [1, 1]} : vector<8x384xf32> to vector<8x128xf32>
    %458 = vector.extract_strided_slice %454 {offsets = [0, 128], sizes = [8, 128], strides = [1, 1]} : vector<8x384xf32> to vector<8x128xf32>
    %459 = vector.extract_strided_slice %454 {offsets = [0, 256], sizes = [8, 128], strides = [1, 1]} : vector<8x384xf32> to vector<8x128xf32>
    %460 = arith.mulf %458, %442 : vector<8x128xf32>
    %461 = arith.mulf %457, %456 : vector<8x128xf32>
    %462 = arith.addf %460, %461 : vector<8x128xf32>
    %463 = math.tanh %462 : vector<8x128xf32>
    %464 = arith.mulf %459, %463 : vector<8x128xf32>
    %c24_189 = arith.constant 24 : index
    %c0_190 = arith.constant 0 : index
    %465 = vector.load %arg14[%c24_189, %c0_190] : memref<64x128xf32, #tpu.memory_space<vmem>>, vector<8x128xf32>
    tpu.vector_store %arg14[%c24_189, %c0_190], %464 {strides = array<i32>} : memref<64x128xf32, #tpu.memory_space<vmem>>, vector<8x128xf32>,
    %c32_191 = arith.constant 32 : index
    %c0_192 = arith.constant 0 : index
    %466 = vector.load %arg13[%c32_191, %c0_192] : memref<64x512xf32, #tpu.memory_space<vmem>>, vector<8x512xf32>
    %cst_193 = arith.constant dense<0.000000e+00> : vector<8x512xf32>
    %467 = tpu.matmul %464, %383, %cst_193 {dimension_numbers = #tpu.dot_dimension_numbers<[1], [0], [0], [1], [0, 0, 1, 1], [], []>} : vector<8x128xf32>, vector<128x512xf32>, vector<8x512xf32> -> vector<8x512xf32>
    %468 = arith.addf %466, %467 : vector<8x512xf32>
    %469 = vector.extract_strided_slice %468 {offsets = [0, 0], sizes = [8, 384], strides = [1, 1]} : vector<8x512xf32> to vector<8x384xf32>
    %470 = arith.negf %469 : vector<8x384xf32>
    %471 = math.exp %470 : vector<8x384xf32>
    %cst_194 = arith.constant 1.000000e+00 : f32
    %472 = vector.broadcast %cst_194 : f32 to vector<8x384xf32>
    %473 = arith.addf %472, %471 : vector<8x384xf32>
    %474 = arith.divf %472, %473 : vector<8x384xf32>
    %475 = vector.extract_strided_slice %468 {offsets = [0, 384], sizes = [8, 128], strides = [1, 1]} : vector<8x512xf32> to vector<8x128xf32>
    %476 = math.tanh %475 : vector<8x128xf32>
    %477 = vector.extract_strided_slice %474 {offsets = [0, 0], sizes = [8, 128], strides = [1, 1]} : vector<8x384xf32> to vector<8x128xf32>
    %478 = vector.extract_strided_slice %474 {offsets = [0, 128], sizes = [8, 128], strides = [1, 1]} : vector<8x384xf32> to vector<8x128xf32>
    %479 = vector.extract_strided_slice %474 {offsets = [0, 256], sizes = [8, 128], strides = [1, 1]} : vector<8x384xf32> to vector<8x128xf32>
    %480 = arith.mulf %478, %462 : vector<8x128xf32>
    %481 = arith.mulf %477, %476 : vector<8x128xf32>
    %482 = arith.addf %480, %481 : vector<8x128xf32>
    %483 = math.tanh %482 : vector<8x128xf32>
    %484 = arith.mulf %479, %483 : vector<8x128xf32>
    %c32_195 = arith.constant 32 : index
    %c0_196 = arith.constant 0 : index
    %485 = vector.load %arg14[%c32_195, %c0_196] : memref<64x128xf32, #tpu.memory_space<vmem>>, vector<8x128xf32>
    tpu.vector_store %arg14[%c32_195, %c0_196], %484 {strides = array<i32>} : memref<64x128xf32, #tpu.memory_space<vmem>>, vector<8x128xf32>,
    %c40_197 = arith.constant 40 : index
    %c0_198 = arith.constant 0 : index
    %486 = vector.load %arg13[%c40_197, %c0_198] : memref<64x512xf32, #tpu.memory_space<vmem>>, vector<8x512xf32>
    %cst_199 = arith.constant dense<0.000000e+00> : vector<8x512xf32>
    %487 = tpu.matmul %484, %383, %cst_199 {dimension_numbers = #tpu.dot_dimension_numbers<[1], [0], [0], [1], [0, 0, 1, 1], [], []>} : vector<8x128xf32>, vector<128x512xf32>, vector<8x512xf32> -> vector<8x512xf32>
    %488 = arith.addf %486, %487 : vector<8x512xf32>
    %489 = vector.extract_strided_slice %488 {offsets = [0, 0], sizes = [8, 384], strides = [1, 1]} : vector<8x512xf32> to vector<8x384xf32>
    %490 = arith.negf %489 : vector<8x384xf32>
    %491 = math.exp %490 : vector<8x384xf32>
    %cst_200 = arith.constant 1.000000e+00 : f32
    %492 = vector.broadcast %cst_200 : f32 to vector<8x384xf32>
    %493 = arith.addf %492, %491 : vector<8x384xf32>
    %494 = arith.divf %492, %493 : vector<8x384xf32>
    %495 = vector.extract_strided_slice %488 {offsets = [0, 384], sizes = [8, 128], strides = [1, 1]} : vector<8x512xf32> to vector<8x128xf32>
    %496 = math.tanh %495 : vector<8x128xf32>
    %497 = vector.extract_strided_slice %494 {offsets = [0, 0], sizes = [8, 128], strides = [1, 1]} : vector<8x384xf32> to vector<8x128xf32>
    %498 = vector.extract_strided_slice %494 {offsets = [0, 128], sizes = [8, 128], strides = [1, 1]} : vector<8x384xf32> to vector<8x128xf32>
    %499 = vector.extract_strided_slice %494 {offsets = [0, 256], sizes = [8, 128], strides = [1, 1]} : vector<8x384xf32> to vector<8x128xf32>
    %500 = arith.mulf %498, %482 : vector<8x128xf32>
    %501 = arith.mulf %497, %496 : vector<8x128xf32>
    %502 = arith.addf %500, %501 : vector<8x128xf32>
    %503 = math.tanh %502 : vector<8x128xf32>
    %504 = arith.mulf %499, %503 : vector<8x128xf32>
    %c40_201 = arith.constant 40 : index
    %c0_202 = arith.constant 0 : index
    %505 = vector.load %arg14[%c40_201, %c0_202] : memref<64x128xf32, #tpu.memory_space<vmem>>, vector<8x128xf32>
    tpu.vector_store %arg14[%c40_201, %c0_202], %504 {strides = array<i32>} : memref<64x128xf32, #tpu.memory_space<vmem>>, vector<8x128xf32>,
    %c48_203 = arith.constant 48 : index
    %c0_204 = arith.constant 0 : index
    %506 = vector.load %arg13[%c48_203, %c0_204] : memref<64x512xf32, #tpu.memory_space<vmem>>, vector<8x512xf32>
    %cst_205 = arith.constant dense<0.000000e+00> : vector<8x512xf32>
    %507 = tpu.matmul %504, %383, %cst_205 {dimension_numbers = #tpu.dot_dimension_numbers<[1], [0], [0], [1], [0, 0, 1, 1], [], []>} : vector<8x128xf32>, vector<128x512xf32>, vector<8x512xf32> -> vector<8x512xf32>
    %508 = arith.addf %506, %507 : vector<8x512xf32>
    %509 = vector.extract_strided_slice %508 {offsets = [0, 0], sizes = [8, 384], strides = [1, 1]} : vector<8x512xf32> to vector<8x384xf32>
    %510 = arith.negf %509 : vector<8x384xf32>
    %511 = math.exp %510 : vector<8x384xf32>
    %cst_206 = arith.constant 1.000000e+00 : f32
    %512 = vector.broadcast %cst_206 : f32 to vector<8x384xf32>
    %513 = arith.addf %512, %511 : vector<8x384xf32>
    %514 = arith.divf %512, %513 : vector<8x384xf32>
    %515 = vector.extract_strided_slice %508 {offsets = [0, 384], sizes = [8, 128], strides = [1, 1]} : vector<8x512xf32> to vector<8x128xf32>
    %516 = math.tanh %515 : vector<8x128xf32>
    %517 = vector.extract_strided_slice %514 {offsets = [0, 0], sizes = [8, 128], strides = [1, 1]} : vector<8x384xf32> to vector<8x128xf32>
    %518 = vector.extract_strided_slice %514 {offsets = [0, 128], sizes = [8, 128], strides = [1, 1]} : vector<8x384xf32> to vector<8x128xf32>
    %519 = vector.extract_strided_slice %514 {offsets = [0, 256], sizes = [8, 128], strides = [1, 1]} : vector<8x384xf32> to vector<8x128xf32>
    %520 = arith.mulf %518, %502 : vector<8x128xf32>
    %521 = arith.mulf %517, %516 : vector<8x128xf32>
    %522 = arith.addf %520, %521 : vector<8x128xf32>
    %523 = math.tanh %522 : vector<8x128xf32>
    %524 = arith.mulf %519, %523 : vector<8x128xf32>
    %c48_207 = arith.constant 48 : index
    %c0_208 = arith.constant 0 : index
    %525 = vector.load %arg14[%c48_207, %c0_208] : memref<64x128xf32, #tpu.memory_space<vmem>>, vector<8x128xf32>
    tpu.vector_store %arg14[%c48_207, %c0_208], %524 {strides = array<i32>} : memref<64x128xf32, #tpu.memory_space<vmem>>, vector<8x128xf32>,
    %c56_209 = arith.constant 56 : index
    %c0_210 = arith.constant 0 : index
    %526 = vector.load %arg13[%c56_209, %c0_210] : memref<64x512xf32, #tpu.memory_space<vmem>>, vector<8x512xf32>
    %cst_211 = arith.constant dense<0.000000e+00> : vector<8x512xf32>
    %527 = tpu.matmul %524, %383, %cst_211 {dimension_numbers = #tpu.dot_dimension_numbers<[1], [0], [0], [1], [0, 0, 1, 1], [], []>} : vector<8x128xf32>, vector<128x512xf32>, vector<8x512xf32> -> vector<8x512xf32>
    %528 = arith.addf %526, %527 : vector<8x512xf32>
    %529 = vector.extract_strided_slice %528 {offsets = [0, 0], sizes = [8, 384], strides = [1, 1]} : vector<8x512xf32> to vector<8x384xf32>
    %530 = arith.negf %529 : vector<8x384xf32>
    %531 = math.exp %530 : vector<8x384xf32>
    %cst_212 = arith.constant 1.000000e+00 : f32
    %532 = vector.broadcast %cst_212 : f32 to vector<8x384xf32>
    %533 = arith.addf %532, %531 : vector<8x384xf32>
    %534 = arith.divf %532, %533 : vector<8x384xf32>
    %535 = vector.extract_strided_slice %528 {offsets = [0, 384], sizes = [8, 128], strides = [1, 1]} : vector<8x512xf32> to vector<8x128xf32>
    %536 = math.tanh %535 : vector<8x128xf32>
    %537 = vector.extract_strided_slice %534 {offsets = [0, 0], sizes = [8, 128], strides = [1, 1]} : vector<8x384xf32> to vector<8x128xf32>
    %538 = vector.extract_strided_slice %534 {offsets = [0, 128], sizes = [8, 128], strides = [1, 1]} : vector<8x384xf32> to vector<8x128xf32>
    %539 = vector.extract_strided_slice %534 {offsets = [0, 256], sizes = [8, 128], strides = [1, 1]} : vector<8x384xf32> to vector<8x128xf32>
    %540 = arith.mulf %538, %522 : vector<8x128xf32>
    %541 = arith.mulf %537, %536 : vector<8x128xf32>
    %542 = arith.addf %540, %541 : vector<8x128xf32>
    %543 = math.tanh %542 : vector<8x128xf32>
    %544 = arith.mulf %539, %543 : vector<8x128xf32>
    %c56_213 = arith.constant 56 : index
    %c0_214 = arith.constant 0 : index
    %545 = vector.load %arg14[%c56_213, %c0_214] : memref<64x128xf32, #tpu.memory_space<vmem>>, vector<8x128xf32>
    tpu.vector_store %arg14[%c56_213, %c0_214], %544 {strides = array<i32>} : memref<64x128xf32, #tpu.memory_space<vmem>>, vector<8x128xf32>,
    %c0_215 = arith.constant 0 : index
    %c0_216 = arith.constant 0 : index
    %546 = vector.load %arg10[%c0_215, %c0_216] : memref<1x128xf32, #tpu.memory_space<vmem>>, vector<1x128xf32>
    %547 = vector.broadcast %546 : vector<1x128xf32> to vector<8x128xf32>
    %548 = arith.mulf %544, %547 : vector<8x128xf32>
    %cst_217 = arith.constant dense<0.000000e+00> : vector<8xf32>
    %549 = vector.multi_reduction <add>, %548, %cst_217 [1] : vector<8x128xf32> to vector<8xf32>
    %550 = vector.shape_cast %549 : vector<8xf32> to vector<8x1xf32>
    %c0_218 = arith.constant 0 : index
    %c0_219 = arith.constant 0 : index
    %551 = vector.load %arg11[%c0_218, %c0_219] : memref<1x1xf32, #tpu.memory_space<vmem>>, vector<1x1xf32>
    %552 = vector.broadcast %551 : vector<1x1xf32> to vector<8x1xf32>
    %553 = arith.addf %550, %552 : vector<8x1xf32>
    %c0_220 = arith.constant 0 : index
    %c0_221 = arith.constant 0 : index
    %554 = vector.load %arg12[%c0_220, %c0_221] : memref<8x1xf32, #tpu.memory_space<vmem>>, vector<8x1xf32>
    tpu.vector_store %arg12[%c0_220, %c0_221], %553 {strides = array<i32>} : memref<8x1xf32, #tpu.memory_space<vmem>>, vector<8x1xf32>,
    return
  }
}

</mosaic_0001>

<llo_original>
// kernel: lstm_model_forward.1
$region0: #{lstm_model_forward.1}
  #allocation0 [shape = 'u32[]', space=smem, size = 0x4, offset = 0x4, fixed_abs, tag = 'smem constant byte address 0x4 - core index']
  #allocation1 [shape = 'u32[144,128]{1,0:T(1,128)}', space=vmem, size = 0x12000, scoped, tag = 'internal scratch']
  #allocation2 [shape = 'f32[64,512]{1,0:T(8,128)}', space=vmem, size = 0x20000, scoped, tag = 'scratch operand']
  #allocation3 [shape = 'f32[64,128]{1,0:T(8,128)}', space=vmem, size = 0x8000, scoped, tag = 'scratch operand']
  #allocation4 [shape = 'f32[2,128,512]{2,1,0:T(8,128)}', space=vmem, size = 0x80000, scoped, tag = 'scratch operand']
  #allocation5 [shape = 'f32[2,128,512]{2,1,0:T(8,128)}', space=vmem, size = 0x80000, scoped, tag = 'scratch operand']
  #allocation6 [shape = 's32[4]{0}', space=sflag, size = 0x10, scoped, tag = 'scratch operand']
  #allocation7 [shape = 'f32[1,1]{1,0:T(1,128)S(1)}', space=vmem, size = 0x200, scoped, tag = 'scoped memory for lstm_model_forward.1']
  #allocation10 [shape = 's32[]', space=sflag, size = 0x4, offset = 0, fixed_abs, tag = 'sflag constant byte address 0x0 - dummy sync flag']
  #allocation11 [shape = 's32[]', space=sflag, size = 0x4, offset = 0, fixed_abs, tag = 'sflag constant byte address 0x0 - dummy sync flag']
  #allocation12 [shape = 'u32[]', space=smem, size = 0x4, offset = 0x44, fixed_abs, tag = 'smem constant byte address 0x44 - assertion arg 0']
  #allocation13 [shape = 'u32[]', space=smem, size = 0x4, offset = 0x48, fixed_abs, tag = 'smem constant byte address 0x48 - assertion arg 1']
  #allocation14 [shape = 's32[]', space=sflag, size = 0x4, offset = 0, fixed_abs, tag = 'sflag constant byte address 0x0 - dummy sync flag']
  #allocation15 [shape = 's32[]', space=sflag, size = 0x4, offset = 0, fixed_abs, tag = 'sflag constant byte address 0x0 - dummy sync flag']
  #allocation16 [shape = 's32[]', space=sflag, size = 0x4, offset = 0, fixed_abs, tag = 'sflag constant byte address 0x0 - dummy sync flag']
  #allocation17 [shape = 's32[]', space=sflag, size = 0x4, offset = 0, fixed_abs, tag = 'sflag constant byte address 0x0 - dummy sync flag']
  #allocation18 [shape = 's32[]', space=sflag, size = 0x4, offset = 0, fixed_abs, tag = 'sflag constant byte address 0x0 - dummy sync flag']
  #allocation19 [shape = 's32[]', space=sflag, size = 0x4, offset = 0, fixed_abs, tag = 'sflag constant byte address 0x0 - dummy sync flag']
  %s0 = inlined_call_operand.vmem [shape: f32[64,8], index: 0, kind: input, shape index: {}]
  %s1 = inlined_call_operand.vmem [shape: f32[8,512], index: 1, kind: input, shape index: {}]
  %s2 = inlined_call_operand.hbm [shape: f32[128,512], index: 2, kind: input, shape index: {}]
  %s3 = inlined_call_operand.vmem [shape: f32[1,512], index: 3, kind: input, shape index: {}]
  %s4 = inlined_call_operand.hbm [shape: f32[128,512], index: 4, kind: input, shape index: {}]
  %s5 = inlined_call_operand.hbm [shape: f32[128,512], index: 5, kind: input, shape index: {}]
  %s6 = inlined_call_operand.vmem [shape: f32[1,512], index: 6, kind: input, shape index: {}]
  %s7 = inlined_call_operand.hbm [shape: f32[128,512], index: 7, kind: input, shape index: {}]
  %s8 = inlined_call_operand.hbm [shape: f32[128,512], index: 8, kind: input, shape index: {}]
  %s9 = inlined_call_operand.vmem [shape: f32[1,512], index: 9, kind: input, shape index: {}]
  %s10 = inlined_call_operand.vmem [shape: f32[1,128], index: 10, kind: input, shape index: {}]
  %s11 = inlined_call_operand.<no memory space> [shape: f32[1,1], index: 11, kind: input, shape index: {}]
  %s12 = inlined_call_operand.vmem [shape: f32[8,1], index: 12, kind: output, shape index: {}]
  %s13 = sld [smem:[#allocation0]]
  $region62: #{lstm_model_forward.1} parent=0
    _
  %s15 = ssub.s32 1, %s13
  %s16 = scalar_select 0, %s15, %s13
  %v17 = vstv %s11
  %18 = vst [vmem:[#allocation7] sm:$0x1] %v17
  $region1: #{lstm_model_forward.1} parent=0
    #allocation8 [shape = 'u8[262144]{0}', space=vmem, size = 0x40000, scoped, tag = 'input window, operand 2, single buffered']
    #allocation9 [shape = 's32[1]{0}', space=sflag, size = 0x4, scoped, tag = 'scoped memory for lstm_model_forward.1']
    %19 = vsyncpa [#allocation9], 0
    // Predicated region
    $region2: #{lstm_model_forward.1} parent=1 // pred_check
      _
    $region3: #{lstm_model_forward.1} parent=1 // pred_check_branch
      %21 = sbr.rel (0) target = $region5
    $region4: #{lstm_model_forward.1} parent=1 // pred_region
      _
    $region5: #{lstm_model_forward.1} parent=1 // pred_fallthru
      _
    // Predicated region
    $region6: #{lstm_model_forward.1} parent=1 // pred_check
      _
    $region7: #{lstm_model_forward.1} parent=1 // pred_check_branch
      %23 = sbr.rel (0) target = $region9
    $region8: #{lstm_model_forward.1} parent=1 // pred_region
      _
    $region9: #{lstm_model_forward.1} parent=1 // pred_fallthru
      _
    // Predicated region
    $region10: #{lstm_model_forward.1} parent=1 // pred_check
      _
    $region11: #{lstm_model_forward.1} parent=1 // pred_check_branch
      %25 = sbr.rel (0) target = $region13
    $region12: #{lstm_model_forward.1} parent=1 // pred_region
      %s27 = ssub.s32 8192, 8192
      %28 = vsyncadd [#allocation9], %s27
      %s29 = sshll.u32 [#allocation8], 4
      %s30 = int_to_ptr.vmem [resolvable:$true] %s29
      %35 = dma.hbm_to_vmem [thread:$0]  %s2, 8192, %s30, [#allocation9], 512, 512, 32
    $region13: #{lstm_model_forward.1} parent=1 // pred_fallthru
      _
    // Predicated region
    $region14: #{lstm_model_forward.1} parent=1 // pred_check
      _
    $region15: #{lstm_model_forward.1} parent=1 // pred_check_branch
      %37 = sbr.rel (0) target = $region17
    $region16: #{lstm_model_forward.1} parent=1 // pred_region
      _
    $region17: #{lstm_model_forward.1} parent=1 // pred_fallthru
      _
    // Predicated region
    $region18: #{lstm_model_forward.1} parent=1 // pred_check
      _
    $region19: #{lstm_model_forward.1} parent=1 // pred_check_branch
      %39 = sbr.rel (0) target = $region21
    $region20: #{lstm_model_forward.1} parent=1 // pred_region
      _
    $region21: #{lstm_model_forward.1} parent=1 // pred_fallthru
      _
    // Predicated region
    $region22: #{lstm_model_forward.1} parent=1 // pred_check
      _
    $region23: #{lstm_model_forward.1} parent=1 // pred_check_branch
      %41 = sbr.rel (0) target = $region25
    $region24: #{lstm_model_forward.1} parent=1 // pred_region
      _
    $region25: #{lstm_model_forward.1} parent=1 // pred_fallthru
      _
    // Predicated region
    $region26: #{lstm_model_forward.1} parent=1 // pred_check
      _
    $region27: #{lstm_model_forward.1} parent=1 // pred_check_branch
      %43 = sbr.rel (0) target = $region29
    $region28: #{lstm_model_forward.1} parent=1 // pred_region
      _
    $region29: #{lstm_model_forward.1} parent=1 // pred_fallthru
      _
    // Predicated region
    $region30: #{lstm_model_forward.1} parent=1 // pred_check
      _
    $region31: #{lstm_model_forward.1} parent=1 // pred_check_branch
      %45 = sbr.rel (0) target = $region33
    $region32: #{lstm_model_forward.1} parent=1 // pred_region
      _
    $region33: #{lstm_model_forward.1} parent=1 // pred_fallthru
      _
    // Predicated region
    $region34: #{lstm_model_forward.1} parent=1 // pred_check
      _
    $region35: #{lstm_model_forward.1} parent=1 // pred_check_branch
      %47 = sbr.rel (0) target = $region37
    $region36: #{lstm_model_forward.1} parent=1 // pred_region
      %48 = dma.done [#allocation9], 8192
    $region37: #{lstm_model_forward.1} parent=1 // pred_fallthru
      _
    // Predicated region
    $region38: #{lstm_model_forward.1} parent=1 // pred_check
      _
    $region39: #{lstm_model_forward.1} parent=1 // pred_check_branch
      %50 = sbr.rel target = $region41
    $region40: #{lstm_model_forward.1} parent=1 // pred_region
      %51 = sst [smem:[#allocation12]] [#allocation11]
      %52 = sst [smem:[#allocation13]] [#allocation10]
    $region41: #{lstm_model_forward.1} parent=1 // pred_fallthru
      _
    %54 = shalt.err (0)
    %s56 = sshll.u32 [#allocation4], 4
    %s57 = int_to_ptr.vmem [resolvable:$true] %s56
    %59 = dma.hbm_to_vmem [thread:$0]  %s4, 8192, %s57, [#allocation6]
    %s60 = scalar_lea.sflag [#allocation6], 1
    // Predicated region
    $region42: #{lstm_model_forward.1} parent=1 // pred_check
      _
    $region43: #{lstm_model_forward.1} parent=1 // pred_check_branch
      %62 = sbr.rel target = $region45
    $region44: #{lstm_model_forward.1} parent=1 // pred_region
      %63 = sst [smem:[#allocation12]] [#allocation15]
      %64 = sst [smem:[#allocation13]] [#allocation14]
    $region45: #{lstm_model_forward.1} parent=1 // pred_fallthru
      _
    %66 = shalt.err (0)
    %s68 = sshll.u32 [#allocation5], 4
    %s69 = int_to_ptr.vmem [resolvable:$true] %s68
    %71 = dma.hbm_to_vmem [thread:$0]  %s5, 8192, %s69, %s60
    %s72 = scalar_lea.vmem [#allocation4], 512
    %s73 = scalar_lea.sflag [#allocation6], 2
    // Predicated region
    $region46: #{lstm_model_forward.1} parent=1 // pred_check
      _
    $region47: #{lstm_model_forward.1} parent=1 // pred_check_branch
      %75 = sbr.rel target = $region49
    $region48: #{lstm_model_forward.1} parent=1 // pred_region
      %76 = sst [smem:[#allocation12]] [#allocation17]
      %77 = sst [smem:[#allocation13]] [#allocation16]
    $region49: #{lstm_model_forward.1} parent=1 // pred_fallthru
      _
    %79 = shalt.err (0)
    %s81 = sshll.u32 %s72, 4
    %s82 = int_to_ptr.vmem [resolvable:$true] %s81
    %84 = dma.hbm_to_vmem [thread:$0]  %s7, 8192, %s82, %s73
    %s85 = scalar_lea.vmem [#allocation5], 512
    %s86 = scalar_lea.sflag [#allocation6], 3
    // Predicated region
    $region50: #{lstm_model_forward.1} parent=1 // pred_check
      _
    $region51: #{lstm_model_forward.1} parent=1 // pred_check_branch
      %88 = sbr.rel target = $region53
    $region52: #{lstm_model_forward.1} parent=1 // pred_region
      %89 = sst [smem:[#allocation12]] [#allocation19]
      %90 = sst [smem:[#allocation13]] [#allocation18]
    $region53: #{lstm_model_forward.1} parent=1 // pred_fallthru
      _
    %92 = shalt.err (0)
    %s94 = sshll.u32 %s85, 4
    %s95 = int_to_ptr.vmem [resolvable:$true] %s94
    %97 = dma.hbm_to_vmem [thread:$0]  %s8, 8192, %s95, %s86
    %v98 = vld [vmem:[%s0] sm:$0xff]
    %v99 = vld [vmem:[%s0 + $0x8] sm:$0xff]
    %v100 = vld [vmem:[%s0 + $0x10] sm:$0xff]
    %v101 = vld [vmem:[%s0 + $0x18] sm:$0xff]
    %v102 = vld [vmem:[%s0 + $0x20] sm:$0xff]
    %v103 = vld [vmem:[%s0 + $0x28] sm:$0xff]
    %v104 = vld [vmem:[%s0 + $0x30] sm:$0xff]
    %v105 = vld [vmem:[%s0 + $0x38] sm:$0xff]
    %v106 = vld [vmem:[%s1] sm:$0xff]
    %v107 = vld [vmem:[%s1 + $0x8] sm:$0xff]
    %v108 = vld [vmem:[%s1 + $0x10] sm:$0xff]
    %v109 = vld [vmem:[%s1 + $0x18] sm:$0xff]
    %v110 = vld [vmem:[%s3] sm:$0xf]
    %v112 = vlaneseq
    %v113 = vshrl.u32 %v112, 7
    %v114 = vsub.s32 0, %v113
    %v115 = vrot.slane %v110, %v114
    %v116 = vlaneseq
    %v117 = vshrl.u32 %v116, 7
    %v118 = vsub.s32 1, %v117
    %v119 = vrot.slane %v110, %v118
    %v120 = vlaneseq
    %v121 = vshrl.u32 %v120, 7
    %v122 = vsub.s32 2, %v121
    %v123 = vrot.slane %v110, %v122
    %v124 = vlaneseq
    %v125 = vshrl.u32 %v124, 7
    %v126 = vsub.s32 3, %v125
    %v127 = vrot.slane %v110, %v126
    %vm132 = vcmask 64512
    %v134 = vsel %vm132, %v98, 0
    %v137 = vsel %vm132, %v99, 0
    %v140 = vsel %vm132, %v100, 0
    %v143 = vsel %vm132, %v101, 0
    %v146 = vsel %vm132, %v102, 0
    %v149 = vsel %vm132, %v103, 0
    %v152 = vsel %vm132, %v104, 0
    %v155 = vsel %vm132, %v105, 0
    %157 = vmatprep.subr.mxu0 %v107
    %158 = vmatpush1.msra.mxu0 %v106
    %159 = vmatprep.subr.mxu0 0.0
    %160 = vmatpush1.msra.mxu0 0.0
    %161 = vmatprep.subr.mxu0 0.0
    %162 = vmatpush1.msra.mxu0 0.0
    %163 = vmatprep.subr.mxu0 0.0
    %164 = vmatpush1.msra.mxu0 0.0
    %165 = vmatprep.subr.mxu0 0.0
    %166 = vmatpush1.msra.mxu0 0.0
    %167 = vmatprep.subr.mxu0 0.0
    %168 = vmatpush1.msra.mxu0 0.0
    %169 = vmatprep.subr.mxu0 0.0
    %170 = vmatpush1.msra.mxu0 0.0
    %171 = vmatprep.subr.mxu0 0.0
    %172 = vmatpush1.msra.mxu0 0.0
    %173 = vmatprep.subr.mxu0 0.0
    %174 = vmatpush1.msra.mxu0 0.0
    %175 = vmatprep.subr.mxu0 0.0
    %176 = vmatpush1.msra.mxu0 0.0
    %177 = vmatprep.subr.mxu0 0.0
    %178 = vmatpush1.msra.mxu0 0.0
    %179 = vmatprep.subr.mxu0 0.0
    %180 = vmatpush1.msra.mxu0 0.0
    %181 = vmatprep.subr.mxu0 0.0
    %182 = vmatpush1.msra.mxu0 0.0
    %183 = vmatprep.subr.mxu0 0.0
    %184 = vmatpush1.msra.mxu0 0.0
    %185 = vmatprep.subr.mxu0 0.0
    %186 = vmatpush1.msra.mxu0 0.0
    %187 = vmatprep.subr.mxu0 0.0
    %188 = vmatpush1.msra.mxu0 0.0
    %189 = vmatprep.subr.mxu0 0.0
    %190 = vmatpush1.msra.mxu0 0.0
    %191 = vmatprep.subr.mxu0 0.0
    %192 = vmatpush1.msra.mxu0 0.0
    %193 = vmatprep.subr.mxu0 0.0
    %194 = vmatpush1.msra.mxu0 0.0
    %195 = vmatprep.subr.mxu0 0.0
    %196 = vmatpush1.msra.mxu0 0.0
    %197 = vmatprep.subr.mxu0 0.0
    %198 = vmatpush1.msra.mxu0 0.0
    %199 = vmatprep.subr.mxu0 0.0
    %200 = vmatpush1.msra.mxu0 0.0
    %201 = vmatprep.subr.mxu0 0.0
    %202 = vmatpush1.msra.mxu0 0.0
    %203 = vmatprep.subr.mxu0 0.0
    %204 = vmatpush1.msra.mxu0 0.0
    %205 = vmatprep.subr.mxu0 0.0
    %206 = vmatpush1.msra.mxu0 0.0
    %207 = vmatprep.subr.mxu0 0.0
    %208 = vmatpush1.msra.mxu0 0.0
    %209 = vmatprep.subr.mxu0 0.0
    %210 = vmatpush1.msra.mxu0 0.0
    %211 = vmatprep.subr.mxu0 0.0
    %212 = vmatpush1.msra.mxu0 0.0
    %213 = vmatprep.subr.mxu0 0.0
    %214 = vmatpush1.msra.mxu0 0.0
    %215 = vmatprep.subr.mxu0 0.0
    %216 = vmatpush1.msra.mxu0 0.0
    %217 = vmatprep.subr.mxu0 0.0
    %218 = vmatpush1.msra.mxu0 0.0
    %219 = vmatprep.subr.mxu0 0.0
    %220 = vmatpush1.msra.mxu0 0.0
    %221 = vmatprep.mubr.f32.mxu0 0.0
    %222 = vmatmul.mubr.f32.gmra.mrb[0].mxu0 %v134
    %v223 = vpop.f32.mrb[0].mxu0
    %v224 = vadd.f32 %v115, %v223
    %v225 = vpop.f32.mrb[0].mxu0
    %v226 = vadd.f32 %v119, %v225
    %227 = vmatprep.mubr.f32.mxu0 0.0
    %228 = vmatmul.mubr.f32.gmra.mrb[0].mxu0 %v137
    %v229 = vpop.f32.mrb[0].mxu0
    %v230 = vadd.f32 %v115, %v229
    %v231 = vpop.f32.mrb[0].mxu0
    %v232 = vadd.f32 %v119, %v231
    %233 = vmatprep.mubr.f32.mxu0 0.0
    %234 = vmatmul.mubr.f32.gmra.mrb[0].mxu0 %v140
    %v235 = vpop.f32.mrb[0].mxu0
    %v236 = vadd.f32 %v115, %v235
    %v237 = vpop.f32.mrb[0].mxu0
    %v238 = vadd.f32 %v119, %v237
    %239 = vmatprep.mubr.f32.mxu0 0.0
    %240 = vmatmul.mubr.f32.gmra.mrb[0].mxu0 %v143
    %v241 = vpop.f32.mrb[0].mxu0
    %v242 = vadd.f32 %v115, %v241
    %v243 = vpop.f32.mrb[0].mxu0
    %v244 = vadd.f32 %v119, %v243
    %245 = vmatprep.mubr.f32.mxu0 0.0
    %246 = vmatmul.mubr.f32.gmra.mrb[0].mxu0 %v146
    %v247 = vpop.f32.mrb[0].mxu0
    %v248 = vadd.f32 %v115, %v247
    %v249 = vpop.f32.mrb[0].mxu0
    %v250 = vadd.f32 %v119, %v249
    %251 = vmatprep.mubr.f32.mxu0 0.0
    %252 = vmatmul.mubr.f32.gmra.mrb[0].mxu0 %v149
    %v253 = vpop.f32.mrb[0].mxu0
    %v254 = vadd.f32 %v115, %v253
    %v255 = vpop.f32.mrb[0].mxu0
    %v256 = vadd.f32 %v119, %v255
    %257 = vmatprep.mubr.f32.mxu0 0.0
    %258 = vmatmul.mubr.f32.gmra.mrb[0].mxu0 %v152
    %v259 = vpop.f32.mrb[0].mxu0
    %v260 = vadd.f32 %v115, %v259
    %v261 = vpop.f32.mrb[0].mxu0
    %v262 = vadd.f32 %v119, %v261
    %263 = vmatprep.mubr.f32.mxu0 0.0
    %264 = vmatmul.mubr.f32.gmra.mrb[0].mxu0 %v155
    %v265 = vpop.f32.mrb[0].mxu0
    %v266 = vadd.f32 %v115, %v265
    %v267 = vpop.f32.mrb[0].mxu0
    %v268 = vadd.f32 %v119, %v267
    %269 = vdwg.mxu0
    %270 = vmatprep.subr.mxu0 %v109
    %271 = vmatpush1.msra.mxu0 %v108
    %272 = vmatprep.subr.mxu0 0.0
    %273 = vmatpush1.msra.mxu0 0.0
    %274 = vmatprep.subr.mxu0 0.0
    %275 = vmatpush1.msra.mxu0 0.0
    %276 = vmatprep.subr.mxu0 0.0
    %277 = vmatpush1.msra.mxu0 0.0
    %278 = vmatprep.subr.mxu0 0.0
    %279 = vmatpush1.msra.mxu0 0.0
    %280 = vmatprep.subr.mxu0 0.0
    %281 = vmatpush1.msra.mxu0 0.0
    %282 = vmatprep.subr.mxu0 0.0
    %283 = vmatpush1.msra.mxu0 0.0
    %284 = vmatprep.subr.mxu0 0.0
    %285 = vmatpush1.msra.mxu0 0.0
    %286 = vmatprep.subr.mxu0 0.0
    %287 = vmatpush1.msra.mxu0 0.0
    %288 = vmatprep.subr.mxu0 0.0
    %289 = vmatpush1.msra.mxu0 0.0
    %290 = vmatprep.subr.mxu0 0.0
    %291 = vmatpush1.msra.mxu0 0.0
    %292 = vmatprep.subr.mxu0 0.0
    %293 = vmatpush1.msra.mxu0 0.0
    %294 = vmatprep.subr.mxu0 0.0
    %295 = vmatpush1.msra.mxu0 0.0
    %296 = vmatprep.subr.mxu0 0.0
    %297 = vmatpush1.msra.mxu0 0.0
    %298 = vmatprep.subr.mxu0 0.0
    %299 = vmatpush1.msra.mxu0 0.0
    %300 = vmatprep.subr.mxu0 0.0
    %301 = vmatpush1.msra.mxu0 0.0
    %302 = vmatprep.subr.mxu0 0.0
    %303 = vmatpush1.msra.mxu0 0.0
    %304 = vmatprep.subr.mxu0 0.0
    %305 = vmatpush1.msra.mxu0 0.0
    %306 = vmatprep.subr.mxu0 0.0
    %307 = vmatpush1.msra.mxu0 0.0
    %308 = vmatprep.subr.mxu0 0.0
    %309 = vmatpush1.msra.mxu0 0.0
    %310 = vmatprep.subr.mxu0 0.0
    %311 = vmatpush1.msra.mxu0 0.0
    %312 = vmatprep.subr.mxu0 0.0
    %313 = vmatpush1.msra.mxu0 0.0
    %314 = vmatprep.subr.mxu0 0.0
    %315 = vmatpush1.msra.mxu0 0.0
    %316 = vmatprep.subr.mxu0 0.0
    %317 = vmatpush1.msra.mxu0 0.0
    %318 = vmatprep.subr.mxu0 0.0
    %319 = vmatpush1.msra.mxu0 0.0
    %320 = vmatprep.subr.mxu0 0.0
    %321 = vmatpush1.msra.mxu0 0.0
    %322 = vmatprep.subr.mxu0 0.0
    %323 = vmatpush1.msra.mxu0 0.0
    %324 = vmatprep.subr.mxu0 0.0
    %325 = vmatpush1.msra.mxu0 0.0
    %326 = vmatprep.subr.mxu0 0.0
    %327 = vmatpush1.msra.mxu0 0.0
    %328 = vmatprep.subr.mxu0 0.0
    %329 = vmatpush1.msra.mxu0 0.0
    %330 = vmatprep.subr.mxu0 0.0
    %331 = vmatpush1.msra.mxu0 0.0
    %332 = vmatprep.subr.mxu0 0.0
    %333 = vmatpush1.msra.mxu0 0.0
    %334 = vmatprep.mubr.f32.mxu0 0.0
    %335 = vmatmul.mubr.f32.gmra.mrb[0].mxu0 %v134
    %v336 = vpop.f32.mrb[0].mxu0
    %v337 = vadd.f32 %v123, %v336
    %v338 = vpop.f32.mrb[0].mxu0
    %v339 = vadd.f32 %v127, %v338
    %340 = vmatprep.mubr.f32.mxu0 0.0
    %341 = vmatmul.mubr.f32.gmra.mrb[0].mxu0 %v137
    %v342 = vpop.f32.mrb[0].mxu0
    %v343 = vadd.f32 %v123, %v342
    %v344 = vpop.f32.mrb[0].mxu0
    %v345 = vadd.f32 %v127, %v344
    %346 = vmatprep.mubr.f32.mxu0 0.0
    %347 = vmatmul.mubr.f32.gmra.mrb[0].mxu0 %v140
    %v348 = vpop.f32.mrb[0].mxu0
    %v349 = vadd.f32 %v123, %v348
    %v350 = vpop.f32.mrb[0].mxu0
    %v351 = vadd.f32 %v127, %v350
    %352 = vmatprep.mubr.f32.mxu0 0.0
    %353 = vmatmul.mubr.f32.gmra.mrb[0].mxu0 %v143
    %v354 = vpop.f32.mrb[0].mxu0
    %v355 = vadd.f32 %v123, %v354
    %v356 = vpop.f32.mrb[0].mxu0
    %v357 = vadd.f32 %v127, %v356
    %358 = vmatprep.mubr.f32.mxu0 0.0
    %359 = vmatmul.mubr.f32.gmra.mrb[0].mxu0 %v146
    %v360 = vpop.f32.mrb[0].mxu0
    %v361 = vadd.f32 %v123, %v360
    %v362 = vpop.f32.mrb[0].mxu0
    %v363 = vadd.f32 %v127, %v362
    %364 = vmatprep.mubr.f32.mxu0 0.0
    %365 = vmatmul.mubr.f32.gmra.mrb[0].mxu0 %v149
    %v366 = vpop.f32.mrb[0].mxu0
    %v367 = vadd.f32 %v123, %v366
    %v368 = vpop.f32.mrb[0].mxu0
    %v369 = vadd.f32 %v127, %v368
    %370 = vmatprep.mubr.f32.mxu0 0.0
    %371 = vmatmul.mubr.f32.gmra.mrb[0].mxu0 %v152
    %v372 = vpop.f32.mrb[0].mxu0
    %v373 = vadd.f32 %v123, %v372
    %v374 = vpop.f32.mrb[0].mxu0
    %v375 = vadd.f32 %v127, %v374
    %376 = vmatprep.mubr.f32.mxu0 0.0
    %377 = vmatmul.mubr.f32.gmra.mrb[0].mxu0 %v155
    %v378 = vpop.f32.mrb[0].mxu0
    %v379 = vadd.f32 %v123, %v378
    %v380 = vpop.f32.mrb[0].mxu0
    %v381 = vadd.f32 %v127, %v380
    %382 = vdwg.mxu0
    %383 = vst [vmem:[#allocation2] sm:$0xff] %v224
    %384 = vst [vmem:[#allocation2 + $0x8] sm:$0xff] %v226
    %385 = vst [vmem:[#allocation2 + $0x10] sm:$0xff] %v337
    %386 = vst [vmem:[#allocation2 + $0x18] sm:$0xff] %v339
    %387 = vst [vmem:[#allocation2 + $0x20] sm:$0xff] %v230
    %388 = vst [vmem:[#allocation2 + $0x28] sm:$0xff] %v232
    %389 = vst [vmem:[#allocation2 + $0x30] sm:$0xff] %v343
    %390 = vst [vmem:[#allocation2 + $0x38] sm:$0xff] %v345
    %391 = vst [vmem:[#allocation2 + $0x40] sm:$0xff] %v236
    %392 = vst [vmem:[#allocation2 + $0x48] sm:$0xff] %v238
    %393 = vst [vmem:[#allocation2 + $0x50] sm:$0xff] %v349
    %394 = vst [vmem:[#allocation2 + $0x58] sm:$0xff] %v351
    %395 = vst [vmem:[#allocation2 + $0x60] sm:$0xff] %v242
    %396 = vst [vmem:[#allocation2 + $0x68] sm:$0xff] %v244
    %397 = vst [vmem:[#allocation2 + $0x70] sm:$0xff] %v355
    %398 = vst [vmem:[#allocation2 + $0x78] sm:$0xff] %v357
    %399 = vst [vmem:[#allocation2 + $0x80] sm:$0xff] %v248
    %400 = vst [vmem:[#allocation2 + $0x88] sm:$0xff] %v250
    %401 = vst [vmem:[#allocation2 + $0x90] sm:$0xff] %v361
    %402 = vst [vmem:[#allocation2 + $0x98] sm:$0xff] %v363
    %403 = vst [vmem:[#allocation2 + $0xa0] sm:$0xff] %v254
    %404 = vst [vmem:[#allocation2 + $0xa8] sm:$0xff] %v256
    %405 = vst [vmem:[#allocation2 + $0xb0] sm:$0xff] %v367
    %406 = vst [vmem:[#allocation2 + $0xb8] sm:$0xff] %v369
    %407 = vst [vmem:[#allocation2 + $0xc0] sm:$0xff] %v260
    %408 = vst [vmem:[#allocation2 + $0xc8] sm:$0xff] %v262
    %409 = vst [vmem:[#allocation2 + $0xd0] sm:$0xff] %v373
    %410 = vst [vmem:[#allocation2 + $0xd8] sm:$0xff] %v375
    %411 = vst [vmem:[#allocation2 + $0xe0] sm:$0xff] %v266
    %412 = vst [vmem:[#allocation2 + $0xe8] sm:$0xff] %v268
    %413 = vst [vmem:[#allocation2 + $0xf0] sm:$0xff] %v379
    %414 = vst [vmem:[#allocation2 + $0xf8] sm:$0xff] %v381
    %v415 = vld [vmem:[#allocation8] sm:$0xff]
    %v416 = vld [vmem:[#allocation8 + $0x8] sm:$0xff]
    %v417 = vld [vmem:[#allocation8 + $0x10] sm:$0xff]
    %v418 = vld [vmem:[#allocation8 + $0x18] sm:$0xff]
    %v419 = vld [vmem:[#allocation8 + $0x20] sm:$0xff]
    %v420 = vld [vmem:[#allocation8 + $0x28] sm:$0xff]
    %v421 = vld [vmem:[#allocation8 + $0x30] sm:$0xff]
    %v422 = vld [vmem:[#allocation8 + $0x38] sm:$0xff]
    %v423 = vld [vmem:[#allocation8 + $0x40] sm:$0xff]
    %v424 = vld [vmem:[#allocation8 + $0x48] sm:$0xff]
    %v425 = vld [vmem:[#allocation8 + $0x50] sm:$0xff]
    %v426 = vld [vmem:[#allocation8 + $0x58] sm:$0xff]
    %v427 = vld [vmem:[#allocation8 + $0x60] sm:$0xff]
    %v428 = vld [vmem:[#allocation8 + $0x68] sm:$0xff]
    %v429 = vld [vmem:[#allocation8 + $0x70] sm:$0xff]
    %v430 = vld [vmem:[#allocation8 + $0x78] sm:$0xff]
    %v431 = vld [vmem:[#allocation8 + $0x80] sm:$0xff]
    %v432 = vld [vmem:[#allocation8 + $0x88] sm:$0xff]
    %v433 = vld [vmem:[#allocation8 + $0x90] sm:$0xff]
    %v434 = vld [vmem:[#allocation8 + $0x98] sm:$0xff]
    %v435 = vld [vmem:[#allocation8 + $0xa0] sm:$0xff]
    %v436 = vld [vmem:[#allocation8 + $0xa8] sm:$0xff]
    %v437 = vld [vmem:[#allocation8 + $0xb0] sm:$0xff]
    %v438 = vld [vmem:[#allocation8 + $0xb8] sm:$0xff]
    %v439 = vld [vmem:[#allocation8 + $0xc0] sm:$0xff]
    %v440 = vld [vmem:[#allocation8 + $0xc8] sm:$0xff]
    %v441 = vld [vmem:[#allocation8 + $0xd0] sm:$0xff]
    %v442 = vld [vmem:[#allocation8 + $0xd8] sm:$0xff]
    %v443 = vld [vmem:[#allocation8 + $0xe0] sm:$0xff]
    %v444 = vld [vmem:[#allocation8 + $0xe8] sm:$0xff]
    %v445 = vld [vmem:[#allocation8 + $0xf0] sm:$0xff]
    %v446 = vld [vmem:[#allocation8 + $0xf8] sm:$0xff]
    %v447 = vld [vmem:[#allocation8 + $0x100] sm:$0xff]
    %v448 = vld [vmem:[#allocation8 + $0x108] sm:$0xff]
    %v449 = vld [vmem:[#allocation8 + $0x110] sm:$0xff]
    %v450 = vld [vmem:[#allocation8 + $0x118] sm:$0xff]
    %v451 = vld [vmem:[#allocation8 + $0x120] sm:$0xff]
    %v452 = vld [vmem:[#allocation8 + $0x128] sm:$0xff]
    %v453 = vld [vmem:[#allocation8 + $0x130] sm:$0xff]
    %v454 = vld [vmem:[#allocation8 + $0x138] sm:$0xff]
    %v455 = vld [vmem:[#allocation8 + $0x140] sm:$0xff]
    %v456 = vld [vmem:[#allocation8 + $0x148] sm:$0xff]
    %v457 = vld [vmem:[#allocation8 + $0x150] sm:$0xff]
    %v458 = vld [vmem:[#allocation8 + $0x158] sm:$0xff]
    %v459 = vld [vmem:[#allocation8 + $0x160] sm:$0xff]
    %v460 = vld [vmem:[#allocation8 + $0x168] sm:$0xff]
    %v461 = vld [vmem:[#allocation8 + $0x170] sm:$0xff]
    %v462 = vld [vmem:[#allocation8 + $0x178] sm:$0xff]
    %v463 = vld [vmem:[#allocation8 + $0x180] sm:$0xff]
    %v464 = vld [vmem:[#allocation8 + $0x188] sm:$0xff]
    %v465 = vld [vmem:[#allocation8 + $0x190] sm:$0xff]
    %v466 = vld [vmem:[#allocation8 + $0x198] sm:$0xff]
    %v467 = vld [vmem:[#allocation8 + $0x1a0] sm:$0xff]
    %v468 = vld [vmem:[#allocation8 + $0x1a8] sm:$0xff]
    %v469 = vld [vmem:[#allocation8 + $0x1b0] sm:$0xff]
    %v470 = vld [vmem:[#allocation8 + $0x1b8] sm:$0xff]
    %v471 = vld [vmem:[#allocation8 + $0x1c0] sm:$0xff]
    %v472 = vld [vmem:[#allocation8 + $0x1c8] sm:$0xff]
    %v473 = vld [vmem:[#allocation8 + $0x1d0] sm:$0xff]
    %v474 = vld [vmem:[#allocation8 + $0x1d8] sm:$0xff]
    %v475 = vld [vmem:[#allocation8 + $0x1e0] sm:$0xff]
    %v476 = vld [vmem:[#allocation8 + $0x1e8] sm:$0xff]
    %v477 = vld [vmem:[#allocation8 + $0x1f0] sm:$0xff]
    %v478 = vld [vmem:[#allocation8 + $0x1f8] sm:$0xff]
    %v479 = vld [vmem:[#allocation2] sm:$0xff]
    %v480 = vld [vmem:[#allocation2 + $0x8] sm:$0xff]
    %v481 = vld [vmem:[#allocation2 + $0x10] sm:$0xff]
    %v482 = vld [vmem:[#allocation2 + $0x18] sm:$0xff]
    %483 = vmatprep.subr.mxu0 %v416
    %484 = vmatpush1.msra.mxu0 %v415
    %485 = vmatprep.subr.mxu0 %v420
    %486 = vmatpush1.msra.mxu0 %v419
    %487 = vmatprep.subr.mxu0 %v424
    %488 = vmatpush1.msra.mxu0 %v423
    %489 = vmatprep.subr.mxu0 %v428
    %490 = vmatpush1.msra.mxu0 %v427
    %491 = vmatprep.subr.mxu0 %v432
    %492 = vmatpush1.msra.mxu0 %v431
    %493 = vmatprep.subr.mxu0 %v436
    %494 = vmatpush1.msra.mxu0 %v435
    %495 = vmatprep.subr.mxu0 %v440
    %496 = vmatpush1.msra.mxu0 %v439
    %497 = vmatprep.subr.mxu0 %v444
    %498 = vmatpush1.msra.mxu0 %v443
    %499 = vmatprep.subr.mxu0 %v448
    %500 = vmatpush1.msra.mxu0 %v447
    %501 = vmatprep.subr.mxu0 %v452
    %502 = vmatpush1.msra.mxu0 %v451
    %503 = vmatprep.subr.mxu0 %v456
    %504 = vmatpush1.msra.mxu0 %v455
    %505 = vmatprep.subr.mxu0 %v460
    %506 = vmatpush1.msra.mxu0 %v459
    %507 = vmatprep.subr.mxu0 %v464
    %508 = vmatpush1.msra.mxu0 %v463
    %509 = vmatprep.subr.mxu0 %v468
    %510 = vmatpush1.msra.mxu0 %v467
    %511 = vmatprep.subr.mxu0 %v472
    %512 = vmatpush1.msra.mxu0 %v471
    %513 = vmatprep.subr.mxu0 %v476
    %514 = vmatpush1.msra.mxu0 %v475
    %515 = vmatprep.subr.mxu0 0.0
    %516 = vmatpush1.msra.mxu0 0.0
    %517 = vmatprep.subr.mxu0 0.0
    %518 = vmatpush1.msra.mxu0 0.0
    %519 = vmatprep.subr.mxu0 0.0
    %520 = vmatpush1.msra.mxu0 0.0
    %521 = vmatprep.subr.mxu0 0.0
    %522 = vmatpush1.msra.mxu0 0.0
    %523 = vmatprep.subr.mxu0 0.0
    %524 = vmatpush1.msra.mxu0 0.0
    %525 = vmatprep.subr.mxu0 0.0
    %526 = vmatpush1.msra.mxu0 0.0
    %527 = vmatprep.subr.mxu0 0.0
    %528 = vmatpush1.msra.mxu0 0.0
    %529 = vmatprep.subr.mxu0 0.0
    %530 = vmatpush1.msra.mxu0 0.0
    %531 = vmatprep.subr.mxu0 0.0
    %532 = vmatpush1.msra.mxu0 0.0
    %533 = vmatprep.subr.mxu0 0.0
    %534 = vmatpush1.msra.mxu0 0.0
    %535 = vmatprep.subr.mxu0 0.0
    %536 = vmatpush1.msra.mxu0 0.0
    %537 = vmatprep.subr.mxu0 0.0
    %538 = vmatpush1.msra.mxu0 0.0
    %539 = vmatprep.subr.mxu0 0.0
    %540 = vmatpush1.msra.mxu0 0.0
    %541 = vmatprep.subr.mxu0 0.0
    %542 = vmatpush1.msra.mxu0 0.0
    %543 = vmatprep.subr.mxu0 0.0
    %544 = vmatpush1.msra.mxu0 0.0
    %545 = vmatprep.subr.mxu0 0.0
    %546 = vmatpush1.msra.mxu0 0.0
    %547 = vmatprep.mubr.f32.mxu0 0.0
    %548 = vmatmul.mubr.f32.gmra.mrb[0].mxu0 0.0
    %v549 = vpop.f32.mrb[0].mxu0
    %v550 = vadd.f32 0.0, %v549
    %v551 = vpop.f32.mrb[0].mxu0
    %v552 = vadd.f32 0.0, %v551
    %553 = vdwg.mxu0
    %554 = vmatprep.subr.mxu0 %v418
    %555 = vmatpush1.msra.mxu0 %v417
    %556 = vmatprep.subr.mxu0 %v422
    %557 = vmatpush1.msra.mxu0 %v421
    %558 = vmatprep.subr.mxu0 %v426
    %559 = vmatpush1.msra.mxu0 %v425
    %560 = vmatprep.subr.mxu0 %v430
    %561 = vmatpush1.msra.mxu0 %v429
    %562 = vmatprep.subr.mxu0 %v434
    %563 = vmatpush1.msra.mxu0 %v433
    %564 = vmatprep.subr.mxu0 %v438
    %565 = vmatpush1.msra.mxu0 %v437
    %566 = vmatprep.subr.mxu0 %v442
    %567 = vmatpush1.msra.mxu0 %v441
    %568 = vmatprep.subr.mxu0 %v446
    %569 = vmatpush1.msra.mxu0 %v445
    %570 = vmatprep.subr.mxu0 %v450
    %571 = vmatpush1.msra.mxu0 %v449
    %572 = vmatprep.subr.mxu0 %v454
    %573 = vmatpush1.msra.mxu0 %v453
    %574 = vmatprep.subr.mxu0 %v458
    %575 = vmatpush1.msra.mxu0 %v457
    %576 = vmatprep.subr.mxu0 %v462
    %577 = vmatpush1.msra.mxu0 %v461
    %578 = vmatprep.subr.mxu0 %v466
    %579 = vmatpush1.msra.mxu0 %v465
    %580 = vmatprep.subr.mxu0 %v470
    %581 = vmatpush1.msra.mxu0 %v469
    %582 = vmatprep.subr.mxu0 %v474
    %583 = vmatpush1.msra.mxu0 %v473
    %584 = vmatprep.subr.mxu0 %v478
    %585 = vmatpush1.msra.mxu0 %v477
    %586 = vmatprep.subr.mxu0 0.0
    %587 = vmatpush1.msra.mxu0 0.0
    %588 = vmatprep.subr.mxu0 0.0
    %589 = vmatpush1.msra.mxu0 0.0
    %590 = vmatprep.subr.mxu0 0.0
    %591 = vmatpush1.msra.mxu0 0.0
    %592 = vmatprep.subr.mxu0 0.0
    %593 = vmatpush1.msra.mxu0 0.0
    %594 = vmatprep.subr.mxu0 0.0
    %595 = vmatpush1.msra.mxu0 0.0
    %596 = vmatprep.subr.mxu0 0.0
    %597 = vmatpush1.msra.mxu0 0.0
    %598 = vmatprep.subr.mxu0 0.0
    %599 = vmatpush1.msra.mxu0 0.0
    %600 = vmatprep.subr.mxu0 0.0
    %601 = vmatpush1.msra.mxu0 0.0
    %602 = vmatprep.subr.mxu0 0.0
    %603 = vmatpush1.msra.mxu0 0.0
    %604 = vmatprep.subr.mxu0 0.0
    %605 = vmatpush1.msra.mxu0 0.0
    %606 = vmatprep.subr.mxu0 0.0
    %607 = vmatpush1.msra.mxu0 0.0
    %608 = vmatprep.subr.mxu0 0.0
    %609 = vmatpush1.msra.mxu0 0.0
    %610 = vmatprep.subr.mxu0 0.0
    %611 = vmatpush1.msra.mxu0 0.0
    %612 = vmatprep.subr.mxu0 0.0
    %613 = vmatpush1.msra.mxu0 0.0
    %614 = vmatprep.subr.mxu0 0.0
    %615 = vmatpush1.msra.mxu0 0.0
    %616 = vmatprep.subr.mxu0 0.0
    %617 = vmatpush1.msra.mxu0 0.0
    %618 = vmatprep.mubr.f32.mxu0 0.0
    %619 = vmatmul.mubr.f32.gmra.mrb[0].mxu0 0.0
    %v620 = vpop.f32.mrb[0].mxu0
    %v621 = vadd.f32 0.0, %v620
    %v622 = vpop.f32.mrb[0].mxu0
    %v623 = vadd.f32 0.0, %v622
    %624 = vdwg.mxu0
    %v625 = vadd.f32 %v479, %v550
    %v626 = vadd.f32 %v480, %v552
    %v627 = vadd.f32 %v481, %v621
    %v628 = vadd.f32 %v482, %v623
    %v629 = vxor.u32 %v625, 2147483648
    %v630 = vxor.u32 %v626, 2147483648
    %v631 = vxor.u32 %v627, 2147483648
    %v632 = vmul.f32 %v629, 1.442695
    %v633 = vpow.pop %v632
    %v634 = vmul.f32 %v630, 1.442695
    %v635 = vpow.pop %v634
    %v636 = vmul.f32 %v631, 1.442695
    %v637 = vpow.pop %v636
    %v638 = vadd.f32 %v633, 1.0
    %v639 = vadd.f32 %v635, 1.0
    %v640 = vadd.f32 %v637, 1.0
    %v641 = vrcp.pop %v638
    %v642 = vmul.f32 1.0, %v641
    %v643 = vrcp.pop %v639
    %v644 = vmul.f32 1.0, %v643
    %v645 = vrcp.pop %v640
    %v646 = vmul.f32 1.0, %v645
    %v647 = vtanh.pop %v628
    %v648 = vmul.f32 %v644, 0.0
    %v649 = vmul.f32 %v642, %v647
    %v650 = vadd.f32 %v648, %v649
    %v651 = vtanh.pop %v650
    %v652 = vmul.f32 %v646, %v651
    %653 = vst [vmem:[#allocation3] sm:$0xff] %v652
    %v654 = vld [vmem:[#allocation2 + $0x20] sm:$0xff]
    %v655 = vld [vmem:[#allocation2 + $0x28] sm:$0xff]
    %v656 = vld [vmem:[#allocation2 + $0x30] sm:$0xff]
    %v657 = vld [vmem:[#allocation2 + $0x38] sm:$0xff]
    %658 = vmatprep.subr.mxu0 %v416
    %659 = vmatpush1.msra.mxu0 %v415
    %660 = vmatprep.subr.mxu0 %v420
    %661 = vmatpush1.msra.mxu0 %v419
    %662 = vmatprep.subr.mxu0 %v424
    %663 = vmatpush1.msra.mxu0 %v423
    %664 = vmatprep.subr.mxu0 %v428
    %665 = vmatpush1.msra.mxu0 %v427
    %666 = vmatprep.subr.mxu0 %v432
    %667 = vmatpush1.msra.mxu0 %v431
    %668 = vmatprep.subr.mxu0 %v436
    %669 = vmatpush1.msra.mxu0 %v435
    %670 = vmatprep.subr.mxu0 %v440
    %671 = vmatpush1.msra.mxu0 %v439
    %672 = vmatprep.subr.mxu0 %v444
    %673 = vmatpush1.msra.mxu0 %v443
    %674 = vmatprep.subr.mxu0 %v448
    %675 = vmatpush1.msra.mxu0 %v447
    %676 = vmatprep.subr.mxu0 %v452
    %677 = vmatpush1.msra.mxu0 %v451
    %678 = vmatprep.subr.mxu0 %v456
    %679 = vmatpush1.msra.mxu0 %v455
    %680 = vmatprep.subr.mxu0 %v460
    %681 = vmatpush1.msra.mxu0 %v459
    %682 = vmatprep.subr.mxu0 %v464
    %683 = vmatpush1.msra.mxu0 %v463
    %684 = vmatprep.subr.mxu0 %v468
    %685 = vmatpush1.msra.mxu0 %v467
    %686 = vmatprep.subr.mxu0 %v472
    %687 = vmatpush1.msra.mxu0 %v471
    %688 = vmatprep.subr.mxu0 %v476
    %689 = vmatpush1.msra.mxu0 %v475
    %690 = vmatprep.subr.mxu0 0.0
    %691 = vmatpush1.msra.mxu0 0.0
    %692 = vmatprep.subr.mxu0 0.0
    %693 = vmatpush1.msra.mxu0 0.0
    %694 = vmatprep.subr.mxu0 0.0
    %695 = vmatpush1.msra.mxu0 0.0
    %696 = vmatprep.subr.mxu0 0.0
    %697 = vmatpush1.msra.mxu0 0.0
    %698 = vmatprep.subr.mxu0 0.0
    %699 = vmatpush1.msra.mxu0 0.0
    %700 = vmatprep.subr.mxu0 0.0
    %701 = vmatpush1.msra.mxu0 0.0
    %702 = vmatprep.subr.mxu0 0.0
    %703 = vmatpush1.msra.mxu0 0.0
    %704 = vmatprep.subr.mxu0 0.0
    %705 = vmatpush1.msra.mxu0 0.0
    %706 = vmatprep.subr.mxu0 0.0
    %707 = vmatpush1.msra.mxu0 0.0
    %708 = vmatprep.subr.mxu0 0.0
    %709 = vmatpush1.msra.mxu0 0.0
    %710 = vmatprep.subr.mxu0 0.0
    %711 = vmatpush1.msra.mxu0 0.0
    %712 = vmatprep.subr.mxu0 0.0
    %713 = vmatpush1.msra.mxu0 0.0
    %714 = vmatprep.subr.mxu0 0.0
    %715 = vmatpush1.msra.mxu0 0.0
    %716 = vmatprep.subr.mxu0 0.0
    %717 = vmatpush1.msra.mxu0 0.0
    %718 = vmatprep.subr.mxu0 0.0
    %719 = vmatpush1.msra.mxu0 0.0
    %720 = vmatprep.subr.mxu0 0.0
    %721 = vmatpush1.msra.mxu0 0.0
    %722 = vmatprep.mubr.f32.mxu0 0.0
    %723 = vmatmul.mubr.f32.gmra.mrb[0].mxu0 %v652
    %v724 = vpop.f32.mrb[0].mxu0
    %v725 = vadd.f32 0.0, %v724
    %v726 = vpop.f32.mrb[0].mxu0
    %v727 = vadd.f32 0.0, %v726
    %728 = vdwg.mxu0
    %729 = vmatprep.subr.mxu0 %v418
    %730 = vmatpush1.msra.mxu0 %v417
    %731 = vmatprep.subr.mxu0 %v422
    %732 = vmatpush1.msra.mxu0 %v421
    %733 = vmatprep.subr.mxu0 %v426
    %734 = vmatpush1.msra.mxu0 %v425
    %735 = vmatprep.subr.mxu0 %v430
    %736 = vmatpush1.msra.mxu0 %v429
    %737 = vmatprep.subr.mxu0 %v434
    %738 = vmatpush1.msra.mxu0 %v433
    %739 = vmatprep.subr.mxu0 %v438
    %740 = vmatpush1.msra.mxu0 %v437
    %741 = vmatprep.subr.mxu0 %v442
    %742 = vmatpush1.msra.mxu0 %v441
    %743 = vmatprep.subr.mxu0 %v446
    %744 = vmatpush1.msra.mxu0 %v445
    %745 = vmatprep.subr.mxu0 %v450
    %746 = vmatpush1.msra.mxu0 %v449
    %747 = vmatprep.subr.mxu0 %v454
    %748 = vmatpush1.msra.mxu0 %v453
    %749 = vmatprep.subr.mxu0 %v458
    %750 = vmatpush1.msra.mxu0 %v457
    %751 = vmatprep.subr.mxu0 %v462
    %752 = vmatpush1.msra.mxu0 %v461
    %753 = vmatprep.subr.mxu0 %v466
    %754 = vmatpush1.msra.mxu0 %v465
    %755 = vmatprep.subr.mxu0 %v470
    %756 = vmatpush1.msra.mxu0 %v469
    %757 = vmatprep.subr.mxu0 %v474
    %758 = vmatpush1.msra.mxu0 %v473
    %759 = vmatprep.subr.mxu0 %v478
    %760 = vmatpush1.msra.mxu0 %v477
    %761 = vmatprep.subr.mxu0 0.0
    %762 = vmatpush1.msra.mxu0 0.0
    %763 = vmatprep.subr.mxu0 0.0
    %764 = vmatpush1.msra.mxu0 0.0
    %765 = vmatprep.subr.mxu0 0.0
    %766 = vmatpush1.msra.mxu0 0.0
    %767 = vmatprep.subr.mxu0 0.0
    %768 = vmatpush1.msra.mxu0 0.0
    %769 = vmatprep.subr.mxu0 0.0
    %770 = vmatpush1.msra.mxu0 0.0
    %771 = vmatprep.subr.mxu0 0.0
    %772 = vmatpush1.msra.mxu0 0.0
    %773 = vmatprep.subr.mxu0 0.0
    %774 = vmatpush1.msra.mxu0 0.0
    %775 = vmatprep.subr.mxu0 0.0
    %776 = vmatpush1.msra.mxu0 0.0
    %777 = vmatprep.subr.mxu0 0.0
    %778 = vmatpush1.msra.mxu0 0.0
    %779 = vmatprep.subr.mxu0 0.0
    %780 = vmatpush1.msra.mxu0 0.0
    %781 = vmatprep.subr.mxu0 0.0
    %782 = vmatpush1.msra.mxu0 0.0
    %783 = vmatprep.subr.mxu0 0.0
    %784 = vmatpush1.msra.mxu0 0.0
    %785 = vmatprep.subr.mxu0 0.0
    %786 = vmatpush1.msra.mxu0 0.0
    %787 = vmatprep.subr.mxu0 0.0
    %788 = vmatpush1.msra.mxu0 0.0
    %789 = vmatprep.subr.mxu0 0.0
    %790 = vmatpush1.msra.mxu0 0.0
    %791 = vmatprep.subr.mxu0 0.0
    %792 = vmatpush1.msra.mxu0 0.0
    %793 = vmatprep.mubr.f32.mxu0 0.0
    %794 = vmatmul.mubr.f32.gmra.mrb[0].mxu0 %v652
    %v795 = vpop.f32.mrb[0].mxu0
    %v796 = vadd.f32 0.0, %v795
    %v797 = vpop.f32.mrb[0].mxu0
    %v798 = vadd.f32 0.0, %v797
    %799 = vdwg.mxu0
    %v800 = vadd.f32 %v654, %v725
    %v801 = vadd.f32 %v655, %v727
    %v802 = vadd.f32 %v656, %v796
    %v803 = vadd.f32 %v657, %v798
    %v804 = vxor.u32 %v800, 2147483648
    %v805 = vxor.u32 %v801, 2147483648
    %v806 = vxor.u32 %v802, 2147483648
    %v807 = vmul.f32 %v804, 1.442695
    %v808 = vpow.pop %v807
    %v809 = vmul.f32 %v805, 1.442695
    %v810 = vpow.pop %v809
    %v811 = vmul.f32 %v806, 1.442695
    %v812 = vpow.pop %v811
    %v813 = vadd.f32 %v808, 1.0
    %v814 = vadd.f32 %v810, 1.0
    %v815 = vadd.f32 %v812, 1.0
    %v816 = vrcp.pop %v813
    %v817 = vmul.f32 1.0, %v816
    %v818 = vrcp.pop %v814
    %v819 = vmul.f32 1.0, %v818
    %v820 = vrcp.pop %v815
    %v821 = vmul.f32 1.0, %v820
    %v822 = vtanh.pop %v803
    %v823 = vmul.f32 %v819, %v650
    %v824 = vmul.f32 %v817, %v822
    %v825 = vadd.f32 %v823, %v824
    %v826 = vtanh.pop %v825
    %v827 = vmul.f32 %v821, %v826
    %828 = vst [vmem:[#allocation3 + $0x8] sm:$0xff] %v827
    %v829 = vld [vmem:[#allocation2 + $0x40] sm:$0xff]
    %v830 = vld [vmem:[#allocation2 + $0x48] sm:$0xff]
    %v831 = vld [vmem:[#allocation2 + $0x50] sm:$0xff]
    %v832 = vld [vmem:[#allocation2 + $0x58] sm:$0xff]
    %833 = vmatprep.subr.mxu0 %v416
    %834 = vmatpush1.msra.mxu0 %v415
    %835 = vmatprep.subr.mxu0 %v420
    %836 = vmatpush1.msra.mxu0 %v419
    %837 = vmatprep.subr.mxu0 %v424
    %838 = vmatpush1.msra.mxu0 %v423
    %839 = vmatprep.subr.mxu0 %v428
    %840 = vmatpush1.msra.mxu0 %v427
    %841 = vmatprep.subr.mxu0 %v432
    %842 = vmatpush1.msra.mxu0 %v431
    %843 = vmatprep.subr.mxu0 %v436
    %844 = vmatpush1.msra.mxu0 %v435
    %845 = vmatprep.subr.mxu0 %v440
    %846 = vmatpush1.msra.mxu0 %v439
    %847 = vmatprep.subr.mxu0 %v444
    %848 = vmatpush1.msra.mxu0 %v443
    %849 = vmatprep.subr.mxu0 %v448
    %850 = vmatpush1.msra.mxu0 %v447
    %851 = vmatprep.subr.mxu0 %v452
    %852 = vmatpush1.msra.mxu0 %v451
    %853 = vmatprep.subr.mxu0 %v456
    %854 = vmatpush1.msra.mxu0 %v455
    %855 = vmatprep.subr.mxu0 %v460
    %856 = vmatpush1.msra.mxu0 %v459
    %857 = vmatprep.subr.mxu0 %v464
    %858 = vmatpush1.msra.mxu0 %v463
    %859 = vmatprep.subr.mxu0 %v468
    %860 = vmatpush1.msra.mxu0 %v467
    %861 = vmatprep.subr.mxu0 %v472
    %862 = vmatpush1.msra.mxu0 %v471
    %863 = vmatprep.subr.mxu0 %v476
    %864 = vmatpush1.msra.mxu0 %v475
    %865 = vmatprep.subr.mxu0 0.0
    %866 = vmatpush1.msra.mxu0 0.0
    %867 = vmatprep.subr.mxu0 0.0
    %868 = vmatpush1.msra.mxu0 0.0
    %869 = vmatprep.subr.mxu0 0.0
    %870 = vmatpush1.msra.mxu0 0.0
    %871 = vmatprep.subr.mxu0 0.0
    %872 = vmatpush1.msra.mxu0 0.0
    %873 = vmatprep.subr.mxu0 0.0
    %874 = vmatpush1.msra.mxu0 0.0
    %875 = vmatprep.subr.mxu0 0.0
    %876 = vmatpush1.msra.mxu0 0.0
    %877 = vmatprep.subr.mxu0 0.0
    %878 = vmatpush1.msra.mxu0 0.0
    %879 = vmatprep.subr.mxu0 0.0
    %880 = vmatpush1.msra.mxu0 0.0
    %881 = vmatprep.subr.mxu0 0.0
    %882 = vmatpush1.msra.mxu0 0.0
    %883 = vmatprep.subr.mxu0 0.0
    %884 = vmatpush1.msra.mxu0 0.0
    %885 = vmatprep.subr.mxu0 0.0
    %886 = vmatpush1.msra.mxu0 0.0
    %887 = vmatprep.subr.mxu0 0.0
    %888 = vmatpush1.msra.mxu0 0.0
    %889 = vmatprep.subr.mxu0 0.0
    %890 = vmatpush1.msra.mxu0 0.0
    %891 = vmatprep.subr.mxu0 0.0
    %892 = vmatpush1.msra.mxu0 0.0
    %893 = vmatprep.subr.mxu0 0.0
    %894 = vmatpush1.msra.mxu0 0.0
    %895 = vmatprep.subr.mxu0 0.0
    %896 = vmatpush1.msra.mxu0 0.0
    %897 = vmatprep.mubr.f32.mxu0 0.0
    %898 = vmatmul.mubr.f32.gmra.mrb[0].mxu0 %v827
    %v899 = vpop.f32.mrb[0].mxu0
    %v900 = vadd.f32 0.0, %v899
    %v901 = vpop.f32.mrb[0].mxu0
    %v902 = vadd.f32 0.0, %v901
    %903 = vdwg.mxu0
    %904 = vmatprep.subr.mxu0 %v418
    %905 = vmatpush1.msra.mxu0 %v417
    %906 = vmatprep.subr.mxu0 %v422
    %907 = vmatpush1.msra.mxu0 %v421
    %908 = vmatprep.subr.mxu0 %v426
    %909 = vmatpush1.msra.mxu0 %v425
    %910 = vmatprep.subr.mxu0 %v430
    %911 = vmatpush1.msra.mxu0 %v429
    %912 = vmatprep.subr.mxu0 %v434
    %913 = vmatpush1.msra.mxu0 %v433
    %914 = vmatprep.subr.mxu0 %v438
    %915 = vmatpush1.msra.mxu0 %v437
    %916 = vmatprep.subr.mxu0 %v442
    %917 = vmatpush1.msra.mxu0 %v441
    %918 = vmatprep.subr.mxu0 %v446
    %919 = vmatpush1.msra.mxu0 %v445
    %920 = vmatprep.subr.mxu0 %v450
    %921 = vmatpush1.msra.mxu0 %v449
    %922 = vmatprep.subr.mxu0 %v454
    %923 = vmatpush1.msra.mxu0 %v453
    %924 = vmatprep.subr.mxu0 %v458
    %925 = vmatpush1.msra.mxu0 %v457
    %926 = vmatprep.subr.mxu0 %v462
    %927 = vmatpush1.msra.mxu0 %v461
    %928 = vmatprep.subr.mxu0 %v466
    %929 = vmatpush1.msra.mxu0 %v465
    %930 = vmatprep.subr.mxu0 %v470
    %931 = vmatpush1.msra.mxu0 %v469
    %932 = vmatprep.subr.mxu0 %v474
    %933 = vmatpush1.msra.mxu0 %v473
    %934 = vmatprep.subr.mxu0 %v478
    %935 = vmatpush1.msra.mxu0 %v477
    %936 = vmatprep.subr.mxu0 0.0
    %937 = vmatpush1.msra.mxu0 0.0
    %938 = vmatprep.subr.mxu0 0.0
    %939 = vmatpush1.msra.mxu0 0.0
    %940 = vmatprep.subr.mxu0 0.0
    %941 = vmatpush1.msra.mxu0 0.0
    %942 = vmatprep.subr.mxu0 0.0
    %943 = vmatpush1.msra.mxu0 0.0
    %944 = vmatprep.subr.mxu0 0.0
    %945 = vmatpush1.msra.mxu0 0.0
    %946 = vmatprep.subr.mxu0 0.0
    %947 = vmatpush1.msra.mxu0 0.0
    %948 = vmatprep.subr.mxu0 0.0
    %949 = vmatpush1.msra.mxu0 0.0
    %950 = vmatprep.subr.mxu0 0.0
    %951 = vmatpush1.msra.mxu0 0.0
    %952 = vmatprep.subr.mxu0 0.0
    %953 = vmatpush1.msra.mxu0 0.0
    %954 = vmatprep.subr.mxu0 0.0
    %955 = vmatpush1.msra.mxu0 0.0
    %956 = vmatprep.subr.mxu0 0.0
    %957 = vmatpush1.msra.mxu0 0.0
    %958 = vmatprep.subr.mxu0 0.0
    %959 = vmatpush1.msra.mxu0 0.0
    %960 = vmatprep.subr.mxu0 0.0
    %961 = vmatpush1.msra.mxu0 0.0
    %962 = vmatprep.subr.mxu0 0.0
    %963 = vmatpush1.msra.mxu0 0.0
    %964 = vmatprep.subr.mxu0 0.0
    %965 = vmatpush1.msra.mxu0 0.0
    %966 = vmatprep.subr.mxu0 0.0
    %967 = vmatpush1.msra.mxu0 0.0
    %968 = vmatprep.mubr.f32.mxu0 0.0
    %969 = vmatmul.mubr.f32.gmra.mrb[0].mxu0 %v827
    %v970 = vpop.f32.mrb[0].mxu0
    %v971 = vadd.f32 0.0, %v970
    %v972 = vpop.f32.mrb[0].mxu0
    %v973 = vadd.f32 0.0, %v972
    %974 = vdwg.mxu0
    %v975 = vadd.f32 %v829, %v900
    %v976 = vadd.f32 %v830, %v902
    %v977 = vadd.f32 %v831, %v971
    %v978 = vadd.f32 %v832, %v973
    %v979 = vxor.u32 %v975, 2147483648
    %v980 = vxor.u32 %v976, 2147483648
    %v981 = vxor.u32 %v977, 2147483648
    %v982 = vmul.f32 %v979, 1.442695
    %v983 = vpow.pop %v982
    %v984 = vmul.f32 %v980, 1.442695
    %v985 = vpow.pop %v984
    %v986 = vmul.f32 %v981, 1.442695
    %v987 = vpow.pop %v986
    %v988 = vadd.f32 %v983, 1.0
    %v989 = vadd.f32 %v985, 1.0
    %v990 = vadd.f32 %v987, 1.0
    %v991 = vrcp.pop %v988
    %v992 = vmul.f32 1.0, %v991
    %v993 = vrcp.pop %v989
    %v994 = vmul.f32 1.0, %v993
    %v995 = vrcp.pop %v990
    %v996 = vmul.f32 1.0, %v995
    %v997 = vtanh.pop %v978
    %v998 = vmul.f32 %v994, %v825
    %v999 = vmul.f32 %v992, %v997
    %v1000 = vadd.f32 %v998, %v999
    %v1001 = vtanh.pop %v1000
    %v1002 = vmul.f32 %v996, %v1001
    %1003 = vst [vmem:[#allocation3 + $0x10] sm:$0xff] %v1002
    %v1004 = vld [vmem:[#allocation2 + $0x60] sm:$0xff]
    %v1005 = vld [vmem:[#allocation2 + $0x68] sm:$0xff]
    %v1006 = vld [vmem:[#allocation2 + $0x70] sm:$0xff]
    %v1007 = vld [vmem:[#allocation2 + $0x78] sm:$0xff]
    %1008 = vmatprep.subr.mxu0 %v416
    %1009 = vmatpush1.msra.mxu0 %v415
    %1010 = vmatprep.subr.mxu0 %v420
    %1011 = vmatpush1.msra.mxu0 %v419
    %1012 = vmatprep.subr.mxu0 %v424
    %1013 = vmatpush1.msra.mxu0 %v423
    %1014 = vmatprep.subr.mxu0 %v428
    %1015 = vmatpush1.msra.mxu0 %v427
    %1016 = vmatprep.subr.mxu0 %v432
    %1017 = vmatpush1.msra.mxu0 %v431
    %1018 = vmatprep.subr.mxu0 %v436
    %1019 = vmatpush1.msra.mxu0 %v435
    %1020 = vmatprep.subr.mxu0 %v440
    %1021 = vmatpush1.msra.mxu0 %v439
    %1022 = vmatprep.subr.mxu0 %v444
    %1023 = vmatpush1.msra.mxu0 %v443
    %1024 = vmatprep.subr.mxu0 %v448
    %1025 = vmatpush1.msra.mxu0 %v447
    %1026 = vmatprep.subr.mxu0 %v452
    %1027 = vmatpush1.msra.mxu0 %v451
    %1028 = vmatprep.subr.mxu0 %v456
    %1029 = vmatpush1.msra.mxu0 %v455
    %1030 = vmatprep.subr.mxu0 %v460
    %1031 = vmatpush1.msra.mxu0 %v459
    %1032 = vmatprep.subr.mxu0 %v464
    %1033 = vmatpush1.msra.mxu0 %v463
    %1034 = vmatprep.subr.mxu0 %v468
    %1035 = vmatpush1.msra.mxu0 %v467
    %1036 = vmatprep.subr.mxu0 %v472
    %1037 = vmatpush1.msra.mxu0 %v471
    %1038 = vmatprep.subr.mxu0 %v476
    %1039 = vmatpush1.msra.mxu0 %v475
    %1040 = vmatprep.subr.mxu0 0.0
    %1041 = vmatpush1.msra.mxu0 0.0
    %1042 = vmatprep.subr.mxu0 0.0
    %1043 = vmatpush1.msra.mxu0 0.0
    %1044 = vmatprep.subr.mxu0 0.0
    %1045 = vmatpush1.msra.mxu0 0.0
    %1046 = vmatprep.subr.mxu0 0.0
    %1047 = vmatpush1.msra.mxu0 0.0
    %1048 = vmatprep.subr.mxu0 0.0
    %1049 = vmatpush1.msra.mxu0 0.0
    %1050 = vmatprep.subr.mxu0 0.0
    %1051 = vmatpush1.msra.mxu0 0.0
    %1052 = vmatprep.subr.mxu0 0.0
    %1053 = vmatpush1.msra.mxu0 0.0
    %1054 = vmatprep.subr.mxu0 0.0
    %1055 = vmatpush1.msra.mxu0 0.0
    %1056 = vmatprep.subr.mxu0 0.0
    %1057 = vmatpush1.msra.mxu0 0.0
    %1058 = vmatprep.subr.mxu0 0.0
    %1059 = vmatpush1.msra.mxu0 0.0
    %1060 = vmatprep.subr.mxu0 0.0
    %1061 = vmatpush1.msra.mxu0 0.0
    %1062 = vmatprep.subr.mxu0 0.0
    %1063 = vmatpush1.msra.mxu0 0.0
    %1064 = vmatprep.subr.mxu0 0.0
    %1065 = vmatpush1.msra.mxu0 0.0
    %1066 = vmatprep.subr.mxu0 0.0
    %1067 = vmatpush1.msra.mxu0 0.0
    %1068 = vmatprep.subr.mxu0 0.0
    %1069 = vmatpush1.msra.mxu0 0.0
    %1070 = vmatprep.subr.mxu0 0.0
    %1071 = vmatpush1.msra.mxu0 0.0
    %1072 = vmatprep.mubr.f32.mxu0 0.0
    %1073 = vmatmul.mubr.f32.gmra.mrb[0].mxu0 %v1002
    %v1074 = vpop.f32.mrb[0].mxu0
    %v1075 = vadd.f32 0.0, %v1074
    %v1076 = vpop.f32.mrb[0].mxu0
    %v1077 = vadd.f32 0.0, %v1076
    %1078 = vdwg.mxu0
    %1079 = vmatprep.subr.mxu0 %v418
    %1080 = vmatpush1.msra.mxu0 %v417
    %1081 = vmatprep.subr.mxu0 %v422
    %1082 = vmatpush1.msra.mxu0 %v421
    %1083 = vmatprep.subr.mxu0 %v426
    %1084 = vmatpush1.msra.mxu0 %v425
    %1085 = vmatprep.subr.mxu0 %v430
    %1086 = vmatpush1.msra.mxu0 %v429
    %1087 = vmatprep.subr.mxu0 %v434
    %1088 = vmatpush1.msra.mxu0 %v433
    %1089 = vmatprep.subr.mxu0 %v438
    %1090 = vmatpush1.msra.mxu0 %v437
    %1091 = vmatprep.subr.mxu0 %v442
    %1092 = vmatpush1.msra.mxu0 %v441
    %1093 = vmatprep.subr.mxu0 %v446
    %1094 = vmatpush1.msra.mxu0 %v445
    %1095 = vmatprep.subr.mxu0 %v450
    %1096 = vmatpush1.msra.mxu0 %v449
    %1097 = vmatprep.subr.mxu0 %v454
    %1098 = vmatpush1.msra.mxu0 %v453
    %1099 = vmatprep.subr.mxu0 %v458
    %1100 = vmatpush1.msra.mxu0 %v457
    %1101 = vmatprep.subr.mxu0 %v462
    %1102 = vmatpush1.msra.mxu0 %v461
    %1103 = vmatprep.subr.mxu0 %v466
    %1104 = vmatpush1.msra.mxu0 %v465
    %1105 = vmatprep.subr.mxu0 %v470
    %1106 = vmatpush1.msra.mxu0 %v469
    %1107 = vmatprep.subr.mxu0 %v474
    %1108 = vmatpush1.msra.mxu0 %v473
    %1109 = vmatprep.subr.mxu0 %v478
    %1110 = vmatpush1.msra.mxu0 %v477
    %1111 = vmatprep.subr.mxu0 0.0
    %1112 = vmatpush1.msra.mxu0 0.0
    %1113 = vmatprep.subr.mxu0 0.0
    %1114 = vmatpush1.msra.mxu0 0.0
    %1115 = vmatprep.subr.mxu0 0.0
    %1116 = vmatpush1.msra.mxu0 0.0
    %1117 = vmatprep.subr.mxu0 0.0
    %1118 = vmatpush1.msra.mxu0 0.0
    %1119 = vmatprep.subr.mxu0 0.0
    %1120 = vmatpush1.msra.mxu0 0.0
    %1121 = vmatprep.subr.mxu0 0.0
    %1122 = vmatpush1.msra.mxu0 0.0
    %1123 = vmatprep.subr.mxu0 0.0
    %1124 = vmatpush1.msra.mxu0 0.0
    %1125 = vmatprep.subr.mxu0 0.0
    %1126 = vmatpush1.msra.mxu0 0.0
    %1127 = vmatprep.subr.mxu0 0.0
    %1128 = vmatpush1.msra.mxu0 0.0
    %1129 = vmatprep.subr.mxu0 0.0
    %1130 = vmatpush1.msra.mxu0 0.0
    %1131 = vmatprep.subr.mxu0 0.0
    %1132 = vmatpush1.msra.mxu0 0.0
    %1133 = vmatprep.subr.mxu0 0.0
    %1134 = vmatpush1.msra.mxu0 0.0
    %1135 = vmatprep.subr.mxu0 0.0
    %1136 = vmatpush1.msra.mxu0 0.0
    %1137 = vmatprep.subr.mxu0 0.0
    %1138 = vmatpush1.msra.mxu0 0.0
    %1139 = vmatprep.subr.mxu0 0.0
    %1140 = vmatpush1.msra.mxu0 0.0
    %1141 = vmatprep.subr.mxu0 0.0
    %1142 = vmatpush1.msra.mxu0 0.0
    %1143 = vmatprep.mubr.f32.mxu0 0.0
    %1144 = vmatmul.mubr.f32.gmra.mrb[0].mxu0 %v1002
    %v1145 = vpop.f32.mrb[0].mxu0
    %v1146 = vadd.f32 0.0, %v1145
    %v1147 = vpop.f32.mrb[0].mxu0
    %v1148 = vadd.f32 0.0, %v1147
    %1149 = vdwg.mxu0
    %v1150 = vadd.f32 %v1004, %v1075
    %v1151 = vadd.f32 %v1005, %v1077
    %v1152 = vadd.f32 %v1006, %v1146
    %v1153 = vadd.f32 %v1007, %v1148
    %v1154 = vxor.u32 %v1150, 2147483648
    %v1155 = vxor.u32 %v1151, 2147483648
    %v1156 = vxor.u32 %v1152, 2147483648
    %v1157 = vmul.f32 %v1154, 1.442695
    %v1158 = vpow.pop %v1157
    %v1159 = vmul.f32 %v1155, 1.442695
    %v1160 = vpow.pop %v1159
    %v1161 = vmul.f32 %v1156, 1.442695
    %v1162 = vpow.pop %v1161
    %v1163 = vadd.f32 %v1158, 1.0
    %v1164 = vadd.f32 %v1160, 1.0
    %v1165 = vadd.f32 %v1162, 1.0
    %v1166 = vrcp.pop %v1163
    %v1167 = vmul.f32 1.0, %v1166
    %v1168 = vrcp.pop %v1164
    %v1169 = vmul.f32 1.0, %v1168
    %v1170 = vrcp.pop %v1165
    %v1171 = vmul.f32 1.0, %v1170
    %v1172 = vtanh.pop %v1153
    %v1173 = vmul.f32 %v1169, %v1000
    %v1174 = vmul.f32 %v1167, %v1172
    %v1175 = vadd.f32 %v1173, %v1174
    %v1176 = vtanh.pop %v1175
    %v1177 = vmul.f32 %v1171, %v1176
    %1178 = vst [vmem:[#allocation3 + $0x18] sm:$0xff] %v1177
    %v1179 = vld [vmem:[#allocation2 + $0x80] sm:$0xff]
    %v1180 = vld [vmem:[#allocation2 + $0x88] sm:$0xff]
    %v1181 = vld [vmem:[#allocation2 + $0x90] sm:$0xff]
    %v1182 = vld [vmem:[#allocation2 + $0x98] sm:$0xff]
    %1183 = vmatprep.subr.mxu0 %v416
    %1184 = vmatpush1.msra.mxu0 %v415
    %1185 = vmatprep.subr.mxu0 %v420
    %1186 = vmatpush1.msra.mxu0 %v419
    %1187 = vmatprep.subr.mxu0 %v424
    %1188 = vmatpush1.msra.mxu0 %v423
    %1189 = vmatprep.subr.mxu0 %v428
    %1190 = vmatpush1.msra.mxu0 %v427
    %1191 = vmatprep.subr.mxu0 %v432
    %1192 = vmatpush1.msra.mxu0 %v431
    %1193 = vmatprep.subr.mxu0 %v436
    %1194 = vmatpush1.msra.mxu0 %v435
    %1195 = vmatprep.subr.mxu0 %v440
    %1196 = vmatpush1.msra.mxu0 %v439
    %1197 = vmatprep.subr.mxu0 %v444
    %1198 = vmatpush1.msra.mxu0 %v443
    %1199 = vmatprep.subr.mxu0 %v448
    %1200 = vmatpush1.msra.mxu0 %v447
    %1201 = vmatprep.subr.mxu0 %v452
    %1202 = vmatpush1.msra.mxu0 %v451
    %1203 = vmatprep.subr.mxu0 %v456
    %1204 = vmatpush1.msra.mxu0 %v455
    %1205 = vmatprep.subr.mxu0 %v460
    %1206 = vmatpush1.msra.mxu0 %v459
    %1207 = vmatprep.subr.mxu0 %v464
    %1208 = vmatpush1.msra.mxu0 %v463
    %1209 = vmatprep.subr.mxu0 %v468
    %1210 = vmatpush1.msra.mxu0 %v467
    %1211 = vmatprep.subr.mxu0 %v472
    %1212 = vmatpush1.msra.mxu0 %v471
    %1213 = vmatprep.subr.mxu0 %v476
    %1214 = vmatpush1.msra.mxu0 %v475
    %1215 = vmatprep.subr.mxu0 0.0
    %1216 = vmatpush1.msra.mxu0 0.0
    %1217 = vmatprep.subr.mxu0 0.0
    %1218 = vmatpush1.msra.mxu0 0.0
    %1219 = vmatprep.subr.mxu0 0.0
    %1220 = vmatpush1.msra.mxu0 0.0
    %1221 = vmatprep.subr.mxu0 0.0
    %1222 = vmatpush1.msra.mxu0 0.0
    %1223 = vmatprep.subr.mxu0 0.0
    %1224 = vmatpush1.msra.mxu0 0.0
    %1225 = vmatprep.subr.mxu0 0.0
    %1226 = vmatpush1.msra.mxu0 0.0
    %1227 = vmatprep.subr.mxu0 0.0
    %1228 = vmatpush1.msra.mxu0 0.0
    %1229 = vmatprep.subr.mxu0 0.0
    %1230 = vmatpush1.msra.mxu0 0.0
    %1231 = vmatprep.subr.mxu0 0.0
    %1232 = vmatpush1.msra.mxu0 0.0
    %1233 = vmatprep.subr.mxu0 0.0
    %1234 = vmatpush1.msra.mxu0 0.0
    %1235 = vmatprep.subr.mxu0 0.0
    %1236 = vmatpush1.msra.mxu0 0.0
    %1237 = vmatprep.subr.mxu0 0.0
    %1238 = vmatpush1.msra.mxu0 0.0
    %1239 = vmatprep.subr.mxu0 0.0
    %1240 = vmatpush1.msra.mxu0 0.0
    %1241 = vmatprep.subr.mxu0 0.0
    %1242 = vmatpush1.msra.mxu0 0.0
    %1243 = vmatprep.subr.mxu0 0.0
    %1244 = vmatpush1.msra.mxu0 0.0
    %1245 = vmatprep.subr.mxu0 0.0
    %1246 = vmatpush1.msra.mxu0 0.0
    %1247 = vmatprep.mubr.f32.mxu0 0.0
    %1248 = vmatmul.mubr.f32.gmra.mrb[0].mxu0 %v1177
    %v1249 = vpop.f32.mrb[0].mxu0
    %v1250 = vadd.f32 0.0, %v1249
    %v1251 = vpop.f32.mrb[0].mxu0
    %v1252 = vadd.f32 0.0, %v1251
    %1253 = vdwg.mxu0
    %1254 = vmatprep.subr.mxu0 %v418
    %1255 = vmatpush1.msra.mxu0 %v417
    %1256 = vmatprep.subr.mxu0 %v422
    %1257 = vmatpush1.msra.mxu0 %v421
    %1258 = vmatprep.subr.mxu0 %v426
    %1259 = vmatpush1.msra.mxu0 %v425
    %1260 = vmatprep.subr.mxu0 %v430
    %1261 = vmatpush1.msra.mxu0 %v429
    %1262 = vmatprep.subr.mxu0 %v434
    %1263 = vmatpush1.msra.mxu0 %v433
    %1264 = vmatprep.subr.mxu0 %v438
    %1265 = vmatpush1.msra.mxu0 %v437
    %1266 = vmatprep.subr.mxu0 %v442
    %1267 = vmatpush1.msra.mxu0 %v441
    %1268 = vmatprep.subr.mxu0 %v446
    %1269 = vmatpush1.msra.mxu0 %v445
    %1270 = vmatprep.subr.mxu0 %v450
    %1271 = vmatpush1.msra.mxu0 %v449
    %1272 = vmatprep.subr.mxu0 %v454
    %1273 = vmatpush1.msra.mxu0 %v453
    %1274 = vmatprep.subr.mxu0 %v458
    %1275 = vmatpush1.msra.mxu0 %v457
    %1276 = vmatprep.subr.mxu0 %v462
    %1277 = vmatpush1.msra.mxu0 %v461
    %1278 = vmatprep.subr.mxu0 %v466
    %1279 = vmatpush1.msra.mxu0 %v465
    %1280 = vmatprep.subr.mxu0 %v470
    %1281 = vmatpush1.msra.mxu0 %v469
    %1282 = vmatprep.subr.mxu0 %v474
    %1283 = vmatpush1.msra.mxu0 %v473
    %1284 = vmatprep.subr.mxu0 %v478
    %1285 = vmatpush1.msra.mxu0 %v477
    %1286 = vmatprep.subr.mxu0 0.0
    %1287 = vmatpush1.msra.mxu0 0.0
    %1288 = vmatprep.subr.mxu0 0.0
    %1289 = vmatpush1.msra.mxu0 0.0
    %1290 = vmatprep.subr.mxu0 0.0
    %1291 = vmatpush1.msra.mxu0 0.0
    %1292 = vmatprep.subr.mxu0 0.0
    %1293 = vmatpush1.msra.mxu0 0.0
    %1294 = vmatprep.subr.mxu0 0.0
    %1295 = vmatpush1.msra.mxu0 0.0
    %1296 = vmatprep.subr.mxu0 0.0
    %1297 = vmatpush1.msra.mxu0 0.0
    %1298 = vmatprep.subr.mxu0 0.0
    %1299 = vmatpush1.msra.mxu0 0.0
    %1300 = vmatprep.subr.mxu0 0.0
    %1301 = vmatpush1.msra.mxu0 0.0
    %1302 = vmatprep.subr.mxu0 0.0
    %1303 = vmatpush1.msra.mxu0 0.0
    %1304 = vmatprep.subr.mxu0 0.0
    %1305 = vmatpush1.msra.mxu0 0.0
    %1306 = vmatprep.subr.mxu0 0.0
    %1307 = vmatpush1.msra.mxu0 0.0
    %1308 = vmatprep.subr.mxu0 0.0
    %1309 = vmatpush1.msra.mxu0 0.0
    %1310 = vmatprep.subr.mxu0 0.0
    %1311 = vmatpush1.msra.mxu0 0.0
    %1312 = vmatprep.subr.mxu0 0.0
    %1313 = vmatpush1.msra.mxu0 0.0
    %1314 = vmatprep.subr.mxu0 0.0
    %1315 = vmatpush1.msra.mxu0 0.0
    %1316 = vmatprep.subr.mxu0 0.0
    %1317 = vmatpush1.msra.mxu0 0.0
    %1318 = vmatprep.mubr.f32.mxu0 0.0
    %1319 = vmatmul.mubr.f32.gmra.mrb[0].mxu0 %v1177
    %v1320 = vpop.f32.mrb[0].mxu0
    %v1321 = vadd.f32 0.0, %v1320
    %v1322 = vpop.f32.mrb[0].mxu0
    %v1323 = vadd.f32 0.0, %v1322
    %1324 = vdwg.mxu0
    %v1325 = vadd.f32 %v1179, %v1250
    %v1326 = vadd.f32 %v1180, %v1252
    %v1327 = vadd.f32 %v1181, %v1321
    %v1328 = vadd.f32 %v1182, %v1323
    %v1329 = vxor.u32 %v1325, 2147483648
    %v1330 = vxor.u32 %v1326, 2147483648
    %v1331 = vxor.u32 %v1327, 2147483648
    %v1332 = vmul.f32 %v1329, 1.442695
    %v1333 = vpow.pop %v1332
    %v1334 = vmul.f32 %v1330, 1.442695
    %v1335 = vpow.pop %v1334
    %v1336 = vmul.f32 %v1331, 1.442695
    %v1337 = vpow.pop %v1336
    %v1338 = vadd.f32 %v1333, 1.0
    %v1339 = vadd.f32 %v1335, 1.0
    %v1340 = vadd.f32 %v1337, 1.0
    %v1341 = vrcp.pop %v1338
    %v1342 = vmul.f32 1.0, %v1341
    %v1343 = vrcp.pop %v1339
    %v1344 = vmul.f32 1.0, %v1343
    %v1345 = vrcp.pop %v1340
    %v1346 = vmul.f32 1.0, %v1345
    %v1347 = vtanh.pop %v1328
    %v1348 = vmul.f32 %v1344, %v1175
    %v1349 = vmul.f32 %v1342, %v1347
    %v1350 = vadd.f32 %v1348, %v1349
    %v1351 = vtanh.pop %v1350
    %v1352 = vmul.f32 %v1346, %v1351
    %1353 = vst [vmem:[#allocation3 + $0x20] sm:$0xff] %v1352
    %v1354 = vld [vmem:[#allocation2 + $0xa0] sm:$0xff]
    %v1355 = vld [vmem:[#allocation2 + $0xa8] sm:$0xff]
    %v1356 = vld [vmem:[#allocation2 + $0xb0] sm:$0xff]
    %v1357 = vld [vmem:[#allocation2 + $0xb8] sm:$0xff]
    %1358 = vmatprep.subr.mxu0 %v416
    %1359 = vmatpush1.msra.mxu0 %v415
    %1360 = vmatprep.subr.mxu0 %v420
    %1361 = vmatpush1.msra.mxu0 %v419
    %1362 = vmatprep.subr.mxu0 %v424
    %1363 = vmatpush1.msra.mxu0 %v423
    %1364 = vmatprep.subr.mxu0 %v428
    %1365 = vmatpush1.msra.mxu0 %v427
    %1366 = vmatprep.subr.mxu0 %v432
    %1367 = vmatpush1.msra.mxu0 %v431
    %1368 = vmatprep.subr.mxu0 %v436
    %1369 = vmatpush1.msra.mxu0 %v435
    %1370 = vmatprep.subr.mxu0 %v440
    %1371 = vmatpush1.msra.mxu0 %v439
    %1372 = vmatprep.subr.mxu0 %v444
    %1373 = vmatpush1.msra.mxu0 %v443
    %1374 = vmatprep.subr.mxu0 %v448
    %1375 = vmatpush1.msra.mxu0 %v447
    %1376 = vmatprep.subr.mxu0 %v452
    %1377 = vmatpush1.msra.mxu0 %v451
    %1378 = vmatprep.subr.mxu0 %v456
    %1379 = vmatpush1.msra.mxu0 %v455
    %1380 = vmatprep.subr.mxu0 %v460
    %1381 = vmatpush1.msra.mxu0 %v459
    %1382 = vmatprep.subr.mxu0 %v464
    %1383 = vmatpush1.msra.mxu0 %v463
    %1384 = vmatprep.subr.mxu0 %v468
    %1385 = vmatpush1.msra.mxu0 %v467
    %1386 = vmatprep.subr.mxu0 %v472
    %1387 = vmatpush1.msra.mxu0 %v471
    %1388 = vmatprep.subr.mxu0 %v476
    %1389 = vmatpush1.msra.mxu0 %v475
    %1390 = vmatprep.subr.mxu0 0.0
    %1391 = vmatpush1.msra.mxu0 0.0
    %1392 = vmatprep.subr.mxu0 0.0
    %1393 = vmatpush1.msra.mxu0 0.0
    %1394 = vmatprep.subr.mxu0 0.0
    %1395 = vmatpush1.msra.mxu0 0.0
    %1396 = vmatprep.subr.mxu0 0.0
    %1397 = vmatpush1.msra.mxu0 0.0
    %1398 = vmatprep.subr.mxu0 0.0
    %1399 = vmatpush1.msra.mxu0 0.0
    %1400 = vmatprep.subr.mxu0 0.0
    %1401 = vmatpush1.msra.mxu0 0.0
    %1402 = vmatprep.subr.mxu0 0.0
    %1403 = vmatpush1.msra.mxu0 0.0
    %1404 = vmatprep.subr.mxu0 0.0
    %1405 = vmatpush1.msra.mxu0 0.0
    %1406 = vmatprep.subr.mxu0 0.0
    %1407 = vmatpush1.msra.mxu0 0.0
    %1408 = vmatprep.subr.mxu0 0.0
    %1409 = vmatpush1.msra.mxu0 0.0
    %1410 = vmatprep.subr.mxu0 0.0
    %1411 = vmatpush1.msra.mxu0 0.0
    %1412 = vmatprep.subr.mxu0 0.0
    %1413 = vmatpush1.msra.mxu0 0.0
    %1414 = vmatprep.subr.mxu0 0.0
    %1415 = vmatpush1.msra.mxu0 0.0
    %1416 = vmatprep.subr.mxu0 0.0
    %1417 = vmatpush1.msra.mxu0 0.0
    %1418 = vmatprep.subr.mxu0 0.0
    %1419 = vmatpush1.msra.mxu0 0.0
    %1420 = vmatprep.subr.mxu0 0.0
    %1421 = vmatpush1.msra.mxu0 0.0
    %1422 = vmatprep.mubr.f32.mxu0 0.0
    %1423 = vmatmul.mubr.f32.gmra.mrb[0].mxu0 %v1352
    %v1424 = vpop.f32.mrb[0].mxu0
    %v1425 = vadd.f32 0.0, %v1424
    %v1426 = vpop.f32.mrb[0].mxu0
    %v1427 = vadd.f32 0.0, %v1426
    %1428 = vdwg.mxu0
    %1429 = vmatprep.subr.mxu0 %v418
    %1430 = vmatpush1.msra.mxu0 %v417
    %1431 = vmatprep.subr.mxu0 %v422
    %1432 = vmatpush1.msra.mxu0 %v421
    %1433 = vmatprep.subr.mxu0 %v426
    %1434 = vmatpush1.msra.mxu0 %v425
    %1435 = vmatprep.subr.mxu0 %v430
    %1436 = vmatpush1.msra.mxu0 %v429
    %1437 = vmatprep.subr.mxu0 %v434
    %1438 = vmatpush1.msra.mxu0 %v433
    %1439 = vmatprep.subr.mxu0 %v438
    %1440 = vmatpush1.msra.mxu0 %v437
    %1441 = vmatprep.subr.mxu0 %v442
    %1442 = vmatpush1.msra.mxu0 %v441
    %1443 = vmatprep.subr.mxu0 %v446
    %1444 = vmatpush1.msra.mxu0 %v445
    %1445 = vmatprep.subr.mxu0 %v450
    %1446 = vmatpush1.msra.mxu0 %v449
    %1447 = vmatprep.subr.mxu0 %v454
    %1448 = vmatpush1.msra.mxu0 %v453
    %1449 = vmatprep.subr.mxu0 %v458
    %1450 = vmatpush1.msra.mxu0 %v457
    %1451 = vmatprep.subr.mxu0 %v462
    %1452 = vmatpush1.msra.mxu0 %v461
    %1453 = vmatprep.subr.mxu0 %v466
    %1454 = vmatpush1.msra.mxu0 %v465
    %1455 = vmatprep.subr.mxu0 %v470
    %1456 = vmatpush1.msra.mxu0 %v469
    %1457 = vmatprep.subr.mxu0 %v474
    %1458 = vmatpush1.msra.mxu0 %v473
    %1459 = vmatprep.subr.mxu0 %v478
    %1460 = vmatpush1.msra.mxu0 %v477
    %1461 = vmatprep.subr.mxu0 0.0
    %1462 = vmatpush1.msra.mxu0 0.0
    %1463 = vmatprep.subr.mxu0 0.0
    %1464 = vmatpush1.msra.mxu0 0.0
    %1465 = vmatprep.subr.mxu0 0.0
    %1466 = vmatpush1.msra.mxu0 0.0
    %1467 = vmatprep.subr.mxu0 0.0
    %1468 = vmatpush1.msra.mxu0 0.0
    %1469 = vmatprep.subr.mxu0 0.0
    %1470 = vmatpush1.msra.mxu0 0.0
    %1471 = vmatprep.subr.mxu0 0.0
    %1472 = vmatpush1.msra.mxu0 0.0
    %1473 = vmatprep.subr.mxu0 0.0
    %1474 = vmatpush1.msra.mxu0 0.0
    %1475 = vmatprep.subr.mxu0 0.0
    %1476 = vmatpush1.msra.mxu0 0.0
    %1477 = vmatprep.subr.mxu0 0.0
    %1478 = vmatpush1.msra.mxu0 0.0
    %1479 = vmatprep.subr.mxu0 0.0
    %1480 = vmatpush1.msra.mxu0 0.0
    %1481 = vmatprep.subr.mxu0 0.0
    %1482 = vmatpush1.msra.mxu0 0.0
    %1483 = vmatprep.subr.mxu0 0.0
    %1484 = vmatpush1.msra.mxu0 0.0
    %1485 = vmatprep.subr.mxu0 0.0
    %1486 = vmatpush1.msra.mxu0 0.0
    %1487 = vmatprep.subr.mxu0 0.0
    %1488 = vmatpush1.msra.mxu0 0.0
    %1489 = vmatprep.subr.mxu0 0.0
    %1490 = vmatpush1.msra.mxu0 0.0
    %1491 = vmatprep.subr.mxu0 0.0
    %1492 = vmatpush1.msra.mxu0 0.0
    %1493 = vmatprep.mubr.f32.mxu0 0.0
    %1494 = vmatmul.mubr.f32.gmra.mrb[0].mxu0 %v1352
    %v1495 = vpop.f32.mrb[0].mxu0
    %v1496 = vadd.f32 0.0, %v1495
    %v1497 = vpop.f32.mrb[0].mxu0
    %v1498 = vadd.f32 0.0, %v1497
    %1499 = vdwg.mxu0
    %v1500 = vadd.f32 %v1354, %v1425
    %v1501 = vadd.f32 %v1355, %v1427
    %v1502 = vadd.f32 %v1356, %v1496
    %v1503 = vadd.f32 %v1357, %v1498
    %v1504 = vxor.u32 %v1500, 2147483648
    %v1505 = vxor.u32 %v1501, 2147483648
    %v1506 = vxor.u32 %v1502, 2147483648
    %v1507 = vmul.f32 %v1504, 1.442695
    %v1508 = vpow.pop %v1507
    %v1509 = vmul.f32 %v1505, 1.442695
    %v1510 = vpow.pop %v1509
    %v1511 = vmul.f32 %v1506, 1.442695
    %v1512 = vpow.pop %v1511
    %v1513 = vadd.f32 %v1508, 1.0
    %v1514 = vadd.f32 %v1510, 1.0
    %v1515 = vadd.f32 %v1512, 1.0
    %v1516 = vrcp.pop %v1513
    %v1517 = vmul.f32 1.0, %v1516
    %v1518 = vrcp.pop %v1514
    %v1519 = vmul.f32 1.0, %v1518
    %v1520 = vrcp.pop %v1515
    %v1521 = vmul.f32 1.0, %v1520
    %v1522 = vtanh.pop %v1503
    %v1523 = vmul.f32 %v1519, %v1350
    %v1524 = vmul.f32 %v1517, %v1522
    %v1525 = vadd.f32 %v1523, %v1524
    %v1526 = vtanh.pop %v1525
    %v1527 = vmul.f32 %v1521, %v1526
    %1528 = vst [vmem:[#allocation3 + $0x28] sm:$0xff] %v1527
    %v1529 = vld [vmem:[#allocation2 + $0xc0] sm:$0xff]
    %v1530 = vld [vmem:[#allocation2 + $0xc8] sm:$0xff]
    %v1531 = vld [vmem:[#allocation2 + $0xd0] sm:$0xff]
    %v1532 = vld [vmem:[#allocation2 + $0xd8] sm:$0xff]
    %1533 = vmatprep.subr.mxu0 %v416
    %1534 = vmatpush1.msra.mxu0 %v415
    %1535 = vmatprep.subr.mxu0 %v420
    %1536 = vmatpush1.msra.mxu0 %v419
    %1537 = vmatprep.subr.mxu0 %v424
    %1538 = vmatpush1.msra.mxu0 %v423
    %1539 = vmatprep.subr.mxu0 %v428
    %1540 = vmatpush1.msra.mxu0 %v427
    %1541 = vmatprep.subr.mxu0 %v432
    %1542 = vmatpush1.msra.mxu0 %v431
    %1543 = vmatprep.subr.mxu0 %v436
    %1544 = vmatpush1.msra.mxu0 %v435
    %1545 = vmatprep.subr.mxu0 %v440
    %1546 = vmatpush1.msra.mxu0 %v439
    %1547 = vmatprep.subr.mxu0 %v444
    %1548 = vmatpush1.msra.mxu0 %v443
    %1549 = vmatprep.subr.mxu0 %v448
    %1550 = vmatpush1.msra.mxu0 %v447
    %1551 = vmatprep.subr.mxu0 %v452
    %1552 = vmatpush1.msra.mxu0 %v451
    %1553 = vmatprep.subr.mxu0 %v456
    %1554 = vmatpush1.msra.mxu0 %v455
    %1555 = vmatprep.subr.mxu0 %v460
    %1556 = vmatpush1.msra.mxu0 %v459
    %1557 = vmatprep.subr.mxu0 %v464
    %1558 = vmatpush1.msra.mxu0 %v463
    %1559 = vmatprep.subr.mxu0 %v468
    %1560 = vmatpush1.msra.mxu0 %v467
    %1561 = vmatprep.subr.mxu0 %v472
    %1562 = vmatpush1.msra.mxu0 %v471
    %1563 = vmatprep.subr.mxu0 %v476
    %1564 = vmatpush1.msra.mxu0 %v475
    %1565 = vmatprep.subr.mxu0 0.0
    %1566 = vmatpush1.msra.mxu0 0.0
    %1567 = vmatprep.subr.mxu0 0.0
    %1568 = vmatpush1.msra.mxu0 0.0
    %1569 = vmatprep.subr.mxu0 0.0
    %1570 = vmatpush1.msra.mxu0 0.0
    %1571 = vmatprep.subr.mxu0 0.0
    %1572 = vmatpush1.msra.mxu0 0.0
    %1573 = vmatprep.subr.mxu0 0.0
    %1574 = vmatpush1.msra.mxu0 0.0
    %1575 = vmatprep.subr.mxu0 0.0
    %1576 = vmatpush1.msra.mxu0 0.0
    %1577 = vmatprep.subr.mxu0 0.0
    %1578 = vmatpush1.msra.mxu0 0.0
    %1579 = vmatprep.subr.mxu0 0.0
    %1580 = vmatpush1.msra.mxu0 0.0
    %1581 = vmatprep.subr.mxu0 0.0
    %1582 = vmatpush1.msra.mxu0 0.0
    %1583 = vmatprep.subr.mxu0 0.0
    %1584 = vmatpush1.msra.mxu0 0.0
    %1585 = vmatprep.subr.mxu0 0.0
    %1586 = vmatpush1.msra.mxu0 0.0
    %1587 = vmatprep.subr.mxu0 0.0
    %1588 = vmatpush1.msra.mxu0 0.0
    %1589 = vmatprep.subr.mxu0 0.0
    %1590 = vmatpush1.msra.mxu0 0.0
    %1591 = vmatprep.subr.mxu0 0.0
    %1592 = vmatpush1.msra.mxu0 0.0
    %1593 = vmatprep.subr.mxu0 0.0
    %1594 = vmatpush1.msra.mxu0 0.0
    %1595 = vmatprep.subr.mxu0 0.0
    %1596 = vmatpush1.msra.mxu0 0.0
    %1597 = vmatprep.mubr.f32.mxu0 0.0
    %1598 = vmatmul.mubr.f32.gmra.mrb[0].mxu0 %v1527
    %v1599 = vpop.f32.mrb[0].mxu0
    %v1600 = vadd.f32 0.0, %v1599
    %v1601 = vpop.f32.mrb[0].mxu0
    %v1602 = vadd.f32 0.0, %v1601
    %1603 = vdwg.mxu0
    %1604 = vmatprep.subr.mxu0 %v418
    %1605 = vmatpush1.msra.mxu0 %v417
    %1606 = vmatprep.subr.mxu0 %v422
    %1607 = vmatpush1.msra.mxu0 %v421
    %1608 = vmatprep.subr.mxu0 %v426
    %1609 = vmatpush1.msra.mxu0 %v425
    %1610 = vmatprep.subr.mxu0 %v430
    %1611 = vmatpush1.msra.mxu0 %v429
    %1612 = vmatprep.subr.mxu0 %v434
    %1613 = vmatpush1.msra.mxu0 %v433
    %1614 = vmatprep.subr.mxu0 %v438
    %1615 = vmatpush1.msra.mxu0 %v437
    %1616 = vmatprep.subr.mxu0 %v442
    %1617 = vmatpush1.msra.mxu0 %v441
    %1618 = vmatprep.subr.mxu0 %v446
    %1619 = vmatpush1.msra.mxu0 %v445
    %1620 = vmatprep.subr.mxu0 %v450
    %1621 = vmatpush1.msra.mxu0 %v449
    %1622 = vmatprep.subr.mxu0 %v454
    %1623 = vmatpush1.msra.mxu0 %v453
    %1624 = vmatprep.subr.mxu0 %v458
    %1625 = vmatpush1.msra.mxu0 %v457
    %1626 = vmatprep.subr.mxu0 %v462
    %1627 = vmatpush1.msra.mxu0 %v461
    %1628 = vmatprep.subr.mxu0 %v466
    %1629 = vmatpush1.msra.mxu0 %v465
    %1630 = vmatprep.subr.mxu0 %v470
    %1631 = vmatpush1.msra.mxu0 %v469
    %1632 = vmatprep.subr.mxu0 %v474
    %1633 = vmatpush1.msra.mxu0 %v473
    %1634 = vmatprep.subr.mxu0 %v478
    %1635 = vmatpush1.msra.mxu0 %v477
    %1636 = vmatprep.subr.mxu0 0.0
    %1637 = vmatpush1.msra.mxu0 0.0
    %1638 = vmatprep.subr.mxu0 0.0
    %1639 = vmatpush1.msra.mxu0 0.0
    %1640 = vmatprep.subr.mxu0 0.0
    %1641 = vmatpush1.msra.mxu0 0.0
    %1642 = vmatprep.subr.mxu0 0.0
    %1643 = vmatpush1.msra.mxu0 0.0
    %1644 = vmatprep.subr.mxu0 0.0
    %1645 = vmatpush1.msra.mxu0 0.0
    %1646 = vmatprep.subr.mxu0 0.0
    %1647 = vmatpush1.msra.mxu0 0.0
    %1648 = vmatprep.subr.mxu0 0.0
    %1649 = vmatpush1.msra.mxu0 0.0
    %1650 = vmatprep.subr.mxu0 0.0
    %1651 = vmatpush1.msra.mxu0 0.0
    %1652 = vmatprep.subr.mxu0 0.0
    %1653 = vmatpush1.msra.mxu0 0.0
    %1654 = vmatprep.subr.mxu0 0.0
    %1655 = vmatpush1.msra.mxu0 0.0
    %1656 = vmatprep.subr.mxu0 0.0
    %1657 = vmatpush1.msra.mxu0 0.0
    %1658 = vmatprep.subr.mxu0 0.0
    %1659 = vmatpush1.msra.mxu0 0.0
    %1660 = vmatprep.subr.mxu0 0.0
    %1661 = vmatpush1.msra.mxu0 0.0
    %1662 = vmatprep.subr.mxu0 0.0
    %1663 = vmatpush1.msra.mxu0 0.0
    %1664 = vmatprep.subr.mxu0 0.0
    %1665 = vmatpush1.msra.mxu0 0.0
    %1666 = vmatprep.subr.mxu0 0.0
    %1667 = vmatpush1.msra.mxu0 0.0
    %1668 = vmatprep.mubr.f32.mxu0 0.0
    %1669 = vmatmul.mubr.f32.gmra.mrb[0].mxu0 %v1527
    %v1670 = vpop.f32.mrb[0].mxu0
    %v1671 = vadd.f32 0.0, %v1670
    %v1672 = vpop.f32.mrb[0].mxu0
    %v1673 = vadd.f32 0.0, %v1672
    %1674 = vdwg.mxu0
    %v1675 = vadd.f32 %v1529, %v1600
    %v1676 = vadd.f32 %v1530, %v1602
    %v1677 = vadd.f32 %v1531, %v1671
    %v1678 = vadd.f32 %v1532, %v1673
    %v1679 = vxor.u32 %v1675, 2147483648
    %v1680 = vxor.u32 %v1676, 2147483648
    %v1681 = vxor.u32 %v1677, 2147483648
    %v1682 = vmul.f32 %v1679, 1.442695
    %v1683 = vpow.pop %v1682
    %v1684 = vmul.f32 %v1680, 1.442695
    %v1685 = vpow.pop %v1684
    %v1686 = vmul.f32 %v1681, 1.442695
    %v1687 = vpow.pop %v1686
    %v1688 = vadd.f32 %v1683, 1.0
    %v1689 = vadd.f32 %v1685, 1.0
    %v1690 = vadd.f32 %v1687, 1.0
    %v1691 = vrcp.pop %v1688
    %v1692 = vmul.f32 1.0, %v1691
    %v1693 = vrcp.pop %v1689
    %v1694 = vmul.f32 1.0, %v1693
    %v1695 = vrcp.pop %v1690
    %v1696 = vmul.f32 1.0, %v1695
    %v1697 = vtanh.pop %v1678
    %v1698 = vmul.f32 %v1694, %v1525
    %v1699 = vmul.f32 %v1692, %v1697
    %v1700 = vadd.f32 %v1698, %v1699
    %v1701 = vtanh.pop %v1700
    %v1702 = vmul.f32 %v1696, %v1701
    %1703 = vst [vmem:[#allocation3 + $0x30] sm:$0xff] %v1702
    %v1704 = vld [vmem:[#allocation2 + $0xe0] sm:$0xff]
    %v1705 = vld [vmem:[#allocation2 + $0xe8] sm:$0xff]
    %v1706 = vld [vmem:[#allocation2 + $0xf0] sm:$0xff]
    %v1707 = vld [vmem:[#allocation2 + $0xf8] sm:$0xff]
    %1708 = vmatprep.subr.mxu0 %v416
    %1709 = vmatpush1.msra.mxu0 %v415
    %1710 = vmatprep.subr.mxu0 %v420
    %1711 = vmatpush1.msra.mxu0 %v419
    %1712 = vmatprep.subr.mxu0 %v424
    %1713 = vmatpush1.msra.mxu0 %v423
    %1714 = vmatprep.subr.mxu0 %v428
    %1715 = vmatpush1.msra.mxu0 %v427
    %1716 = vmatprep.subr.mxu0 %v432
    %1717 = vmatpush1.msra.mxu0 %v431
    %1718 = vmatprep.subr.mxu0 %v436
    %1719 = vmatpush1.msra.mxu0 %v435
    %1720 = vmatprep.subr.mxu0 %v440
    %1721 = vmatpush1.msra.mxu0 %v439
    %1722 = vmatprep.subr.mxu0 %v444
    %1723 = vmatpush1.msra.mxu0 %v443
    %1724 = vmatprep.subr.mxu0 %v448
    %1725 = vmatpush1.msra.mxu0 %v447
    %1726 = vmatprep.subr.mxu0 %v452
    %1727 = vmatpush1.msra.mxu0 %v451
    %1728 = vmatprep.subr.mxu0 %v456
    %1729 = vmatpush1.msra.mxu0 %v455
    %1730 = vmatprep.subr.mxu0 %v460
    %1731 = vmatpush1.msra.mxu0 %v459
    %1732 = vmatprep.subr.mxu0 %v464
    %1733 = vmatpush1.msra.mxu0 %v463
    %1734 = vmatprep.subr.mxu0 %v468
    %1735 = vmatpush1.msra.mxu0 %v467
    %1736 = vmatprep.subr.mxu0 %v472
    %1737 = vmatpush1.msra.mxu0 %v471
    %1738 = vmatprep.subr.mxu0 %v476
    %1739 = vmatpush1.msra.mxu0 %v475
    %1740 = vmatprep.subr.mxu0 0.0
    %1741 = vmatpush1.msra.mxu0 0.0
    %1742 = vmatprep.subr.mxu0 0.0
    %1743 = vmatpush1.msra.mxu0 0.0
    %1744 = vmatprep.subr.mxu0 0.0
    %1745 = vmatpush1.msra.mxu0 0.0
    %1746 = vmatprep.subr.mxu0 0.0
    %1747 = vmatpush1.msra.mxu0 0.0
    %1748 = vmatprep.subr.mxu0 0.0
    %1749 = vmatpush1.msra.mxu0 0.0
    %1750 = vmatprep.subr.mxu0 0.0
    %1751 = vmatpush1.msra.mxu0 0.0
    %1752 = vmatprep.subr.mxu0 0.0
    %1753 = vmatpush1.msra.mxu0 0.0
    %1754 = vmatprep.subr.mxu0 0.0
    %1755 = vmatpush1.msra.mxu0 0.0
    %1756 = vmatprep.subr.mxu0 0.0
    %1757 = vmatpush1.msra.mxu0 0.0
    %1758 = vmatprep.subr.mxu0 0.0
    %1759 = vmatpush1.msra.mxu0 0.0
    %1760 = vmatprep.subr.mxu0 0.0
    %1761 = vmatpush1.msra.mxu0 0.0
    %1762 = vmatprep.subr.mxu0 0.0
    %1763 = vmatpush1.msra.mxu0 0.0
    %1764 = vmatprep.subr.mxu0 0.0
    %1765 = vmatpush1.msra.mxu0 0.0
    %1766 = vmatprep.subr.mxu0 0.0
    %1767 = vmatpush1.msra.mxu0 0.0
    %1768 = vmatprep.subr.mxu0 0.0
    %1769 = vmatpush1.msra.mxu0 0.0
    %1770 = vmatprep.subr.mxu0 0.0
    %1771 = vmatpush1.msra.mxu0 0.0
    %1772 = vmatprep.mubr.f32.mxu0 0.0
    %1773 = vmatmul.mubr.f32.gmra.mrb[0].mxu0 %v1702
    %v1774 = vpop.f32.mrb[0].mxu0
    %v1775 = vadd.f32 0.0, %v1774
    %v1776 = vpop.f32.mrb[0].mxu0
    %v1777 = vadd.f32 0.0, %v1776
    %1778 = vdwg.mxu0
    %1779 = vmatprep.subr.mxu0 %v418
    %1780 = vmatpush1.msra.mxu0 %v417
    %1781 = vmatprep.subr.mxu0 %v422
    %1782 = vmatpush1.msra.mxu0 %v421
    %1783 = vmatprep.subr.mxu0 %v426
    %1784 = vmatpush1.msra.mxu0 %v425
    %1785 = vmatprep.subr.mxu0 %v430
    %1786 = vmatpush1.msra.mxu0 %v429
    %1787 = vmatprep.subr.mxu0 %v434
    %1788 = vmatpush1.msra.mxu0 %v433
    %1789 = vmatprep.subr.mxu0 %v438
    %1790 = vmatpush1.msra.mxu0 %v437
    %1791 = vmatprep.subr.mxu0 %v442
    %1792 = vmatpush1.msra.mxu0 %v441
    %1793 = vmatprep.subr.mxu0 %v446
    %1794 = vmatpush1.msra.mxu0 %v445
    %1795 = vmatprep.subr.mxu0 %v450
    %1796 = vmatpush1.msra.mxu0 %v449
    %1797 = vmatprep.subr.mxu0 %v454
    %1798 = vmatpush1.msra.mxu0 %v453
    %1799 = vmatprep.subr.mxu0 %v458
    %1800 = vmatpush1.msra.mxu0 %v457
    %1801 = vmatprep.subr.mxu0 %v462
    %1802 = vmatpush1.msra.mxu0 %v461
    %1803 = vmatprep.subr.mxu0 %v466
    %1804 = vmatpush1.msra.mxu0 %v465
    %1805 = vmatprep.subr.mxu0 %v470
    %1806 = vmatpush1.msra.mxu0 %v469
    %1807 = vmatprep.subr.mxu0 %v474
    %1808 = vmatpush1.msra.mxu0 %v473
    %1809 = vmatprep.subr.mxu0 %v478
    %1810 = vmatpush1.msra.mxu0 %v477
    %1811 = vmatprep.subr.mxu0 0.0
    %1812 = vmatpush1.msra.mxu0 0.0
    %1813 = vmatprep.subr.mxu0 0.0
    %1814 = vmatpush1.msra.mxu0 0.0
    %1815 = vmatprep.subr.mxu0 0.0
    %1816 = vmatpush1.msra.mxu0 0.0
    %1817 = vmatprep.subr.mxu0 0.0
    %1818 = vmatpush1.msra.mxu0 0.0
    %1819 = vmatprep.subr.mxu0 0.0
    %1820 = vmatpush1.msra.mxu0 0.0
    %1821 = vmatprep.subr.mxu0 0.0
    %1822 = vmatpush1.msra.mxu0 0.0
    %1823 = vmatprep.subr.mxu0 0.0
    %1824 = vmatpush1.msra.mxu0 0.0
    %1825 = vmatprep.subr.mxu0 0.0
    %1826 = vmatpush1.msra.mxu0 0.0
    %1827 = vmatprep.subr.mxu0 0.0
    %1828 = vmatpush1.msra.mxu0 0.0
    %1829 = vmatprep.subr.mxu0 0.0
    %1830 = vmatpush1.msra.mxu0 0.0
    %1831 = vmatprep.subr.mxu0 0.0
    %1832 = vmatpush1.msra.mxu0 0.0
    %1833 = vmatprep.subr.mxu0 0.0
    %1834 = vmatpush1.msra.mxu0 0.0
    %1835 = vmatprep.subr.mxu0 0.0
    %1836 = vmatpush1.msra.mxu0 0.0
    %1837 = vmatprep.subr.mxu0 0.0
    %1838 = vmatpush1.msra.mxu0 0.0
    %1839 = vmatprep.subr.mxu0 0.0
    %1840 = vmatpush1.msra.mxu0 0.0
    %1841 = vmatprep.subr.mxu0 0.0
    %1842 = vmatpush1.msra.mxu0 0.0
    %1843 = vmatprep.mubr.f32.mxu0 0.0
    %1844 = vmatmul.mubr.f32.gmra.mrb[0].mxu0 %v1702
    %v1845 = vpop.f32.mrb[0].mxu0
    %v1846 = vadd.f32 0.0, %v1845
    %v1847 = vpop.f32.mrb[0].mxu0
    %v1848 = vadd.f32 0.0, %v1847
    %1849 = vdwg.mxu0
    %v1850 = vadd.f32 %v1704, %v1775
    %v1851 = vadd.f32 %v1705, %v1777
    %v1852 = vadd.f32 %v1706, %v1846
    %v1853 = vadd.f32 %v1707, %v1848
    %v1854 = vxor.u32 %v1850, 2147483648
    %v1855 = vxor.u32 %v1851, 2147483648
    %v1856 = vxor.u32 %v1852, 2147483648
    %v1857 = vmul.f32 %v1854, 1.442695
    %v1858 = vpow.pop %v1857
    %v1859 = vmul.f32 %v1855, 1.442695
    %v1860 = vpow.pop %v1859
    %v1861 = vmul.f32 %v1856, 1.442695
    %v1862 = vpow.pop %v1861
    %v1863 = vadd.f32 %v1858, 1.0
    %v1864 = vadd.f32 %v1860, 1.0
    %v1865 = vadd.f32 %v1862, 1.0
    %v1866 = vrcp.pop %v1863
    %v1867 = vmul.f32 1.0, %v1866
    %v1868 = vrcp.pop %v1864
    %v1869 = vmul.f32 1.0, %v1868
    %v1870 = vrcp.pop %v1865
    %v1871 = vmul.f32 1.0, %v1870
    %v1872 = vtanh.pop %v1853
    %v1873 = vmul.f32 %v1869, %v1700
    %v1874 = vmul.f32 %v1867, %v1872
    %v1875 = vadd.f32 %v1873, %v1874
    %v1876 = vtanh.pop %v1875
    %v1877 = vmul.f32 %v1871, %v1876
    %1878 = vst [vmem:[#allocation3 + $0x38] sm:$0xff] %v1877
    %s1879 = smul.u32 8, 16
    %s1880 = smul.u32 %s1879, 4
    %s1881 = sshll.u32 %s1880, 4
    %1882 = dma.done [#allocation6], %s1881
    %s1883 = sshll.u32 %s1880, 4
    %1884 = dma.done %s60, %s1883
    %v1885 = vld [vmem:[#allocation3] sm:$0xff]
    %v1886 = vld [vmem:[#allocation3 + $0x8] sm:$0xff]
    %v1887 = vld [vmem:[#allocation3 + $0x10] sm:$0xff]
    %v1888 = vld [vmem:[#allocation3 + $0x18] sm:$0xff]
    %v1889 = vld [vmem:[#allocation3 + $0x20] sm:$0xff]
    %v1890 = vld [vmem:[#allocation3 + $0x28] sm:$0xff]
    %v1891 = vld [vmem:[#allocation3 + $0x30] sm:$0xff]
    %v1892 = vld [vmem:[#allocation3 + $0x38] sm:$0xff]
    %v1893 = vld [vmem:[#allocation4] sm:$0xff]
    %v1894 = vld [vmem:[#allocation4 + $0x8] sm:$0xff]
    %v1895 = vld [vmem:[#allocation4 + $0x10] sm:$0xff]
    %v1896 = vld [vmem:[#allocation4 + $0x18] sm:$0xff]
    %v1897 = vld [vmem:[#allocation4 + $0x20] sm:$0xff]
    %v1898 = vld [vmem:[#allocation4 + $0x28] sm:$0xff]
    %v1899 = vld [vmem:[#allocation4 + $0x30] sm:$0xff]
    %v1900 = vld [vmem:[#allocation4 + $0x38] sm:$0xff]
    %v1901 = vld [vmem:[#allocation4 + $0x40] sm:$0xff]
    %v1902 = vld [vmem:[#allocation4 + $0x48] sm:$0xff]
    %v1903 = vld [vmem:[#allocation4 + $0x50] sm:$0xff]
    %v1904 = vld [vmem:[#allocation4 + $0x58] sm:$0xff]
    %v1905 = vld [vmem:[#allocation4 + $0x60] sm:$0xff]
    %v1906 = vld [vmem:[#allocation4 + $0x68] sm:$0xff]
    %v1907 = vld [vmem:[#allocation4 + $0x70] sm:$0xff]
    %v1908 = vld [vmem:[#allocation4 + $0x78] sm:$0xff]
    %v1909 = vld [vmem:[#allocation4 + $0x80] sm:$0xff]
    %v1910 = vld [vmem:[#allocation4 + $0x88] sm:$0xff]
    %v1911 = vld [vmem:[#allocation4 + $0x90] sm:$0xff]
    %v1912 = vld [vmem:[#allocation4 + $0x98] sm:$0xff]
    %v1913 = vld [vmem:[#allocation4 + $0xa0] sm:$0xff]
    %v1914 = vld [vmem:[#allocation4 + $0xa8] sm:$0xff]
    %v1915 = vld [vmem:[#allocation4 + $0xb0] sm:$0xff]
    %v1916 = vld [vmem:[#allocation4 + $0xb8] sm:$0xff]
    %v1917 = vld [vmem:[#allocation4 + $0xc0] sm:$0xff]
    %v1918 = vld [vmem:[#allocation4 + $0xc8] sm:$0xff]
    %v1919 = vld [vmem:[#allocation4 + $0xd0] sm:$0xff]
    %v1920 = vld [vmem:[#allocation4 + $0xd8] sm:$0xff]
    %v1921 = vld [vmem:[#allocation4 + $0xe0] sm:$0xff]
    %v1922 = vld [vmem:[#allocation4 + $0xe8] sm:$0xff]
    %v1923 = vld [vmem:[#allocation4 + $0xf0] sm:$0xff]
    %v1924 = vld [vmem:[#allocation4 + $0xf8] sm:$0xff]
    %v1925 = vld [vmem:[#allocation4 + $0x100] sm:$0xff]
    %v1926 = vld [vmem:[#allocation4 + $0x108] sm:$0xff]
    %v1927 = vld [vmem:[#allocation4 + $0x110] sm:$0xff]
    %v1928 = vld [vmem:[#allocation4 + $0x118] sm:$0xff]
    %v1929 = vld [vmem:[#allocation4 + $0x120] sm:$0xff]
    %v1930 = vld [vmem:[#allocation4 + $0x128] sm:$0xff]
    %v1931 = vld [vmem:[#allocation4 + $0x130] sm:$0xff]
    %v1932 = vld [vmem:[#allocation4 + $0x138] sm:$0xff]
    %v1933 = vld [vmem:[#allocation4 + $0x140] sm:$0xff]
    %v1934 = vld [vmem:[#allocation4 + $0x148] sm:$0xff]
    %v1935 = vld [vmem:[#allocation4 + $0x150] sm:$0xff]
    %v1936 = vld [vmem:[#allocation4 + $0x158] sm:$0xff]
    %v1937 = vld [vmem:[#allocation4 + $0x160] sm:$0xff]
    %v1938 = vld [vmem:[#allocation4 + $0x168] sm:$0xff]
    %v1939 = vld [vmem:[#allocation4 + $0x170] sm:$0xff]
    %v1940 = vld [vmem:[#allocation4 + $0x178] sm:$0xff]
    %v1941 = vld [vmem:[#allocation4 + $0x180] sm:$0xff]
    %v1942 = vld [vmem:[#allocation4 + $0x188] sm:$0xff]
    %v1943 = vld [vmem:[#allocation4 + $0x190] sm:$0xff]
    %v1944 = vld [vmem:[#allocation4 + $0x198] sm:$0xff]
    %v1945 = vld [vmem:[#allocation4 + $0x1a0] sm:$0xff]
    %v1946 = vld [vmem:[#allocation4 + $0x1a8] sm:$0xff]
    %v1947 = vld [vmem:[#allocation4 + $0x1b0] sm:$0xff]
    %v1948 = vld [vmem:[#allocation4 + $0x1b8] sm:$0xff]
    %v1949 = vld [vmem:[#allocation4 + $0x1c0] sm:$0xff]
    %v1950 = vld [vmem:[#allocation4 + $0x1c8] sm:$0xff]
    %v1951 = vld [vmem:[#allocation4 + $0x1d0] sm:$0xff]
    %v1952 = vld [vmem:[#allocation4 + $0x1d8] sm:$0xff]
    %v1953 = vld [vmem:[#allocation4 + $0x1e0] sm:$0xff]
    %v1954 = vld [vmem:[#allocation4 + $0x1e8] sm:$0xff]
    %v1955 = vld [vmem:[#allocation4 + $0x1f0] sm:$0xff]
    %v1956 = vld [vmem:[#allocation4 + $0x1f8] sm:$0xff]
    %v1957 = vld [vmem:[%s6] sm:$0xf]
    %v1959 = vlaneseq
    %v1960 = vshrl.u32 %v1959, 7
    %v1961 = vsub.s32 0, %v1960
    %v1962 = vrot.slane %v1957, %v1961
    %v1963 = vlaneseq
    %v1964 = vshrl.u32 %v1963, 7
    %v1965 = vsub.s32 1, %v1964
    %v1966 = vrot.slane %v1957, %v1965
    %v1967 = vlaneseq
    %v1968 = vshrl.u32 %v1967, 7
    %v1969 = vsub.s32 2, %v1968
    %v1970 = vrot.slane %v1957, %v1969
    %v1971 = vlaneseq
    %v1972 = vshrl.u32 %v1971, 7
    %v1973 = vsub.s32 3, %v1972
    %v1974 = vrot.slane %v1957, %v1973
    %1979 = vmatprep.subr.mxu0 %v1894
    %1980 = vmatpush1.msra.mxu0 %v1893
    %1981 = vmatprep.subr.mxu0 %v1898
    %1982 = vmatpush1.msra.mxu0 %v1897
    %1983 = vmatprep.subr.mxu0 %v1902
    %1984 = vmatpush1.msra.mxu0 %v1901
    %1985 = vmatprep.subr.mxu0 %v1906
    %1986 = vmatpush1.msra.mxu0 %v1905
    %1987 = vmatprep.subr.mxu0 %v1910
    %1988 = vmatpush1.msra.mxu0 %v1909
    %1989 = vmatprep.subr.mxu0 %v1914
    %1990 = vmatpush1.msra.mxu0 %v1913
    %1991 = vmatprep.subr.mxu0 %v1918
    %1992 = vmatpush1.msra.mxu0 %v1917
    %1993 = vmatprep.subr.mxu0 %v1922
    %1994 = vmatpush1.msra.mxu0 %v1921
    %1995 = vmatprep.subr.mxu0 %v1926
    %1996 = vmatpush1.msra.mxu0 %v1925
    %1997 = vmatprep.subr.mxu0 %v1930
    %1998 = vmatpush1.msra.mxu0 %v1929
    %1999 = vmatprep.subr.mxu0 %v1934
    %2000 = vmatpush1.msra.mxu0 %v1933
    %2001 = vmatprep.subr.mxu0 %v1938
    %2002 = vmatpush1.msra.mxu0 %v1937
    %2003 = vmatprep.subr.mxu0 %v1942
    %2004 = vmatpush1.msra.mxu0 %v1941
    %2005 = vmatprep.subr.mxu0 %v1946
    %2006 = vmatpush1.msra.mxu0 %v1945
    %2007 = vmatprep.subr.mxu0 %v1950
    %2008 = vmatpush1.msra.mxu0 %v1949
    %2009 = vmatprep.subr.mxu0 %v1954
    %2010 = vmatpush1.msra.mxu0 %v1953
    %2011 = vmatprep.subr.mxu0 0.0
    %2012 = vmatpush1.msra.mxu0 0.0
    %2013 = vmatprep.subr.mxu0 0.0
    %2014 = vmatpush1.msra.mxu0 0.0
    %2015 = vmatprep.subr.mxu0 0.0
    %2016 = vmatpush1.msra.mxu0 0.0
    %2017 = vmatprep.subr.mxu0 0.0
    %2018 = vmatpush1.msra.mxu0 0.0
    %2019 = vmatprep.subr.mxu0 0.0
    %2020 = vmatpush1.msra.mxu0 0.0
    %2021 = vmatprep.subr.mxu0 0.0
    %2022 = vmatpush1.msra.mxu0 0.0
    %2023 = vmatprep.subr.mxu0 0.0
    %2024 = vmatpush1.msra.mxu0 0.0
    %2025 = vmatprep.subr.mxu0 0.0
    %2026 = vmatpush1.msra.mxu0 0.0
    %2027 = vmatprep.subr.mxu0 0.0
    %2028 = vmatpush1.msra.mxu0 0.0
    %2029 = vmatprep.subr.mxu0 0.0
    %2030 = vmatpush1.msra.mxu0 0.0
    %2031 = vmatprep.subr.mxu0 0.0
    %2032 = vmatpush1.msra.mxu0 0.0
    %2033 = vmatprep.subr.mxu0 0.0
    %2034 = vmatpush1.msra.mxu0 0.0
    %2035 = vmatprep.subr.mxu0 0.0
    %2036 = vmatpush1.msra.mxu0 0.0
    %2037 = vmatprep.subr.mxu0 0.0
    %2038 = vmatpush1.msra.mxu0 0.0
    %2039 = vmatprep.subr.mxu0 0.0
    %2040 = vmatpush1.msra.mxu0 0.0
    %2041 = vmatprep.subr.mxu0 0.0
    %2042 = vmatpush1.msra.mxu0 0.0
    %2043 = vmatprep.mubr.f32.mxu0 0.0
    %2044 = vmatmul.mubr.f32.gmra.mrb[0].mxu0 %v1885
    %v2045 = vpop.f32.mrb[0].mxu0
    %v2046 = vadd.f32 %v1962, %v2045
    %v2047 = vpop.f32.mrb[0].mxu0
    %v2048 = vadd.f32 %v1966, %v2047
    %2049 = vmatprep.mubr.f32.mxu0 0.0
    %2050 = vmatmul.mubr.f32.gmra.mrb[0].mxu0 %v1886
    %v2051 = vpop.f32.mrb[0].mxu0
    %v2052 = vadd.f32 %v1962, %v2051
    %v2053 = vpop.f32.mrb[0].mxu0
    %v2054 = vadd.f32 %v1966, %v2053
    %2055 = vmatprep.mubr.f32.mxu0 0.0
    %2056 = vmatmul.mubr.f32.gmra.mrb[0].mxu0 %v1887
    %v2057 = vpop.f32.mrb[0].mxu0
    %v2058 = vadd.f32 %v1962, %v2057
    %v2059 = vpop.f32.mrb[0].mxu0
    %v2060 = vadd.f32 %v1966, %v2059
    %2061 = vmatprep.mubr.f32.mxu0 0.0
    %2062 = vmatmul.mubr.f32.gmra.mrb[0].mxu0 %v1888
    %v2063 = vpop.f32.mrb[0].mxu0
    %v2064 = vadd.f32 %v1962, %v2063
    %v2065 = vpop.f32.mrb[0].mxu0
    %v2066 = vadd.f32 %v1966, %v2065
    %2067 = vmatprep.mubr.f32.mxu0 0.0
    %2068 = vmatmul.mubr.f32.gmra.mrb[0].mxu0 %v1889
    %v2069 = vpop.f32.mrb[0].mxu0
    %v2070 = vadd.f32 %v1962, %v2069
    %v2071 = vpop.f32.mrb[0].mxu0
    %v2072 = vadd.f32 %v1966, %v2071
    %2073 = vmatprep.mubr.f32.mxu0 0.0
    %2074 = vmatmul.mubr.f32.gmra.mrb[0].mxu0 %v1890
    %v2075 = vpop.f32.mrb[0].mxu0
    %v2076 = vadd.f32 %v1962, %v2075
    %v2077 = vpop.f32.mrb[0].mxu0
    %v2078 = vadd.f32 %v1966, %v2077
    %2079 = vmatprep.mubr.f32.mxu0 0.0
    %2080 = vmatmul.mubr.f32.gmra.mrb[0].mxu0 %v1891
    %v2081 = vpop.f32.mrb[0].mxu0
    %v2082 = vadd.f32 %v1962, %v2081
    %v2083 = vpop.f32.mrb[0].mxu0
    %v2084 = vadd.f32 %v1966, %v2083
    %2085 = vmatprep.mubr.f32.mxu0 0.0
    %2086 = vmatmul.mubr.f32.gmra.mrb[0].mxu0 %v1892
    %v2087 = vpop.f32.mrb[0].mxu0
    %v2088 = vadd.f32 %v1962, %v2087
    %v2089 = vpop.f32.mrb[0].mxu0
    %v2090 = vadd.f32 %v1966, %v2089
    %2091 = vdwg.mxu0
    %2092 = vmatprep.subr.mxu0 %v1896
    %2093 = vmatpush1.msra.mxu0 %v1895
    %2094 = vmatprep.subr.mxu0 %v1900
    %2095 = vmatpush1.msra.mxu0 %v1899
    %2096 = vmatprep.subr.mxu0 %v1904
    %2097 = vmatpush1.msra.mxu0 %v1903
    %2098 = vmatprep.subr.mxu0 %v1908
    %2099 = vmatpush1.msra.mxu0 %v1907
    %2100 = vmatprep.subr.mxu0 %v1912
    %2101 = vmatpush1.msra.mxu0 %v1911
    %2102 = vmatprep.subr.mxu0 %v1916
    %2103 = vmatpush1.msra.mxu0 %v1915
    %2104 = vmatprep.subr.mxu0 %v1920
    %2105 = vmatpush1.msra.mxu0 %v1919
    %2106 = vmatprep.subr.mxu0 %v1924
    %2107 = vmatpush1.msra.mxu0 %v1923
    %2108 = vmatprep.subr.mxu0 %v1928
    %2109 = vmatpush1.msra.mxu0 %v1927
    %2110 = vmatprep.subr.mxu0 %v1932
    %2111 = vmatpush1.msra.mxu0 %v1931
    %2112 = vmatprep.subr.mxu0 %v1936
    %2113 = vmatpush1.msra.mxu0 %v1935
    %2114 = vmatprep.subr.mxu0 %v1940
    %2115 = vmatpush1.msra.mxu0 %v1939
    %2116 = vmatprep.subr.mxu0 %v1944
    %2117 = vmatpush1.msra.mxu0 %v1943
    %2118 = vmatprep.subr.mxu0 %v1948
    %2119 = vmatpush1.msra.mxu0 %v1947
    %2120 = vmatprep.subr.mxu0 %v1952
    %2121 = vmatpush1.msra.mxu0 %v1951
    %2122 = vmatprep.subr.mxu0 %v1956
    %2123 = vmatpush1.msra.mxu0 %v1955
    %2124 = vmatprep.subr.mxu0 0.0
    %2125 = vmatpush1.msra.mxu0 0.0
    %2126 = vmatprep.subr.mxu0 0.0
    %2127 = vmatpush1.msra.mxu0 0.0
    %2128 = vmatprep.subr.mxu0 0.0
    %2129 = vmatpush1.msra.mxu0 0.0
    %2130 = vmatprep.subr.mxu0 0.0
    %2131 = vmatpush1.msra.mxu0 0.0
    %2132 = vmatprep.subr.mxu0 0.0
    %2133 = vmatpush1.msra.mxu0 0.0
    %2134 = vmatprep.subr.mxu0 0.0
    %2135 = vmatpush1.msra.mxu0 0.0
    %2136 = vmatprep.subr.mxu0 0.0
    %2137 = vmatpush1.msra.mxu0 0.0
    %2138 = vmatprep.subr.mxu0 0.0
    %2139 = vmatpush1.msra.mxu0 0.0
    %2140 = vmatprep.subr.mxu0 0.0
    %2141 = vmatpush1.msra.mxu0 0.0
    %2142 = vmatprep.subr.mxu0 0.0
    %2143 = vmatpush1.msra.mxu0 0.0
    %2144 = vmatprep.subr.mxu0 0.0
    %2145 = vmatpush1.msra.mxu0 0.0
    %2146 = vmatprep.subr.mxu0 0.0
    %2147 = vmatpush1.msra.mxu0 0.0
    %2148 = vmatprep.subr.mxu0 0.0
    %2149 = vmatpush1.msra.mxu0 0.0
    %2150 = vmatprep.subr.mxu0 0.0
    %2151 = vmatpush1.msra.mxu0 0.0
    %2152 = vmatprep.subr.mxu0 0.0
    %2153 = vmatpush1.msra.mxu0 0.0
    %2154 = vmatprep.subr.mxu0 0.0
    %2155 = vmatpush1.msra.mxu0 0.0
    %2156 = vmatprep.mubr.f32.mxu0 0.0
    %2157 = vmatmul.mubr.f32.gmra.mrb[0].mxu0 %v1885
    %v2158 = vpop.f32.mrb[0].mxu0
    %v2159 = vadd.f32 %v1970, %v2158
    %v2160 = vpop.f32.mrb[0].mxu0
    %v2161 = vadd.f32 %v1974, %v2160
    %2162 = vmatprep.mubr.f32.mxu0 0.0
    %2163 = vmatmul.mubr.f32.gmra.mrb[0].mxu0 %v1886
    %v2164 = vpop.f32.mrb[0].mxu0
    %v2165 = vadd.f32 %v1970, %v2164
    %v2166 = vpop.f32.mrb[0].mxu0
    %v2167 = vadd.f32 %v1974, %v2166
    %2168 = vmatprep.mubr.f32.mxu0 0.0
    %2169 = vmatmul.mubr.f32.gmra.mrb[0].mxu0 %v1887
    %v2170 = vpop.f32.mrb[0].mxu0
    %v2171 = vadd.f32 %v1970, %v2170
    %v2172 = vpop.f32.mrb[0].mxu0
    %v2173 = vadd.f32 %v1974, %v2172
    %2174 = vmatprep.mubr.f32.mxu0 0.0
    %2175 = vmatmul.mubr.f32.gmra.mrb[0].mxu0 %v1888
    %v2176 = vpop.f32.mrb[0].mxu0
    %v2177 = vadd.f32 %v1970, %v2176
    %v2178 = vpop.f32.mrb[0].mxu0
    %v2179 = vadd.f32 %v1974, %v2178
    %2180 = vmatprep.mubr.f32.mxu0 0.0
    %2181 = vmatmul.mubr.f32.gmra.mrb[0].mxu0 %v1889
    %v2182 = vpop.f32.mrb[0].mxu0
    %v2183 = vadd.f32 %v1970, %v2182
    %v2184 = vpop.f32.mrb[0].mxu0
    %v2185 = vadd.f32 %v1974, %v2184
    %2186 = vmatprep.mubr.f32.mxu0 0.0
    %2187 = vmatmul.mubr.f32.gmra.mrb[0].mxu0 %v1890
    %v2188 = vpop.f32.mrb[0].mxu0
    %v2189 = vadd.f32 %v1970, %v2188
    %v2190 = vpop.f32.mrb[0].mxu0
    %v2191 = vadd.f32 %v1974, %v2190
    %2192 = vmatprep.mubr.f32.mxu0 0.0
    %2193 = vmatmul.mubr.f32.gmra.mrb[0].mxu0 %v1891
    %v2194 = vpop.f32.mrb[0].mxu0
    %v2195 = vadd.f32 %v1970, %v2194
    %v2196 = vpop.f32.mrb[0].mxu0
    %v2197 = vadd.f32 %v1974, %v2196
    %2198 = vmatprep.mubr.f32.mxu0 0.0
    %2199 = vmatmul.mubr.f32.gmra.mrb[0].mxu0 %v1892
    %v2200 = vpop.f32.mrb[0].mxu0
    %v2201 = vadd.f32 %v1970, %v2200
    %v2202 = vpop.f32.mrb[0].mxu0
    %v2203 = vadd.f32 %v1974, %v2202
    %2204 = vdwg.mxu0
    %2205 = vst [vmem:[#allocation2] sm:$0xff] %v2046
    %2206 = vst [vmem:[#allocation2 + $0x8] sm:$0xff] %v2048
    %2207 = vst [vmem:[#allocation2 + $0x10] sm:$0xff] %v2159
    %2208 = vst [vmem:[#allocation2 + $0x18] sm:$0xff] %v2161
    %2209 = vst [vmem:[#allocation2 + $0x20] sm:$0xff] %v2052
    %2210 = vst [vmem:[#allocation2 + $0x28] sm:$0xff] %v2054
    %2211 = vst [vmem:[#allocation2 + $0x30] sm:$0xff] %v2165
    %2212 = vst [vmem:[#allocation2 + $0x38] sm:$0xff] %v2167
    %2213 = vst [vmem:[#allocation2 + $0x40] sm:$0xff] %v2058
    %2214 = vst [vmem:[#allocation2 + $0x48] sm:$0xff] %v2060
    %2215 = vst [vmem:[#allocation2 + $0x50] sm:$0xff] %v2171
    %2216 = vst [vmem:[#allocation2 + $0x58] sm:$0xff] %v2173
    %2217 = vst [vmem:[#allocation2 + $0x60] sm:$0xff] %v2064
    %2218 = vst [vmem:[#allocation2 + $0x68] sm:$0xff] %v2066
    %2219 = vst [vmem:[#allocation2 + $0x70] sm:$0xff] %v2177
    %2220 = vst [vmem:[#allocation2 + $0x78] sm:$0xff] %v2179
    %2221 = vst [vmem:[#allocation2 + $0x80] sm:$0xff] %v2070
    %2222 = vst [vmem:[#allocation2 + $0x88] sm:$0xff] %v2072
    %2223 = vst [vmem:[#allocation2 + $0x90] sm:$0xff] %v2183
    %2224 = vst [vmem:[#allocation2 + $0x98] sm:$0xff] %v2185
    %2225 = vst [vmem:[#allocation2 + $0xa0] sm:$0xff] %v2076
    %2226 = vst [vmem:[#allocation2 + $0xa8] sm:$0xff] %v2078
    %2227 = vst [vmem:[#allocation2 + $0xb0] sm:$0xff] %v2189
    %2228 = vst [vmem:[#allocation2 + $0xb8] sm:$0xff] %v2191
    %2229 = vst [vmem:[#allocation2 + $0xc0] sm:$0xff] %v2082
    %2230 = vst [vmem:[#allocation2 + $0xc8] sm:$0xff] %v2084
    %2231 = vst [vmem:[#allocation2 + $0xd0] sm:$0xff] %v2195
    %2232 = vst [vmem:[#allocation2 + $0xd8] sm:$0xff] %v2197
    %2233 = vst [vmem:[#allocation2 + $0xe0] sm:$0xff] %v2088
    %2234 = vst [vmem:[#allocation2 + $0xe8] sm:$0xff] %v2090
    %2235 = vst [vmem:[#allocation2 + $0xf0] sm:$0xff] %v2201
    %2236 = vst [vmem:[#allocation2 + $0xf8] sm:$0xff] %v2203
    %v2237 = vld [vmem:[#allocation5] sm:$0xff]
    %v2238 = vld [vmem:[#allocation5 + $0x8] sm:$0xff]
    %v2239 = vld [vmem:[#allocation5 + $0x10] sm:$0xff]
    %v2240 = vld [vmem:[#allocation5 + $0x18] sm:$0xff]
    %v2241 = vld [vmem:[#allocation5 + $0x20] sm:$0xff]
    %v2242 = vld [vmem:[#allocation5 + $0x28] sm:$0xff]
    %v2243 = vld [vmem:[#allocation5 + $0x30] sm:$0xff]
    %v2244 = vld [vmem:[#allocation5 + $0x38] sm:$0xff]
    %v2245 = vld [vmem:[#allocation5 + $0x40] sm:$0xff]
    %v2246 = vld [vmem:[#allocation5 + $0x48] sm:$0xff]
    %v2247 = vld [vmem:[#allocation5 + $0x50] sm:$0xff]
    %v2248 = vld [vmem:[#allocation5 + $0x58] sm:$0xff]
    %v2249 = vld [vmem:[#allocation5 + $0x60] sm:$0xff]
    %v2250 = vld [vmem:[#allocation5 + $0x68] sm:$0xff]
    %v2251 = vld [vmem:[#allocation5 + $0x70] sm:$0xff]
    %v2252 = vld [vmem:[#allocation5 + $0x78] sm:$0xff]
    %v2253 = vld [vmem:[#allocation5 + $0x80] sm:$0xff]
    %v2254 = vld [vmem:[#allocation5 + $0x88] sm:$0xff]
    %v2255 = vld [vmem:[#allocation5 + $0x90] sm:$0xff]
    %v2256 = vld [vmem:[#allocation5 + $0x98] sm:$0xff]
    %v2257 = vld [vmem:[#allocation5 + $0xa0] sm:$0xff]
    %v2258 = vld [vmem:[#allocation5 + $0xa8] sm:$0xff]
    %v2259 = vld [vmem:[#allocation5 + $0xb0] sm:$0xff]
    %v2260 = vld [vmem:[#allocation5 + $0xb8] sm:$0xff]
    %v2261 = vld [vmem:[#allocation5 + $0xc0] sm:$0xff]
    %v2262 = vld [vmem:[#allocation5 + $0xc8] sm:$0xff]
    %v2263 = vld [vmem:[#allocation5 + $0xd0] sm:$0xff]
    %v2264 = vld [vmem:[#allocation5 + $0xd8] sm:$0xff]
    %v2265 = vld [vmem:[#allocation5 + $0xe0] sm:$0xff]
    %v2266 = vld [vmem:[#allocation5 + $0xe8] sm:$0xff]
    %v2267 = vld [vmem:[#allocation5 + $0xf0] sm:$0xff]
    %v2268 = vld [vmem:[#allocation5 + $0xf8] sm:$0xff]
    %v2269 = vld [vmem:[#allocation5 + $0x100] sm:$0xff]
    %v2270 = vld [vmem:[#allocation5 + $0x108] sm:$0xff]
    %v2271 = vld [vmem:[#allocation5 + $0x110] sm:$0xff]
    %v2272 = vld [vmem:[#allocation5 + $0x118] sm:$0xff]
    %v2273 = vld [vmem:[#allocation5 + $0x120] sm:$0xff]
    %v2274 = vld [vmem:[#allocation5 + $0x128] sm:$0xff]
    %v2275 = vld [vmem:[#allocation5 + $0x130] sm:$0xff]
    %v2276 = vld [vmem:[#allocation5 + $0x138] sm:$0xff]
    %v2277 = vld [vmem:[#allocation5 + $0x140] sm:$0xff]
    %v2278 = vld [vmem:[#allocation5 + $0x148] sm:$0xff]
    %v2279 = vld [vmem:[#allocation5 + $0x150] sm:$0xff]
    %v2280 = vld [vmem:[#allocation5 + $0x158] sm:$0xff]
    %v2281 = vld [vmem:[#allocation5 + $0x160] sm:$0xff]
    %v2282 = vld [vmem:[#allocation5 + $0x168] sm:$0xff]
    %v2283 = vld [vmem:[#allocation5 + $0x170] sm:$0xff]
    %v2284 = vld [vmem:[#allocation5 + $0x178] sm:$0xff]
    %v2285 = vld [vmem:[#allocation5 + $0x180] sm:$0xff]
    %v2286 = vld [vmem:[#allocation5 + $0x188] sm:$0xff]
    %v2287 = vld [vmem:[#allocation5 + $0x190] sm:$0xff]
    %v2288 = vld [vmem:[#allocation5 + $0x198] sm:$0xff]
    %v2289 = vld [vmem:[#allocation5 + $0x1a0] sm:$0xff]
    %v2290 = vld [vmem:[#allocation5 + $0x1a8] sm:$0xff]
    %v2291 = vld [vmem:[#allocation5 + $0x1b0] sm:$0xff]
    %v2292 = vld [vmem:[#allocation5 + $0x1b8] sm:$0xff]
    %v2293 = vld [vmem:[#allocation5 + $0x1c0] sm:$0xff]
    %v2294 = vld [vmem:[#allocation5 + $0x1c8] sm:$0xff]
    %v2295 = vld [vmem:[#allocation5 + $0x1d0] sm:$0xff]
    %v2296 = vld [vmem:[#allocation5 + $0x1d8] sm:$0xff]
    %v2297 = vld [vmem:[#allocation5 + $0x1e0] sm:$0xff]
    %v2298 = vld [vmem:[#allocation5 + $0x1e8] sm:$0xff]
    %v2299 = vld [vmem:[#allocation5 + $0x1f0] sm:$0xff]
    %v2300 = vld [vmem:[#allocation5 + $0x1f8] sm:$0xff]
    %v2301 = vld [vmem:[#allocation2] sm:$0xff]
    %v2302 = vld [vmem:[#allocation2 + $0x8] sm:$0xff]
    %v2303 = vld [vmem:[#allocation2 + $0x10] sm:$0xff]
    %v2304 = vld [vmem:[#allocation2 + $0x18] sm:$0xff]
    %2305 = vmatprep.subr.mxu0 %v2238
    %2306 = vmatpush1.msra.mxu0 %v2237
    %2307 = vmatprep.subr.mxu0 %v2242
    %2308 = vmatpush1.msra.mxu0 %v2241
    %2309 = vmatprep.subr.mxu0 %v2246
    %2310 = vmatpush1.msra.mxu0 %v2245
    %2311 = vmatprep.subr.mxu0 %v2250
    %2312 = vmatpush1.msra.mxu0 %v2249
    %2313 = vmatprep.subr.mxu0 %v2254
    %2314 = vmatpush1.msra.mxu0 %v2253
    %2315 = vmatprep.subr.mxu0 %v2258
    %2316 = vmatpush1.msra.mxu0 %v2257
    %2317 = vmatprep.subr.mxu0 %v2262
    %2318 = vmatpush1.msra.mxu0 %v2261
    %2319 = vmatprep.subr.mxu0 %v2266
    %2320 = vmatpush1.msra.mxu0 %v2265
    %2321 = vmatprep.subr.mxu0 %v2270
    %2322 = vmatpush1.msra.mxu0 %v2269
    %2323 = vmatprep.subr.mxu0 %v2274
    %2324 = vmatpush1.msra.mxu0 %v2273
    %2325 = vmatprep.subr.mxu0 %v2278
    %2326 = vmatpush1.msra.mxu0 %v2277
    %2327 = vmatprep.subr.mxu0 %v2282
    %2328 = vmatpush1.msra.mxu0 %v2281
    %2329 = vmatprep.subr.mxu0 %v2286
    %2330 = vmatpush1.msra.mxu0 %v2285
    %2331 = vmatprep.subr.mxu0 %v2290
    %2332 = vmatpush1.msra.mxu0 %v2289
    %2333 = vmatprep.subr.mxu0 %v2294
    %2334 = vmatpush1.msra.mxu0 %v2293
    %2335 = vmatprep.subr.mxu0 %v2298
    %2336 = vmatpush1.msra.mxu0 %v2297
    %2337 = vmatprep.subr.mxu0 0.0
    %2338 = vmatpush1.msra.mxu0 0.0
    %2339 = vmatprep.subr.mxu0 0.0
    %2340 = vmatpush1.msra.mxu0 0.0
    %2341 = vmatprep.subr.mxu0 0.0
    %2342 = vmatpush1.msra.mxu0 0.0
    %2343 = vmatprep.subr.mxu0 0.0
    %2344 = vmatpush1.msra.mxu0 0.0
    %2345 = vmatprep.subr.mxu0 0.0
    %2346 = vmatpush1.msra.mxu0 0.0
    %2347 = vmatprep.subr.mxu0 0.0
    %2348 = vmatpush1.msra.mxu0 0.0
    %2349 = vmatprep.subr.mxu0 0.0
    %2350 = vmatpush1.msra.mxu0 0.0
    %2351 = vmatprep.subr.mxu0 0.0
    %2352 = vmatpush1.msra.mxu0 0.0
    %2353 = vmatprep.subr.mxu0 0.0
    %2354 = vmatpush1.msra.mxu0 0.0
    %2355 = vmatprep.subr.mxu0 0.0
    %2356 = vmatpush1.msra.mxu0 0.0
    %2357 = vmatprep.subr.mxu0 0.0
    %2358 = vmatpush1.msra.mxu0 0.0
    %2359 = vmatprep.subr.mxu0 0.0
    %2360 = vmatpush1.msra.mxu0 0.0
    %2361 = vmatprep.subr.mxu0 0.0
    %2362 = vmatpush1.msra.mxu0 0.0
    %2363 = vmatprep.subr.mxu0 0.0
    %2364 = vmatpush1.msra.mxu0 0.0
    %2365 = vmatprep.subr.mxu0 0.0
    %2366 = vmatpush1.msra.mxu0 0.0
    %2367 = vmatprep.subr.mxu0 0.0
    %2368 = vmatpush1.msra.mxu0 0.0
    %2369 = vmatprep.mubr.f32.mxu0 0.0
    %2370 = vmatmul.mubr.f32.gmra.mrb[0].mxu0 0.0
    %v2371 = vpop.f32.mrb[0].mxu0
    %v2372 = vadd.f32 0.0, %v2371
    %v2373 = vpop.f32.mrb[0].mxu0
    %v2374 = vadd.f32 0.0, %v2373
    %2375 = vdwg.mxu0
    %2376 = vmatprep.subr.mxu0 %v2240
    %2377 = vmatpush1.msra.mxu0 %v2239
    %2378 = vmatprep.subr.mxu0 %v2244
    %2379 = vmatpush1.msra.mxu0 %v2243
    %2380 = vmatprep.subr.mxu0 %v2248
    %2381 = vmatpush1.msra.mxu0 %v2247
    %2382 = vmatprep.subr.mxu0 %v2252
    %2383 = vmatpush1.msra.mxu0 %v2251
    %2384 = vmatprep.subr.mxu0 %v2256
    %2385 = vmatpush1.msra.mxu0 %v2255
    %2386 = vmatprep.subr.mxu0 %v2260
    %2387 = vmatpush1.msra.mxu0 %v2259
    %2388 = vmatprep.subr.mxu0 %v2264
    %2389 = vmatpush1.msra.mxu0 %v2263
    %2390 = vmatprep.subr.mxu0 %v2268
    %2391 = vmatpush1.msra.mxu0 %v2267
    %2392 = vmatprep.subr.mxu0 %v2272
    %2393 = vmatpush1.msra.mxu0 %v2271
    %2394 = vmatprep.subr.mxu0 %v2276
    %2395 = vmatpush1.msra.mxu0 %v2275
    %2396 = vmatprep.subr.mxu0 %v2280
    %2397 = vmatpush1.msra.mxu0 %v2279
    %2398 = vmatprep.subr.mxu0 %v2284
    %2399 = vmatpush1.msra.mxu0 %v2283
    %2400 = vmatprep.subr.mxu0 %v2288
    %2401 = vmatpush1.msra.mxu0 %v2287
    %2402 = vmatprep.subr.mxu0 %v2292
    %2403 = vmatpush1.msra.mxu0 %v2291
    %2404 = vmatprep.subr.mxu0 %v2296
    %2405 = vmatpush1.msra.mxu0 %v2295
    %2406 = vmatprep.subr.mxu0 %v2300
    %2407 = vmatpush1.msra.mxu0 %v2299
    %2408 = vmatprep.subr.mxu0 0.0
    %2409 = vmatpush1.msra.mxu0 0.0
    %2410 = vmatprep.subr.mxu0 0.0
    %2411 = vmatpush1.msra.mxu0 0.0
    %2412 = vmatprep.subr.mxu0 0.0
    %2413 = vmatpush1.msra.mxu0 0.0
    %2414 = vmatprep.subr.mxu0 0.0
    %2415 = vmatpush1.msra.mxu0 0.0
    %2416 = vmatprep.subr.mxu0 0.0
    %2417 = vmatpush1.msra.mxu0 0.0
    %2418 = vmatprep.subr.mxu0 0.0
    %2419 = vmatpush1.msra.mxu0 0.0
    %2420 = vmatprep.subr.mxu0 0.0
    %2421 = vmatpush1.msra.mxu0 0.0
    %2422 = vmatprep.subr.mxu0 0.0
    %2423 = vmatpush1.msra.mxu0 0.0
    %2424 = vmatprep.subr.mxu0 0.0
    %2425 = vmatpush1.msra.mxu0 0.0
    %2426 = vmatprep.subr.mxu0 0.0
    %2427 = vmatpush1.msra.mxu0 0.0
    %2428 = vmatprep.subr.mxu0 0.0
    %2429 = vmatpush1.msra.mxu0 0.0
    %2430 = vmatprep.subr.mxu0 0.0
    %2431 = vmatpush1.msra.mxu0 0.0
    %2432 = vmatprep.subr.mxu0 0.0
    %2433 = vmatpush1.msra.mxu0 0.0
    %2434 = vmatprep.subr.mxu0 0.0
    %2435 = vmatpush1.msra.mxu0 0.0
    %2436 = vmatprep.subr.mxu0 0.0
    %2437 = vmatpush1.msra.mxu0 0.0
    %2438 = vmatprep.subr.mxu0 0.0
    %2439 = vmatpush1.msra.mxu0 0.0
    %2440 = vmatprep.mubr.f32.mxu0 0.0
    %2441 = vmatmul.mubr.f32.gmra.mrb[0].mxu0 0.0
    %v2442 = vpop.f32.mrb[0].mxu0
    %v2443 = vadd.f32 0.0, %v2442
    %v2444 = vpop.f32.mrb[0].mxu0
    %v2445 = vadd.f32 0.0, %v2444
    %2446 = vdwg.mxu0
    %v2447 = vadd.f32 %v2301, %v2372
    %v2448 = vadd.f32 %v2302, %v2374
    %v2449 = vadd.f32 %v2303, %v2443
    %v2450 = vadd.f32 %v2304, %v2445
    %v2451 = vxor.u32 %v2447, 2147483648
    %v2452 = vxor.u32 %v2448, 2147483648
    %v2453 = vxor.u32 %v2449, 2147483648
    %v2454 = vmul.f32 %v2451, 1.442695
    %v2455 = vpow.pop %v2454
    %v2456 = vmul.f32 %v2452, 1.442695
    %v2457 = vpow.pop %v2456
    %v2458 = vmul.f32 %v2453, 1.442695
    %v2459 = vpow.pop %v2458
    %v2460 = vadd.f32 %v2455, 1.0
    %v2461 = vadd.f32 %v2457, 1.0
    %v2462 = vadd.f32 %v2459, 1.0
    %v2463 = vrcp.pop %v2460
    %v2464 = vmul.f32 1.0, %v2463
    %v2465 = vrcp.pop %v2461
    %v2466 = vmul.f32 1.0, %v2465
    %v2467 = vrcp.pop %v2462
    %v2468 = vmul.f32 1.0, %v2467
    %v2469 = vtanh.pop %v2450
    %v2470 = vmul.f32 %v2466, 0.0
    %v2471 = vmul.f32 %v2464, %v2469
    %v2472 = vadd.f32 %v2470, %v2471
    %v2473 = vtanh.pop %v2472
    %v2474 = vmul.f32 %v2468, %v2473
    %2475 = vst [vmem:[#allocation3] sm:$0xff] %v2474
    %v2476 = vld [vmem:[#allocation2 + $0x20] sm:$0xff]
    %v2477 = vld [vmem:[#allocation2 + $0x28] sm:$0xff]
    %v2478 = vld [vmem:[#allocation2 + $0x30] sm:$0xff]
    %v2479 = vld [vmem:[#allocation2 + $0x38] sm:$0xff]
    %2480 = vmatprep.subr.mxu0 %v2238
    %2481 = vmatpush1.msra.mxu0 %v2237
    %2482 = vmatprep.subr.mxu0 %v2242
    %2483 = vmatpush1.msra.mxu0 %v2241
    %2484 = vmatprep.subr.mxu0 %v2246
    %2485 = vmatpush1.msra.mxu0 %v2245
    %2486 = vmatprep.subr.mxu0 %v2250
    %2487 = vmatpush1.msra.mxu0 %v2249
    %2488 = vmatprep.subr.mxu0 %v2254
    %2489 = vmatpush1.msra.mxu0 %v2253
    %2490 = vmatprep.subr.mxu0 %v2258
    %2491 = vmatpush1.msra.mxu0 %v2257
    %2492 = vmatprep.subr.mxu0 %v2262
    %2493 = vmatpush1.msra.mxu0 %v2261
    %2494 = vmatprep.subr.mxu0 %v2266
    %2495 = vmatpush1.msra.mxu0 %v2265
    %2496 = vmatprep.subr.mxu0 %v2270
    %2497 = vmatpush1.msra.mxu0 %v2269
    %2498 = vmatprep.subr.mxu0 %v2274
    %2499 = vmatpush1.msra.mxu0 %v2273
    %2500 = vmatprep.subr.mxu0 %v2278
    %2501 = vmatpush1.msra.mxu0 %v2277
    %2502 = vmatprep.subr.mxu0 %v2282
    %2503 = vmatpush1.msra.mxu0 %v2281
    %2504 = vmatprep.subr.mxu0 %v2286
    %2505 = vmatpush1.msra.mxu0 %v2285
    %2506 = vmatprep.subr.mxu0 %v2290
    %2507 = vmatpush1.msra.mxu0 %v2289
    %2508 = vmatprep.subr.mxu0 %v2294
    %2509 = vmatpush1.msra.mxu0 %v2293
    %2510 = vmatprep.subr.mxu0 %v2298
    %2511 = vmatpush1.msra.mxu0 %v2297
    %2512 = vmatprep.subr.mxu0 0.0
    %2513 = vmatpush1.msra.mxu0 0.0
    %2514 = vmatprep.subr.mxu0 0.0
    %2515 = vmatpush1.msra.mxu0 0.0
    %2516 = vmatprep.subr.mxu0 0.0
    %2517 = vmatpush1.msra.mxu0 0.0
    %2518 = vmatprep.subr.mxu0 0.0
    %2519 = vmatpush1.msra.mxu0 0.0
    %2520 = vmatprep.subr.mxu0 0.0
    %2521 = vmatpush1.msra.mxu0 0.0
    %2522 = vmatprep.subr.mxu0 0.0
    %2523 = vmatpush1.msra.mxu0 0.0
    %2524 = vmatprep.subr.mxu0 0.0
    %2525 = vmatpush1.msra.mxu0 0.0
    %2526 = vmatprep.subr.mxu0 0.0
    %2527 = vmatpush1.msra.mxu0 0.0
    %2528 = vmatprep.subr.mxu0 0.0
    %2529 = vmatpush1.msra.mxu0 0.0
    %2530 = vmatprep.subr.mxu0 0.0
    %2531 = vmatpush1.msra.mxu0 0.0
    %2532 = vmatprep.subr.mxu0 0.0
    %2533 = vmatpush1.msra.mxu0 0.0
    %2534 = vmatprep.subr.mxu0 0.0
    %2535 = vmatpush1.msra.mxu0 0.0
    %2536 = vmatprep.subr.mxu0 0.0
    %2537 = vmatpush1.msra.mxu0 0.0
    %2538 = vmatprep.subr.mxu0 0.0
    %2539 = vmatpush1.msra.mxu0 0.0
    %2540 = vmatprep.subr.mxu0 0.0
    %2541 = vmatpush1.msra.mxu0 0.0
    %2542 = vmatprep.subr.mxu0 0.0
    %2543 = vmatpush1.msra.mxu0 0.0
    %2544 = vmatprep.mubr.f32.mxu0 0.0
    %2545 = vmatmul.mubr.f32.gmra.mrb[0].mxu0 %v2474
    %v2546 = vpop.f32.mrb[0].mxu0
    %v2547 = vadd.f32 0.0, %v2546
    %v2548 = vpop.f32.mrb[0].mxu0
    %v2549 = vadd.f32 0.0, %v2548
    %2550 = vdwg.mxu0
    %2551 = vmatprep.subr.mxu0 %v2240
    %2552 = vmatpush1.msra.mxu0 %v2239
    %2553 = vmatprep.subr.mxu0 %v2244
    %2554 = vmatpush1.msra.mxu0 %v2243
    %2555 = vmatprep.subr.mxu0 %v2248
    %2556 = vmatpush1.msra.mxu0 %v2247
    %2557 = vmatprep.subr.mxu0 %v2252
    %2558 = vmatpush1.msra.mxu0 %v2251
    %2559 = vmatprep.subr.mxu0 %v2256
    %2560 = vmatpush1.msra.mxu0 %v2255
    %2561 = vmatprep.subr.mxu0 %v2260
    %2562 = vmatpush1.msra.mxu0 %v2259
    %2563 = vmatprep.subr.mxu0 %v2264
    %2564 = vmatpush1.msra.mxu0 %v2263
    %2565 = vmatprep.subr.mxu0 %v2268
    %2566 = vmatpush1.msra.mxu0 %v2267
    %2567 = vmatprep.subr.mxu0 %v2272
    %2568 = vmatpush1.msra.mxu0 %v2271
    %2569 = vmatprep.subr.mxu0 %v2276
    %2570 = vmatpush1.msra.mxu0 %v2275
    %2571 = vmatprep.subr.mxu0 %v2280
    %2572 = vmatpush1.msra.mxu0 %v2279
    %2573 = vmatprep.subr.mxu0 %v2284
    %2574 = vmatpush1.msra.mxu0 %v2283
    %2575 = vmatprep.subr.mxu0 %v2288
    %2576 = vmatpush1.msra.mxu0 %v2287
    %2577 = vmatprep.subr.mxu0 %v2292
    %2578 = vmatpush1.msra.mxu0 %v2291
    %2579 = vmatprep.subr.mxu0 %v2296
    %2580 = vmatpush1.msra.mxu0 %v2295
    %2581 = vmatprep.subr.mxu0 %v2300
    %2582 = vmatpush1.msra.mxu0 %v2299
    %2583 = vmatprep.subr.mxu0 0.0
    %2584 = vmatpush1.msra.mxu0 0.0
    %2585 = vmatprep.subr.mxu0 0.0
    %2586 = vmatpush1.msra.mxu0 0.0
    %2587 = vmatprep.subr.mxu0 0.0
    %2588 = vmatpush1.msra.mxu0 0.0
    %2589 = vmatprep.subr.mxu0 0.0
    %2590 = vmatpush1.msra.mxu0 0.0
    %2591 = vmatprep.subr.mxu0 0.0
    %2592 = vmatpush1.msra.mxu0 0.0
    %2593 = vmatprep.subr.mxu0 0.0
    %2594 = vmatpush1.msra.mxu0 0.0
    %2595 = vmatprep.subr.mxu0 0.0
    %2596 = vmatpush1.msra.mxu0 0.0
    %2597 = vmatprep.subr.mxu0 0.0
    %2598 = vmatpush1.msra.mxu0 0.0
    %2599 = vmatprep.subr.mxu0 0.0
    %2600 = vmatpush1.msra.mxu0 0.0
    %2601 = vmatprep.subr.mxu0 0.0
    %2602 = vmatpush1.msra.mxu0 0.0
    %2603 = vmatprep.subr.mxu0 0.0
    %2604 = vmatpush1.msra.mxu0 0.0
    %2605 = vmatprep.subr.mxu0 0.0
    %2606 = vmatpush1.msra.mxu0 0.0
    %2607 = vmatprep.subr.mxu0 0.0
    %2608 = vmatpush1.msra.mxu0 0.0
    %2609 = vmatprep.subr.mxu0 0.0
    %2610 = vmatpush1.msra.mxu0 0.0
    %2611 = vmatprep.subr.mxu0 0.0
    %2612 = vmatpush1.msra.mxu0 0.0
    %2613 = vmatprep.subr.mxu0 0.0
    %2614 = vmatpush1.msra.mxu0 0.0
    %2615 = vmatprep.mubr.f32.mxu0 0.0
    %2616 = vmatmul.mubr.f32.gmra.mrb[0].mxu0 %v2474
    %v2617 = vpop.f32.mrb[0].mxu0
    %v2618 = vadd.f32 0.0, %v2617
    %v2619 = vpop.f32.mrb[0].mxu0
    %v2620 = vadd.f32 0.0, %v2619
    %2621 = vdwg.mxu0
    %v2622 = vadd.f32 %v2476, %v2547
    %v2623 = vadd.f32 %v2477, %v2549
    %v2624 = vadd.f32 %v2478, %v2618
    %v2625 = vadd.f32 %v2479, %v2620
    %v2626 = vxor.u32 %v2622, 2147483648
    %v2627 = vxor.u32 %v2623, 2147483648
    %v2628 = vxor.u32 %v2624, 2147483648
    %v2629 = vmul.f32 %v2626, 1.442695
    %v2630 = vpow.pop %v2629
    %v2631 = vmul.f32 %v2627, 1.442695
    %v2632 = vpow.pop %v2631
    %v2633 = vmul.f32 %v2628, 1.442695
    %v2634 = vpow.pop %v2633
    %v2635 = vadd.f32 %v2630, 1.0
    %v2636 = vadd.f32 %v2632, 1.0
    %v2637 = vadd.f32 %v2634, 1.0
    %v2638 = vrcp.pop %v2635
    %v2639 = vmul.f32 1.0, %v2638
    %v2640 = vrcp.pop %v2636
    %v2641 = vmul.f32 1.0, %v2640
    %v2642 = vrcp.pop %v2637
    %v2643 = vmul.f32 1.0, %v2642
    %v2644 = vtanh.pop %v2625
    %v2645 = vmul.f32 %v2641, %v2472
    %v2646 = vmul.f32 %v2639, %v2644
    %v2647 = vadd.f32 %v2645, %v2646
    %v2648 = vtanh.pop %v2647
    %v2649 = vmul.f32 %v2643, %v2648
    %2650 = vst [vmem:[#allocation3 + $0x8] sm:$0xff] %v2649
    %v2651 = vld [vmem:[#allocation2 + $0x40] sm:$0xff]
    %v2652 = vld [vmem:[#allocation2 + $0x48] sm:$0xff]
    %v2653 = vld [vmem:[#allocation2 + $0x50] sm:$0xff]
    %v2654 = vld [vmem:[#allocation2 + $0x58] sm:$0xff]
    %2655 = vmatprep.subr.mxu0 %v2238
    %2656 = vmatpush1.msra.mxu0 %v2237
    %2657 = vmatprep.subr.mxu0 %v2242
    %2658 = vmatpush1.msra.mxu0 %v2241
    %2659 = vmatprep.subr.mxu0 %v2246
    %2660 = vmatpush1.msra.mxu0 %v2245
    %2661 = vmatprep.subr.mxu0 %v2250
    %2662 = vmatpush1.msra.mxu0 %v2249
    %2663 = vmatprep.subr.mxu0 %v2254
    %2664 = vmatpush1.msra.mxu0 %v2253
    %2665 = vmatprep.subr.mxu0 %v2258
    %2666 = vmatpush1.msra.mxu0 %v2257
    %2667 = vmatprep.subr.mxu0 %v2262
    %2668 = vmatpush1.msra.mxu0 %v2261
    %2669 = vmatprep.subr.mxu0 %v2266
    %2670 = vmatpush1.msra.mxu0 %v2265
    %2671 = vmatprep.subr.mxu0 %v2270
    %2672 = vmatpush1.msra.mxu0 %v2269
    %2673 = vmatprep.subr.mxu0 %v2274
    %2674 = vmatpush1.msra.mxu0 %v2273
    %2675 = vmatprep.subr.mxu0 %v2278
    %2676 = vmatpush1.msra.mxu0 %v2277
    %2677 = vmatprep.subr.mxu0 %v2282
    %2678 = vmatpush1.msra.mxu0 %v2281
    %2679 = vmatprep.subr.mxu0 %v2286
    %2680 = vmatpush1.msra.mxu0 %v2285
    %2681 = vmatprep.subr.mxu0 %v2290
    %2682 = vmatpush1.msra.mxu0 %v2289
    %2683 = vmatprep.subr.mxu0 %v2294
    %2684 = vmatpush1.msra.mxu0 %v2293
    %2685 = vmatprep.subr.mxu0 %v2298
    %2686 = vmatpush1.msra.mxu0 %v2297
    %2687 = vmatprep.subr.mxu0 0.0
    %2688 = vmatpush1.msra.mxu0 0.0
    %2689 = vmatprep.subr.mxu0 0.0
    %2690 = vmatpush1.msra.mxu0 0.0
    %2691 = vmatprep.subr.mxu0 0.0
    %2692 = vmatpush1.msra.mxu0 0.0
    %2693 = vmatprep.subr.mxu0 0.0
    %2694 = vmatpush1.msra.mxu0 0.0
    %2695 = vmatprep.subr.mxu0 0.0
    %2696 = vmatpush1.msra.mxu0 0.0
    %2697 = vmatprep.subr.mxu0 0.0
    %2698 = vmatpush1.msra.mxu0 0.0
    %2699 = vmatprep.subr.mxu0 0.0
    %2700 = vmatpush1.msra.mxu0 0.0
    %2701 = vmatprep.subr.mxu0 0.0
    %2702 = vmatpush1.msra.mxu0 0.0
    %2703 = vmatprep.subr.mxu0 0.0
    %2704 = vmatpush1.msra.mxu0 0.0
    %2705 = vmatprep.subr.mxu0 0.0
    %2706 = vmatpush1.msra.mxu0 0.0
    %2707 = vmatprep.subr.mxu0 0.0
    %2708 = vmatpush1.msra.mxu0 0.0
    %2709 = vmatprep.subr.mxu0 0.0
    %2710 = vmatpush1.msra.mxu0 0.0
    %2711 = vmatprep.subr.mxu0 0.0
    %2712 = vmatpush1.msra.mxu0 0.0
    %2713 = vmatprep.subr.mxu0 0.0
    %2714 = vmatpush1.msra.mxu0 0.0
    %2715 = vmatprep.subr.mxu0 0.0
    %2716 = vmatpush1.msra.mxu0 0.0
    %2717 = vmatprep.subr.mxu0 0.0
    %2718 = vmatpush1.msra.mxu0 0.0
    %2719 = vmatprep.mubr.f32.mxu0 0.0
    %2720 = vmatmul.mubr.f32.gmra.mrb[0].mxu0 %v2649
    %v2721 = vpop.f32.mrb[0].mxu0
    %v2722 = vadd.f32 0.0, %v2721
    %v2723 = vpop.f32.mrb[0].mxu0
    %v2724 = vadd.f32 0.0, %v2723
    %2725 = vdwg.mxu0
    %2726 = vmatprep.subr.mxu0 %v2240
    %2727 = vmatpush1.msra.mxu0 %v2239
    %2728 = vmatprep.subr.mxu0 %v2244
    %2729 = vmatpush1.msra.mxu0 %v2243
    %2730 = vmatprep.subr.mxu0 %v2248
    %2731 = vmatpush1.msra.mxu0 %v2247
    %2732 = vmatprep.subr.mxu0 %v2252
    %2733 = vmatpush1.msra.mxu0 %v2251
    %2734 = vmatprep.subr.mxu0 %v2256
    %2735 = vmatpush1.msra.mxu0 %v2255
    %2736 = vmatprep.subr.mxu0 %v2260
    %2737 = vmatpush1.msra.mxu0 %v2259
    %2738 = vmatprep.subr.mxu0 %v2264
    %2739 = vmatpush1.msra.mxu0 %v2263
    %2740 = vmatprep.subr.mxu0 %v2268
    %2741 = vmatpush1.msra.mxu0 %v2267
    %2742 = vmatprep.subr.mxu0 %v2272
    %2743 = vmatpush1.msra.mxu0 %v2271
    %2744 = vmatprep.subr.mxu0 %v2276
    %2745 = vmatpush1.msra.mxu0 %v2275
    %2746 = vmatprep.subr.mxu0 %v2280
    %2747 = vmatpush1.msra.mxu0 %v2279
    %2748 = vmatprep.subr.mxu0 %v2284
    %2749 = vmatpush1.msra.mxu0 %v2283
    %2750 = vmatprep.subr.mxu0 %v2288
    %2751 = vmatpush1.msra.mxu0 %v2287
    %2752 = vmatprep.subr.mxu0 %v2292
    %2753 = vmatpush1.msra.mxu0 %v2291
    %2754 = vmatprep.subr.mxu0 %v2296
    %2755 = vmatpush1.msra.mxu0 %v2295
    %2756 = vmatprep.subr.mxu0 %v2300
    %2757 = vmatpush1.msra.mxu0 %v2299
    %2758 = vmatprep.subr.mxu0 0.0
    %2759 = vmatpush1.msra.mxu0 0.0
    %2760 = vmatprep.subr.mxu0 0.0
    %2761 = vmatpush1.msra.mxu0 0.0
    %2762 = vmatprep.subr.mxu0 0.0
    %2763 = vmatpush1.msra.mxu0 0.0
    %2764 = vmatprep.subr.mxu0 0.0
    %2765 = vmatpush1.msra.mxu0 0.0
    %2766 = vmatprep.subr.mxu0 0.0
    %2767 = vmatpush1.msra.mxu0 0.0
    %2768 = vmatprep.subr.mxu0 0.0
    %2769 = vmatpush1.msra.mxu0 0.0
    %2770 = vmatprep.subr.mxu0 0.0
    %2771 = vmatpush1.msra.mxu0 0.0
    %2772 = vmatprep.subr.mxu0 0.0
    %2773 = vmatpush1.msra.mxu0 0.0
    %2774 = vmatprep.subr.mxu0 0.0
    %2775 = vmatpush1.msra.mxu0 0.0
    %2776 = vmatprep.subr.mxu0 0.0
    %2777 = vmatpush1.msra.mxu0 0.0
    %2778 = vmatprep.subr.mxu0 0.0
    %2779 = vmatpush1.msra.mxu0 0.0
    %2780 = vmatprep.subr.mxu0 0.0
    %2781 = vmatpush1.msra.mxu0 0.0
    %2782 = vmatprep.subr.mxu0 0.0
    %2783 = vmatpush1.msra.mxu0 0.0
    %2784 = vmatprep.subr.mxu0 0.0
    %2785 = vmatpush1.msra.mxu0 0.0
    %2786 = vmatprep.subr.mxu0 0.0
    %2787 = vmatpush1.msra.mxu0 0.0
    %2788 = vmatprep.subr.mxu0 0.0
    %2789 = vmatpush1.msra.mxu0 0.0
    %2790 = vmatprep.mubr.f32.mxu0 0.0
    %2791 = vmatmul.mubr.f32.gmra.mrb[0].mxu0 %v2649
    %v2792 = vpop.f32.mrb[0].mxu0
    %v2793 = vadd.f32 0.0, %v2792
    %v2794 = vpop.f32.mrb[0].mxu0
    %v2795 = vadd.f32 0.0, %v2794
    %2796 = vdwg.mxu0
    %v2797 = vadd.f32 %v2651, %v2722
    %v2798 = vadd.f32 %v2652, %v2724
    %v2799 = vadd.f32 %v2653, %v2793
    %v2800 = vadd.f32 %v2654, %v2795
    %v2801 = vxor.u32 %v2797, 2147483648
    %v2802 = vxor.u32 %v2798, 2147483648
    %v2803 = vxor.u32 %v2799, 2147483648
    %v2804 = vmul.f32 %v2801, 1.442695
    %v2805 = vpow.pop %v2804
    %v2806 = vmul.f32 %v2802, 1.442695
    %v2807 = vpow.pop %v2806
    %v2808 = vmul.f32 %v2803, 1.442695
    %v2809 = vpow.pop %v2808
    %v2810 = vadd.f32 %v2805, 1.0
    %v2811 = vadd.f32 %v2807, 1.0
    %v2812 = vadd.f32 %v2809, 1.0
    %v2813 = vrcp.pop %v2810
    %v2814 = vmul.f32 1.0, %v2813
    %v2815 = vrcp.pop %v2811
    %v2816 = vmul.f32 1.0, %v2815
    %v2817 = vrcp.pop %v2812
    %v2818 = vmul.f32 1.0, %v2817
    %v2819 = vtanh.pop %v2800
    %v2820 = vmul.f32 %v2816, %v2647
    %v2821 = vmul.f32 %v2814, %v2819
    %v2822 = vadd.f32 %v2820, %v2821
    %v2823 = vtanh.pop %v2822
    %v2824 = vmul.f32 %v2818, %v2823
    %2825 = vst [vmem:[#allocation3 + $0x10] sm:$0xff] %v2824
    %v2826 = vld [vmem:[#allocation2 + $0x60] sm:$0xff]
    %v2827 = vld [vmem:[#allocation2 + $0x68] sm:$0xff]
    %v2828 = vld [vmem:[#allocation2 + $0x70] sm:$0xff]
    %v2829 = vld [vmem:[#allocation2 + $0x78] sm:$0xff]
    %2830 = vmatprep.subr.mxu0 %v2238
    %2831 = vmatpush1.msra.mxu0 %v2237
    %2832 = vmatprep.subr.mxu0 %v2242
    %2833 = vmatpush1.msra.mxu0 %v2241
    %2834 = vmatprep.subr.mxu0 %v2246
    %2835 = vmatpush1.msra.mxu0 %v2245
    %2836 = vmatprep.subr.mxu0 %v2250
    %2837 = vmatpush1.msra.mxu0 %v2249
    %2838 = vmatprep.subr.mxu0 %v2254
    %2839 = vmatpush1.msra.mxu0 %v2253
    %2840 = vmatprep.subr.mxu0 %v2258
    %2841 = vmatpush1.msra.mxu0 %v2257
    %2842 = vmatprep.subr.mxu0 %v2262
    %2843 = vmatpush1.msra.mxu0 %v2261
    %2844 = vmatprep.subr.mxu0 %v2266
    %2845 = vmatpush1.msra.mxu0 %v2265
    %2846 = vmatprep.subr.mxu0 %v2270
    %2847 = vmatpush1.msra.mxu0 %v2269
    %2848 = vmatprep.subr.mxu0 %v2274
    %2849 = vmatpush1.msra.mxu0 %v2273
    %2850 = vmatprep.subr.mxu0 %v2278
    %2851 = vmatpush1.msra.mxu0 %v2277
    %2852 = vmatprep.subr.mxu0 %v2282
    %2853 = vmatpush1.msra.mxu0 %v2281
    %2854 = vmatprep.subr.mxu0 %v2286
    %2855 = vmatpush1.msra.mxu0 %v2285
    %2856 = vmatprep.subr.mxu0 %v2290
    %2857 = vmatpush1.msra.mxu0 %v2289
    %2858 = vmatprep.subr.mxu0 %v2294
    %2859 = vmatpush1.msra.mxu0 %v2293
    %2860 = vmatprep.subr.mxu0 %v2298
    %2861 = vmatpush1.msra.mxu0 %v2297
    %2862 = vmatprep.subr.mxu0 0.0
    %2863 = vmatpush1.msra.mxu0 0.0
    %2864 = vmatprep.subr.mxu0 0.0
    %2865 = vmatpush1.msra.mxu0 0.0
    %2866 = vmatprep.subr.mxu0 0.0
    %2867 = vmatpush1.msra.mxu0 0.0
    %2868 = vmatprep.subr.mxu0 0.0
    %2869 = vmatpush1.msra.mxu0 0.0
    %2870 = vmatprep.subr.mxu0 0.0
    %2871 = vmatpush1.msra.mxu0 0.0
    %2872 = vmatprep.subr.mxu0 0.0
    %2873 = vmatpush1.msra.mxu0 0.0
    %2874 = vmatprep.subr.mxu0 0.0
    %2875 = vmatpush1.msra.mxu0 0.0
    %2876 = vmatprep.subr.mxu0 0.0
    %2877 = vmatpush1.msra.mxu0 0.0
    %2878 = vmatprep.subr.mxu0 0.0
    %2879 = vmatpush1.msra.mxu0 0.0
    %2880 = vmatprep.subr.mxu0 0.0
    %2881 = vmatpush1.msra.mxu0 0.0
    %2882 = vmatprep.subr.mxu0 0.0
    %2883 = vmatpush1.msra.mxu0 0.0
    %2884 = vmatprep.subr.mxu0 0.0
    %2885 = vmatpush1.msra.mxu0 0.0
    %2886 = vmatprep.subr.mxu0 0.0
    %2887 = vmatpush1.msra.mxu0 0.0
    %2888 = vmatprep.subr.mxu0 0.0
    %2889 = vmatpush1.msra.mxu0 0.0
    %2890 = vmatprep.subr.mxu0 0.0
    %2891 = vmatpush1.msra.mxu0 0.0
    %2892 = vmatprep.subr.mxu0 0.0
    %2893 = vmatpush1.msra.mxu0 0.0
    %2894 = vmatprep.mubr.f32.mxu0 0.0
    %2895 = vmatmul.mubr.f32.gmra.mrb[0].mxu0 %v2824
    %v2896 = vpop.f32.mrb[0].mxu0
    %v2897 = vadd.f32 0.0, %v2896
    %v2898 = vpop.f32.mrb[0].mxu0
    %v2899 = vadd.f32 0.0, %v2898
    %2900 = vdwg.mxu0
    %2901 = vmatprep.subr.mxu0 %v2240
    %2902 = vmatpush1.msra.mxu0 %v2239
    %2903 = vmatprep.subr.mxu0 %v2244
    %2904 = vmatpush1.msra.mxu0 %v2243
    %2905 = vmatprep.subr.mxu0 %v2248
    %2906 = vmatpush1.msra.mxu0 %v2247
    %2907 = vmatprep.subr.mxu0 %v2252
    %2908 = vmatpush1.msra.mxu0 %v2251
    %2909 = vmatprep.subr.mxu0 %v2256
    %2910 = vmatpush1.msra.mxu0 %v2255
    %2911 = vmatprep.subr.mxu0 %v2260
    %2912 = vmatpush1.msra.mxu0 %v2259
    %2913 = vmatprep.subr.mxu0 %v2264
    %2914 = vmatpush1.msra.mxu0 %v2263
    %2915 = vmatprep.subr.mxu0 %v2268
    %2916 = vmatpush1.msra.mxu0 %v2267
    %2917 = vmatprep.subr.mxu0 %v2272
    %2918 = vmatpush1.msra.mxu0 %v2271
    %2919 = vmatprep.subr.mxu0 %v2276
    %2920 = vmatpush1.msra.mxu0 %v2275
    %2921 = vmatprep.subr.mxu0 %v2280
    %2922 = vmatpush1.msra.mxu0 %v2279
    %2923 = vmatprep.subr.mxu0 %v2284
    %2924 = vmatpush1.msra.mxu0 %v2283
    %2925 = vmatprep.subr.mxu0 %v2288
    %2926 = vmatpush1.msra.mxu0 %v2287
    %2927 = vmatprep.subr.mxu0 %v2292
    %2928 = vmatpush1.msra.mxu0 %v2291
    %2929 = vmatprep.subr.mxu0 %v2296
    %2930 = vmatpush1.msra.mxu0 %v2295
    %2931 = vmatprep.subr.mxu0 %v2300
    %2932 = vmatpush1.msra.mxu0 %v2299
    %2933 = vmatprep.subr.mxu0 0.0
    %2934 = vmatpush1.msra.mxu0 0.0
    %2935 = vmatprep.subr.mxu0 0.0
    %2936 = vmatpush1.msra.mxu0 0.0
    %2937 = vmatprep.subr.mxu0 0.0
    %2938 = vmatpush1.msra.mxu0 0.0
    %2939 = vmatprep.subr.mxu0 0.0
    %2940 = vmatpush1.msra.mxu0 0.0
    %2941 = vmatprep.subr.mxu0 0.0
    %2942 = vmatpush1.msra.mxu0 0.0
    %2943 = vmatprep.subr.mxu0 0.0
    %2944 = vmatpush1.msra.mxu0 0.0
    %2945 = vmatprep.subr.mxu0 0.0
    %2946 = vmatpush1.msra.mxu0 0.0
    %2947 = vmatprep.subr.mxu0 0.0
    %2948 = vmatpush1.msra.mxu0 0.0
    %2949 = vmatprep.subr.mxu0 0.0
    %2950 = vmatpush1.msra.mxu0 0.0
    %2951 = vmatprep.subr.mxu0 0.0
    %2952 = vmatpush1.msra.mxu0 0.0
    %2953 = vmatprep.subr.mxu0 0.0
    %2954 = vmatpush1.msra.mxu0 0.0
    %2955 = vmatprep.subr.mxu0 0.0
    %2956 = vmatpush1.msra.mxu0 0.0
    %2957 = vmatprep.subr.mxu0 0.0
    %2958 = vmatpush1.msra.mxu0 0.0
    %2959 = vmatprep.subr.mxu0 0.0
    %2960 = vmatpush1.msra.mxu0 0.0
    %2961 = vmatprep.subr.mxu0 0.0
    %2962 = vmatpush1.msra.mxu0 0.0
    %2963 = vmatprep.subr.mxu0 0.0
    %2964 = vmatpush1.msra.mxu0 0.0
    %2965 = vmatprep.mubr.f32.mxu0 0.0
    %2966 = vmatmul.mubr.f32.gmra.mrb[0].mxu0 %v2824
    %v2967 = vpop.f32.mrb[0].mxu0
    %v2968 = vadd.f32 0.0, %v2967
    %v2969 = vpop.f32.mrb[0].mxu0
    %v2970 = vadd.f32 0.0, %v2969
    %2971 = vdwg.mxu0
    %v2972 = vadd.f32 %v2826, %v2897
    %v2973 = vadd.f32 %v2827, %v2899
    %v2974 = vadd.f32 %v2828, %v2968
    %v2975 = vadd.f32 %v2829, %v2970
    %v2976 = vxor.u32 %v2972, 2147483648
    %v2977 = vxor.u32 %v2973, 2147483648
    %v2978 = vxor.u32 %v2974, 2147483648
    %v2979 = vmul.f32 %v2976, 1.442695
    %v2980 = vpow.pop %v2979
    %v2981 = vmul.f32 %v2977, 1.442695
    %v2982 = vpow.pop %v2981
    %v2983 = vmul.f32 %v2978, 1.442695
    %v2984 = vpow.pop %v2983
    %v2985 = vadd.f32 %v2980, 1.0
    %v2986 = vadd.f32 %v2982, 1.0
    %v2987 = vadd.f32 %v2984, 1.0
    %v2988 = vrcp.pop %v2985
    %v2989 = vmul.f32 1.0, %v2988
    %v2990 = vrcp.pop %v2986
    %v2991 = vmul.f32 1.0, %v2990
    %v2992 = vrcp.pop %v2987
    %v2993 = vmul.f32 1.0, %v2992
    %v2994 = vtanh.pop %v2975
    %v2995 = vmul.f32 %v2991, %v2822
    %v2996 = vmul.f32 %v2989, %v2994
    %v2997 = vadd.f32 %v2995, %v2996
    %v2998 = vtanh.pop %v2997
    %v2999 = vmul.f32 %v2993, %v2998
    %3000 = vst [vmem:[#allocation3 + $0x18] sm:$0xff] %v2999
    %v3001 = vld [vmem:[#allocation2 + $0x80] sm:$0xff]
    %v3002 = vld [vmem:[#allocation2 + $0x88] sm:$0xff]
    %v3003 = vld [vmem:[#allocation2 + $0x90] sm:$0xff]
    %v3004 = vld [vmem:[#allocation2 + $0x98] sm:$0xff]
    %3005 = vmatprep.subr.mxu0 %v2238
    %3006 = vmatpush1.msra.mxu0 %v2237
    %3007 = vmatprep.subr.mxu0 %v2242
    %3008 = vmatpush1.msra.mxu0 %v2241
    %3009 = vmatprep.subr.mxu0 %v2246
    %3010 = vmatpush1.msra.mxu0 %v2245
    %3011 = vmatprep.subr.mxu0 %v2250
    %3012 = vmatpush1.msra.mxu0 %v2249
    %3013 = vmatprep.subr.mxu0 %v2254
    %3014 = vmatpush1.msra.mxu0 %v2253
    %3015 = vmatprep.subr.mxu0 %v2258
    %3016 = vmatpush1.msra.mxu0 %v2257
    %3017 = vmatprep.subr.mxu0 %v2262
    %3018 = vmatpush1.msra.mxu0 %v2261
    %3019 = vmatprep.subr.mxu0 %v2266
    %3020 = vmatpush1.msra.mxu0 %v2265
    %3021 = vmatprep.subr.mxu0 %v2270
    %3022 = vmatpush1.msra.mxu0 %v2269
    %3023 = vmatprep.subr.mxu0 %v2274
    %3024 = vmatpush1.msra.mxu0 %v2273
    %3025 = vmatprep.subr.mxu0 %v2278
    %3026 = vmatpush1.msra.mxu0 %v2277
    %3027 = vmatprep.subr.mxu0 %v2282
    %3028 = vmatpush1.msra.mxu0 %v2281
    %3029 = vmatprep.subr.mxu0 %v2286
    %3030 = vmatpush1.msra.mxu0 %v2285
    %3031 = vmatprep.subr.mxu0 %v2290
    %3032 = vmatpush1.msra.mxu0 %v2289
    %3033 = vmatprep.subr.mxu0 %v2294
    %3034 = vmatpush1.msra.mxu0 %v2293
    %3035 = vmatprep.subr.mxu0 %v2298
    %3036 = vmatpush1.msra.mxu0 %v2297
    %3037 = vmatprep.subr.mxu0 0.0
    %3038 = vmatpush1.msra.mxu0 0.0
    %3039 = vmatprep.subr.mxu0 0.0
    %3040 = vmatpush1.msra.mxu0 0.0
    %3041 = vmatprep.subr.mxu0 0.0
    %3042 = vmatpush1.msra.mxu0 0.0
    %3043 = vmatprep.subr.mxu0 0.0
    %3044 = vmatpush1.msra.mxu0 0.0
    %3045 = vmatprep.subr.mxu0 0.0
    %3046 = vmatpush1.msra.mxu0 0.0
    %3047 = vmatprep.subr.mxu0 0.0
    %3048 = vmatpush1.msra.mxu0 0.0
    %3049 = vmatprep.subr.mxu0 0.0
    %3050 = vmatpush1.msra.mxu0 0.0
    %3051 = vmatprep.subr.mxu0 0.0
    %3052 = vmatpush1.msra.mxu0 0.0
    %3053 = vmatprep.subr.mxu0 0.0
    %3054 = vmatpush1.msra.mxu0 0.0
    %3055 = vmatprep.subr.mxu0 0.0
    %3056 = vmatpush1.msra.mxu0 0.0
    %3057 = vmatprep.subr.mxu0 0.0
    %3058 = vmatpush1.msra.mxu0 0.0
    %3059 = vmatprep.subr.mxu0 0.0
    %3060 = vmatpush1.msra.mxu0 0.0
    %3061 = vmatprep.subr.mxu0 0.0
    %3062 = vmatpush1.msra.mxu0 0.0
    %3063 = vmatprep.subr.mxu0 0.0
    %3064 = vmatpush1.msra.mxu0 0.0
    %3065 = vmatprep.subr.mxu0 0.0
    %3066 = vmatpush1.msra.mxu0 0.0
    %3067 = vmatprep.subr.mxu0 0.0
    %3068 = vmatpush1.msra.mxu0 0.0
    %3069 = vmatprep.mubr.f32.mxu0 0.0
    %3070 = vmatmul.mubr.f32.gmra.mrb[0].mxu0 %v2999
    %v3071 = vpop.f32.mrb[0].mxu0
    %v3072 = vadd.f32 0.0, %v3071
    %v3073 = vpop.f32.mrb[0].mxu0
    %v3074 = vadd.f32 0.0, %v3073
    %3075 = vdwg.mxu0
    %3076 = vmatprep.subr.mxu0 %v2240
    %3077 = vmatpush1.msra.mxu0 %v2239
    %3078 = vmatprep.subr.mxu0 %v2244
    %3079 = vmatpush1.msra.mxu0 %v2243
    %3080 = vmatprep.subr.mxu0 %v2248
    %3081 = vmatpush1.msra.mxu0 %v2247
    %3082 = vmatprep.subr.mxu0 %v2252
    %3083 = vmatpush1.msra.mxu0 %v2251
    %3084 = vmatprep.subr.mxu0 %v2256
    %3085 = vmatpush1.msra.mxu0 %v2255
    %3086 = vmatprep.subr.mxu0 %v2260
    %3087 = vmatpush1.msra.mxu0 %v2259
    %3088 = vmatprep.subr.mxu0 %v2264
    %3089 = vmatpush1.msra.mxu0 %v2263
    %3090 = vmatprep.subr.mxu0 %v2268
    %3091 = vmatpush1.msra.mxu0 %v2267
    %3092 = vmatprep.subr.mxu0 %v2272
    %3093 = vmatpush1.msra.mxu0 %v2271
    %3094 = vmatprep.subr.mxu0 %v2276
    %3095 = vmatpush1.msra.mxu0 %v2275
    %3096 = vmatprep.subr.mxu0 %v2280
    %3097 = vmatpush1.msra.mxu0 %v2279
    %3098 = vmatprep.subr.mxu0 %v2284
    %3099 = vmatpush1.msra.mxu0 %v2283
    %3100 = vmatprep.subr.mxu0 %v2288
    %3101 = vmatpush1.msra.mxu0 %v2287
    %3102 = vmatprep.subr.mxu0 %v2292
    %3103 = vmatpush1.msra.mxu0 %v2291
    %3104 = vmatprep.subr.mxu0 %v2296
    %3105 = vmatpush1.msra.mxu0 %v2295
    %3106 = vmatprep.subr.mxu0 %v2300
    %3107 = vmatpush1.msra.mxu0 %v2299
    %3108 = vmatprep.subr.mxu0 0.0
    %3109 = vmatpush1.msra.mxu0 0.0
    %3110 = vmatprep.subr.mxu0 0.0
    %3111 = vmatpush1.msra.mxu0 0.0
    %3112 = vmatprep.subr.mxu0 0.0
    %3113 = vmatpush1.msra.mxu0 0.0
    %3114 = vmatprep.subr.mxu0 0.0
    %3115 = vmatpush1.msra.mxu0 0.0
    %3116 = vmatprep.subr.mxu0 0.0
    %3117 = vmatpush1.msra.mxu0 0.0
    %3118 = vmatprep.subr.mxu0 0.0
    %3119 = vmatpush1.msra.mxu0 0.0
    %3120 = vmatprep.subr.mxu0 0.0
    %3121 = vmatpush1.msra.mxu0 0.0
    %3122 = vmatprep.subr.mxu0 0.0
    %3123 = vmatpush1.msra.mxu0 0.0
    %3124 = vmatprep.subr.mxu0 0.0
    %3125 = vmatpush1.msra.mxu0 0.0
    %3126 = vmatprep.subr.mxu0 0.0
    %3127 = vmatpush1.msra.mxu0 0.0
    %3128 = vmatprep.subr.mxu0 0.0
    %3129 = vmatpush1.msra.mxu0 0.0
    %3130 = vmatprep.subr.mxu0 0.0
    %3131 = vmatpush1.msra.mxu0 0.0
    %3132 = vmatprep.subr.mxu0 0.0
    %3133 = vmatpush1.msra.mxu0 0.0
    %3134 = vmatprep.subr.mxu0 0.0
    %3135 = vmatpush1.msra.mxu0 0.0
    %3136 = vmatprep.subr.mxu0 0.0
    %3137 = vmatpush1.msra.mxu0 0.0
    %3138 = vmatprep.subr.mxu0 0.0
    %3139 = vmatpush1.msra.mxu0 0.0
    %3140 = vmatprep.mubr.f32.mxu0 0.0
    %3141 = vmatmul.mubr.f32.gmra.mrb[0].mxu0 %v2999
    %v3142 = vpop.f32.mrb[0].mxu0
    %v3143 = vadd.f32 0.0, %v3142
    %v3144 = vpop.f32.mrb[0].mxu0
    %v3145 = vadd.f32 0.0, %v3144
    %3146 = vdwg.mxu0
    %v3147 = vadd.f32 %v3001, %v3072
    %v3148 = vadd.f32 %v3002, %v3074
    %v3149 = vadd.f32 %v3003, %v3143
    %v3150 = vadd.f32 %v3004, %v3145
    %v3151 = vxor.u32 %v3147, 2147483648
    %v3152 = vxor.u32 %v3148, 2147483648
    %v3153 = vxor.u32 %v3149, 2147483648
    %v3154 = vmul.f32 %v3151, 1.442695
    %v3155 = vpow.pop %v3154
    %v3156 = vmul.f32 %v3152, 1.442695
    %v3157 = vpow.pop %v3156
    %v3158 = vmul.f32 %v3153, 1.442695
    %v3159 = vpow.pop %v3158
    %v3160 = vadd.f32 %v3155, 1.0
    %v3161 = vadd.f32 %v3157, 1.0
    %v3162 = vadd.f32 %v3159, 1.0
    %v3163 = vrcp.pop %v3160
    %v3164 = vmul.f32 1.0, %v3163
    %v3165 = vrcp.pop %v3161
    %v3166 = vmul.f32 1.0, %v3165
    %v3167 = vrcp.pop %v3162
    %v3168 = vmul.f32 1.0, %v3167
    %v3169 = vtanh.pop %v3150
    %v3170 = vmul.f32 %v3166, %v2997
    %v3171 = vmul.f32 %v3164, %v3169
    %v3172 = vadd.f32 %v3170, %v3171
    %v3173 = vtanh.pop %v3172
    %v3174 = vmul.f32 %v3168, %v3173
    %3175 = vst [vmem:[#allocation3 + $0x20] sm:$0xff] %v3174
    %v3176 = vld [vmem:[#allocation2 + $0xa0] sm:$0xff]
    %v3177 = vld [vmem:[#allocation2 + $0xa8] sm:$0xff]
    %v3178 = vld [vmem:[#allocation2 + $0xb0] sm:$0xff]
    %v3179 = vld [vmem:[#allocation2 + $0xb8] sm:$0xff]
    %3180 = vmatprep.subr.mxu0 %v2238
    %3181 = vmatpush1.msra.mxu0 %v2237
    %3182 = vmatprep.subr.mxu0 %v2242
    %3183 = vmatpush1.msra.mxu0 %v2241
    %3184 = vmatprep.subr.mxu0 %v2246
    %3185 = vmatpush1.msra.mxu0 %v2245
    %3186 = vmatprep.subr.mxu0 %v2250
    %3187 = vmatpush1.msra.mxu0 %v2249
    %3188 = vmatprep.subr.mxu0 %v2254
    %3189 = vmatpush1.msra.mxu0 %v2253
    %3190 = vmatprep.subr.mxu0 %v2258
    %3191 = vmatpush1.msra.mxu0 %v2257
    %3192 = vmatprep.subr.mxu0 %v2262
    %3193 = vmatpush1.msra.mxu0 %v2261
    %3194 = vmatprep.subr.mxu0 %v2266
    %3195 = vmatpush1.msra.mxu0 %v2265
    %3196 = vmatprep.subr.mxu0 %v2270
    %3197 = vmatpush1.msra.mxu0 %v2269
    %3198 = vmatprep.subr.mxu0 %v2274
    %3199 = vmatpush1.msra.mxu0 %v2273
    %3200 = vmatprep.subr.mxu0 %v2278
    %3201 = vmatpush1.msra.mxu0 %v2277
    %3202 = vmatprep.subr.mxu0 %v2282
    %3203 = vmatpush1.msra.mxu0 %v2281
    %3204 = vmatprep.subr.mxu0 %v2286
    %3205 = vmatpush1.msra.mxu0 %v2285
    %3206 = vmatprep.subr.mxu0 %v2290
    %3207 = vmatpush1.msra.mxu0 %v2289
    %3208 = vmatprep.subr.mxu0 %v2294
    %3209 = vmatpush1.msra.mxu0 %v2293
    %3210 = vmatprep.subr.mxu0 %v2298
    %3211 = vmatpush1.msra.mxu0 %v2297
    %3212 = vmatprep.subr.mxu0 0.0
    %3213 = vmatpush1.msra.mxu0 0.0
    %3214 = vmatprep.subr.mxu0 0.0
    %3215 = vmatpush1.msra.mxu0 0.0
    %3216 = vmatprep.subr.mxu0 0.0
    %3217 = vmatpush1.msra.mxu0 0.0
    %3218 = vmatprep.subr.mxu0 0.0
    %3219 = vmatpush1.msra.mxu0 0.0
    %3220 = vmatprep.subr.mxu0 0.0
    %3221 = vmatpush1.msra.mxu0 0.0
    %3222 = vmatprep.subr.mxu0 0.0
    %3223 = vmatpush1.msra.mxu0 0.0
    %3224 = vmatprep.subr.mxu0 0.0
    %3225 = vmatpush1.msra.mxu0 0.0
    %3226 = vmatprep.subr.mxu0 0.0
    %3227 = vmatpush1.msra.mxu0 0.0
    %3228 = vmatprep.subr.mxu0 0.0
    %3229 = vmatpush1.msra.mxu0 0.0
    %3230 = vmatprep.subr.mxu0 0.0
    %3231 = vmatpush1.msra.mxu0 0.0
    %3232 = vmatprep.subr.mxu0 0.0
    %3233 = vmatpush1.msra.mxu0 0.0
    %3234 = vmatprep.subr.mxu0 0.0
    %3235 = vmatpush1.msra.mxu0 0.0
    %3236 = vmatprep.subr.mxu0 0.0
    %3237 = vmatpush1.msra.mxu0 0.0
    %3238 = vmatprep.subr.mxu0 0.0
    %3239 = vmatpush1.msra.mxu0 0.0
    %3240 = vmatprep.subr.mxu0 0.0
    %3241 = vmatpush1.msra.mxu0 0.0
    %3242 = vmatprep.subr.mxu0 0.0
    %3243 = vmatpush1.msra.mxu0 0.0
    %3244 = vmatprep.mubr.f32.mxu0 0.0
    %3245 = vmatmul.mubr.f32.gmra.mrb[0].mxu0 %v3174
    %v3246 = vpop.f32.mrb[0].mxu0
    %v3247 = vadd.f32 0.0, %v3246
    %v3248 = vpop.f32.mrb[0].mxu0
    %v3249 = vadd.f32 0.0, %v3248
    %3250 = vdwg.mxu0
    %3251 = vmatprep.subr.mxu0 %v2240
    %3252 = vmatpush1.msra.mxu0 %v2239
    %3253 = vmatprep.subr.mxu0 %v2244
    %3254 = vmatpush1.msra.mxu0 %v2243
    %3255 = vmatprep.subr.mxu0 %v2248
    %3256 = vmatpush1.msra.mxu0 %v2247
    %3257 = vmatprep.subr.mxu0 %v2252
    %3258 = vmatpush1.msra.mxu0 %v2251
    %3259 = vmatprep.subr.mxu0 %v2256
    %3260 = vmatpush1.msra.mxu0 %v2255
    %3261 = vmatprep.subr.mxu0 %v2260
    %3262 = vmatpush1.msra.mxu0 %v2259
    %3263 = vmatprep.subr.mxu0 %v2264
    %3264 = vmatpush1.msra.mxu0 %v2263
    %3265 = vmatprep.subr.mxu0 %v2268
    %3266 = vmatpush1.msra.mxu0 %v2267
    %3267 = vmatprep.subr.mxu0 %v2272
    %3268 = vmatpush1.msra.mxu0 %v2271
    %3269 = vmatprep.subr.mxu0 %v2276
    %3270 = vmatpush1.msra.mxu0 %v2275
    %3271 = vmatprep.subr.mxu0 %v2280
    %3272 = vmatpush1.msra.mxu0 %v2279
    %3273 = vmatprep.subr.mxu0 %v2284
    %3274 = vmatpush1.msra.mxu0 %v2283
    %3275 = vmatprep.subr.mxu0 %v2288
    %3276 = vmatpush1.msra.mxu0 %v2287
    %3277 = vmatprep.subr.mxu0 %v2292
    %3278 = vmatpush1.msra.mxu0 %v2291
    %3279 = vmatprep.subr.mxu0 %v2296
    %3280 = vmatpush1.msra.mxu0 %v2295
    %3281 = vmatprep.subr.mxu0 %v2300
    %3282 = vmatpush1.msra.mxu0 %v2299
    %3283 = vmatprep.subr.mxu0 0.0
    %3284 = vmatpush1.msra.mxu0 0.0
    %3285 = vmatprep.subr.mxu0 0.0
    %3286 = vmatpush1.msra.mxu0 0.0
    %3287 = vmatprep.subr.mxu0 0.0
    %3288 = vmatpush1.msra.mxu0 0.0
    %3289 = vmatprep.subr.mxu0 0.0
    %3290 = vmatpush1.msra.mxu0 0.0
    %3291 = vmatprep.subr.mxu0 0.0
    %3292 = vmatpush1.msra.mxu0 0.0
    %3293 = vmatprep.subr.mxu0 0.0
    %3294 = vmatpush1.msra.mxu0 0.0
    %3295 = vmatprep.subr.mxu0 0.0
    %3296 = vmatpush1.msra.mxu0 0.0
    %3297 = vmatprep.subr.mxu0 0.0
    %3298 = vmatpush1.msra.mxu0 0.0
    %3299 = vmatprep.subr.mxu0 0.0
    %3300 = vmatpush1.msra.mxu0 0.0
    %3301 = vmatprep.subr.mxu0 0.0
    %3302 = vmatpush1.msra.mxu0 0.0
    %3303 = vmatprep.subr.mxu0 0.0
    %3304 = vmatpush1.msra.mxu0 0.0
    %3305 = vmatprep.subr.mxu0 0.0
    %3306 = vmatpush1.msra.mxu0 0.0
    %3307 = vmatprep.subr.mxu0 0.0
    %3308 = vmatpush1.msra.mxu0 0.0
    %3309 = vmatprep.subr.mxu0 0.0
    %3310 = vmatpush1.msra.mxu0 0.0
    %3311 = vmatprep.subr.mxu0 0.0
    %3312 = vmatpush1.msra.mxu0 0.0
    %3313 = vmatprep.subr.mxu0 0.0
    %3314 = vmatpush1.msra.mxu0 0.0
    %3315 = vmatprep.mubr.f32.mxu0 0.0
    %3316 = vmatmul.mubr.f32.gmra.mrb[0].mxu0 %v3174
    %v3317 = vpop.f32.mrb[0].mxu0
    %v3318 = vadd.f32 0.0, %v3317
    %v3319 = vpop.f32.mrb[0].mxu0
    %v3320 = vadd.f32 0.0, %v3319
    %3321 = vdwg.mxu0
    %v3322 = vadd.f32 %v3176, %v3247
    %v3323 = vadd.f32 %v3177, %v3249
    %v3324 = vadd.f32 %v3178, %v3318
    %v3325 = vadd.f32 %v3179, %v3320
    %v3326 = vxor.u32 %v3322, 2147483648
    %v3327 = vxor.u32 %v3323, 2147483648
    %v3328 = vxor.u32 %v3324, 2147483648
    %v3329 = vmul.f32 %v3326, 1.442695
    %v3330 = vpow.pop %v3329
    %v3331 = vmul.f32 %v3327, 1.442695
    %v3332 = vpow.pop %v3331
    %v3333 = vmul.f32 %v3328, 1.442695
    %v3334 = vpow.pop %v3333
    %v3335 = vadd.f32 %v3330, 1.0
    %v3336 = vadd.f32 %v3332, 1.0
    %v3337 = vadd.f32 %v3334, 1.0
    %v3338 = vrcp.pop %v3335
    %v3339 = vmul.f32 1.0, %v3338
    %v3340 = vrcp.pop %v3336
    %v3341 = vmul.f32 1.0, %v3340
    %v3342 = vrcp.pop %v3337
    %v3343 = vmul.f32 1.0, %v3342
    %v3344 = vtanh.pop %v3325
    %v3345 = vmul.f32 %v3341, %v3172
    %v3346 = vmul.f32 %v3339, %v3344
    %v3347 = vadd.f32 %v3345, %v3346
    %v3348 = vtanh.pop %v3347
    %v3349 = vmul.f32 %v3343, %v3348
    %3350 = vst [vmem:[#allocation3 + $0x28] sm:$0xff] %v3349
    %v3351 = vld [vmem:[#allocation2 + $0xc0] sm:$0xff]
    %v3352 = vld [vmem:[#allocation2 + $0xc8] sm:$0xff]
    %v3353 = vld [vmem:[#allocation2 + $0xd0] sm:$0xff]
    %v3354 = vld [vmem:[#allocation2 + $0xd8] sm:$0xff]
    %3355 = vmatprep.subr.mxu0 %v2238
    %3356 = vmatpush1.msra.mxu0 %v2237
    %3357 = vmatprep.subr.mxu0 %v2242
    %3358 = vmatpush1.msra.mxu0 %v2241
    %3359 = vmatprep.subr.mxu0 %v2246
    %3360 = vmatpush1.msra.mxu0 %v2245
    %3361 = vmatprep.subr.mxu0 %v2250
    %3362 = vmatpush1.msra.mxu0 %v2249
    %3363 = vmatprep.subr.mxu0 %v2254
    %3364 = vmatpush1.msra.mxu0 %v2253
    %3365 = vmatprep.subr.mxu0 %v2258
    %3366 = vmatpush1.msra.mxu0 %v2257
    %3367 = vmatprep.subr.mxu0 %v2262
    %3368 = vmatpush1.msra.mxu0 %v2261
    %3369 = vmatprep.subr.mxu0 %v2266
    %3370 = vmatpush1.msra.mxu0 %v2265
    %3371 = vmatprep.subr.mxu0 %v2270
    %3372 = vmatpush1.msra.mxu0 %v2269
    %3373 = vmatprep.subr.mxu0 %v2274
    %3374 = vmatpush1.msra.mxu0 %v2273
    %3375 = vmatprep.subr.mxu0 %v2278
    %3376 = vmatpush1.msra.mxu0 %v2277
    %3377 = vmatprep.subr.mxu0 %v2282
    %3378 = vmatpush1.msra.mxu0 %v2281
    %3379 = vmatprep.subr.mxu0 %v2286
    %3380 = vmatpush1.msra.mxu0 %v2285
    %3381 = vmatprep.subr.mxu0 %v2290
    %3382 = vmatpush1.msra.mxu0 %v2289
    %3383 = vmatprep.subr.mxu0 %v2294
    %3384 = vmatpush1.msra.mxu0 %v2293
    %3385 = vmatprep.subr.mxu0 %v2298
    %3386 = vmatpush1.msra.mxu0 %v2297
    %3387 = vmatprep.subr.mxu0 0.0
    %3388 = vmatpush1.msra.mxu0 0.0
    %3389 = vmatprep.subr.mxu0 0.0
    %3390 = vmatpush1.msra.mxu0 0.0
    %3391 = vmatprep.subr.mxu0 0.0
    %3392 = vmatpush1.msra.mxu0 0.0
    %3393 = vmatprep.subr.mxu0 0.0
    %3394 = vmatpush1.msra.mxu0 0.0
    %3395 = vmatprep.subr.mxu0 0.0
    %3396 = vmatpush1.msra.mxu0 0.0
    %3397 = vmatprep.subr.mxu0 0.0
    %3398 = vmatpush1.msra.mxu0 0.0
    %3399 = vmatprep.subr.mxu0 0.0
    %3400 = vmatpush1.msra.mxu0 0.0
    %3401 = vmatprep.subr.mxu0 0.0
    %3402 = vmatpush1.msra.mxu0 0.0
    %3403 = vmatprep.subr.mxu0 0.0
    %3404 = vmatpush1.msra.mxu0 0.0
    %3405 = vmatprep.subr.mxu0 0.0
    %3406 = vmatpush1.msra.mxu0 0.0
    %3407 = vmatprep.subr.mxu0 0.0
    %3408 = vmatpush1.msra.mxu0 0.0
    %3409 = vmatprep.subr.mxu0 0.0
    %3410 = vmatpush1.msra.mxu0 0.0
    %3411 = vmatprep.subr.mxu0 0.0
    %3412 = vmatpush1.msra.mxu0 0.0
    %3413 = vmatprep.subr.mxu0 0.0
    %3414 = vmatpush1.msra.mxu0 0.0
    %3415 = vmatprep.subr.mxu0 0.0
    %3416 = vmatpush1.msra.mxu0 0.0
    %3417 = vmatprep.subr.mxu0 0.0
    %3418 = vmatpush1.msra.mxu0 0.0
    %3419 = vmatprep.mubr.f32.mxu0 0.0
    %3420 = vmatmul.mubr.f32.gmra.mrb[0].mxu0 %v3349
    %v3421 = vpop.f32.mrb[0].mxu0
    %v3422 = vadd.f32 0.0, %v3421
    %v3423 = vpop.f32.mrb[0].mxu0
    %v3424 = vadd.f32 0.0, %v3423
    %3425 = vdwg.mxu0
    %3426 = vmatprep.subr.mxu0 %v2240
    %3427 = vmatpush1.msra.mxu0 %v2239
    %3428 = vmatprep.subr.mxu0 %v2244
    %3429 = vmatpush1.msra.mxu0 %v2243
    %3430 = vmatprep.subr.mxu0 %v2248
    %3431 = vmatpush1.msra.mxu0 %v2247
    %3432 = vmatprep.subr.mxu0 %v2252
    %3433 = vmatpush1.msra.mxu0 %v2251
    %3434 = vmatprep.subr.mxu0 %v2256
    %3435 = vmatpush1.msra.mxu0 %v2255
    %3436 = vmatprep.subr.mxu0 %v2260
    %3437 = vmatpush1.msra.mxu0 %v2259
    %3438 = vmatprep.subr.mxu0 %v2264
    %3439 = vmatpush1.msra.mxu0 %v2263
    %3440 = vmatprep.subr.mxu0 %v2268
    %3441 = vmatpush1.msra.mxu0 %v2267
    %3442 = vmatprep.subr.mxu0 %v2272
    %3443 = vmatpush1.msra.mxu0 %v2271
    %3444 = vmatprep.subr.mxu0 %v2276
    %3445 = vmatpush1.msra.mxu0 %v2275
    %3446 = vmatprep.subr.mxu0 %v2280
    %3447 = vmatpush1.msra.mxu0 %v2279
    %3448 = vmatprep.subr.mxu0 %v2284
    %3449 = vmatpush1.msra.mxu0 %v2283
    %3450 = vmatprep.subr.mxu0 %v2288
    %3451 = vmatpush1.msra.mxu0 %v2287
    %3452 = vmatprep.subr.mxu0 %v2292
    %3453 = vmatpush1.msra.mxu0 %v2291
    %3454 = vmatprep.subr.mxu0 %v2296
    %3455 = vmatpush1.msra.mxu0 %v2295
    %3456 = vmatprep.subr.mxu0 %v2300
    %3457 = vmatpush1.msra.mxu0 %v2299
    %3458 = vmatprep.subr.mxu0 0.0
    %3459 = vmatpush1.msra.mxu0 0.0
    %3460 = vmatprep.subr.mxu0 0.0
    %3461 = vmatpush1.msra.mxu0 0.0
    %3462 = vmatprep.subr.mxu0 0.0
    %3463 = vmatpush1.msra.mxu0 0.0
    %3464 = vmatprep.subr.mxu0 0.0
    %3465 = vmatpush1.msra.mxu0 0.0
    %3466 = vmatprep.subr.mxu0 0.0
    %3467 = vmatpush1.msra.mxu0 0.0
    %3468 = vmatprep.subr.mxu0 0.0
    %3469 = vmatpush1.msra.mxu0 0.0
    %3470 = vmatprep.subr.mxu0 0.0
    %3471 = vmatpush1.msra.mxu0 0.0
    %3472 = vmatprep.subr.mxu0 0.0
    %3473 = vmatpush1.msra.mxu0 0.0
    %3474 = vmatprep.subr.mxu0 0.0
    %3475 = vmatpush1.msra.mxu0 0.0
    %3476 = vmatprep.subr.mxu0 0.0
    %3477 = vmatpush1.msra.mxu0 0.0
    %3478 = vmatprep.subr.mxu0 0.0
    %3479 = vmatpush1.msra.mxu0 0.0
    %3480 = vmatprep.subr.mxu0 0.0
    %3481 = vmatpush1.msra.mxu0 0.0
    %3482 = vmatprep.subr.mxu0 0.0
    %3483 = vmatpush1.msra.mxu0 0.0
    %3484 = vmatprep.subr.mxu0 0.0
    %3485 = vmatpush1.msra.mxu0 0.0
    %3486 = vmatprep.subr.mxu0 0.0
    %3487 = vmatpush1.msra.mxu0 0.0
    %3488 = vmatprep.subr.mxu0 0.0
    %3489 = vmatpush1.msra.mxu0 0.0
    %3490 = vmatprep.mubr.f32.mxu0 0.0
    %3491 = vmatmul.mubr.f32.gmra.mrb[0].mxu0 %v3349
    %v3492 = vpop.f32.mrb[0].mxu0
    %v3493 = vadd.f32 0.0, %v3492
    %v3494 = vpop.f32.mrb[0].mxu0
    %v3495 = vadd.f32 0.0, %v3494
    %3496 = vdwg.mxu0
    %v3497 = vadd.f32 %v3351, %v3422
    %v3498 = vadd.f32 %v3352, %v3424
    %v3499 = vadd.f32 %v3353, %v3493
    %v3500 = vadd.f32 %v3354, %v3495
    %v3501 = vxor.u32 %v3497, 2147483648
    %v3502 = vxor.u32 %v3498, 2147483648
    %v3503 = vxor.u32 %v3499, 2147483648
    %v3504 = vmul.f32 %v3501, 1.442695
    %v3505 = vpow.pop %v3504
    %v3506 = vmul.f32 %v3502, 1.442695
    %v3507 = vpow.pop %v3506
    %v3508 = vmul.f32 %v3503, 1.442695
    %v3509 = vpow.pop %v3508
    %v3510 = vadd.f32 %v3505, 1.0
    %v3511 = vadd.f32 %v3507, 1.0
    %v3512 = vadd.f32 %v3509, 1.0
    %v3513 = vrcp.pop %v3510
    %v3514 = vmul.f32 1.0, %v3513
    %v3515 = vrcp.pop %v3511
    %v3516 = vmul.f32 1.0, %v3515
    %v3517 = vrcp.pop %v3512
    %v3518 = vmul.f32 1.0, %v3517
    %v3519 = vtanh.pop %v3500
    %v3520 = vmul.f32 %v3516, %v3347
    %v3521 = vmul.f32 %v3514, %v3519
    %v3522 = vadd.f32 %v3520, %v3521
    %v3523 = vtanh.pop %v3522
    %v3524 = vmul.f32 %v3518, %v3523
    %3525 = vst [vmem:[#allocation3 + $0x30] sm:$0xff] %v3524
    %v3526 = vld [vmem:[#allocation2 + $0xe0] sm:$0xff]
    %v3527 = vld [vmem:[#allocation2 + $0xe8] sm:$0xff]
    %v3528 = vld [vmem:[#allocation2 + $0xf0] sm:$0xff]
    %v3529 = vld [vmem:[#allocation2 + $0xf8] sm:$0xff]
    %3530 = vmatprep.subr.mxu0 %v2238
    %3531 = vmatpush1.msra.mxu0 %v2237
    %3532 = vmatprep.subr.mxu0 %v2242
    %3533 = vmatpush1.msra.mxu0 %v2241
    %3534 = vmatprep.subr.mxu0 %v2246
    %3535 = vmatpush1.msra.mxu0 %v2245
    %3536 = vmatprep.subr.mxu0 %v2250
    %3537 = vmatpush1.msra.mxu0 %v2249
    %3538 = vmatprep.subr.mxu0 %v2254
    %3539 = vmatpush1.msra.mxu0 %v2253
    %3540 = vmatprep.subr.mxu0 %v2258
    %3541 = vmatpush1.msra.mxu0 %v2257
    %3542 = vmatprep.subr.mxu0 %v2262
    %3543 = vmatpush1.msra.mxu0 %v2261
    %3544 = vmatprep.subr.mxu0 %v2266
    %3545 = vmatpush1.msra.mxu0 %v2265
    %3546 = vmatprep.subr.mxu0 %v2270
    %3547 = vmatpush1.msra.mxu0 %v2269
    %3548 = vmatprep.subr.mxu0 %v2274
    %3549 = vmatpush1.msra.mxu0 %v2273
    %3550 = vmatprep.subr.mxu0 %v2278
    %3551 = vmatpush1.msra.mxu0 %v2277
    %3552 = vmatprep.subr.mxu0 %v2282
    %3553 = vmatpush1.msra.mxu0 %v2281
    %3554 = vmatprep.subr.mxu0 %v2286
    %3555 = vmatpush1.msra.mxu0 %v2285
    %3556 = vmatprep.subr.mxu0 %v2290
    %3557 = vmatpush1.msra.mxu0 %v2289
    %3558 = vmatprep.subr.mxu0 %v2294
    %3559 = vmatpush1.msra.mxu0 %v2293
    %3560 = vmatprep.subr.mxu0 %v2298
    %3561 = vmatpush1.msra.mxu0 %v2297
    %3562 = vmatprep.subr.mxu0 0.0
    %3563 = vmatpush1.msra.mxu0 0.0
    %3564 = vmatprep.subr.mxu0 0.0
    %3565 = vmatpush1.msra.mxu0 0.0
    %3566 = vmatprep.subr.mxu0 0.0
    %3567 = vmatpush1.msra.mxu0 0.0
    %3568 = vmatprep.subr.mxu0 0.0
    %3569 = vmatpush1.msra.mxu0 0.0
    %3570 = vmatprep.subr.mxu0 0.0
    %3571 = vmatpush1.msra.mxu0 0.0
    %3572 = vmatprep.subr.mxu0 0.0
    %3573 = vmatpush1.msra.mxu0 0.0
    %3574 = vmatprep.subr.mxu0 0.0
    %3575 = vmatpush1.msra.mxu0 0.0
    %3576 = vmatprep.subr.mxu0 0.0
    %3577 = vmatpush1.msra.mxu0 0.0
    %3578 = vmatprep.subr.mxu0 0.0
    %3579 = vmatpush1.msra.mxu0 0.0
    %3580 = vmatprep.subr.mxu0 0.0
    %3581 = vmatpush1.msra.mxu0 0.0
    %3582 = vmatprep.subr.mxu0 0.0
    %3583 = vmatpush1.msra.mxu0 0.0
    %3584 = vmatprep.subr.mxu0 0.0
    %3585 = vmatpush1.msra.mxu0 0.0
    %3586 = vmatprep.subr.mxu0 0.0
    %3587 = vmatpush1.msra.mxu0 0.0
    %3588 = vmatprep.subr.mxu0 0.0
    %3589 = vmatpush1.msra.mxu0 0.0
    %3590 = vmatprep.subr.mxu0 0.0
    %3591 = vmatpush1.msra.mxu0 0.0
    %3592 = vmatprep.subr.mxu0 0.0
    %3593 = vmatpush1.msra.mxu0 0.0
    %3594 = vmatprep.mubr.f32.mxu0 0.0
    %3595 = vmatmul.mubr.f32.gmra.mrb[0].mxu0 %v3524
    %v3596 = vpop.f32.mrb[0].mxu0
    %v3597 = vadd.f32 0.0, %v3596
    %v3598 = vpop.f32.mrb[0].mxu0
    %v3599 = vadd.f32 0.0, %v3598
    %3600 = vdwg.mxu0
    %3601 = vmatprep.subr.mxu0 %v2240
    %3602 = vmatpush1.msra.mxu0 %v2239
    %3603 = vmatprep.subr.mxu0 %v2244
    %3604 = vmatpush1.msra.mxu0 %v2243
    %3605 = vmatprep.subr.mxu0 %v2248
    %3606 = vmatpush1.msra.mxu0 %v2247
    %3607 = vmatprep.subr.mxu0 %v2252
    %3608 = vmatpush1.msra.mxu0 %v2251
    %3609 = vmatprep.subr.mxu0 %v2256
    %3610 = vmatpush1.msra.mxu0 %v2255
    %3611 = vmatprep.subr.mxu0 %v2260
    %3612 = vmatpush1.msra.mxu0 %v2259
    %3613 = vmatprep.subr.mxu0 %v2264
    %3614 = vmatpush1.msra.mxu0 %v2263
    %3615 = vmatprep.subr.mxu0 %v2268
    %3616 = vmatpush1.msra.mxu0 %v2267
    %3617 = vmatprep.subr.mxu0 %v2272
    %3618 = vmatpush1.msra.mxu0 %v2271
    %3619 = vmatprep.subr.mxu0 %v2276
    %3620 = vmatpush1.msra.mxu0 %v2275
    %3621 = vmatprep.subr.mxu0 %v2280
    %3622 = vmatpush1.msra.mxu0 %v2279
    %3623 = vmatprep.subr.mxu0 %v2284
    %3624 = vmatpush1.msra.mxu0 %v2283
    %3625 = vmatprep.subr.mxu0 %v2288
    %3626 = vmatpush1.msra.mxu0 %v2287
    %3627 = vmatprep.subr.mxu0 %v2292
    %3628 = vmatpush1.msra.mxu0 %v2291
    %3629 = vmatprep.subr.mxu0 %v2296
    %3630 = vmatpush1.msra.mxu0 %v2295
    %3631 = vmatprep.subr.mxu0 %v2300
    %3632 = vmatpush1.msra.mxu0 %v2299
    %3633 = vmatprep.subr.mxu0 0.0
    %3634 = vmatpush1.msra.mxu0 0.0
    %3635 = vmatprep.subr.mxu0 0.0
    %3636 = vmatpush1.msra.mxu0 0.0
    %3637 = vmatprep.subr.mxu0 0.0
    %3638 = vmatpush1.msra.mxu0 0.0
    %3639 = vmatprep.subr.mxu0 0.0
    %3640 = vmatpush1.msra.mxu0 0.0
    %3641 = vmatprep.subr.mxu0 0.0
    %3642 = vmatpush1.msra.mxu0 0.0
    %3643 = vmatprep.subr.mxu0 0.0
    %3644 = vmatpush1.msra.mxu0 0.0
    %3645 = vmatprep.subr.mxu0 0.0
    %3646 = vmatpush1.msra.mxu0 0.0
    %3647 = vmatprep.subr.mxu0 0.0
    %3648 = vmatpush1.msra.mxu0 0.0
    %3649 = vmatprep.subr.mxu0 0.0
    %3650 = vmatpush1.msra.mxu0 0.0
    %3651 = vmatprep.subr.mxu0 0.0
    %3652 = vmatpush1.msra.mxu0 0.0
    %3653 = vmatprep.subr.mxu0 0.0
    %3654 = vmatpush1.msra.mxu0 0.0
    %3655 = vmatprep.subr.mxu0 0.0
    %3656 = vmatpush1.msra.mxu0 0.0
    %3657 = vmatprep.subr.mxu0 0.0
    %3658 = vmatpush1.msra.mxu0 0.0
    %3659 = vmatprep.subr.mxu0 0.0
    %3660 = vmatpush1.msra.mxu0 0.0
    %3661 = vmatprep.subr.mxu0 0.0
    %3662 = vmatpush1.msra.mxu0 0.0
    %3663 = vmatprep.subr.mxu0 0.0
    %3664 = vmatpush1.msra.mxu0 0.0
    %3665 = vmatprep.mubr.f32.mxu0 0.0
    %3666 = vmatmul.mubr.f32.gmra.mrb[0].mxu0 %v3524
    %v3667 = vpop.f32.mrb[0].mxu0
    %v3668 = vadd.f32 0.0, %v3667
    %v3669 = vpop.f32.mrb[0].mxu0
    %v3670 = vadd.f32 0.0, %v3669
    %3671 = vdwg.mxu0
    %v3672 = vadd.f32 %v3526, %v3597
    %v3673 = vadd.f32 %v3527, %v3599
    %v3674 = vadd.f32 %v3528, %v3668
    %v3675 = vadd.f32 %v3529, %v3670
    %v3676 = vxor.u32 %v3672, 2147483648
    %v3677 = vxor.u32 %v3673, 2147483648
    %v3678 = vxor.u32 %v3674, 2147483648
    %v3679 = vmul.f32 %v3676, 1.442695
    %v3680 = vpow.pop %v3679
    %v3681 = vmul.f32 %v3677, 1.442695
    %v3682 = vpow.pop %v3681
    %v3683 = vmul.f32 %v3678, 1.442695
    %v3684 = vpow.pop %v3683
    %v3685 = vadd.f32 %v3680, 1.0
    %v3686 = vadd.f32 %v3682, 1.0
    %v3687 = vadd.f32 %v3684, 1.0
    %v3688 = vrcp.pop %v3685
    %v3689 = vmul.f32 1.0, %v3688
    %v3690 = vrcp.pop %v3686
    %v3691 = vmul.f32 1.0, %v3690
    %v3692 = vrcp.pop %v3687
    %v3693 = vmul.f32 1.0, %v3692
    %v3694 = vtanh.pop %v3675
    %v3695 = vmul.f32 %v3691, %v3522
    %v3696 = vmul.f32 %v3689, %v3694
    %v3697 = vadd.f32 %v3695, %v3696
    %v3698 = vtanh.pop %v3697
    %v3699 = vmul.f32 %v3693, %v3698
    %3700 = vst [vmem:[#allocation3 + $0x38] sm:$0xff] %v3699
    %s3701 = sshll.u32 %s1880, 4
    %3702 = dma.done %s73, %s3701
    %s3703 = sshll.u32 %s1880, 4
    %3704 = dma.done %s86, %s3703
    %v3705 = vld [vmem:[#allocation3] sm:$0xff]
    %v3706 = vld [vmem:[#allocation3 + $0x8] sm:$0xff]
    %v3707 = vld [vmem:[#allocation3 + $0x10] sm:$0xff]
    %v3708 = vld [vmem:[#allocation3 + $0x18] sm:$0xff]
    %v3709 = vld [vmem:[#allocation3 + $0x20] sm:$0xff]
    %v3710 = vld [vmem:[#allocation3 + $0x28] sm:$0xff]
    %v3711 = vld [vmem:[#allocation3 + $0x30] sm:$0xff]
    %v3712 = vld [vmem:[#allocation3 + $0x38] sm:$0xff]
    %v3713 = vld [vmem:[%s72] sm:$0xff]
    %v3714 = vld [vmem:[%s72 + $0x8] sm:$0xff]
    %v3715 = vld [vmem:[%s72 + $0x10] sm:$0xff]
    %v3716 = vld [vmem:[%s72 + $0x18] sm:$0xff]
    %v3717 = vld [vmem:[%s72 + $0x20] sm:$0xff]
    %v3718 = vld [vmem:[%s72 + $0x28] sm:$0xff]
    %v3719 = vld [vmem:[%s72 + $0x30] sm:$0xff]
    %v3720 = vld [vmem:[%s72 + $0x38] sm:$0xff]
    %v3721 = vld [vmem:[%s72 + $0x40] sm:$0xff]
    %v3722 = vld [vmem:[%s72 + $0x48] sm:$0xff]
    %v3723 = vld [vmem:[%s72 + $0x50] sm:$0xff]
    %v3724 = vld [vmem:[%s72 + $0x58] sm:$0xff]
    %v3725 = vld [vmem:[%s72 + $0x60] sm:$0xff]
    %v3726 = vld [vmem:[%s72 + $0x68] sm:$0xff]
    %v3727 = vld [vmem:[%s72 + $0x70] sm:$0xff]
    %v3728 = vld [vmem:[%s72 + $0x78] sm:$0xff]
    %v3729 = vld [vmem:[%s72 + $0x80] sm:$0xff]
    %v3730 = vld [vmem:[%s72 + $0x88] sm:$0xff]
    %v3731 = vld [vmem:[%s72 + $0x90] sm:$0xff]
    %v3732 = vld [vmem:[%s72 + $0x98] sm:$0xff]
    %v3733 = vld [vmem:[%s72 + $0xa0] sm:$0xff]
    %v3734 = vld [vmem:[%s72 + $0xa8] sm:$0xff]
    %v3735 = vld [vmem:[%s72 + $0xb0] sm:$0xff]
    %v3736 = vld [vmem:[%s72 + $0xb8] sm:$0xff]
    %v3737 = vld [vmem:[%s72 + $0xc0] sm:$0xff]
    %v3738 = vld [vmem:[%s72 + $0xc8] sm:$0xff]
    %v3739 = vld [vmem:[%s72 + $0xd0] sm:$0xff]
    %v3740 = vld [vmem:[%s72 + $0xd8] sm:$0xff]
    %v3741 = vld [vmem:[%s72 + $0xe0] sm:$0xff]
    %v3742 = vld [vmem:[%s72 + $0xe8] sm:$0xff]
    %v3743 = vld [vmem:[%s72 + $0xf0] sm:$0xff]
    %v3744 = vld [vmem:[%s72 + $0xf8] sm:$0xff]
    %v3745 = vld [vmem:[%s72 + $0x100] sm:$0xff]
    %v3746 = vld [vmem:[%s72 + $0x108] sm:$0xff]
    %v3747 = vld [vmem:[%s72 + $0x110] sm:$0xff]
    %v3748 = vld [vmem:[%s72 + $0x118] sm:$0xff]
    %v3749 = vld [vmem:[%s72 + $0x120] sm:$0xff]
    %v3750 = vld [vmem:[%s72 + $0x128] sm:$0xff]
    %v3751 = vld [vmem:[%s72 + $0x130] sm:$0xff]
    %v3752 = vld [vmem:[%s72 + $0x138] sm:$0xff]
    %v3753 = vld [vmem:[%s72 + $0x140] sm:$0xff]
    %v3754 = vld [vmem:[%s72 + $0x148] sm:$0xff]
    %v3755 = vld [vmem:[%s72 + $0x150] sm:$0xff]
    %v3756 = vld [vmem:[%s72 + $0x158] sm:$0xff]
    %v3757 = vld [vmem:[%s72 + $0x160] sm:$0xff]
    %v3758 = vld [vmem:[%s72 + $0x168] sm:$0xff]
    %v3759 = vld [vmem:[%s72 + $0x170] sm:$0xff]
    %v3760 = vld [vmem:[%s72 + $0x178] sm:$0xff]
    %v3761 = vld [vmem:[%s72 + $0x180] sm:$0xff]
    %v3762 = vld [vmem:[%s72 + $0x188] sm:$0xff]
    %v3763 = vld [vmem:[%s72 + $0x190] sm:$0xff]
    %v3764 = vld [vmem:[%s72 + $0x198] sm:$0xff]
    %v3765 = vld [vmem:[%s72 + $0x1a0] sm:$0xff]
    %v3766 = vld [vmem:[%s72 + $0x1a8] sm:$0xff]
    %v3767 = vld [vmem:[%s72 + $0x1b0] sm:$0xff]
    %v3768 = vld [vmem:[%s72 + $0x1b8] sm:$0xff]
    %v3769 = vld [vmem:[%s72 + $0x1c0] sm:$0xff]
    %v3770 = vld [vmem:[%s72 + $0x1c8] sm:$0xff]
    %v3771 = vld [vmem:[%s72 + $0x1d0] sm:$0xff]
    %v3772 = vld [vmem:[%s72 + $0x1d8] sm:$0xff]
    %v3773 = vld [vmem:[%s72 + $0x1e0] sm:$0xff]
    %v3774 = vld [vmem:[%s72 + $0x1e8] sm:$0xff]
    %v3775 = vld [vmem:[%s72 + $0x1f0] sm:$0xff]
    %v3776 = vld [vmem:[%s72 + $0x1f8] sm:$0xff]
    %v3777 = vld [vmem:[%s9] sm:$0xf]
    %v3779 = vlaneseq
    %v3780 = vshrl.u32 %v3779, 7
    %v3781 = vsub.s32 0, %v3780
    %v3782 = vrot.slane %v3777, %v3781
    %v3783 = vlaneseq
    %v3784 = vshrl.u32 %v3783, 7
    %v3785 = vsub.s32 1, %v3784
    %v3786 = vrot.slane %v3777, %v3785
    %v3787 = vlaneseq
    %v3788 = vshrl.u32 %v3787, 7
    %v3789 = vsub.s32 2, %v3788
    %v3790 = vrot.slane %v3777, %v3789
    %v3791 = vlaneseq
    %v3792 = vshrl.u32 %v3791, 7
    %v3793 = vsub.s32 3, %v3792
    %v3794 = vrot.slane %v3777, %v3793
    %3799 = vmatprep.subr.mxu0 %v3714
    %3800 = vmatpush1.msra.mxu0 %v3713
    %3801 = vmatprep.subr.mxu0 %v3718
    %3802 = vmatpush1.msra.mxu0 %v3717
    %3803 = vmatprep.subr.mxu0 %v3722
    %3804 = vmatpush1.msra.mxu0 %v3721
    %3805 = vmatprep.subr.mxu0 %v3726
    %3806 = vmatpush1.msra.mxu0 %v3725
    %3807 = vmatprep.subr.mxu0 %v3730
    %3808 = vmatpush1.msra.mxu0 %v3729
    %3809 = vmatprep.subr.mxu0 %v3734
    %3810 = vmatpush1.msra.mxu0 %v3733
    %3811 = vmatprep.subr.mxu0 %v3738
    %3812 = vmatpush1.msra.mxu0 %v3737
    %3813 = vmatprep.subr.mxu0 %v3742
    %3814 = vmatpush1.msra.mxu0 %v3741
    %3815 = vmatprep.subr.mxu0 %v3746
    %3816 = vmatpush1.msra.mxu0 %v3745
    %3817 = vmatprep.subr.mxu0 %v3750
    %3818 = vmatpush1.msra.mxu0 %v3749
    %3819 = vmatprep.subr.mxu0 %v3754
    %3820 = vmatpush1.msra.mxu0 %v3753
    %3821 = vmatprep.subr.mxu0 %v3758
    %3822 = vmatpush1.msra.mxu0 %v3757
    %3823 = vmatprep.subr.mxu0 %v3762
    %3824 = vmatpush1.msra.mxu0 %v3761
    %3825 = vmatprep.subr.mxu0 %v3766
    %3826 = vmatpush1.msra.mxu0 %v3765
    %3827 = vmatprep.subr.mxu0 %v3770
    %3828 = vmatpush1.msra.mxu0 %v3769
    %3829 = vmatprep.subr.mxu0 %v3774
    %3830 = vmatpush1.msra.mxu0 %v3773
    %3831 = vmatprep.subr.mxu0 0.0
    %3832 = vmatpush1.msra.mxu0 0.0
    %3833 = vmatprep.subr.mxu0 0.0
    %3834 = vmatpush1.msra.mxu0 0.0
    %3835 = vmatprep.subr.mxu0 0.0
    %3836 = vmatpush1.msra.mxu0 0.0
    %3837 = vmatprep.subr.mxu0 0.0
    %3838 = vmatpush1.msra.mxu0 0.0
    %3839 = vmatprep.subr.mxu0 0.0
    %3840 = vmatpush1.msra.mxu0 0.0
    %3841 = vmatprep.subr.mxu0 0.0
    %3842 = vmatpush1.msra.mxu0 0.0
    %3843 = vmatprep.subr.mxu0 0.0
    %3844 = vmatpush1.msra.mxu0 0.0
    %3845 = vmatprep.subr.mxu0 0.0
    %3846 = vmatpush1.msra.mxu0 0.0
    %3847 = vmatprep.subr.mxu0 0.0
    %3848 = vmatpush1.msra.mxu0 0.0
    %3849 = vmatprep.subr.mxu0 0.0
    %3850 = vmatpush1.msra.mxu0 0.0
    %3851 = vmatprep.subr.mxu0 0.0
    %3852 = vmatpush1.msra.mxu0 0.0
    %3853 = vmatprep.subr.mxu0 0.0
    %3854 = vmatpush1.msra.mxu0 0.0
    %3855 = vmatprep.subr.mxu0 0.0
    %3856 = vmatpush1.msra.mxu0 0.0
    %3857 = vmatprep.subr.mxu0 0.0
    %3858 = vmatpush1.msra.mxu0 0.0
    %3859 = vmatprep.subr.mxu0 0.0
    %3860 = vmatpush1.msra.mxu0 0.0
    %3861 = vmatprep.subr.mxu0 0.0
    %3862 = vmatpush1.msra.mxu0 0.0
    %3863 = vmatprep.mubr.f32.mxu0 0.0
    %3864 = vmatmul.mubr.f32.gmra.mrb[0].mxu0 %v3705
    %v3865 = vpop.f32.mrb[0].mxu0
    %v3866 = vadd.f32 %v3782, %v3865
    %v3867 = vpop.f32.mrb[0].mxu0
    %v3868 = vadd.f32 %v3786, %v3867
    %3869 = vmatprep.mubr.f32.mxu0 0.0
    %3870 = vmatmul.mubr.f32.gmra.mrb[0].mxu0 %v3706
    %v3871 = vpop.f32.mrb[0].mxu0
    %v3872 = vadd.f32 %v3782, %v3871
    %v3873 = vpop.f32.mrb[0].mxu0
    %v3874 = vadd.f32 %v3786, %v3873
    %3875 = vmatprep.mubr.f32.mxu0 0.0
    %3876 = vmatmul.mubr.f32.gmra.mrb[0].mxu0 %v3707
    %v3877 = vpop.f32.mrb[0].mxu0
    %v3878 = vadd.f32 %v3782, %v3877
    %v3879 = vpop.f32.mrb[0].mxu0
    %v3880 = vadd.f32 %v3786, %v3879
    %3881 = vmatprep.mubr.f32.mxu0 0.0
    %3882 = vmatmul.mubr.f32.gmra.mrb[0].mxu0 %v3708
    %v3883 = vpop.f32.mrb[0].mxu0
    %v3884 = vadd.f32 %v3782, %v3883
    %v3885 = vpop.f32.mrb[0].mxu0
    %v3886 = vadd.f32 %v3786, %v3885
    %3887 = vmatprep.mubr.f32.mxu0 0.0
    %3888 = vmatmul.mubr.f32.gmra.mrb[0].mxu0 %v3709
    %v3889 = vpop.f32.mrb[0].mxu0
    %v3890 = vadd.f32 %v3782, %v3889
    %v3891 = vpop.f32.mrb[0].mxu0
    %v3892 = vadd.f32 %v3786, %v3891
    %3893 = vmatprep.mubr.f32.mxu0 0.0
    %3894 = vmatmul.mubr.f32.gmra.mrb[0].mxu0 %v3710
    %v3895 = vpop.f32.mrb[0].mxu0
    %v3896 = vadd.f32 %v3782, %v3895
    %v3897 = vpop.f32.mrb[0].mxu0
    %v3898 = vadd.f32 %v3786, %v3897
    %3899 = vmatprep.mubr.f32.mxu0 0.0
    %3900 = vmatmul.mubr.f32.gmra.mrb[0].mxu0 %v3711
    %v3901 = vpop.f32.mrb[0].mxu0
    %v3902 = vadd.f32 %v3782, %v3901
    %v3903 = vpop.f32.mrb[0].mxu0
    %v3904 = vadd.f32 %v3786, %v3903
    %3905 = vmatprep.mubr.f32.mxu0 0.0
    %3906 = vmatmul.mubr.f32.gmra.mrb[0].mxu0 %v3712
    %v3907 = vpop.f32.mrb[0].mxu0
    %v3908 = vadd.f32 %v3782, %v3907
    %v3909 = vpop.f32.mrb[0].mxu0
    %v3910 = vadd.f32 %v3786, %v3909
    %3911 = vdwg.mxu0
    %3912 = vmatprep.subr.mxu0 %v3716
    %3913 = vmatpush1.msra.mxu0 %v3715
    %3914 = vmatprep.subr.mxu0 %v3720
    %3915 = vmatpush1.msra.mxu0 %v3719
    %3916 = vmatprep.subr.mxu0 %v3724
    %3917 = vmatpush1.msra.mxu0 %v3723
    %3918 = vmatprep.subr.mxu0 %v3728
    %3919 = vmatpush1.msra.mxu0 %v3727
    %3920 = vmatprep.subr.mxu0 %v3732
    %3921 = vmatpush1.msra.mxu0 %v3731
    %3922 = vmatprep.subr.mxu0 %v3736
    %3923 = vmatpush1.msra.mxu0 %v3735
    %3924 = vmatprep.subr.mxu0 %v3740
    %3925 = vmatpush1.msra.mxu0 %v3739
    %3926 = vmatprep.subr.mxu0 %v3744
    %3927 = vmatpush1.msra.mxu0 %v3743
    %3928 = vmatprep.subr.mxu0 %v3748
    %3929 = vmatpush1.msra.mxu0 %v3747
    %3930 = vmatprep.subr.mxu0 %v3752
    %3931 = vmatpush1.msra.mxu0 %v3751
    %3932 = vmatprep.subr.mxu0 %v3756
    %3933 = vmatpush1.msra.mxu0 %v3755
    %3934 = vmatprep.subr.mxu0 %v3760
    %3935 = vmatpush1.msra.mxu0 %v3759
    %3936 = vmatprep.subr.mxu0 %v3764
    %3937 = vmatpush1.msra.mxu0 %v3763
    %3938 = vmatprep.subr.mxu0 %v3768
    %3939 = vmatpush1.msra.mxu0 %v3767
    %3940 = vmatprep.subr.mxu0 %v3772
    %3941 = vmatpush1.msra.mxu0 %v3771
    %3942 = vmatprep.subr.mxu0 %v3776
    %3943 = vmatpush1.msra.mxu0 %v3775
    %3944 = vmatprep.subr.mxu0 0.0
    %3945 = vmatpush1.msra.mxu0 0.0
    %3946 = vmatprep.subr.mxu0 0.0
    %3947 = vmatpush1.msra.mxu0 0.0
    %3948 = vmatprep.subr.mxu0 0.0
    %3949 = vmatpush1.msra.mxu0 0.0
    %3950 = vmatprep.subr.mxu0 0.0
    %3951 = vmatpush1.msra.mxu0 0.0
    %3952 = vmatprep.subr.mxu0 0.0
    %3953 = vmatpush1.msra.mxu0 0.0
    %3954 = vmatprep.subr.mxu0 0.0
    %3955 = vmatpush1.msra.mxu0 0.0
    %3956 = vmatprep.subr.mxu0 0.0
    %3957 = vmatpush1.msra.mxu0 0.0
    %3958 = vmatprep.subr.mxu0 0.0
    %3959 = vmatpush1.msra.mxu0 0.0
    %3960 = vmatprep.subr.mxu0 0.0
    %3961 = vmatpush1.msra.mxu0 0.0
    %3962 = vmatprep.subr.mxu0 0.0
    %3963 = vmatpush1.msra.mxu0 0.0
    %3964 = vmatprep.subr.mxu0 0.0
    %3965 = vmatpush1.msra.mxu0 0.0
    %3966 = vmatprep.subr.mxu0 0.0
    %3967 = vmatpush1.msra.mxu0 0.0
    %3968 = vmatprep.subr.mxu0 0.0
    %3969 = vmatpush1.msra.mxu0 0.0
    %3970 = vmatprep.subr.mxu0 0.0
    %3971 = vmatpush1.msra.mxu0 0.0
    %3972 = vmatprep.subr.mxu0 0.0
    %3973 = vmatpush1.msra.mxu0 0.0
    %3974 = vmatprep.subr.mxu0 0.0
    %3975 = vmatpush1.msra.mxu0 0.0
    %3976 = vmatprep.mubr.f32.mxu0 0.0
    %3977 = vmatmul.mubr.f32.gmra.mrb[0].mxu0 %v3705
    %v3978 = vpop.f32.mrb[0].mxu0
    %v3979 = vadd.f32 %v3790, %v3978
    %v3980 = vpop.f32.mrb[0].mxu0
    %v3981 = vadd.f32 %v3794, %v3980
    %3982 = vmatprep.mubr.f32.mxu0 0.0
    %3983 = vmatmul.mubr.f32.gmra.mrb[0].mxu0 %v3706
    %v3984 = vpop.f32.mrb[0].mxu0
    %v3985 = vadd.f32 %v3790, %v3984
    %v3986 = vpop.f32.mrb[0].mxu0
    %v3987 = vadd.f32 %v3794, %v3986
    %3988 = vmatprep.mubr.f32.mxu0 0.0
    %3989 = vmatmul.mubr.f32.gmra.mrb[0].mxu0 %v3707
    %v3990 = vpop.f32.mrb[0].mxu0
    %v3991 = vadd.f32 %v3790, %v3990
    %v3992 = vpop.f32.mrb[0].mxu0
    %v3993 = vadd.f32 %v3794, %v3992
    %3994 = vmatprep.mubr.f32.mxu0 0.0
    %3995 = vmatmul.mubr.f32.gmra.mrb[0].mxu0 %v3708
    %v3996 = vpop.f32.mrb[0].mxu0
    %v3997 = vadd.f32 %v3790, %v3996
    %v3998 = vpop.f32.mrb[0].mxu0
    %v3999 = vadd.f32 %v3794, %v3998
    %4000 = vmatprep.mubr.f32.mxu0 0.0
    %4001 = vmatmul.mubr.f32.gmra.mrb[0].mxu0 %v3709
    %v4002 = vpop.f32.mrb[0].mxu0
    %v4003 = vadd.f32 %v3790, %v4002
    %v4004 = vpop.f32.mrb[0].mxu0
    %v4005 = vadd.f32 %v3794, %v4004
    %4006 = vmatprep.mubr.f32.mxu0 0.0
    %4007 = vmatmul.mubr.f32.gmra.mrb[0].mxu0 %v3710
    %v4008 = vpop.f32.mrb[0].mxu0
    %v4009 = vadd.f32 %v3790, %v4008
    %v4010 = vpop.f32.mrb[0].mxu0
    %v4011 = vadd.f32 %v3794, %v4010
    %4012 = vmatprep.mubr.f32.mxu0 0.0
    %4013 = vmatmul.mubr.f32.gmra.mrb[0].mxu0 %v3711
    %v4014 = vpop.f32.mrb[0].mxu0
    %v4015 = vadd.f32 %v3790, %v4014
    %v4016 = vpop.f32.mrb[0].mxu0
    %v4017 = vadd.f32 %v3794, %v4016
    %4018 = vmatprep.mubr.f32.mxu0 0.0
    %4019 = vmatmul.mubr.f32.gmra.mrb[0].mxu0 %v3712
    %v4020 = vpop.f32.mrb[0].mxu0
    %v4021 = vadd.f32 %v3790, %v4020
    %v4022 = vpop.f32.mrb[0].mxu0
    %v4023 = vadd.f32 %v3794, %v4022
    %4024 = vdwg.mxu0
    %4025 = vst [vmem:[#allocation2] sm:$0xff] %v3866
    %4026 = vst [vmem:[#allocation2 + $0x8] sm:$0xff] %v3868
    %4027 = vst [vmem:[#allocation2 + $0x10] sm:$0xff] %v3979
    %4028 = vst [vmem:[#allocation2 + $0x18] sm:$0xff] %v3981
    %4029 = vst [vmem:[#allocation2 + $0x20] sm:$0xff] %v3872
    %4030 = vst [vmem:[#allocation2 + $0x28] sm:$0xff] %v3874
    %4031 = vst [vmem:[#allocation2 + $0x30] sm:$0xff] %v3985
    %4032 = vst [vmem:[#allocation2 + $0x38] sm:$0xff] %v3987
    %4033 = vst [vmem:[#allocation2 + $0x40] sm:$0xff] %v3878
    %4034 = vst [vmem:[#allocation2 + $0x48] sm:$0xff] %v3880
    %4035 = vst [vmem:[#allocation2 + $0x50] sm:$0xff] %v3991
    %4036 = vst [vmem:[#allocation2 + $0x58] sm:$0xff] %v3993
    %4037 = vst [vmem:[#allocation2 + $0x60] sm:$0xff] %v3884
    %4038 = vst [vmem:[#allocation2 + $0x68] sm:$0xff] %v3886
    %4039 = vst [vmem:[#allocation2 + $0x70] sm:$0xff] %v3997
    %4040 = vst [vmem:[#allocation2 + $0x78] sm:$0xff] %v3999
    %4041 = vst [vmem:[#allocation2 + $0x80] sm:$0xff] %v3890
    %4042 = vst [vmem:[#allocation2 + $0x88] sm:$0xff] %v3892
    %4043 = vst [vmem:[#allocation2 + $0x90] sm:$0xff] %v4003
    %4044 = vst [vmem:[#allocation2 + $0x98] sm:$0xff] %v4005
    %4045 = vst [vmem:[#allocation2 + $0xa0] sm:$0xff] %v3896
    %4046 = vst [vmem:[#allocation2 + $0xa8] sm:$0xff] %v3898
    %4047 = vst [vmem:[#allocation2 + $0xb0] sm:$0xff] %v4009
    %4048 = vst [vmem:[#allocation2 + $0xb8] sm:$0xff] %v4011
    %4049 = vst [vmem:[#allocation2 + $0xc0] sm:$0xff] %v3902
    %4050 = vst [vmem:[#allocation2 + $0xc8] sm:$0xff] %v3904
    %4051 = vst [vmem:[#allocation2 + $0xd0] sm:$0xff] %v4015
    %4052 = vst [vmem:[#allocation2 + $0xd8] sm:$0xff] %v4017
    %4053 = vst [vmem:[#allocation2 + $0xe0] sm:$0xff] %v3908
    %4054 = vst [vmem:[#allocation2 + $0xe8] sm:$0xff] %v3910
    %4055 = vst [vmem:[#allocation2 + $0xf0] sm:$0xff] %v4021
    %4056 = vst [vmem:[#allocation2 + $0xf8] sm:$0xff] %v4023
    %v4057 = vld [vmem:[%s85] sm:$0xff]
    %v4058 = vld [vmem:[%s85 + $0x8] sm:$0xff]
    %v4059 = vld [vmem:[%s85 + $0x10] sm:$0xff]
    %v4060 = vld [vmem:[%s85 + $0x18] sm:$0xff]
    %v4061 = vld [vmem:[%s85 + $0x20] sm:$0xff]
    %v4062 = vld [vmem:[%s85 + $0x28] sm:$0xff]
    %v4063 = vld [vmem:[%s85 + $0x30] sm:$0xff]
    %v4064 = vld [vmem:[%s85 + $0x38] sm:$0xff]
    %v4065 = vld [vmem:[%s85 + $0x40] sm:$0xff]
    %v4066 = vld [vmem:[%s85 + $0x48] sm:$0xff]
    %v4067 = vld [vmem:[%s85 + $0x50] sm:$0xff]
    %v4068 = vld [vmem:[%s85 + $0x58] sm:$0xff]
    %v4069 = vld [vmem:[%s85 + $0x60] sm:$0xff]
    %v4070 = vld [vmem:[%s85 + $0x68] sm:$0xff]
    %v4071 = vld [vmem:[%s85 + $0x70] sm:$0xff]
    %v4072 = vld [vmem:[%s85 + $0x78] sm:$0xff]
    %v4073 = vld [vmem:[%s85 + $0x80] sm:$0xff]
    %v4074 = vld [vmem:[%s85 + $0x88] sm:$0xff]
    %v4075 = vld [vmem:[%s85 + $0x90] sm:$0xff]
    %v4076 = vld [vmem:[%s85 + $0x98] sm:$0xff]
    %v4077 = vld [vmem:[%s85 + $0xa0] sm:$0xff]
    %v4078 = vld [vmem:[%s85 + $0xa8] sm:$0xff]
    %v4079 = vld [vmem:[%s85 + $0xb0] sm:$0xff]
    %v4080 = vld [vmem:[%s85 + $0xb8] sm:$0xff]
    %v4081 = vld [vmem:[%s85 + $0xc0] sm:$0xff]
    %v4082 = vld [vmem:[%s85 + $0xc8] sm:$0xff]
    %v4083 = vld [vmem:[%s85 + $0xd0] sm:$0xff]
    %v4084 = vld [vmem:[%s85 + $0xd8] sm:$0xff]
    %v4085 = vld [vmem:[%s85 + $0xe0] sm:$0xff]
    %v4086 = vld [vmem:[%s85 + $0xe8] sm:$0xff]
    %v4087 = vld [vmem:[%s85 + $0xf0] sm:$0xff]
    %v4088 = vld [vmem:[%s85 + $0xf8] sm:$0xff]
    %v4089 = vld [vmem:[%s85 + $0x100] sm:$0xff]
    %v4090 = vld [vmem:[%s85 + $0x108] sm:$0xff]
    %v4091 = vld [vmem:[%s85 + $0x110] sm:$0xff]
    %v4092 = vld [vmem:[%s85 + $0x118] sm:$0xff]
    %v4093 = vld [vmem:[%s85 + $0x120] sm:$0xff]
    %v4094 = vld [vmem:[%s85 + $0x128] sm:$0xff]
    %v4095 = vld [vmem:[%s85 + $0x130] sm:$0xff]
    %v4096 = vld [vmem:[%s85 + $0x138] sm:$0xff]
    %v4097 = vld [vmem:[%s85 + $0x140] sm:$0xff]
    %v4098 = vld [vmem:[%s85 + $0x148] sm:$0xff]
    %v4099 = vld [vmem:[%s85 + $0x150] sm:$0xff]
    %v4100 = vld [vmem:[%s85 + $0x158] sm:$0xff]
    %v4101 = vld [vmem:[%s85 + $0x160] sm:$0xff]
    %v4102 = vld [vmem:[%s85 + $0x168] sm:$0xff]
    %v4103 = vld [vmem:[%s85 + $0x170] sm:$0xff]
    %v4104 = vld [vmem:[%s85 + $0x178] sm:$0xff]
    %v4105 = vld [vmem:[%s85 + $0x180] sm:$0xff]
    %v4106 = vld [vmem:[%s85 + $0x188] sm:$0xff]
    %v4107 = vld [vmem:[%s85 + $0x190] sm:$0xff]
    %v4108 = vld [vmem:[%s85 + $0x198] sm:$0xff]
    %v4109 = vld [vmem:[%s85 + $0x1a0] sm:$0xff]
    %v4110 = vld [vmem:[%s85 + $0x1a8] sm:$0xff]
    %v4111 = vld [vmem:[%s85 + $0x1b0] sm:$0xff]
    %v4112 = vld [vmem:[%s85 + $0x1b8] sm:$0xff]
    %v4113 = vld [vmem:[%s85 + $0x1c0] sm:$0xff]
    %v4114 = vld [vmem:[%s85 + $0x1c8] sm:$0xff]
    %v4115 = vld [vmem:[%s85 + $0x1d0] sm:$0xff]
    %v4116 = vld [vmem:[%s85 + $0x1d8] sm:$0xff]
    %v4117 = vld [vmem:[%s85 + $0x1e0] sm:$0xff]
    %v4118 = vld [vmem:[%s85 + $0x1e8] sm:$0xff]
    %v4119 = vld [vmem:[%s85 + $0x1f0] sm:$0xff]
    %v4120 = vld [vmem:[%s85 + $0x1f8] sm:$0xff]
    %v4121 = vld [vmem:[#allocation2] sm:$0xff]
    %v4122 = vld [vmem:[#allocation2 + $0x8] sm:$0xff]
    %v4123 = vld [vmem:[#allocation2 + $0x10] sm:$0xff]
    %v4124 = vld [vmem:[#allocation2 + $0x18] sm:$0xff]
    %4125 = vmatprep.subr.mxu0 %v4058
    %4126 = vmatpush1.msra.mxu0 %v4057
    %4127 = vmatprep.subr.mxu0 %v4062
    %4128 = vmatpush1.msra.mxu0 %v4061
    %4129 = vmatprep.subr.mxu0 %v4066
    %4130 = vmatpush1.msra.mxu0 %v4065
    %4131 = vmatprep.subr.mxu0 %v4070
    %4132 = vmatpush1.msra.mxu0 %v4069
    %4133 = vmatprep.subr.mxu0 %v4074
    %4134 = vmatpush1.msra.mxu0 %v4073
    %4135 = vmatprep.subr.mxu0 %v4078
    %4136 = vmatpush1.msra.mxu0 %v4077
    %4137 = vmatprep.subr.mxu0 %v4082
    %4138 = vmatpush1.msra.mxu0 %v4081
    %4139 = vmatprep.subr.mxu0 %v4086
    %4140 = vmatpush1.msra.mxu0 %v4085
    %4141 = vmatprep.subr.mxu0 %v4090
    %4142 = vmatpush1.msra.mxu0 %v4089
    %4143 = vmatprep.subr.mxu0 %v4094
    %4144 = vmatpush1.msra.mxu0 %v4093
    %4145 = vmatprep.subr.mxu0 %v4098
    %4146 = vmatpush1.msra.mxu0 %v4097
    %4147 = vmatprep.subr.mxu0 %v4102
    %4148 = vmatpush1.msra.mxu0 %v4101
    %4149 = vmatprep.subr.mxu0 %v4106
    %4150 = vmatpush1.msra.mxu0 %v4105
    %4151 = vmatprep.subr.mxu0 %v4110
    %4152 = vmatpush1.msra.mxu0 %v4109
    %4153 = vmatprep.subr.mxu0 %v4114
    %4154 = vmatpush1.msra.mxu0 %v4113
    %4155 = vmatprep.subr.mxu0 %v4118
    %4156 = vmatpush1.msra.mxu0 %v4117
    %4157 = vmatprep.subr.mxu0 0.0
    %4158 = vmatpush1.msra.mxu0 0.0
    %4159 = vmatprep.subr.mxu0 0.0
    %4160 = vmatpush1.msra.mxu0 0.0
    %4161 = vmatprep.subr.mxu0 0.0
    %4162 = vmatpush1.msra.mxu0 0.0
    %4163 = vmatprep.subr.mxu0 0.0
    %4164 = vmatpush1.msra.mxu0 0.0
    %4165 = vmatprep.subr.mxu0 0.0
    %4166 = vmatpush1.msra.mxu0 0.0
    %4167 = vmatprep.subr.mxu0 0.0
    %4168 = vmatpush1.msra.mxu0 0.0
    %4169 = vmatprep.subr.mxu0 0.0
    %4170 = vmatpush1.msra.mxu0 0.0
    %4171 = vmatprep.subr.mxu0 0.0
    %4172 = vmatpush1.msra.mxu0 0.0
    %4173 = vmatprep.subr.mxu0 0.0
    %4174 = vmatpush1.msra.mxu0 0.0
    %4175 = vmatprep.subr.mxu0 0.0
    %4176 = vmatpush1.msra.mxu0 0.0
    %4177 = vmatprep.subr.mxu0 0.0
    %4178 = vmatpush1.msra.mxu0 0.0
    %4179 = vmatprep.subr.mxu0 0.0
    %4180 = vmatpush1.msra.mxu0 0.0
    %4181 = vmatprep.subr.mxu0 0.0
    %4182 = vmatpush1.msra.mxu0 0.0
    %4183 = vmatprep.subr.mxu0 0.0
    %4184 = vmatpush1.msra.mxu0 0.0
    %4185 = vmatprep.subr.mxu0 0.0
    %4186 = vmatpush1.msra.mxu0 0.0
    %4187 = vmatprep.subr.mxu0 0.0
    %4188 = vmatpush1.msra.mxu0 0.0
    %4189 = vmatprep.mubr.f32.mxu0 0.0
    %4190 = vmatmul.mubr.f32.gmra.mrb[0].mxu0 0.0
    %v4191 = vpop.f32.mrb[0].mxu0
    %v4192 = vadd.f32 0.0, %v4191
    %v4193 = vpop.f32.mrb[0].mxu0
    %v4194 = vadd.f32 0.0, %v4193
    %4195 = vdwg.mxu0
    %4196 = vmatprep.subr.mxu0 %v4060
    %4197 = vmatpush1.msra.mxu0 %v4059
    %4198 = vmatprep.subr.mxu0 %v4064
    %4199 = vmatpush1.msra.mxu0 %v4063
    %4200 = vmatprep.subr.mxu0 %v4068
    %4201 = vmatpush1.msra.mxu0 %v4067
    %4202 = vmatprep.subr.mxu0 %v4072
    %4203 = vmatpush1.msra.mxu0 %v4071
    %4204 = vmatprep.subr.mxu0 %v4076
    %4205 = vmatpush1.msra.mxu0 %v4075
    %4206 = vmatprep.subr.mxu0 %v4080
    %4207 = vmatpush1.msra.mxu0 %v4079
    %4208 = vmatprep.subr.mxu0 %v4084
    %4209 = vmatpush1.msra.mxu0 %v4083
    %4210 = vmatprep.subr.mxu0 %v4088
    %4211 = vmatpush1.msra.mxu0 %v4087
    %4212 = vmatprep.subr.mxu0 %v4092
    %4213 = vmatpush1.msra.mxu0 %v4091
    %4214 = vmatprep.subr.mxu0 %v4096
    %4215 = vmatpush1.msra.mxu0 %v4095
    %4216 = vmatprep.subr.mxu0 %v4100
    %4217 = vmatpush1.msra.mxu0 %v4099
    %4218 = vmatprep.subr.mxu0 %v4104
    %4219 = vmatpush1.msra.mxu0 %v4103
    %4220 = vmatprep.subr.mxu0 %v4108
    %4221 = vmatpush1.msra.mxu0 %v4107
    %4222 = vmatprep.subr.mxu0 %v4112
    %4223 = vmatpush1.msra.mxu0 %v4111
    %4224 = vmatprep.subr.mxu0 %v4116
    %4225 = vmatpush1.msra.mxu0 %v4115
    %4226 = vmatprep.subr.mxu0 %v4120
    %4227 = vmatpush1.msra.mxu0 %v4119
    %4228 = vmatprep.subr.mxu0 0.0
    %4229 = vmatpush1.msra.mxu0 0.0
    %4230 = vmatprep.subr.mxu0 0.0
    %4231 = vmatpush1.msra.mxu0 0.0
    %4232 = vmatprep.subr.mxu0 0.0
    %4233 = vmatpush1.msra.mxu0 0.0
    %4234 = vmatprep.subr.mxu0 0.0
    %4235 = vmatpush1.msra.mxu0 0.0
    %4236 = vmatprep.subr.mxu0 0.0
    %4237 = vmatpush1.msra.mxu0 0.0
    %4238 = vmatprep.subr.mxu0 0.0
    %4239 = vmatpush1.msra.mxu0 0.0
    %4240 = vmatprep.subr.mxu0 0.0
    %4241 = vmatpush1.msra.mxu0 0.0
    %4242 = vmatprep.subr.mxu0 0.0
    %4243 = vmatpush1.msra.mxu0 0.0
    %4244 = vmatprep.subr.mxu0 0.0
    %4245 = vmatpush1.msra.mxu0 0.0
    %4246 = vmatprep.subr.mxu0 0.0
    %4247 = vmatpush1.msra.mxu0 0.0
    %4248 = vmatprep.subr.mxu0 0.0
    %4249 = vmatpush1.msra.mxu0 0.0
    %4250 = vmatprep.subr.mxu0 0.0
    %4251 = vmatpush1.msra.mxu0 0.0
    %4252 = vmatprep.subr.mxu0 0.0
    %4253 = vmatpush1.msra.mxu0 0.0
    %4254 = vmatprep.subr.mxu0 0.0
    %4255 = vmatpush1.msra.mxu0 0.0
    %4256 = vmatprep.subr.mxu0 0.0
    %4257 = vmatpush1.msra.mxu0 0.0
    %4258 = vmatprep.subr.mxu0 0.0
    %4259 = vmatpush1.msra.mxu0 0.0
    %4260 = vmatprep.mubr.f32.mxu0 0.0
    %4261 = vmatmul.mubr.f32.gmra.mrb[0].mxu0 0.0
    %v4262 = vpop.f32.mrb[0].mxu0
    %v4263 = vadd.f32 0.0, %v4262
    %v4264 = vpop.f32.mrb[0].mxu0
    %v4265 = vadd.f32 0.0, %v4264
    %4266 = vdwg.mxu0
    %v4267 = vadd.f32 %v4121, %v4192
    %v4268 = vadd.f32 %v4122, %v4194
    %v4269 = vadd.f32 %v4123, %v4263
    %v4270 = vadd.f32 %v4124, %v4265
    %v4271 = vxor.u32 %v4267, 2147483648
    %v4272 = vxor.u32 %v4268, 2147483648
    %v4273 = vxor.u32 %v4269, 2147483648
    %v4274 = vmul.f32 %v4271, 1.442695
    %v4275 = vpow.pop %v4274
    %v4276 = vmul.f32 %v4272, 1.442695
    %v4277 = vpow.pop %v4276
    %v4278 = vmul.f32 %v4273, 1.442695
    %v4279 = vpow.pop %v4278
    %v4280 = vadd.f32 %v4275, 1.0
    %v4281 = vadd.f32 %v4277, 1.0
    %v4282 = vadd.f32 %v4279, 1.0
    %v4283 = vrcp.pop %v4280
    %v4284 = vmul.f32 1.0, %v4283
    %v4285 = vrcp.pop %v4281
    %v4286 = vmul.f32 1.0, %v4285
    %v4287 = vrcp.pop %v4282
    %v4288 = vmul.f32 1.0, %v4287
    %v4289 = vtanh.pop %v4270
    %v4290 = vmul.f32 %v4286, 0.0
    %v4291 = vmul.f32 %v4284, %v4289
    %v4292 = vadd.f32 %v4290, %v4291
    %v4293 = vtanh.pop %v4292
    %v4294 = vmul.f32 %v4288, %v4293
    %4295 = vst [vmem:[#allocation3] sm:$0xff] %v4294
    %v4296 = vld [vmem:[#allocation2 + $0x20] sm:$0xff]
    %v4297 = vld [vmem:[#allocation2 + $0x28] sm:$0xff]
    %v4298 = vld [vmem:[#allocation2 + $0x30] sm:$0xff]
    %v4299 = vld [vmem:[#allocation2 + $0x38] sm:$0xff]
    %4300 = vmatprep.subr.mxu0 %v4058
    %4301 = vmatpush1.msra.mxu0 %v4057
    %4302 = vmatprep.subr.mxu0 %v4062
    %4303 = vmatpush1.msra.mxu0 %v4061
    %4304 = vmatprep.subr.mxu0 %v4066
    %4305 = vmatpush1.msra.mxu0 %v4065
    %4306 = vmatprep.subr.mxu0 %v4070
    %4307 = vmatpush1.msra.mxu0 %v4069
    %4308 = vmatprep.subr.mxu0 %v4074
    %4309 = vmatpush1.msra.mxu0 %v4073
    %4310 = vmatprep.subr.mxu0 %v4078
    %4311 = vmatpush1.msra.mxu0 %v4077
    %4312 = vmatprep.subr.mxu0 %v4082
    %4313 = vmatpush1.msra.mxu0 %v4081
    %4314 = vmatprep.subr.mxu0 %v4086
    %4315 = vmatpush1.msra.mxu0 %v4085
    %4316 = vmatprep.subr.mxu0 %v4090
    %4317 = vmatpush1.msra.mxu0 %v4089
    %4318 = vmatprep.subr.mxu0 %v4094
    %4319 = vmatpush1.msra.mxu0 %v4093
    %4320 = vmatprep.subr.mxu0 %v4098
    %4321 = vmatpush1.msra.mxu0 %v4097
    %4322 = vmatprep.subr.mxu0 %v4102
    %4323 = vmatpush1.msra.mxu0 %v4101
    %4324 = vmatprep.subr.mxu0 %v4106
    %4325 = vmatpush1.msra.mxu0 %v4105
    %4326 = vmatprep.subr.mxu0 %v4110
    %4327 = vmatpush1.msra.mxu0 %v4109
    %4328 = vmatprep.subr.mxu0 %v4114
    %4329 = vmatpush1.msra.mxu0 %v4113
    %4330 = vmatprep.subr.mxu0 %v4118
    %4331 = vmatpush1.msra.mxu0 %v4117
    %4332 = vmatprep.subr.mxu0 0.0
    %4333 = vmatpush1.msra.mxu0 0.0
    %4334 = vmatprep.subr.mxu0 0.0
    %4335 = vmatpush1.msra.mxu0 0.0
    %4336 = vmatprep.subr.mxu0 0.0
    %4337 = vmatpush1.msra.mxu0 0.0
    %4338 = vmatprep.subr.mxu0 0.0
    %4339 = vmatpush1.msra.mxu0 0.0
    %4340 = vmatprep.subr.mxu0 0.0
    %4341 = vmatpush1.msra.mxu0 0.0
    %4342 = vmatprep.subr.mxu0 0.0
    %4343 = vmatpush1.msra.mxu0 0.0
    %4344 = vmatprep.subr.mxu0 0.0
    %4345 = vmatpush1.msra.mxu0 0.0
    %4346 = vmatprep.subr.mxu0 0.0
    %4347 = vmatpush1.msra.mxu0 0.0
    %4348 = vmatprep.subr.mxu0 0.0
    %4349 = vmatpush1.msra.mxu0 0.0
    %4350 = vmatprep.subr.mxu0 0.0
    %4351 = vmatpush1.msra.mxu0 0.0
    %4352 = vmatprep.subr.mxu0 0.0
    %4353 = vmatpush1.msra.mxu0 0.0
    %4354 = vmatprep.subr.mxu0 0.0
    %4355 = vmatpush1.msra.mxu0 0.0
    %4356 = vmatprep.subr.mxu0 0.0
    %4357 = vmatpush1.msra.mxu0 0.0
    %4358 = vmatprep.subr.mxu0 0.0
    %4359 = vmatpush1.msra.mxu0 0.0
    %4360 = vmatprep.subr.mxu0 0.0
    %4361 = vmatpush1.msra.mxu0 0.0
    %4362 = vmatprep.subr.mxu0 0.0
    %4363 = vmatpush1.msra.mxu0 0.0
    %4364 = vmatprep.mubr.f32.mxu0 0.0
    %4365 = vmatmul.mubr.f32.gmra.mrb[0].mxu0 %v4294
    %v4366 = vpop.f32.mrb[0].mxu0
    %v4367 = vadd.f32 0.0, %v4366
    %v4368 = vpop.f32.mrb[0].mxu0
    %v4369 = vadd.f32 0.0, %v4368
    %4370 = vdwg.mxu0
    %4371 = vmatprep.subr.mxu0 %v4060
    %4372 = vmatpush1.msra.mxu0 %v4059
    %4373 = vmatprep.subr.mxu0 %v4064
    %4374 = vmatpush1.msra.mxu0 %v4063
    %4375 = vmatprep.subr.mxu0 %v4068
    %4376 = vmatpush1.msra.mxu0 %v4067
    %4377 = vmatprep.subr.mxu0 %v4072
    %4378 = vmatpush1.msra.mxu0 %v4071
    %4379 = vmatprep.subr.mxu0 %v4076
    %4380 = vmatpush1.msra.mxu0 %v4075
    %4381 = vmatprep.subr.mxu0 %v4080
    %4382 = vmatpush1.msra.mxu0 %v4079
    %4383 = vmatprep.subr.mxu0 %v4084
    %4384 = vmatpush1.msra.mxu0 %v4083
    %4385 = vmatprep.subr.mxu0 %v4088
    %4386 = vmatpush1.msra.mxu0 %v4087
    %4387 = vmatprep.subr.mxu0 %v4092
    %4388 = vmatpush1.msra.mxu0 %v4091
    %4389 = vmatprep.subr.mxu0 %v4096
    %4390 = vmatpush1.msra.mxu0 %v4095
    %4391 = vmatprep.subr.mxu0 %v4100
    %4392 = vmatpush1.msra.mxu0 %v4099
    %4393 = vmatprep.subr.mxu0 %v4104
    %4394 = vmatpush1.msra.mxu0 %v4103
    %4395 = vmatprep.subr.mxu0 %v4108
    %4396 = vmatpush1.msra.mxu0 %v4107
    %4397 = vmatprep.subr.mxu0 %v4112
    %4398 = vmatpush1.msra.mxu0 %v4111
    %4399 = vmatprep.subr.mxu0 %v4116
    %4400 = vmatpush1.msra.mxu0 %v4115
    %4401 = vmatprep.subr.mxu0 %v4120
    %4402 = vmatpush1.msra.mxu0 %v4119
    %4403 = vmatprep.subr.mxu0 0.0
    %4404 = vmatpush1.msra.mxu0 0.0
    %4405 = vmatprep.subr.mxu0 0.0
    %4406 = vmatpush1.msra.mxu0 0.0
    %4407 = vmatprep.subr.mxu0 0.0
    %4408 = vmatpush1.msra.mxu0 0.0
    %4409 = vmatprep.subr.mxu0 0.0
    %4410 = vmatpush1.msra.mxu0 0.0
    %4411 = vmatprep.subr.mxu0 0.0
    %4412 = vmatpush1.msra.mxu0 0.0
    %4413 = vmatprep.subr.mxu0 0.0
    %4414 = vmatpush1.msra.mxu0 0.0
    %4415 = vmatprep.subr.mxu0 0.0
    %4416 = vmatpush1.msra.mxu0 0.0
    %4417 = vmatprep.subr.mxu0 0.0
    %4418 = vmatpush1.msra.mxu0 0.0
    %4419 = vmatprep.subr.mxu0 0.0
    %4420 = vmatpush1.msra.mxu0 0.0
    %4421 = vmatprep.subr.mxu0 0.0
    %4422 = vmatpush1.msra.mxu0 0.0
    %4423 = vmatprep.subr.mxu0 0.0
    %4424 = vmatpush1.msra.mxu0 0.0
    %4425 = vmatprep.subr.mxu0 0.0
    %4426 = vmatpush1.msra.mxu0 0.0
    %4427 = vmatprep.subr.mxu0 0.0
    %4428 = vmatpush1.msra.mxu0 0.0
    %4429 = vmatprep.subr.mxu0 0.0
    %4430 = vmatpush1.msra.mxu0 0.0
    %4431 = vmatprep.subr.mxu0 0.0
    %4432 = vmatpush1.msra.mxu0 0.0
    %4433 = vmatprep.subr.mxu0 0.0
    %4434 = vmatpush1.msra.mxu0 0.0
    %4435 = vmatprep.mubr.f32.mxu0 0.0
    %4436 = vmatmul.mubr.f32.gmra.mrb[0].mxu0 %v4294
    %v4437 = vpop.f32.mrb[0].mxu0
    %v4438 = vadd.f32 0.0, %v4437
    %v4439 = vpop.f32.mrb[0].mxu0
    %v4440 = vadd.f32 0.0, %v4439
    %4441 = vdwg.mxu0
    %v4442 = vadd.f32 %v4296, %v4367
    %v4443 = vadd.f32 %v4297, %v4369
    %v4444 = vadd.f32 %v4298, %v4438
    %v4445 = vadd.f32 %v4299, %v4440
    %v4446 = vxor.u32 %v4442, 2147483648
    %v4447 = vxor.u32 %v4443, 2147483648
    %v4448 = vxor.u32 %v4444, 2147483648
    %v4449 = vmul.f32 %v4446, 1.442695
    %v4450 = vpow.pop %v4449
    %v4451 = vmul.f32 %v4447, 1.442695
    %v4452 = vpow.pop %v4451
    %v4453 = vmul.f32 %v4448, 1.442695
    %v4454 = vpow.pop %v4453
    %v4455 = vadd.f32 %v4450, 1.0
    %v4456 = vadd.f32 %v4452, 1.0
    %v4457 = vadd.f32 %v4454, 1.0
    %v4458 = vrcp.pop %v4455
    %v4459 = vmul.f32 1.0, %v4458
    %v4460 = vrcp.pop %v4456
    %v4461 = vmul.f32 1.0, %v4460
    %v4462 = vrcp.pop %v4457
    %v4463 = vmul.f32 1.0, %v4462
    %v4464 = vtanh.pop %v4445
    %v4465 = vmul.f32 %v4461, %v4292
    %v4466 = vmul.f32 %v4459, %v4464
    %v4467 = vadd.f32 %v4465, %v4466
    %v4468 = vtanh.pop %v4467
    %v4469 = vmul.f32 %v4463, %v4468
    %4470 = vst [vmem:[#allocation3 + $0x8] sm:$0xff] %v4469
    %v4471 = vld [vmem:[#allocation2 + $0x40] sm:$0xff]
    %v4472 = vld [vmem:[#allocation2 + $0x48] sm:$0xff]
    %v4473 = vld [vmem:[#allocation2 + $0x50] sm:$0xff]
    %v4474 = vld [vmem:[#allocation2 + $0x58] sm:$0xff]
    %4475 = vmatprep.subr.mxu0 %v4058
    %4476 = vmatpush1.msra.mxu0 %v4057
    %4477 = vmatprep.subr.mxu0 %v4062
    %4478 = vmatpush1.msra.mxu0 %v4061
    %4479 = vmatprep.subr.mxu0 %v4066
    %4480 = vmatpush1.msra.mxu0 %v4065
    %4481 = vmatprep.subr.mxu0 %v4070
    %4482 = vmatpush1.msra.mxu0 %v4069
    %4483 = vmatprep.subr.mxu0 %v4074
    %4484 = vmatpush1.msra.mxu0 %v4073
    %4485 = vmatprep.subr.mxu0 %v4078
    %4486 = vmatpush1.msra.mxu0 %v4077
    %4487 = vmatprep.subr.mxu0 %v4082
    %4488 = vmatpush1.msra.mxu0 %v4081
    %4489 = vmatprep.subr.mxu0 %v4086
    %4490 = vmatpush1.msra.mxu0 %v4085
    %4491 = vmatprep.subr.mxu0 %v4090
    %4492 = vmatpush1.msra.mxu0 %v4089
    %4493 = vmatprep.subr.mxu0 %v4094
    %4494 = vmatpush1.msra.mxu0 %v4093
    %4495 = vmatprep.subr.mxu0 %v4098
    %4496 = vmatpush1.msra.mxu0 %v4097
    %4497 = vmatprep.subr.mxu0 %v4102
    %4498 = vmatpush1.msra.mxu0 %v4101
    %4499 = vmatprep.subr.mxu0 %v4106
    %4500 = vmatpush1.msra.mxu0 %v4105
    %4501 = vmatprep.subr.mxu0 %v4110
    %4502 = vmatpush1.msra.mxu0 %v4109
    %4503 = vmatprep.subr.mxu0 %v4114
    %4504 = vmatpush1.msra.mxu0 %v4113
    %4505 = vmatprep.subr.mxu0 %v4118
    %4506 = vmatpush1.msra.mxu0 %v4117
    %4507 = vmatprep.subr.mxu0 0.0
    %4508 = vmatpush1.msra.mxu0 0.0
    %4509 = vmatprep.subr.mxu0 0.0
    %4510 = vmatpush1.msra.mxu0 0.0
    %4511 = vmatprep.subr.mxu0 0.0
    %4512 = vmatpush1.msra.mxu0 0.0
    %4513 = vmatprep.subr.mxu0 0.0
    %4514 = vmatpush1.msra.mxu0 0.0
    %4515 = vmatprep.subr.mxu0 0.0
    %4516 = vmatpush1.msra.mxu0 0.0
    %4517 = vmatprep.subr.mxu0 0.0
    %4518 = vmatpush1.msra.mxu0 0.0
    %4519 = vmatprep.subr.mxu0 0.0
    %4520 = vmatpush1.msra.mxu0 0.0
    %4521 = vmatprep.subr.mxu0 0.0
    %4522 = vmatpush1.msra.mxu0 0.0
    %4523 = vmatprep.subr.mxu0 0.0
    %4524 = vmatpush1.msra.mxu0 0.0
    %4525 = vmatprep.subr.mxu0 0.0
    %4526 = vmatpush1.msra.mxu0 0.0
    %4527 = vmatprep.subr.mxu0 0.0
    %4528 = vmatpush1.msra.mxu0 0.0
    %4529 = vmatprep.subr.mxu0 0.0
    %4530 = vmatpush1.msra.mxu0 0.0
    %4531 = vmatprep.subr.mxu0 0.0
    %4532 = vmatpush1.msra.mxu0 0.0
    %4533 = vmatprep.subr.mxu0 0.0
    %4534 = vmatpush1.msra.mxu0 0.0
    %4535 = vmatprep.subr.mxu0 0.0
    %4536 = vmatpush1.msra.mxu0 0.0
    %4537 = vmatprep.subr.mxu0 0.0
    %4538 = vmatpush1.msra.mxu0 0.0
    %4539 = vmatprep.mubr.f32.mxu0 0.0
    %4540 = vmatmul.mubr.f32.gmra.mrb[0].mxu0 %v4469
    %v4541 = vpop.f32.mrb[0].mxu0
    %v4542 = vadd.f32 0.0, %v4541
    %v4543 = vpop.f32.mrb[0].mxu0
    %v4544 = vadd.f32 0.0, %v4543
    %4545 = vdwg.mxu0
    %4546 = vmatprep.subr.mxu0 %v4060
    %4547 = vmatpush1.msra.mxu0 %v4059
    %4548 = vmatprep.subr.mxu0 %v4064
    %4549 = vmatpush1.msra.mxu0 %v4063
    %4550 = vmatprep.subr.mxu0 %v4068
    %4551 = vmatpush1.msra.mxu0 %v4067
    %4552 = vmatprep.subr.mxu0 %v4072
    %4553 = vmatpush1.msra.mxu0 %v4071
    %4554 = vmatprep.subr.mxu0 %v4076
    %4555 = vmatpush1.msra.mxu0 %v4075
    %4556 = vmatprep.subr.mxu0 %v4080
    %4557 = vmatpush1.msra.mxu0 %v4079
    %4558 = vmatprep.subr.mxu0 %v4084
    %4559 = vmatpush1.msra.mxu0 %v4083
    %4560 = vmatprep.subr.mxu0 %v4088
    %4561 = vmatpush1.msra.mxu0 %v4087
    %4562 = vmatprep.subr.mxu0 %v4092
    %4563 = vmatpush1.msra.mxu0 %v4091
    %4564 = vmatprep.subr.mxu0 %v4096
    %4565 = vmatpush1.msra.mxu0 %v4095
    %4566 = vmatprep.subr.mxu0 %v4100
    %4567 = vmatpush1.msra.mxu0 %v4099
    %4568 = vmatprep.subr.mxu0 %v4104
    %4569 = vmatpush1.msra.mxu0 %v4103
    %4570 = vmatprep.subr.mxu0 %v4108
    %4571 = vmatpush1.msra.mxu0 %v4107
    %4572 = vmatprep.subr.mxu0 %v4112
    %4573 = vmatpush1.msra.mxu0 %v4111
    %4574 = vmatprep.subr.mxu0 %v4116
    %4575 = vmatpush1.msra.mxu0 %v4115
    %4576 = vmatprep.subr.mxu0 %v4120
    %4577 = vmatpush1.msra.mxu0 %v4119
    %4578 = vmatprep.subr.mxu0 0.0
    %4579 = vmatpush1.msra.mxu0 0.0
    %4580 = vmatprep.subr.mxu0 0.0
    %4581 = vmatpush1.msra.mxu0 0.0
    %4582 = vmatprep.subr.mxu0 0.0
    %4583 = vmatpush1.msra.mxu0 0.0
    %4584 = vmatprep.subr.mxu0 0.0
    %4585 = vmatpush1.msra.mxu0 0.0
    %4586 = vmatprep.subr.mxu0 0.0
    %4587 = vmatpush1.msra.mxu0 0.0
    %4588 = vmatprep.subr.mxu0 0.0
    %4589 = vmatpush1.msra.mxu0 0.0
    %4590 = vmatprep.subr.mxu0 0.0
    %4591 = vmatpush1.msra.mxu0 0.0
    %4592 = vmatprep.subr.mxu0 0.0
    %4593 = vmatpush1.msra.mxu0 0.0
    %4594 = vmatprep.subr.mxu0 0.0
    %4595 = vmatpush1.msra.mxu0 0.0
    %4596 = vmatprep.subr.mxu0 0.0
    %4597 = vmatpush1.msra.mxu0 0.0
    %4598 = vmatprep.subr.mxu0 0.0
    %4599 = vmatpush1.msra.mxu0 0.0
    %4600 = vmatprep.subr.mxu0 0.0
    %4601 = vmatpush1.msra.mxu0 0.0
    %4602 = vmatprep.subr.mxu0 0.0
    %4603 = vmatpush1.msra.mxu0 0.0
    %4604 = vmatprep.subr.mxu0 0.0
    %4605 = vmatpush1.msra.mxu0 0.0
    %4606 = vmatprep.subr.mxu0 0.0
    %4607 = vmatpush1.msra.mxu0 0.0
    %4608 = vmatprep.subr.mxu0 0.0
    %4609 = vmatpush1.msra.mxu0 0.0
    %4610 = vmatprep.mubr.f32.mxu0 0.0
    %4611 = vmatmul.mubr.f32.gmra.mrb[0].mxu0 %v4469
    %v4612 = vpop.f32.mrb[0].mxu0
    %v4613 = vadd.f32 0.0, %v4612
    %v4614 = vpop.f32.mrb[0].mxu0
    %v4615 = vadd.f32 0.0, %v4614
    %4616 = vdwg.mxu0
    %v4617 = vadd.f32 %v4471, %v4542
    %v4618 = vadd.f32 %v4472, %v4544
    %v4619 = vadd.f32 %v4473, %v4613
    %v4620 = vadd.f32 %v4474, %v4615
    %v4621 = vxor.u32 %v4617, 2147483648
    %v4622 = vxor.u32 %v4618, 2147483648
    %v4623 = vxor.u32 %v4619, 2147483648
    %v4624 = vmul.f32 %v4621, 1.442695
    %v4625 = vpow.pop %v4624
    %v4626 = vmul.f32 %v4622, 1.442695
    %v4627 = vpow.pop %v4626
    %v4628 = vmul.f32 %v4623, 1.442695
    %v4629 = vpow.pop %v4628
    %v4630 = vadd.f32 %v4625, 1.0
    %v4631 = vadd.f32 %v4627, 1.0
    %v4632 = vadd.f32 %v4629, 1.0
    %v4633 = vrcp.pop %v4630
    %v4634 = vmul.f32 1.0, %v4633
    %v4635 = vrcp.pop %v4631
    %v4636 = vmul.f32 1.0, %v4635
    %v4637 = vrcp.pop %v4632
    %v4638 = vmul.f32 1.0, %v4637
    %v4639 = vtanh.pop %v4620
    %v4640 = vmul.f32 %v4636, %v4467
    %v4641 = vmul.f32 %v4634, %v4639
    %v4642 = vadd.f32 %v4640, %v4641
    %v4643 = vtanh.pop %v4642
    %v4644 = vmul.f32 %v4638, %v4643
    %4645 = vst [vmem:[#allocation3 + $0x10] sm:$0xff] %v4644
    %v4646 = vld [vmem:[#allocation2 + $0x60] sm:$0xff]
    %v4647 = vld [vmem:[#allocation2 + $0x68] sm:$0xff]
    %v4648 = vld [vmem:[#allocation2 + $0x70] sm:$0xff]
    %v4649 = vld [vmem:[#allocation2 + $0x78] sm:$0xff]
    %4650 = vmatprep.subr.mxu0 %v4058
    %4651 = vmatpush1.msra.mxu0 %v4057
    %4652 = vmatprep.subr.mxu0 %v4062
    %4653 = vmatpush1.msra.mxu0 %v4061
    %4654 = vmatprep.subr.mxu0 %v4066
    %4655 = vmatpush1.msra.mxu0 %v4065
    %4656 = vmatprep.subr.mxu0 %v4070
    %4657 = vmatpush1.msra.mxu0 %v4069
    %4658 = vmatprep.subr.mxu0 %v4074
    %4659 = vmatpush1.msra.mxu0 %v4073
    %4660 = vmatprep.subr.mxu0 %v4078
    %4661 = vmatpush1.msra.mxu0 %v4077
    %4662 = vmatprep.subr.mxu0 %v4082
    %4663 = vmatpush1.msra.mxu0 %v4081
    %4664 = vmatprep.subr.mxu0 %v4086
    %4665 = vmatpush1.msra.mxu0 %v4085
    %4666 = vmatprep.subr.mxu0 %v4090
    %4667 = vmatpush1.msra.mxu0 %v4089
    %4668 = vmatprep.subr.mxu0 %v4094
    %4669 = vmatpush1.msra.mxu0 %v4093
    %4670 = vmatprep.subr.mxu0 %v4098
    %4671 = vmatpush1.msra.mxu0 %v4097
    %4672 = vmatprep.subr.mxu0 %v4102
    %4673 = vmatpush1.msra.mxu0 %v4101
    %4674 = vmatprep.subr.mxu0 %v4106
    %4675 = vmatpush1.msra.mxu0 %v4105
    %4676 = vmatprep.subr.mxu0 %v4110
    %4677 = vmatpush1.msra.mxu0 %v4109
    %4678 = vmatprep.subr.mxu0 %v4114
    %4679 = vmatpush1.msra.mxu0 %v4113
    %4680 = vmatprep.subr.mxu0 %v4118
    %4681 = vmatpush1.msra.mxu0 %v4117
    %4682 = vmatprep.subr.mxu0 0.0
    %4683 = vmatpush1.msra.mxu0 0.0
    %4684 = vmatprep.subr.mxu0 0.0
    %4685 = vmatpush1.msra.mxu0 0.0
    %4686 = vmatprep.subr.mxu0 0.0
    %4687 = vmatpush1.msra.mxu0 0.0
    %4688 = vmatprep.subr.mxu0 0.0
    %4689 = vmatpush1.msra.mxu0 0.0
    %4690 = vmatprep.subr.mxu0 0.0
    %4691 = vmatpush1.msra.mxu0 0.0
    %4692 = vmatprep.subr.mxu0 0.0
    %4693 = vmatpush1.msra.mxu0 0.0
    %4694 = vmatprep.subr.mxu0 0.0
    %4695 = vmatpush1.msra.mxu0 0.0
    %4696 = vmatprep.subr.mxu0 0.0
    %4697 = vmatpush1.msra.mxu0 0.0
    %4698 = vmatprep.subr.mxu0 0.0
    %4699 = vmatpush1.msra.mxu0 0.0
    %4700 = vmatprep.subr.mxu0 0.0
    %4701 = vmatpush1.msra.mxu0 0.0
    %4702 = vmatprep.subr.mxu0 0.0
    %4703 = vmatpush1.msra.mxu0 0.0
    %4704 = vmatprep.subr.mxu0 0.0
    %4705 = vmatpush1.msra.mxu0 0.0
    %4706 = vmatprep.subr.mxu0 0.0
    %4707 = vmatpush1.msra.mxu0 0.0
    %4708 = vmatprep.subr.mxu0 0.0
    %4709 = vmatpush1.msra.mxu0 0.0
    %4710 = vmatprep.subr.mxu0 0.0
    %4711 = vmatpush1.msra.mxu0 0.0
    %4712 = vmatprep.subr.mxu0 0.0
    %4713 = vmatpush1.msra.mxu0 0.0
    %4714 = vmatprep.mubr.f32.mxu0 0.0
    %4715 = vmatmul.mubr.f32.gmra.mrb[0].mxu0 %v4644
    %v4716 = vpop.f32.mrb[0].mxu0
    %v4717 = vadd.f32 0.0, %v4716
    %v4718 = vpop.f32.mrb[0].mxu0
    %v4719 = vadd.f32 0.0, %v4718
    %4720 = vdwg.mxu0
    %4721 = vmatprep.subr.mxu0 %v4060
    %4722 = vmatpush1.msra.mxu0 %v4059
    %4723 = vmatprep.subr.mxu0 %v4064
    %4724 = vmatpush1.msra.mxu0 %v4063
    %4725 = vmatprep.subr.mxu0 %v4068
    %4726 = vmatpush1.msra.mxu0 %v4067
    %4727 = vmatprep.subr.mxu0 %v4072
    %4728 = vmatpush1.msra.mxu0 %v4071
    %4729 = vmatprep.subr.mxu0 %v4076
    %4730 = vmatpush1.msra.mxu0 %v4075
    %4731 = vmatprep.subr.mxu0 %v4080
    %4732 = vmatpush1.msra.mxu0 %v4079
    %4733 = vmatprep.subr.mxu0 %v4084
    %4734 = vmatpush1.msra.mxu0 %v4083
    %4735 = vmatprep.subr.mxu0 %v4088
    %4736 = vmatpush1.msra.mxu0 %v4087
    %4737 = vmatprep.subr.mxu0 %v4092
    %4738 = vmatpush1.msra.mxu0 %v4091
    %4739 = vmatprep.subr.mxu0 %v4096
    %4740 = vmatpush1.msra.mxu0 %v4095
    %4741 = vmatprep.subr.mxu0 %v4100
    %4742 = vmatpush1.msra.mxu0 %v4099
    %4743 = vmatprep.subr.mxu0 %v4104
    %4744 = vmatpush1.msra.mxu0 %v4103
    %4745 = vmatprep.subr.mxu0 %v4108
    %4746 = vmatpush1.msra.mxu0 %v4107
    %4747 = vmatprep.subr.mxu0 %v4112
    %4748 = vmatpush1.msra.mxu0 %v4111
    %4749 = vmatprep.subr.mxu0 %v4116
    %4750 = vmatpush1.msra.mxu0 %v4115
    %4751 = vmatprep.subr.mxu0 %v4120
    %4752 = vmatpush1.msra.mxu0 %v4119
    %4753 = vmatprep.subr.mxu0 0.0
    %4754 = vmatpush1.msra.mxu0 0.0
    %4755 = vmatprep.subr.mxu0 0.0
    %4756 = vmatpush1.msra.mxu0 0.0
    %4757 = vmatprep.subr.mxu0 0.0
    %4758 = vmatpush1.msra.mxu0 0.0
    %4759 = vmatprep.subr.mxu0 0.0
    %4760 = vmatpush1.msra.mxu0 0.0
    %4761 = vmatprep.subr.mxu0 0.0
    %4762 = vmatpush1.msra.mxu0 0.0
    %4763 = vmatprep.subr.mxu0 0.0
    %4764 = vmatpush1.msra.mxu0 0.0
    %4765 = vmatprep.subr.mxu0 0.0
    %4766 = vmatpush1.msra.mxu0 0.0
    %4767 = vmatprep.subr.mxu0 0.0
    %4768 = vmatpush1.msra.mxu0 0.0
    %4769 = vmatprep.subr.mxu0 0.0
    %4770 = vmatpush1.msra.mxu0 0.0
    %4771 = vmatprep.subr.mxu0 0.0
    %4772 = vmatpush1.msra.mxu0 0.0
    %4773 = vmatprep.subr.mxu0 0.0
    %4774 = vmatpush1.msra.mxu0 0.0
    %4775 = vmatprep.subr.mxu0 0.0
    %4776 = vmatpush1.msra.mxu0 0.0
    %4777 = vmatprep.subr.mxu0 0.0
    %4778 = vmatpush1.msra.mxu0 0.0
    %4779 = vmatprep.subr.mxu0 0.0
    %4780 = vmatpush1.msra.mxu0 0.0
    %4781 = vmatprep.subr.mxu0 0.0
    %4782 = vmatpush1.msra.mxu0 0.0
    %4783 = vmatprep.subr.mxu0 0.0
    %4784 = vmatpush1.msra.mxu0 0.0
    %4785 = vmatprep.mubr.f32.mxu0 0.0
    %4786 = vmatmul.mubr.f32.gmra.mrb[0].mxu0 %v4644
    %v4787 = vpop.f32.mrb[0].mxu0
    %v4788 = vadd.f32 0.0, %v4787
    %v4789 = vpop.f32.mrb[0].mxu0
    %v4790 = vadd.f32 0.0, %v4789
    %4791 = vdwg.mxu0
    %v4792 = vadd.f32 %v4646, %v4717
    %v4793 = vadd.f32 %v4647, %v4719
    %v4794 = vadd.f32 %v4648, %v4788
    %v4795 = vadd.f32 %v4649, %v4790
    %v4796 = vxor.u32 %v4792, 2147483648
    %v4797 = vxor.u32 %v4793, 2147483648
    %v4798 = vxor.u32 %v4794, 2147483648
    %v4799 = vmul.f32 %v4796, 1.442695
    %v4800 = vpow.pop %v4799
    %v4801 = vmul.f32 %v4797, 1.442695
    %v4802 = vpow.pop %v4801
    %v4803 = vmul.f32 %v4798, 1.442695
    %v4804 = vpow.pop %v4803
    %v4805 = vadd.f32 %v4800, 1.0
    %v4806 = vadd.f32 %v4802, 1.0
    %v4807 = vadd.f32 %v4804, 1.0
    %v4808 = vrcp.pop %v4805
    %v4809 = vmul.f32 1.0, %v4808
    %v4810 = vrcp.pop %v4806
    %v4811 = vmul.f32 1.0, %v4810
    %v4812 = vrcp.pop %v4807
    %v4813 = vmul.f32 1.0, %v4812
    %v4814 = vtanh.pop %v4795
    %v4815 = vmul.f32 %v4811, %v4642
    %v4816 = vmul.f32 %v4809, %v4814
    %v4817 = vadd.f32 %v4815, %v4816
    %v4818 = vtanh.pop %v4817
    %v4819 = vmul.f32 %v4813, %v4818
    %4820 = vst [vmem:[#allocation3 + $0x18] sm:$0xff] %v4819
    %v4821 = vld [vmem:[#allocation2 + $0x80] sm:$0xff]
    %v4822 = vld [vmem:[#allocation2 + $0x88] sm:$0xff]
    %v4823 = vld [vmem:[#allocation2 + $0x90] sm:$0xff]
    %v4824 = vld [vmem:[#allocation2 + $0x98] sm:$0xff]
    %4825 = vmatprep.subr.mxu0 %v4058
    %4826 = vmatpush1.msra.mxu0 %v4057
    %4827 = vmatprep.subr.mxu0 %v4062
    %4828 = vmatpush1.msra.mxu0 %v4061
    %4829 = vmatprep.subr.mxu0 %v4066
    %4830 = vmatpush1.msra.mxu0 %v4065
    %4831 = vmatprep.subr.mxu0 %v4070
    %4832 = vmatpush1.msra.mxu0 %v4069
    %4833 = vmatprep.subr.mxu0 %v4074
    %4834 = vmatpush1.msra.mxu0 %v4073
    %4835 = vmatprep.subr.mxu0 %v4078
    %4836 = vmatpush1.msra.mxu0 %v4077
    %4837 = vmatprep.subr.mxu0 %v4082
    %4838 = vmatpush1.msra.mxu0 %v4081
    %4839 = vmatprep.subr.mxu0 %v4086
    %4840 = vmatpush1.msra.mxu0 %v4085
    %4841 = vmatprep.subr.mxu0 %v4090
    %4842 = vmatpush1.msra.mxu0 %v4089
    %4843 = vmatprep.subr.mxu0 %v4094
    %4844 = vmatpush1.msra.mxu0 %v4093
    %4845 = vmatprep.subr.mxu0 %v4098
    %4846 = vmatpush1.msra.mxu0 %v4097
    %4847 = vmatprep.subr.mxu0 %v4102
    %4848 = vmatpush1.msra.mxu0 %v4101
    %4849 = vmatprep.subr.mxu0 %v4106
    %4850 = vmatpush1.msra.mxu0 %v4105
    %4851 = vmatprep.subr.mxu0 %v4110
    %4852 = vmatpush1.msra.mxu0 %v4109
    %4853 = vmatprep.subr.mxu0 %v4114
    %4854 = vmatpush1.msra.mxu0 %v4113
    %4855 = vmatprep.subr.mxu0 %v4118
    %4856 = vmatpush1.msra.mxu0 %v4117
    %4857 = vmatprep.subr.mxu0 0.0
    %4858 = vmatpush1.msra.mxu0 0.0
    %4859 = vmatprep.subr.mxu0 0.0
    %4860 = vmatpush1.msra.mxu0 0.0
    %4861 = vmatprep.subr.mxu0 0.0
    %4862 = vmatpush1.msra.mxu0 0.0
    %4863 = vmatprep.subr.mxu0 0.0
    %4864 = vmatpush1.msra.mxu0 0.0
    %4865 = vmatprep.subr.mxu0 0.0
    %4866 = vmatpush1.msra.mxu0 0.0
    %4867 = vmatprep.subr.mxu0 0.0
    %4868 = vmatpush1.msra.mxu0 0.0
    %4869 = vmatprep.subr.mxu0 0.0
    %4870 = vmatpush1.msra.mxu0 0.0
    %4871 = vmatprep.subr.mxu0 0.0
    %4872 = vmatpush1.msra.mxu0 0.0
    %4873 = vmatprep.subr.mxu0 0.0
    %4874 = vmatpush1.msra.mxu0 0.0
    %4875 = vmatprep.subr.mxu0 0.0
    %4876 = vmatpush1.msra.mxu0 0.0
    %4877 = vmatprep.subr.mxu0 0.0
    %4878 = vmatpush1.msra.mxu0 0.0
    %4879 = vmatprep.subr.mxu0 0.0
    %4880 = vmatpush1.msra.mxu0 0.0
    %4881 = vmatprep.subr.mxu0 0.0
    %4882 = vmatpush1.msra.mxu0 0.0
    %4883 = vmatprep.subr.mxu0 0.0
    %4884 = vmatpush1.msra.mxu0 0.0
    %4885 = vmatprep.subr.mxu0 0.0
    %4886 = vmatpush1.msra.mxu0 0.0
    %4887 = vmatprep.subr.mxu0 0.0
    %4888 = vmatpush1.msra.mxu0 0.0
    %4889 = vmatprep.mubr.f32.mxu0 0.0
    %4890 = vmatmul.mubr.f32.gmra.mrb[0].mxu0 %v4819
    %v4891 = vpop.f32.mrb[0].mxu0
    %v4892 = vadd.f32 0.0, %v4891
    %v4893 = vpop.f32.mrb[0].mxu0
    %v4894 = vadd.f32 0.0, %v4893
    %4895 = vdwg.mxu0
    %4896 = vmatprep.subr.mxu0 %v4060
    %4897 = vmatpush1.msra.mxu0 %v4059
    %4898 = vmatprep.subr.mxu0 %v4064
    %4899 = vmatpush1.msra.mxu0 %v4063
    %4900 = vmatprep.subr.mxu0 %v4068
    %4901 = vmatpush1.msra.mxu0 %v4067
    %4902 = vmatprep.subr.mxu0 %v4072
    %4903 = vmatpush1.msra.mxu0 %v4071
    %4904 = vmatprep.subr.mxu0 %v4076
    %4905 = vmatpush1.msra.mxu0 %v4075
    %4906 = vmatprep.subr.mxu0 %v4080
    %4907 = vmatpush1.msra.mxu0 %v4079
    %4908 = vmatprep.subr.mxu0 %v4084
    %4909 = vmatpush1.msra.mxu0 %v4083
    %4910 = vmatprep.subr.mxu0 %v4088
    %4911 = vmatpush1.msra.mxu0 %v4087
    %4912 = vmatprep.subr.mxu0 %v4092
    %4913 = vmatpush1.msra.mxu0 %v4091
    %4914 = vmatprep.subr.mxu0 %v4096
    %4915 = vmatpush1.msra.mxu0 %v4095
    %4916 = vmatprep.subr.mxu0 %v4100
    %4917 = vmatpush1.msra.mxu0 %v4099
    %4918 = vmatprep.subr.mxu0 %v4104
    %4919 = vmatpush1.msra.mxu0 %v4103
    %4920 = vmatprep.subr.mxu0 %v4108
    %4921 = vmatpush1.msra.mxu0 %v4107
    %4922 = vmatprep.subr.mxu0 %v4112
    %4923 = vmatpush1.msra.mxu0 %v4111
    %4924 = vmatprep.subr.mxu0 %v4116
    %4925 = vmatpush1.msra.mxu0 %v4115
    %4926 = vmatprep.subr.mxu0 %v4120
    %4927 = vmatpush1.msra.mxu0 %v4119
    %4928 = vmatprep.subr.mxu0 0.0
    %4929 = vmatpush1.msra.mxu0 0.0
    %4930 = vmatprep.subr.mxu0 0.0
    %4931 = vmatpush1.msra.mxu0 0.0
    %4932 = vmatprep.subr.mxu0 0.0
    %4933 = vmatpush1.msra.mxu0 0.0
    %4934 = vmatprep.subr.mxu0 0.0
    %4935 = vmatpush1.msra.mxu0 0.0
    %4936 = vmatprep.subr.mxu0 0.0
    %4937 = vmatpush1.msra.mxu0 0.0
    %4938 = vmatprep.subr.mxu0 0.0
    %4939 = vmatpush1.msra.mxu0 0.0
    %4940 = vmatprep.subr.mxu0 0.0
    %4941 = vmatpush1.msra.mxu0 0.0
    %4942 = vmatprep.subr.mxu0 0.0
    %4943 = vmatpush1.msra.mxu0 0.0
    %4944 = vmatprep.subr.mxu0 0.0
    %4945 = vmatpush1.msra.mxu0 0.0
    %4946 = vmatprep.subr.mxu0 0.0
    %4947 = vmatpush1.msra.mxu0 0.0
    %4948 = vmatprep.subr.mxu0 0.0
    %4949 = vmatpush1.msra.mxu0 0.0
    %4950 = vmatprep.subr.mxu0 0.0
    %4951 = vmatpush1.msra.mxu0 0.0
    %4952 = vmatprep.subr.mxu0 0.0
    %4953 = vmatpush1.msra.mxu0 0.0
    %4954 = vmatprep.subr.mxu0 0.0
    %4955 = vmatpush1.msra.mxu0 0.0
    %4956 = vmatprep.subr.mxu0 0.0
    %4957 = vmatpush1.msra.mxu0 0.0
    %4958 = vmatprep.subr.mxu0 0.0
    %4959 = vmatpush1.msra.mxu0 0.0
    %4960 = vmatprep.mubr.f32.mxu0 0.0
    %4961 = vmatmul.mubr.f32.gmra.mrb[0].mxu0 %v4819
    %v4962 = vpop.f32.mrb[0].mxu0
    %v4963 = vadd.f32 0.0, %v4962
    %v4964 = vpop.f32.mrb[0].mxu0
    %v4965 = vadd.f32 0.0, %v4964
    %4966 = vdwg.mxu0
    %v4967 = vadd.f32 %v4821, %v4892
    %v4968 = vadd.f32 %v4822, %v4894
    %v4969 = vadd.f32 %v4823, %v4963
    %v4970 = vadd.f32 %v4824, %v4965
    %v4971 = vxor.u32 %v4967, 2147483648
    %v4972 = vxor.u32 %v4968, 2147483648
    %v4973 = vxor.u32 %v4969, 2147483648
    %v4974 = vmul.f32 %v4971, 1.442695
    %v4975 = vpow.pop %v4974
    %v4976 = vmul.f32 %v4972, 1.442695
    %v4977 = vpow.pop %v4976
    %v4978 = vmul.f32 %v4973, 1.442695
    %v4979 = vpow.pop %v4978
    %v4980 = vadd.f32 %v4975, 1.0
    %v4981 = vadd.f32 %v4977, 1.0
    %v4982 = vadd.f32 %v4979, 1.0
    %v4983 = vrcp.pop %v4980
    %v4984 = vmul.f32 1.0, %v4983
    %v4985 = vrcp.pop %v4981
    %v4986 = vmul.f32 1.0, %v4985
    %v4987 = vrcp.pop %v4982
    %v4988 = vmul.f32 1.0, %v4987
    %v4989 = vtanh.pop %v4970
    %v4990 = vmul.f32 %v4986, %v4817
    %v4991 = vmul.f32 %v4984, %v4989
    %v4992 = vadd.f32 %v4990, %v4991
    %v4993 = vtanh.pop %v4992
    %v4994 = vmul.f32 %v4988, %v4993
    %4995 = vst [vmem:[#allocation3 + $0x20] sm:$0xff] %v4994
    %v4996 = vld [vmem:[#allocation2 + $0xa0] sm:$0xff]
    %v4997 = vld [vmem:[#allocation2 + $0xa8] sm:$0xff]
    %v4998 = vld [vmem:[#allocation2 + $0xb0] sm:$0xff]
    %v4999 = vld [vmem:[#allocation2 + $0xb8] sm:$0xff]
    %5000 = vmatprep.subr.mxu0 %v4058
    %5001 = vmatpush1.msra.mxu0 %v4057
    %5002 = vmatprep.subr.mxu0 %v4062
    %5003 = vmatpush1.msra.mxu0 %v4061
    %5004 = vmatprep.subr.mxu0 %v4066
    %5005 = vmatpush1.msra.mxu0 %v4065
    %5006 = vmatprep.subr.mxu0 %v4070
    %5007 = vmatpush1.msra.mxu0 %v4069
    %5008 = vmatprep.subr.mxu0 %v4074
    %5009 = vmatpush1.msra.mxu0 %v4073
    %5010 = vmatprep.subr.mxu0 %v4078
    %5011 = vmatpush1.msra.mxu0 %v4077
    %5012 = vmatprep.subr.mxu0 %v4082
    %5013 = vmatpush1.msra.mxu0 %v4081
    %5014 = vmatprep.subr.mxu0 %v4086
    %5015 = vmatpush1.msra.mxu0 %v4085
    %5016 = vmatprep.subr.mxu0 %v4090
    %5017 = vmatpush1.msra.mxu0 %v4089
    %5018 = vmatprep.subr.mxu0 %v4094
    %5019 = vmatpush1.msra.mxu0 %v4093
    %5020 = vmatprep.subr.mxu0 %v4098
    %5021 = vmatpush1.msra.mxu0 %v4097
    %5022 = vmatprep.subr.mxu0 %v4102
    %5023 = vmatpush1.msra.mxu0 %v4101
    %5024 = vmatprep.subr.mxu0 %v4106
    %5025 = vmatpush1.msra.mxu0 %v4105
    %5026 = vmatprep.subr.mxu0 %v4110
    %5027 = vmatpush1.msra.mxu0 %v4109
    %5028 = vmatprep.subr.mxu0 %v4114
    %5029 = vmatpush1.msra.mxu0 %v4113
    %5030 = vmatprep.subr.mxu0 %v4118
    %5031 = vmatpush1.msra.mxu0 %v4117
    %5032 = vmatprep.subr.mxu0 0.0
    %5033 = vmatpush1.msra.mxu0 0.0
    %5034 = vmatprep.subr.mxu0 0.0
    %5035 = vmatpush1.msra.mxu0 0.0
    %5036 = vmatprep.subr.mxu0 0.0
    %5037 = vmatpush1.msra.mxu0 0.0
    %5038 = vmatprep.subr.mxu0 0.0
    %5039 = vmatpush1.msra.mxu0 0.0
    %5040 = vmatprep.subr.mxu0 0.0
    %5041 = vmatpush1.msra.mxu0 0.0
    %5042 = vmatprep.subr.mxu0 0.0
    %5043 = vmatpush1.msra.mxu0 0.0
    %5044 = vmatprep.subr.mxu0 0.0
    %5045 = vmatpush1.msra.mxu0 0.0
    %5046 = vmatprep.subr.mxu0 0.0
    %5047 = vmatpush1.msra.mxu0 0.0
    %5048 = vmatprep.subr.mxu0 0.0
    %5049 = vmatpush1.msra.mxu0 0.0
    %5050 = vmatprep.subr.mxu0 0.0
    %5051 = vmatpush1.msra.mxu0 0.0
    %5052 = vmatprep.subr.mxu0 0.0
    %5053 = vmatpush1.msra.mxu0 0.0
    %5054 = vmatprep.subr.mxu0 0.0
    %5055 = vmatpush1.msra.mxu0 0.0
    %5056 = vmatprep.subr.mxu0 0.0
    %5057 = vmatpush1.msra.mxu0 0.0
    %5058 = vmatprep.subr.mxu0 0.0
    %5059 = vmatpush1.msra.mxu0 0.0
    %5060 = vmatprep.subr.mxu0 0.0
    %5061 = vmatpush1.msra.mxu0 0.0
    %5062 = vmatprep.subr.mxu0 0.0
    %5063 = vmatpush1.msra.mxu0 0.0
    %5064 = vmatprep.mubr.f32.mxu0 0.0
    %5065 = vmatmul.mubr.f32.gmra.mrb[0].mxu0 %v4994
    %v5066 = vpop.f32.mrb[0].mxu0
    %v5067 = vadd.f32 0.0, %v5066
    %v5068 = vpop.f32.mrb[0].mxu0
    %v5069 = vadd.f32 0.0, %v5068
    %5070 = vdwg.mxu0
    %5071 = vmatprep.subr.mxu0 %v4060
    %5072 = vmatpush1.msra.mxu0 %v4059
    %5073 = vmatprep.subr.mxu0 %v4064
    %5074 = vmatpush1.msra.mxu0 %v4063
    %5075 = vmatprep.subr.mxu0 %v4068
    %5076 = vmatpush1.msra.mxu0 %v4067
    %5077 = vmatprep.subr.mxu0 %v4072
    %5078 = vmatpush1.msra.mxu0 %v4071
    %5079 = vmatprep.subr.mxu0 %v4076
    %5080 = vmatpush1.msra.mxu0 %v4075
    %5081 = vmatprep.subr.mxu0 %v4080
    %5082 = vmatpush1.msra.mxu0 %v4079
    %5083 = vmatprep.subr.mxu0 %v4084
    %5084 = vmatpush1.msra.mxu0 %v4083
    %5085 = vmatprep.subr.mxu0 %v4088
    %5086 = vmatpush1.msra.mxu0 %v4087
    %5087 = vmatprep.subr.mxu0 %v4092
    %5088 = vmatpush1.msra.mxu0 %v4091
    %5089 = vmatprep.subr.mxu0 %v4096
    %5090 = vmatpush1.msra.mxu0 %v4095
    %5091 = vmatprep.subr.mxu0 %v4100
    %5092 = vmatpush1.msra.mxu0 %v4099
    %5093 = vmatprep.subr.mxu0 %v4104
    %5094 = vmatpush1.msra.mxu0 %v4103
    %5095 = vmatprep.subr.mxu0 %v4108
    %5096 = vmatpush1.msra.mxu0 %v4107
    %5097 = vmatprep.subr.mxu0 %v4112
    %5098 = vmatpush1.msra.mxu0 %v4111
    %5099 = vmatprep.subr.mxu0 %v4116
    %5100 = vmatpush1.msra.mxu0 %v4115
    %5101 = vmatprep.subr.mxu0 %v4120
    %5102 = vmatpush1.msra.mxu0 %v4119
    %5103 = vmatprep.subr.mxu0 0.0
    %5104 = vmatpush1.msra.mxu0 0.0
    %5105 = vmatprep.subr.mxu0 0.0
    %5106 = vmatpush1.msra.mxu0 0.0
    %5107 = vmatprep.subr.mxu0 0.0
    %5108 = vmatpush1.msra.mxu0 0.0
    %5109 = vmatprep.subr.mxu0 0.0
    %5110 = vmatpush1.msra.mxu0 0.0
    %5111 = vmatprep.subr.mxu0 0.0
    %5112 = vmatpush1.msra.mxu0 0.0
    %5113 = vmatprep.subr.mxu0 0.0
    %5114 = vmatpush1.msra.mxu0 0.0
    %5115 = vmatprep.subr.mxu0 0.0
    %5116 = vmatpush1.msra.mxu0 0.0
    %5117 = vmatprep.subr.mxu0 0.0
    %5118 = vmatpush1.msra.mxu0 0.0
    %5119 = vmatprep.subr.mxu0 0.0
    %5120 = vmatpush1.msra.mxu0 0.0
    %5121 = vmatprep.subr.mxu0 0.0
    %5122 = vmatpush1.msra.mxu0 0.0
    %5123 = vmatprep.subr.mxu0 0.0
    %5124 = vmatpush1.msra.mxu0 0.0
    %5125 = vmatprep.subr.mxu0 0.0
    %5126 = vmatpush1.msra.mxu0 0.0
    %5127 = vmatprep.subr.mxu0 0.0
    %5128 = vmatpush1.msra.mxu0 0.0
    %5129 = vmatprep.subr.mxu0 0.0
    %5130 = vmatpush1.msra.mxu0 0.0
    %5131 = vmatprep.subr.mxu0 0.0
    %5132 = vmatpush1.msra.mxu0 0.0
    %5133 = vmatprep.subr.mxu0 0.0
    %5134 = vmatpush1.msra.mxu0 0.0
    %5135 = vmatprep.mubr.f32.mxu0 0.0
    %5136 = vmatmul.mubr.f32.gmra.mrb[0].mxu0 %v4994
    %v5137 = vpop.f32.mrb[0].mxu0
    %v5138 = vadd.f32 0.0, %v5137
    %v5139 = vpop.f32.mrb[0].mxu0
    %v5140 = vadd.f32 0.0, %v5139
    %5141 = vdwg.mxu0
    %v5142 = vadd.f32 %v4996, %v5067
    %v5143 = vadd.f32 %v4997, %v5069
    %v5144 = vadd.f32 %v4998, %v5138
    %v5145 = vadd.f32 %v4999, %v5140
    %v5146 = vxor.u32 %v5142, 2147483648
    %v5147 = vxor.u32 %v5143, 2147483648
    %v5148 = vxor.u32 %v5144, 2147483648
    %v5149 = vmul.f32 %v5146, 1.442695
    %v5150 = vpow.pop %v5149
    %v5151 = vmul.f32 %v5147, 1.442695
    %v5152 = vpow.pop %v5151
    %v5153 = vmul.f32 %v5148, 1.442695
    %v5154 = vpow.pop %v5153
    %v5155 = vadd.f32 %v5150, 1.0
    %v5156 = vadd.f32 %v5152, 1.0
    %v5157 = vadd.f32 %v5154, 1.0
    %v5158 = vrcp.pop %v5155
    %v5159 = vmul.f32 1.0, %v5158
    %v5160 = vrcp.pop %v5156
    %v5161 = vmul.f32 1.0, %v5160
    %v5162 = vrcp.pop %v5157
    %v5163 = vmul.f32 1.0, %v5162
    %v5164 = vtanh.pop %v5145
    %v5165 = vmul.f32 %v5161, %v4992
    %v5166 = vmul.f32 %v5159, %v5164
    %v5167 = vadd.f32 %v5165, %v5166
    %v5168 = vtanh.pop %v5167
    %v5169 = vmul.f32 %v5163, %v5168
    %5170 = vst [vmem:[#allocation3 + $0x28] sm:$0xff] %v5169
    %v5171 = vld [vmem:[#allocation2 + $0xc0] sm:$0xff]
    %v5172 = vld [vmem:[#allocation2 + $0xc8] sm:$0xff]
    %v5173 = vld [vmem:[#allocation2 + $0xd0] sm:$0xff]
    %v5174 = vld [vmem:[#allocation2 + $0xd8] sm:$0xff]
    %5175 = vmatprep.subr.mxu0 %v4058
    %5176 = vmatpush1.msra.mxu0 %v4057
    %5177 = vmatprep.subr.mxu0 %v4062
    %5178 = vmatpush1.msra.mxu0 %v4061
    %5179 = vmatprep.subr.mxu0 %v4066
    %5180 = vmatpush1.msra.mxu0 %v4065
    %5181 = vmatprep.subr.mxu0 %v4070
    %5182 = vmatpush1.msra.mxu0 %v4069
    %5183 = vmatprep.subr.mxu0 %v4074
    %5184 = vmatpush1.msra.mxu0 %v4073
    %5185 = vmatprep.subr.mxu0 %v4078
    %5186 = vmatpush1.msra.mxu0 %v4077
    %5187 = vmatprep.subr.mxu0 %v4082
    %5188 = vmatpush1.msra.mxu0 %v4081
    %5189 = vmatprep.subr.mxu0 %v4086
    %5190 = vmatpush1.msra.mxu0 %v4085
    %5191 = vmatprep.subr.mxu0 %v4090
    %5192 = vmatpush1.msra.mxu0 %v4089
    %5193 = vmatprep.subr.mxu0 %v4094
    %5194 = vmatpush1.msra.mxu0 %v4093
    %5195 = vmatprep.subr.mxu0 %v4098
    %5196 = vmatpush1.msra.mxu0 %v4097
    %5197 = vmatprep.subr.mxu0 %v4102
    %5198 = vmatpush1.msra.mxu0 %v4101
    %5199 = vmatprep.subr.mxu0 %v4106
    %5200 = vmatpush1.msra.mxu0 %v4105
    %5201 = vmatprep.subr.mxu0 %v4110
    %5202 = vmatpush1.msra.mxu0 %v4109
    %5203 = vmatprep.subr.mxu0 %v4114
    %5204 = vmatpush1.msra.mxu0 %v4113
    %5205 = vmatprep.subr.mxu0 %v4118
    %5206 = vmatpush1.msra.mxu0 %v4117
    %5207 = vmatprep.subr.mxu0 0.0
    %5208 = vmatpush1.msra.mxu0 0.0
    %5209 = vmatprep.subr.mxu0 0.0
    %5210 = vmatpush1.msra.mxu0 0.0
    %5211 = vmatprep.subr.mxu0 0.0
    %5212 = vmatpush1.msra.mxu0 0.0
    %5213 = vmatprep.subr.mxu0 0.0
    %5214 = vmatpush1.msra.mxu0 0.0
    %5215 = vmatprep.subr.mxu0 0.0
    %5216 = vmatpush1.msra.mxu0 0.0
    %5217 = vmatprep.subr.mxu0 0.0
    %5218 = vmatpush1.msra.mxu0 0.0
    %5219 = vmatprep.subr.mxu0 0.0
    %5220 = vmatpush1.msra.mxu0 0.0
    %5221 = vmatprep.subr.mxu0 0.0
    %5222 = vmatpush1.msra.mxu0 0.0
    %5223 = vmatprep.subr.mxu0 0.0
    %5224 = vmatpush1.msra.mxu0 0.0
    %5225 = vmatprep.subr.mxu0 0.0
    %5226 = vmatpush1.msra.mxu0 0.0
    %5227 = vmatprep.subr.mxu0 0.0
    %5228 = vmatpush1.msra.mxu0 0.0
    %5229 = vmatprep.subr.mxu0 0.0
    %5230 = vmatpush1.msra.mxu0 0.0
    %5231 = vmatprep.subr.mxu0 0.0
    %5232 = vmatpush1.msra.mxu0 0.0
    %5233 = vmatprep.subr.mxu0 0.0
    %5234 = vmatpush1.msra.mxu0 0.0
    %5235 = vmatprep.subr.mxu0 0.0
    %5236 = vmatpush1.msra.mxu0 0.0
    %5237 = vmatprep.subr.mxu0 0.0
    %5238 = vmatpush1.msra.mxu0 0.0
    %5239 = vmatprep.mubr.f32.mxu0 0.0
    %5240 = vmatmul.mubr.f32.gmra.mrb[0].mxu0 %v5169
    %v5241 = vpop.f32.mrb[0].mxu0
    %v5242 = vadd.f32 0.0, %v5241
    %v5243 = vpop.f32.mrb[0].mxu0
    %v5244 = vadd.f32 0.0, %v5243
    %5245 = vdwg.mxu0
    %5246 = vmatprep.subr.mxu0 %v4060
    %5247 = vmatpush1.msra.mxu0 %v4059
    %5248 = vmatprep.subr.mxu0 %v4064
    %5249 = vmatpush1.msra.mxu0 %v4063
    %5250 = vmatprep.subr.mxu0 %v4068
    %5251 = vmatpush1.msra.mxu0 %v4067
    %5252 = vmatprep.subr.mxu0 %v4072
    %5253 = vmatpush1.msra.mxu0 %v4071
    %5254 = vmatprep.subr.mxu0 %v4076
    %5255 = vmatpush1.msra.mxu0 %v4075
    %5256 = vmatprep.subr.mxu0 %v4080
    %5257 = vmatpush1.msra.mxu0 %v4079
    %5258 = vmatprep.subr.mxu0 %v4084
    %5259 = vmatpush1.msra.mxu0 %v4083
    %5260 = vmatprep.subr.mxu0 %v4088
    %5261 = vmatpush1.msra.mxu0 %v4087
    %5262 = vmatprep.subr.mxu0 %v4092
    %5263 = vmatpush1.msra.mxu0 %v4091
    %5264 = vmatprep.subr.mxu0 %v4096
    %5265 = vmatpush1.msra.mxu0 %v4095
    %5266 = vmatprep.subr.mxu0 %v4100
    %5267 = vmatpush1.msra.mxu0 %v4099
    %5268 = vmatprep.subr.mxu0 %v4104
    %5269 = vmatpush1.msra.mxu0 %v4103
    %5270 = vmatprep.subr.mxu0 %v4108
    %5271 = vmatpush1.msra.mxu0 %v4107
    %5272 = vmatprep.subr.mxu0 %v4112
    %5273 = vmatpush1.msra.mxu0 %v4111
    %5274 = vmatprep.subr.mxu0 %v4116
    %5275 = vmatpush1.msra.mxu0 %v4115
    %5276 = vmatprep.subr.mxu0 %v4120
    %5277 = vmatpush1.msra.mxu0 %v4119
    %5278 = vmatprep.subr.mxu0 0.0
    %5279 = vmatpush1.msra.mxu0 0.0
    %5280 = vmatprep.subr.mxu0 0.0
    %5281 = vmatpush1.msra.mxu0 0.0
    %5282 = vmatprep.subr.mxu0 0.0
    %5283 = vmatpush1.msra.mxu0 0.0
    %5284 = vmatprep.subr.mxu0 0.0
    %5285 = vmatpush1.msra.mxu0 0.0
    %5286 = vmatprep.subr.mxu0 0.0
    %5287 = vmatpush1.msra.mxu0 0.0
    %5288 = vmatprep.subr.mxu0 0.0
    %5289 = vmatpush1.msra.mxu0 0.0
    %5290 = vmatprep.subr.mxu0 0.0
    %5291 = vmatpush1.msra.mxu0 0.0
    %5292 = vmatprep.subr.mxu0 0.0
    %5293 = vmatpush1.msra.mxu0 0.0
    %5294 = vmatprep.subr.mxu0 0.0
    %5295 = vmatpush1.msra.mxu0 0.0
    %5296 = vmatprep.subr.mxu0 0.0
    %5297 = vmatpush1.msra.mxu0 0.0
    %5298 = vmatprep.subr.mxu0 0.0
    %5299 = vmatpush1.msra.mxu0 0.0
    %5300 = vmatprep.subr.mxu0 0.0
    %5301 = vmatpush1.msra.mxu0 0.0
    %5302 = vmatprep.subr.mxu0 0.0
    %5303 = vmatpush1.msra.mxu0 0.0
    %5304 = vmatprep.subr.mxu0 0.0
    %5305 = vmatpush1.msra.mxu0 0.0
    %5306 = vmatprep.subr.mxu0 0.0
    %5307 = vmatpush1.msra.mxu0 0.0
    %5308 = vmatprep.subr.mxu0 0.0
    %5309 = vmatpush1.msra.mxu0 0.0
    %5310 = vmatprep.mubr.f32.mxu0 0.0
    %5311 = vmatmul.mubr.f32.gmra.mrb[0].mxu0 %v5169
    %v5312 = vpop.f32.mrb[0].mxu0
    %v5313 = vadd.f32 0.0, %v5312
    %v5314 = vpop.f32.mrb[0].mxu0
    %v5315 = vadd.f32 0.0, %v5314
    %5316 = vdwg.mxu0
    %v5317 = vadd.f32 %v5171, %v5242
    %v5318 = vadd.f32 %v5172, %v5244
    %v5319 = vadd.f32 %v5173, %v5313
    %v5320 = vadd.f32 %v5174, %v5315
    %v5321 = vxor.u32 %v5317, 2147483648
    %v5322 = vxor.u32 %v5318, 2147483648
    %v5323 = vxor.u32 %v5319, 2147483648
    %v5324 = vmul.f32 %v5321, 1.442695
    %v5325 = vpow.pop %v5324
    %v5326 = vmul.f32 %v5322, 1.442695
    %v5327 = vpow.pop %v5326
    %v5328 = vmul.f32 %v5323, 1.442695
    %v5329 = vpow.pop %v5328
    %v5330 = vadd.f32 %v5325, 1.0
    %v5331 = vadd.f32 %v5327, 1.0
    %v5332 = vadd.f32 %v5329, 1.0
    %v5333 = vrcp.pop %v5330
    %v5334 = vmul.f32 1.0, %v5333
    %v5335 = vrcp.pop %v5331
    %v5336 = vmul.f32 1.0, %v5335
    %v5337 = vrcp.pop %v5332
    %v5338 = vmul.f32 1.0, %v5337
    %v5339 = vtanh.pop %v5320
    %v5340 = vmul.f32 %v5336, %v5167
    %v5341 = vmul.f32 %v5334, %v5339
    %v5342 = vadd.f32 %v5340, %v5341
    %v5343 = vtanh.pop %v5342
    %v5344 = vmul.f32 %v5338, %v5343
    %5345 = vst [vmem:[#allocation3 + $0x30] sm:$0xff] %v5344
    %v5346 = vld [vmem:[#allocation2 + $0xe0] sm:$0xff]
    %v5347 = vld [vmem:[#allocation2 + $0xe8] sm:$0xff]
    %v5348 = vld [vmem:[#allocation2 + $0xf0] sm:$0xff]
    %v5349 = vld [vmem:[#allocation2 + $0xf8] sm:$0xff]
    %5350 = vmatprep.subr.mxu0 %v4058
    %5351 = vmatpush1.msra.mxu0 %v4057
    %5352 = vmatprep.subr.mxu0 %v4062
    %5353 = vmatpush1.msra.mxu0 %v4061
    %5354 = vmatprep.subr.mxu0 %v4066
    %5355 = vmatpush1.msra.mxu0 %v4065
    %5356 = vmatprep.subr.mxu0 %v4070
    %5357 = vmatpush1.msra.mxu0 %v4069
    %5358 = vmatprep.subr.mxu0 %v4074
    %5359 = vmatpush1.msra.mxu0 %v4073
    %5360 = vmatprep.subr.mxu0 %v4078
    %5361 = vmatpush1.msra.mxu0 %v4077
    %5362 = vmatprep.subr.mxu0 %v4082
    %5363 = vmatpush1.msra.mxu0 %v4081
    %5364 = vmatprep.subr.mxu0 %v4086
    %5365 = vmatpush1.msra.mxu0 %v4085
    %5366 = vmatprep.subr.mxu0 %v4090
    %5367 = vmatpush1.msra.mxu0 %v4089
    %5368 = vmatprep.subr.mxu0 %v4094
    %5369 = vmatpush1.msra.mxu0 %v4093
    %5370 = vmatprep.subr.mxu0 %v4098
    %5371 = vmatpush1.msra.mxu0 %v4097
    %5372 = vmatprep.subr.mxu0 %v4102
    %5373 = vmatpush1.msra.mxu0 %v4101
    %5374 = vmatprep.subr.mxu0 %v4106
    %5375 = vmatpush1.msra.mxu0 %v4105
    %5376 = vmatprep.subr.mxu0 %v4110
    %5377 = vmatpush1.msra.mxu0 %v4109
    %5378 = vmatprep.subr.mxu0 %v4114
    %5379 = vmatpush1.msra.mxu0 %v4113
    %5380 = vmatprep.subr.mxu0 %v4118
    %5381 = vmatpush1.msra.mxu0 %v4117
    %5382 = vmatprep.subr.mxu0 0.0
    %5383 = vmatpush1.msra.mxu0 0.0
    %5384 = vmatprep.subr.mxu0 0.0
    %5385 = vmatpush1.msra.mxu0 0.0
    %5386 = vmatprep.subr.mxu0 0.0
    %5387 = vmatpush1.msra.mxu0 0.0
    %5388 = vmatprep.subr.mxu0 0.0
    %5389 = vmatpush1.msra.mxu0 0.0
    %5390 = vmatprep.subr.mxu0 0.0
    %5391 = vmatpush1.msra.mxu0 0.0
    %5392 = vmatprep.subr.mxu0 0.0
    %5393 = vmatpush1.msra.mxu0 0.0
    %5394 = vmatprep.subr.mxu0 0.0
    %5395 = vmatpush1.msra.mxu0 0.0
    %5396 = vmatprep.subr.mxu0 0.0
    %5397 = vmatpush1.msra.mxu0 0.0
    %5398 = vmatprep.subr.mxu0 0.0
    %5399 = vmatpush1.msra.mxu0 0.0
    %5400 = vmatprep.subr.mxu0 0.0
    %5401 = vmatpush1.msra.mxu0 0.0
    %5402 = vmatprep.subr.mxu0 0.0
    %5403 = vmatpush1.msra.mxu0 0.0
    %5404 = vmatprep.subr.mxu0 0.0
    %5405 = vmatpush1.msra.mxu0 0.0
    %5406 = vmatprep.subr.mxu0 0.0
    %5407 = vmatpush1.msra.mxu0 0.0
    %5408 = vmatprep.subr.mxu0 0.0
    %5409 = vmatpush1.msra.mxu0 0.0
    %5410 = vmatprep.subr.mxu0 0.0
    %5411 = vmatpush1.msra.mxu0 0.0
    %5412 = vmatprep.subr.mxu0 0.0
    %5413 = vmatpush1.msra.mxu0 0.0
    %5414 = vmatprep.mubr.f32.mxu0 0.0
    %5415 = vmatmul.mubr.f32.gmra.mrb[0].mxu0 %v5344
    %v5416 = vpop.f32.mrb[0].mxu0
    %v5417 = vadd.f32 0.0, %v5416
    %v5418 = vpop.f32.mrb[0].mxu0
    %v5419 = vadd.f32 0.0, %v5418
    %5420 = vdwg.mxu0
    %5421 = vmatprep.subr.mxu0 %v4060
    %5422 = vmatpush1.msra.mxu0 %v4059
    %5423 = vmatprep.subr.mxu0 %v4064
    %5424 = vmatpush1.msra.mxu0 %v4063
    %5425 = vmatprep.subr.mxu0 %v4068
    %5426 = vmatpush1.msra.mxu0 %v4067
    %5427 = vmatprep.subr.mxu0 %v4072
    %5428 = vmatpush1.msra.mxu0 %v4071
    %5429 = vmatprep.subr.mxu0 %v4076
    %5430 = vmatpush1.msra.mxu0 %v4075
    %5431 = vmatprep.subr.mxu0 %v4080
    %5432 = vmatpush1.msra.mxu0 %v4079
    %5433 = vmatprep.subr.mxu0 %v4084
    %5434 = vmatpush1.msra.mxu0 %v4083
    %5435 = vmatprep.subr.mxu0 %v4088
    %5436 = vmatpush1.msra.mxu0 %v4087
    %5437 = vmatprep.subr.mxu0 %v4092
    %5438 = vmatpush1.msra.mxu0 %v4091
    %5439 = vmatprep.subr.mxu0 %v4096
    %5440 = vmatpush1.msra.mxu0 %v4095
    %5441 = vmatprep.subr.mxu0 %v4100
    %5442 = vmatpush1.msra.mxu0 %v4099
    %5443 = vmatprep.subr.mxu0 %v4104
    %5444 = vmatpush1.msra.mxu0 %v4103
    %5445 = vmatprep.subr.mxu0 %v4108
    %5446 = vmatpush1.msra.mxu0 %v4107
    %5447 = vmatprep.subr.mxu0 %v4112
    %5448 = vmatpush1.msra.mxu0 %v4111
    %5449 = vmatprep.subr.mxu0 %v4116
    %5450 = vmatpush1.msra.mxu0 %v4115
    %5451 = vmatprep.subr.mxu0 %v4120
    %5452 = vmatpush1.msra.mxu0 %v4119
    %5453 = vmatprep.subr.mxu0 0.0
    %5454 = vmatpush1.msra.mxu0 0.0
    %5455 = vmatprep.subr.mxu0 0.0
    %5456 = vmatpush1.msra.mxu0 0.0
    %5457 = vmatprep.subr.mxu0 0.0
    %5458 = vmatpush1.msra.mxu0 0.0
    %5459 = vmatprep.subr.mxu0 0.0
    %5460 = vmatpush1.msra.mxu0 0.0
    %5461 = vmatprep.subr.mxu0 0.0
    %5462 = vmatpush1.msra.mxu0 0.0
    %5463 = vmatprep.subr.mxu0 0.0
    %5464 = vmatpush1.msra.mxu0 0.0
    %5465 = vmatprep.subr.mxu0 0.0
    %5466 = vmatpush1.msra.mxu0 0.0
    %5467 = vmatprep.subr.mxu0 0.0
    %5468 = vmatpush1.msra.mxu0 0.0
    %5469 = vmatprep.subr.mxu0 0.0
    %5470 = vmatpush1.msra.mxu0 0.0
    %5471 = vmatprep.subr.mxu0 0.0
    %5472 = vmatpush1.msra.mxu0 0.0
    %5473 = vmatprep.subr.mxu0 0.0
    %5474 = vmatpush1.msra.mxu0 0.0
    %5475 = vmatprep.subr.mxu0 0.0
    %5476 = vmatpush1.msra.mxu0 0.0
    %5477 = vmatprep.subr.mxu0 0.0
    %5478 = vmatpush1.msra.mxu0 0.0
    %5479 = vmatprep.subr.mxu0 0.0
    %5480 = vmatpush1.msra.mxu0 0.0
    %5481 = vmatprep.subr.mxu0 0.0
    %5482 = vmatpush1.msra.mxu0 0.0
    %5483 = vmatprep.subr.mxu0 0.0
    %5484 = vmatpush1.msra.mxu0 0.0
    %5485 = vmatprep.mubr.f32.mxu0 0.0
    %5486 = vmatmul.mubr.f32.gmra.mrb[0].mxu0 %v5344
    %v5487 = vpop.f32.mrb[0].mxu0
    %v5488 = vadd.f32 0.0, %v5487
    %v5489 = vpop.f32.mrb[0].mxu0
    %v5490 = vadd.f32 0.0, %v5489
    %5491 = vdwg.mxu0
    %v5492 = vadd.f32 %v5346, %v5417
    %v5493 = vadd.f32 %v5347, %v5419
    %v5494 = vadd.f32 %v5348, %v5488
    %v5495 = vadd.f32 %v5349, %v5490
    %v5496 = vxor.u32 %v5492, 2147483648
    %v5497 = vxor.u32 %v5493, 2147483648
    %v5498 = vxor.u32 %v5494, 2147483648
    %v5499 = vmul.f32 %v5496, 1.442695
    %v5500 = vpow.pop %v5499
    %v5501 = vmul.f32 %v5497, 1.442695
    %v5502 = vpow.pop %v5501
    %v5503 = vmul.f32 %v5498, 1.442695
    %v5504 = vpow.pop %v5503
    %v5505 = vadd.f32 %v5500, 1.0
    %v5506 = vadd.f32 %v5502, 1.0
    %v5507 = vadd.f32 %v5504, 1.0
    %v5508 = vrcp.pop %v5505
    %v5509 = vmul.f32 1.0, %v5508
    %v5510 = vrcp.pop %v5506
    %v5511 = vmul.f32 1.0, %v5510
    %v5512 = vrcp.pop %v5507
    %v5513 = vmul.f32 1.0, %v5512
    %v5514 = vtanh.pop %v5495
    %v5515 = vmul.f32 %v5511, %v5342
    %v5516 = vmul.f32 %v5509, %v5514
    %v5517 = vadd.f32 %v5515, %v5516
    %v5518 = vtanh.pop %v5517
    %v5519 = vmul.f32 %v5513, %v5518
    %5520 = vst [vmem:[#allocation3 + $0x38] sm:$0xff] %v5519
    %v5521 = vld [vmem:[%s10] sm:$0x1]
    %v5523 = vlaneseq
    %v5524 = vshrl.u32 %v5523, 7
    %v5525 = vsub.s32 0, %v5524
    %v5526 = vrot.slane %v5521, %v5525
    %v5528 = vmul.f32 %v5519, %v5526
    %5529 = vadd.xlane.f32.xlu0 %v5528
    %v5530 = vpop.xlane.xlu0 %5529
    %v5531 = vld [vmem:[#allocation7] sm:$0x1]
    %v5533 = vlaneseq
    %v5534 = vshrl.u32 %v5533, 7
    %v5535 = vsub.s32 0, %v5534
    %v5536 = vrot.slane %v5531, %v5535
    %v5538 = vadd.f32 %v5530, %v5536
    %vm5539 = vcmask 7168
    %5540 = vst.msk [vmem:[%s12] sm:$0xff] %vm5539, %v5538
    // Predicated region
    $region54: #{lstm_model_forward.1} parent=1 // pred_check
      _
    $region55: #{lstm_model_forward.1} parent=1 // pred_check_branch
      %5542 = sbr.rel (0) target = $region57
    $region56: #{lstm_model_forward.1} parent=1 // pred_region
      _
    $region57: #{lstm_model_forward.1} parent=1 // pred_fallthru
      _
    // Predicated region
    $region58: #{lstm_model_forward.1} parent=1 // pred_check
      _
    $region59: #{lstm_model_forward.1} parent=1 // pred_check_branch
      %5544 = sbr.rel (0) target = $region61
    $region60: #{lstm_model_forward.1} parent=1 // pred_region
      _
    $region61: #{lstm_model_forward.1} parent=1 // pred_fallthru
      _
    %5545 = vsyncpa [#allocation9], 1
  %5546 = vsyncmov [#allocation6]
  %s5547 = vpop.sfrf %5546
  %p5548 = scmp.eq.s32.totalorder %s5547, 0
  %p5549 = pneg %p5548
  %5551 = shalt.err (%p5549)
  %s5552 = scalar_lea.sflag [#allocation6], 1
  %5553 = vsyncmov %s5552
  %s5554 = vpop.sfrf %5553
  %p5555 = scmp.eq.s32.totalorder %s5554, 0
  %p5556 = pneg %p5555
  %5558 = shalt.err (%p5556)
  %s5559 = scalar_lea.sflag [#allocation6], 2
  %5560 = vsyncmov %s5559
  %s5561 = vpop.sfrf %5560
  %p5562 = scmp.eq.s32.totalorder %s5561, 0
  %p5563 = pneg %p5562
  %5565 = shalt.err (%p5563)
  %s5566 = scalar_lea.sflag [#allocation6], 3
  %5567 = vsyncmov %s5566
  %s5568 = vpop.sfrf %5567
  %p5569 = scmp.eq.s32.totalorder %s5568, 0
  %p5570 = pneg %p5569
  %5572 = shalt.err (%p5570)

</llo_original>
